<compile_context>
chip_gen: v7x
topology: tpu7x:2x2x1
jax: 0.10.0
libtpu: 0.0.40
codegen_flags: <defaults>
</compile_context>

<pallas_src>
import math
import jax
import jax.numpy as jnp
from jax.experimental import pallas as pl
from jax.experimental.pallas import tpu as pltpu


def _choose_tile(T):
    # Query/KV tile size.  128 keeps MXU tiles aligned on every generation
    # (v5e's MXU is 128-wide; also fine for v6e/v7x) and bounds the per-step
    # (H, TILE, TILE) f32 score block.  Tiny sequences fall back to T itself.
    for t in (128, 64, 32, 16, 8):
        if T % t == 0:
            return t
    return T


def _make_kernel(T, TILE, C, n_head, precision):
    hd = C // n_head
    n_kv = T // TILE
    NEG = -1e30  # additive mask value (scores stay f32; exp underflows to 0)

    def kernel(xf_ref, wq_ref, bq_ref, wk_ref, bk_ref, wv_ref, bv_ref,
               wp_ref, bp_ref, o_ref, kt_scr, v_scr):
        qi = pl.program_id(1)
        dtype = xf_ref.dtype          # MXU operand dtype (bf16 models -> full rate)

        # ---- K/V projection once per batch element, stored head-major / per
        # KV tile in VMEM scratch and reused by every query tile.
        # CORRECTNESS: relies on the qi axis being "arbitrary" (sequential) with
        # b as the outer axis -- do not mark qi "parallel" without restructuring.
        @pl.when(qi == 0)
        def _():
            xf = xf_ref[0]                                                  # (T, C)
            k = jnp.dot(xf, wk_ref[...], precision=precision,
                        preferred_element_type=jnp.float32) + bk_ref[...]
            v = jnp.dot(xf, wv_ref[...], precision=precision,
                        preferred_element_type=jnp.float32) + bv_ref[...]
            k4 = k.reshape(n_kv, TILE, n_head, hd)
            v4 = v.reshape(n_kv, TILE, n_head, hd)
            # K pre-transposed: (tile, H, hd, TILE) -> lane dim is the key
            # position (no hd<128 lane padding, no per-tile transpose in loop).
            kt_scr[...] = jnp.transpose(k4, (0, 2, 3, 1)).astype(kt_scr.dtype)
            # V natural layout for P @ V: (tile, H, TILE, hd).
            v_scr[...] = jnp.transpose(v4, (0, 2, 1, 3)).astype(v_scr.dtype)

        # ---- Q projection for this query tile; the 1/sqrt(hd) scale is already
        # folded into Wq/bq wrapper-side.  x is fetched once per b as a full
        # (T, C) block; slice the query tile here (no duplicate x input).
        q_start = pl.multiple_of(qi * TILE, TILE)
        xq = xf_ref[0, pl.ds(q_start, TILE), :]                             # (TILE, C)
        q = jnp.dot(xq, wq_ref[...], precision=precision,
                    preferred_element_type=jnp.float32) + bq_ref[...]
        q = jnp.swapaxes(q.reshape(TILE, n_head, hd), 0, 1).astype(dtype)   # (H, TILE, hd)

        # ---- Flash-style online softmax over KV tiles with causal skipping:
        # query tile qi only needs KV tiles 0..qi (tiles above the diagonal are
        # fully masked), halving score/PV MXU work and exp (EUP) work.
        def kv_step(ki, carry):
            m, l, acc = carry
            kt = kt_scr[ki]                                                 # (H, hd, TILE)
            vt = v_scr[ki]                                                  # (H, TILE, hd)
            s = jnp.einsum('hqd,hdk->hqk', q, kt, precision=precision,
                           preferred_element_type=jnp.float32)              # (H, TILE, TILE) f32
            # Additive causal mask (only the diagonal tile ki == qi truly needs
            # it, but the VPU compare+add is cheap and branch-free).
            q_pos = q_start + jax.lax.broadcasted_iota(jnp.int32, (TILE, TILE), 0)
            k_pos = ki * TILE + jax.lax.broadcasted_iota(jnp.int32, (TILE, TILE), 1)
            s = s + jnp.where(q_pos >= k_pos, 0.0, NEG)
            m_new = jnp.maximum(m, jnp.max(s, axis=-1, keepdims=True))
            alpha = jnp.exp(m - m_new)
            p = jnp.exp(s - m_new)
            l_new = alpha * l + jnp.sum(p, axis=-1, keepdims=True)
            acc_new = alpha * acc + jnp.einsum(
                'hqk,hkd->hqd', p.astype(dtype), vt, precision=precision,
                preferred_element_type=jnp.float32)
            return m_new, l_new, acc_new

        m0 = jnp.full((n_head, TILE, 1), NEG, dtype=jnp.float32)
        l0 = jnp.zeros((n_head, TILE, 1), dtype=jnp.float32)
        acc0 = jnp.zeros((n_head, TILE, hd), dtype=jnp.float32)
        _, l, acc = jax.lax.fori_loop(0, qi + 1, kv_step, (m0, l0, acc0))

        # Exact normalization (the previous approx EUP reciprocal was a likely
        # cause of the >1e-3 mismatch vs. the f32 reference).
        y = acc / l                                                          # (H, TILE, hd)
        y = jnp.swapaxes(y, 0, 1).reshape(TILE, C).astype(dtype)             # (TILE, C)

        out = jnp.dot(y, wp_ref[...], precision=precision,
                      preferred_element_type=jnp.float32) + bp_ref[...]
        # TODO(synk): attn/resid dropout not implemented (eval mode only).
        o_ref[0] = out.astype(o_ref.dtype)

    return kernel


def causal_self_attention(x, w_attn, b_attn, w_proj, b_proj, n_head):
    """Forward of CausalSelfAttention (eval mode).

    x: (B, T, C); w_attn: (C, 3C) stored (in, out); b_attn: (3C,);
    w_proj: (C, C) stored (in, out); b_proj: (C,).
    """
    B, T, C = x.shape
    assert C % n_head == 0
    hd = C // n_head
    TILE = _choose_tile(T)
    n_q = T // TILE

    # Fold the 1/sqrt(hd) attention scale into Wq/bq (one-time, wrapper-side).
    scale = 1.0 / math.sqrt(hd)
    wq = w_attn[:, :C] * scale
    bq = (b_attn[:C] * scale).reshape(1, C)
    wk = w_attn[:, C:2 * C]
    bk = b_attn[C:2 * C].reshape(1, C)
    wv = w_attn[:, 2 * C:]
    bv = b_attn[2 * C:].reshape(1, C)
    bp = b_proj.reshape(1, C)

    # Full-precision MXU passes for f32 models so the kernel agrees with an f32
    # reference; bf16 models run the default single-pass MXU rate.
    # TODO(synk): for f32 production models, casting x / weights to bf16 here
    # (keeping f32 accumulation) halves VMEM and runs the MXU at full rate on
    # v6e/v7x; kept off so this f32 test stays bit-accurate vs. the reference.
    precision = (jax.lax.Precision.HIGHEST if x.dtype == jnp.float32
                 else jax.lax.Precision.DEFAULT)

    kernel = _make_kernel(T, TILE, C, n_head, precision)

    return pl.pallas_call(
        kernel,
        out_shape=jax.ShapeDtypeStruct((B, T, C), x.dtype),
        grid_spec=pltpu.PrefetchScalarGridSpec(
            num_scalar_prefetch=0,
            grid=(B, n_q),
            in_specs=[
                # x: one full-sequence block per batch element (index constant
                # in qi, so it is DMA'd once per b); query tile sliced in-kernel.
                pl.BlockSpec((1, T, C), lambda b, qi: (b, 0, 0)),
                pl.BlockSpec((C, C), lambda b, qi: (0, 0)),   # Wq (pre-scaled)
                pl.BlockSpec((1, C), lambda b, qi: (0, 0)),   # bq (pre-scaled)
                pl.BlockSpec((C, C), lambda b, qi: (0, 0)),   # Wk
                pl.BlockSpec((1, C), lambda b, qi: (0, 0)),   # bk
                pl.BlockSpec((C, C), lambda b, qi: (0, 0)),   # Wv
                pl.BlockSpec((1, C), lambda b, qi: (0, 0)),   # bv
                pl.BlockSpec((C, C), lambda b, qi: (0, 0)),   # W_proj
                pl.BlockSpec((1, C), lambda b, qi: (0, 0)),   # b_proj
                # TODO(synk): pipeline_mode=pl.Buffered(1) on these constant-index
                # weight/bias specs (and the x spec) would drop the wasted second
                # buffer (~9 MiB at C=768 f32) -- most valuable on v7x's 64 MiB VMEM.
            ],
            out_specs=pl.BlockSpec((1, TILE, C), lambda b, qi: (b, qi, 0)),
            scratch_shapes=[
                # K^T per KV tile: (tile, H, hd, TILE) -- lane dim = key position.
                pltpu.VMEM((n_q, n_head, hd, TILE), x.dtype),
                # V per KV tile: (tile, H, TILE, hd) -- natural layout for P @ V.
                pltpu.VMEM((n_q, n_head, TILE, hd), x.dtype),
            ],
        ),
        compiler_params=pltpu.CompilerParams(
            # b: megacore-parallel.  qi MUST stay "arbitrary" (sequential): the
            # K/V scratch written at qi == 0 is reused by every qi > 0.
            # TODO(synk): on v7x with B == 1 one TensorCore idles; splitting
            # heads across cores (or a separate K/V pre-pass so qi can be
            # parallel) would recover that.
            dimension_semantics=("parallel", "arbitrary"),
            # Default scoped VMEM (16/32 MiB) is too small at GPT sizes with f32
            # weights double-buffered; 64 MiB is safe on v5e/v6e and within
            # v7x's physical VMEM (actual usage here is far below the cap).
            vmem_limit_bytes=64 * 1024 * 1024,
        ),
    )(x, wq, bq, wk, bk, wv, bv, w_proj, bp)


def reference(x, w_attn, b_attn, w_proj, b_proj, n_head):
    """Pure-JAX reference mirroring the PyTorch forward (eval mode)."""
    B, T, C = x.shape
    hd = C // n_head
    hp = jax.lax.Precision.HIGHEST
    qkv = jnp.einsum('btc,cd->btd', x, w_attn, precision=hp) + b_attn
    q, k, v = jnp.split(qkv, 3, axis=-1)
    q = q.reshape(B, T, n_head, hd).transpose(0, 2, 1, 3)
    k = k.reshape(B, T, n_head, hd).transpose(0, 2, 1, 3)
    v = v.reshape(B, T, n_head, hd).transpose(0, 2, 1, 3)
    att = jnp.einsum('bhqd,bhkd->bhqk', q, k, precision=hp) / math.sqrt(hd)
    mask = jnp.tril(jnp.ones((T, T), dtype=bool))
    att = jnp.where(mask[None, None], att, -1e30)
    att = jax.nn.softmax(att, axis=-1)
    y = jnp.einsum('bhqk,bhkd->bhqd', att, v, precision=hp)
    y = y.transpose(0, 2, 1, 3).reshape(B, T, C)
    return jnp.einsum('btc,cd->btd', y, w_proj, precision=hp) + b_proj


if __name__ == "__main__":
    # config: n_embd=32, n_head=4, bias=True, dropout=0.0, block_size>=T
    B, T, C, n_head = 2, 8, 32, 4

    key = jax.random.PRNGKey(0)
    kx, k1, k2, k3, k4 = jax.random.split(key, 5)

    x = jax.random.normal(kx, (B, T, C), dtype=jnp.float32)

    # nn.Linear-style init (uniform +-1/sqrt(fan_in)), weights stored as (in, out).
    bound = 1.0 / math.sqrt(C)
    w_attn = jax.random.uniform(k1, (C, 3 * C), jnp.float32, -bound, bound)
    b_attn = jax.random.uniform(k2, (3 * C,), jnp.float32, -bound, bound)
    w_proj = jax.random.uniform(k3, (C, C), jnp.float32, -bound, bound)
    b_proj = jax.random.uniform(k4, (C,), jnp.float32, -bound, bound)

    out = causal_self_attention(x, w_attn, b_attn, w_proj, b_proj, n_head)
    out = jax.block_until_ready(out)

    ref = reference(x, w_attn, b_attn, w_proj, b_proj, n_head)
    ref = jax.block_until_ready(ref)

    assert out.shape == (B, T, C)
    # Exact softmax divide + HIGHEST-precision matmuls on both sides: the only
    # residual differences are f32 summation-order effects (~1e-6); 2e-3 leaves
    # ample margin while still catching any real logic bug.
    err = float(jnp.max(jnp.abs(out - ref)))
    assert err < 2e-3, f"mismatch vs. pure-JAX reference: max abs err = {err:.3e}"

    print("KERNEL_OK")
</pallas_src>

<mosaic_0001>
module attributes {stable_mosaic.version = 11 : i64} {
  func.func @kernel(%arg0: i32, %arg1: i32, %arg2: memref<1x8x32xf32, #tpu.memory_space<vmem>>, %arg3: memref<32x32xf32, #tpu.memory_space<vmem>>, %arg4: memref<1x32xf32, #tpu.memory_space<vmem>>, %arg5: memref<32x32xf32, #tpu.memory_space<vmem>>, %arg6: memref<1x32xf32, #tpu.memory_space<vmem>>, %arg7: memref<32x32xf32, #tpu.memory_space<vmem>>, %arg8: memref<1x32xf32, #tpu.memory_space<vmem>>, %arg9: memref<32x32xf32, #tpu.memory_space<vmem>>, %arg10: memref<1x32xf32, #tpu.memory_space<vmem>>, %arg11: memref<1x8x32xf32, #tpu.memory_space<vmem>>, %arg12: memref<1x4x8x8xf32, #tpu.memory_space<vmem>>, %arg13: memref<1x4x8x8xf32, #tpu.memory_space<vmem>>) attributes {dimension_semantics = [#tpu.dimension_semantics<parallel>, #tpu.dimension_semantics<arbitrary>], iteration_bounds = array<i64: 2, 1>, scalar_prefetch = 0 : i64, scratch_operands = 2 : i64, tpu.core_type = #tpu.core_type<tc>, window_params = [{transform_indices = @transform_0, window_bounds = array<i64: 1, 8, 32>}, {pipeline_mode = #tpu.pipeline_mode<synchronous>, transform_indices = @transform_1, window_bounds = array<i64: 32, 32>}, {pipeline_mode = #tpu.pipeline_mode<synchronous>, transform_indices = @transform_2, window_bounds = array<i64: 1, 32>}, {pipeline_mode = #tpu.pipeline_mode<synchronous>, transform_indices = @transform_3, window_bounds = array<i64: 32, 32>}, {pipeline_mode = #tpu.pipeline_mode<synchronous>, transform_indices = @transform_4, window_bounds = array<i64: 1, 32>}, {pipeline_mode = #tpu.pipeline_mode<synchronous>, transform_indices = @transform_5, window_bounds = array<i64: 32, 32>}, {pipeline_mode = #tpu.pipeline_mode<synchronous>, transform_indices = @transform_6, window_bounds = array<i64: 1, 32>}, {pipeline_mode = #tpu.pipeline_mode<synchronous>, transform_indices = @transform_7, window_bounds = array<i64: 32, 32>}, {pipeline_mode = #tpu.pipeline_mode<synchronous>, transform_indices = @transform_8, window_bounds = array<i64: 1, 32>}, {transform_indices = @transform_9, window_bounds = array<i64: 1, 8, 32>}]} {
    %c0_i32 = arith.constant 0 : i32
    %0 = arith.cmpi eq, %arg1, %c0_i32 : i32
    %1 = arith.extui %0 : i1 to i32
    %c0_i32_0 = arith.constant 0 : i32
    %2 = arith.cmpi ne, %1, %c0_i32_0 : i32
    scf.if %2 {
      %c0_19 = arith.constant 0 : index
      %c0_20 = arith.constant 0 : index
      %c0_21 = arith.constant 0 : index
      %34 = vector.load %arg2[%c0_19, %c0_20, %c0_21] : memref<1x8x32xf32, #tpu.memory_space<vmem>>, vector<1x8x32xf32>
      %35 = vector.shape_cast %34 : vector<1x8x32xf32> to vector<8x32xf32>
      %c0_22 = arith.constant 0 : index
      %c0_23 = arith.constant 0 : index
      %36 = vector.load %arg5[%c0_22, %c0_23] : memref<32x32xf32, #tpu.memory_space<vmem>>, vector<32x32xf32>
      %cst_24 = arith.constant dense<0.000000e+00> : vector<8x32xf32>
      %37 = tpu.matmul %35, %36, %cst_24 {dimension_numbers = #tpu.dot_dimension_numbers<[1], [0], [0], [1], [0, 0, 1, 1], [], []>, precision = #tpu.contract_precision<fp32>} : vector<8x32xf32>, vector<32x32xf32>, vector<8x32xf32> -> vector<8x32xf32>
      %c0_25 = arith.constant 0 : index
      %c0_26 = arith.constant 0 : index
      %38 = vector.load %arg6[%c0_25, %c0_26] : memref<1x32xf32, #tpu.memory_space<vmem>>, vector<1x32xf32>
      %39 = vector.broadcast %38 : vector<1x32xf32> to vector<8x32xf32>
      %40 = arith.addf %37, %39 : vector<8x32xf32>
      %c0_27 = arith.constant 0 : index
      %c0_28 = arith.constant 0 : index
      %41 = vector.load %arg7[%c0_27, %c0_28] : memref<32x32xf32, #tpu.memory_space<vmem>>, vector<32x32xf32>
      %cst_29 = arith.constant dense<0.000000e+00> : vector<8x32xf32>
      %42 = tpu.matmul %35, %41, %cst_29 {dimension_numbers = #tpu.dot_dimension_numbers<[1], [0], [0], [1], [0, 0, 1, 1], [], []>, precision = #tpu.contract_precision<fp32>} : vector<8x32xf32>, vector<32x32xf32>, vector<8x32xf32> -> vector<8x32xf32>
      %c0_30 = arith.constant 0 : index
      %c0_31 = arith.constant 0 : index
      %43 = vector.load %arg8[%c0_30, %c0_31] : memref<1x32xf32, #tpu.memory_space<vmem>>, vector<1x32xf32>
      %44 = vector.broadcast %43 : vector<1x32xf32> to vector<8x32xf32>
      %45 = arith.addf %42, %44 : vector<8x32xf32>
      %46 = vector.shape_cast %40 : vector<8x32xf32> to vector<1x8x4x8xf32>
      %47 = vector.shape_cast %45 : vector<8x32xf32> to vector<1x8x4x8xf32>
      %48 = tpu.transpose %46, [0, 2, 3, 1] : vector<1x8x4x8xf32> -> vector<1x4x8x8xf32>
      %c0_32 = arith.constant 0 : index
      %c0_33 = arith.constant 0 : index
      %c0_34 = arith.constant 0 : index
      %c0_35 = arith.constant 0 : index
      %49 = vector.load %arg12[%c0_32, %c0_33, %c0_34, %c0_35] : memref<1x4x8x8xf32, #tpu.memory_space<vmem>>, vector<1x4x8x8xf32>
      tpu.vector_store %arg12[%c0_32, %c0_33, %c0_34, %c0_35], %48 {strides = array<i32>} : memref<1x4x8x8xf32, #tpu.memory_space<vmem>>, vector<1x4x8x8xf32>,
      %50 = tpu.transpose %47, [0, 2, 1, 3] : vector<1x8x4x8xf32> -> vector<1x4x8x8xf32>
      %c0_36 = arith.constant 0 : index
      %c0_37 = arith.constant 0 : index
      %c0_38 = arith.constant 0 : index
      %c0_39 = arith.constant 0 : index
      %51 = vector.load %arg13[%c0_36, %c0_37, %c0_38, %c0_39] : memref<1x4x8x8xf32, #tpu.memory_space<vmem>>, vector<1x4x8x8xf32>
      tpu.vector_store %arg13[%c0_36, %c0_37, %c0_38, %c0_39], %50 {strides = array<i32>} : memref<1x4x8x8xf32, #tpu.memory_space<vmem>>, vector<1x4x8x8xf32>,
    } else {
    }
    %c8_i32 = arith.constant 8 : i32
    %3 = arith.muli %arg1, %c8_i32 : i32
    %4 = tpu.assume_multiple %3, 8 : i32
    %c0 = arith.constant 0 : index
    %5 = arith.index_cast %4 : i32 to index
    %c0_1 = arith.constant 0 : index
    %6 = vector.load %arg2[%c0, %5, %c0_1] : memref<1x8x32xf32, #tpu.memory_space<vmem>>, vector<1x8x32xf32>
    %7 = vector.shape_cast %6 : vector<1x8x32xf32> to vector<8x32xf32>
    %c0_2 = arith.constant 0 : index
    %c0_3 = arith.constant 0 : index
    %8 = vector.load %arg3[%c0_2, %c0_3] : memref<32x32xf32, #tpu.memory_space<vmem>>, vector<32x32xf32>
    %cst = arith.constant dense<0.000000e+00> : vector<8x32xf32>
    %9 = tpu.matmul %7, %8, %cst {dimension_numbers = #tpu.dot_dimension_numbers<[1], [0], [0], [1], [0, 0, 1, 1], [], []>, precision = #tpu.contract_precision<fp32>} : vector<8x32xf32>, vector<32x32xf32>, vector<8x32xf32> -> vector<8x32xf32>
    %c0_4 = arith.constant 0 : index
    %c0_5 = arith.constant 0 : index
    %10 = vector.load %arg4[%c0_4, %c0_5] : memref<1x32xf32, #tpu.memory_space<vmem>>, vector<1x32xf32>
    %11 = vector.broadcast %10 : vector<1x32xf32> to vector<8x32xf32>
    %12 = arith.addf %9, %11 : vector<8x32xf32>
    %13 = vector.shape_cast %12 : vector<8x32xf32> to vector<8x4x8xf32>
    %14 = tpu.transpose %13, [1, 0, 2] : vector<8x4x8xf32> -> vector<4x8x8xf32>
    %cst_6 = arith.constant -1.000000e+30 : f32
    %15 = vector.broadcast %cst_6 : f32 to vector<4x8x1xf32>
    %cst_7 = arith.constant 0.000000e+00 : f32
    %16 = vector.broadcast %cst_7 : f32 to vector<4x8x1xf32>
    %cst_8 = arith.constant 0.000000e+00 : f32
    %17 = vector.broadcast %cst_8 : f32 to vector<4x8x8xf32>
    %c1_i32 = arith.constant 1 : i32
    %18 = arith.addi %arg1, %c1_i32 : i32
    %c0_i32_9 = arith.constant 0 : i32
    %19 = arith.subi %18, %c0_i32_9 : i32
    %20 = arith.addi %c0_i32_9, %19 : i32
    %c1_i32_10 = arith.constant 1 : i32
    %21:3 = scf.for %arg14 = %c0_i32_9 to %20 step %c1_i32_10 iter_args(%arg15 = %15, %arg16 = %16, %arg17 = %17) -> (vector<4x8x1xf32>, vector<4x8x1xf32>, vector<4x8x8xf32>)  : i32 {
      %34 = arith.index_cast %arg14 : i32 to index
      %c0_19 = arith.constant 0 : index
      %c0_20 = arith.constant 0 : index
      %c0_21 = arith.constant 0 : index
      %35 = vector.load %arg12[%34, %c0_19, %c0_20, %c0_21] : memref<1x4x8x8xf32, #tpu.memory_space<vmem>>, vector<1x4x8x8xf32>
      %36 = vector.shape_cast %35 : vector<1x4x8x8xf32> to vector<4x8x8xf32>
      %37 = arith.index_cast %arg14 : i32 to index
      %c0_22 = arith.constant 0 : index
      %c0_23 = arith.constant 0 : index
      %c0_24 = arith.constant 0 : index
      %38 = vector.load %arg13[%37, %c0_22, %c0_23, %c0_24] : memref<1x4x8x8xf32, #tpu.memory_space<vmem>>, vector<1x4x8x8xf32>
      %39 = vector.shape_cast %38 : vector<1x4x8x8xf32> to vector<4x8x8xf32>
      "tpu.trace_start"() <{level = 10 : i32, message = "hqd,hdk->hqk"}> : () -> ()
      %cst_25 = arith.constant dense<0.000000e+00> : vector<4x8x8xf32>
      %40 = tpu.matmul %14, %36, %cst_25 {dimension_numbers = #tpu.dot_dimension_numbers<[2], [1], [1], [2], [0, 0, 0, 1, 1, 2], [0], [0]>, precision = #tpu.contract_precision<fp32>} : vector<4x8x8xf32>, vector<4x8x8xf32>, vector<4x8x8xf32> -> vector<4x8x8xf32>
      "tpu.trace_stop"() : () -> ()
      %41 = tpu.iota {dimensions = array<i32: 0>} : vector<8x8xi32>
      %42 = vector.broadcast %4 : i32 to vector<8x8xi32>
      %43 = arith.addi %42, %41 : vector<8x8xi32>
      %c8_i32_26 = arith.constant 8 : i32
      %44 = arith.muli %arg14, %c8_i32_26 : i32
      %45 = tpu.iota {dimensions = array<i32: 1>} : vector<8x8xi32>
      %46 = vector.broadcast %44 : i32 to vector<8x8xi32>
      %47 = arith.addi %46, %45 : vector<8x8xi32>
      %48 = arith.cmpi sge, %43, %47 : vector<8x8xi32>
      %cst_27 = arith.constant 0.000000e+00 : f32
      %cst_28 = arith.constant -1.000000e+30 : f32
      %49 = vector.broadcast %cst_27 : f32 to vector<8x8xf32>
      %50 = vector.broadcast %cst_28 : f32 to vector<8x8xf32>
      %51 = arith.select %48, %49, %50 : vector<8x8xi1>, vector<8x8xf32>
      %52 = vector.shape_cast %51 : vector<8x8xf32> to vector<1x8x8xf32>
      %53 = vector.broadcast %52 : vector<1x8x8xf32> to vector<4x8x8xf32>
      %54 = arith.addf %40, %53 : vector<4x8x8xf32>
      %cst_29 = arith.constant dense<0xFF800000> : vector<4x8xf32>
      %55 = vector.multi_reduction <maximumf>, %54, %cst_29 [2] : vector<4x8x8xf32> to vector<4x8xf32>
      %56 = vector.shape_cast %55 : vector<4x8xf32> to vector<4x8x1xf32>
      %57 = arith.maximumf %arg15, %56 : vector<4x8x1xf32>
      %58 = arith.subf %arg15, %57 : vector<4x8x1xf32>
      %59 = math.exp %58 : vector<4x8x1xf32>
      %60 = vector.broadcast %57 : vector<4x8x1xf32> to vector<4x8x8xf32>
      %61 = arith.subf %54, %60 : vector<4x8x8xf32>
      %62 = math.exp %61 : vector<4x8x8xf32>
      %63 = arith.mulf %59, %arg16 : vector<4x8x1xf32>
      %cst_30 = arith.constant dense<0.000000e+00> : vector<4x8xf32>
      %64 = vector.multi_reduction <add>, %62, %cst_30 [2] : vector<4x8x8xf32> to vector<4x8xf32>
      %65 = vector.shape_cast %64 : vector<4x8xf32> to vector<4x8x1xf32>
      %66 = arith.addf %63, %65 : vector<4x8x1xf32>
      %67 = vector.broadcast %59 : vector<4x8x1xf32> to vector<4x8x8xf32>
      %68 = arith.mulf %67, %arg17 : vector<4x8x8xf32>
      "tpu.trace_start"() <{level = 10 : i32, message = "hqk,hkd->hqd"}> : () -> ()
      %cst_31 = arith.constant dense<0.000000e+00> : vector<4x8x8xf32>
      %69 = tpu.matmul %62, %39, %cst_31 {dimension_numbers = #tpu.dot_dimension_numbers<[2], [1], [1], [2], [0, 0, 0, 1, 1, 2], [0], [0]>, precision = #tpu.contract_precision<fp32>} : vector<4x8x8xf32>, vector<4x8x8xf32>, vector<4x8x8xf32> -> vector<4x8x8xf32>
      "tpu.trace_stop"() : () -> ()
      %70 = arith.addf %68, %69 : vector<4x8x8xf32>
      scf.yield %57, %66, %70 : vector<4x8x1xf32>, vector<4x8x1xf32>, vector<4x8x8xf32>
    }
    %22 = vector.broadcast %21#1 : vector<4x8x1xf32> to vector<4x8x8xf32>
    %23 = arith.divf %21#2, %22 : vector<4x8x8xf32>
    %24 = tpu.transpose %23, [1, 0, 2] : vector<4x8x8xf32> -> vector<8x4x8xf32>
    %25 = vector.shape_cast %24 : vector<8x4x8xf32> to vector<8x32xf32>
    %c0_11 = arith.constant 0 : index
    %c0_12 = arith.constant 0 : index
    %26 = vector.load %arg9[%c0_11, %c0_12] : memref<32x32xf32, #tpu.memory_space<vmem>>, vector<32x32xf32>
    %cst_13 = arith.constant dense<0.000000e+00> : vector<8x32xf32>
    %27 = tpu.matmul %25, %26, %cst_13 {dimension_numbers = #tpu.dot_dimension_numbers<[1], [0], [0], [1], [0, 0, 1, 1], [], []>, precision = #tpu.contract_precision<fp32>} : vector<8x32xf32>, vector<32x32xf32>, vector<8x32xf32> -> vector<8x32xf32>
    %c0_14 = arith.constant 0 : index
    %c0_15 = arith.constant 0 : index
    %28 = vector.load %arg10[%c0_14, %c0_15] : memref<1x32xf32, #tpu.memory_space<vmem>>, vector<1x32xf32>
    %29 = vector.broadcast %28 : vector<1x32xf32> to vector<8x32xf32>
    %30 = arith.addf %27, %29 : vector<8x32xf32>
    %c0_16 = arith.constant 0 : index
    %c0_17 = arith.constant 0 : index
    %c0_18 = arith.constant 0 : index
    %31 = vector.load %arg11[%c0_16, %c0_17, %c0_18] : memref<1x8x32xf32, #tpu.memory_space<vmem>>, vector<1x8x32xf32>
    %32 = vector.shape_cast %31 : vector<1x8x32xf32> to vector<8x32xf32>
    %33 = vector.shape_cast %30 : vector<8x32xf32> to vector<1x8x32xf32>
    tpu.vector_store %arg11[%c0_16, %c0_17, %c0_18], %33 {strides = array<i32>} : memref<1x8x32xf32, #tpu.memory_space<vmem>>, vector<1x8x32xf32>,
    return
  }
  func.func @transform_0(%arg0: i32, %arg1: i32) -> (i32, i32, i32) {
    %c0_i32 = arith.constant 0 : i32
    %c0_i32_0 = arith.constant 0 : i32
    %c0_i32_1 = arith.constant 0 : i32
    return %arg0, %c0_i32, %c0_i32_0 : i32, i32, i32
  }
  func.func @transform_1(%arg0: i32, %arg1: i32) -> (i32, i32) {
    %c0_i32 = arith.constant 0 : i32
    %c0_i32_0 = arith.constant 0 : i32
    %c0_i32_1 = arith.constant 0 : i32
    return %c0_i32, %c0_i32_0 : i32, i32
  }
  func.func @transform_2(%arg0: i32, %arg1: i32) -> (i32, i32) {
    %c0_i32 = arith.constant 0 : i32
    %c0_i32_0 = arith.constant 0 : i32
    %c0_i32_1 = arith.constant 0 : i32
    return %c0_i32, %c0_i32_0 : i32, i32
  }
  func.func @transform_3(%arg0: i32, %arg1: i32) -> (i32, i32) {
    %c0_i32 = arith.constant 0 : i32
    %c0_i32_0 = arith.constant 0 : i32
    %c0_i32_1 = arith.constant 0 : i32
    return %c0_i32, %c0_i32_0 : i32, i32
  }
  func.func @transform_4(%arg0: i32, %arg1: i32) -> (i32, i32) {
    %c0_i32 = arith.constant 0 : i32
    %c0_i32_0 = arith.constant 0 : i32
    %c0_i32_1 = arith.constant 0 : i32
    return %c0_i32, %c0_i32_0 : i32, i32
  }
  func.func @transform_5(%arg0: i32, %arg1: i32) -> (i32, i32) {
    %c0_i32 = arith.constant 0 : i32
    %c0_i32_0 = arith.constant 0 : i32
    %c0_i32_1 = arith.constant 0 : i32
    return %c0_i32, %c0_i32_0 : i32, i32
  }
  func.func @transform_6(%arg0: i32, %arg1: i32) -> (i32, i32) {
    %c0_i32 = arith.constant 0 : i32
    %c0_i32_0 = arith.constant 0 : i32
    %c0_i32_1 = arith.constant 0 : i32
    return %c0_i32, %c0_i32_0 : i32, i32
  }
  func.func @transform_7(%arg0: i32, %arg1: i32) -> (i32, i32) {
    %c0_i32 = arith.constant 0 : i32
    %c0_i32_0 = arith.constant 0 : i32
    %c0_i32_1 = arith.constant 0 : i32
    return %c0_i32, %c0_i32_0 : i32, i32
  }
  func.func @transform_8(%arg0: i32, %arg1: i32) -> (i32, i32) {
    %c0_i32 = arith.constant 0 : i32
    %c0_i32_0 = arith.constant 0 : i32
    %c0_i32_1 = arith.constant 0 : i32
    return %c0_i32, %c0_i32_0 : i32, i32
  }
  func.func @transform_9(%arg0: i32, %arg1: i32) -> (i32, i32, i32) {
    %c0_i32 = arith.constant 0 : i32
    %c0_i32_0 = arith.constant 0 : i32
    return %arg0, %arg1, %c0_i32 : i32, i32, i32
  }
}

</mosaic_0001>

<llo_original>
// kernel: tpu_custom_call.1
$region0: #{tpu_custom_call.1}
  #allocation0 [shape = 'u32[]', space=smem, size = 0x4, offset = 0x4, fixed_abs, tag = 'smem constant byte address 0x4 - core index']
  #allocation1 [shape = 'u32[144,128]{1,0:T(1,128)}', space=vmem, size = 0x12000, scoped, tag = 'internal scratch']
  #allocation2 [shape = 'f32[1,4,8,8]{3,2,1,0:T(8,128)}', space=vmem, size = 0x4000, scoped, tag = 'scratch operand']
  #allocation3 [shape = 'f32[1,4,8,8]{3,2,1,0:T(8,128)}', space=vmem, size = 0x4000, scoped, tag = 'scratch operand']
  %s0 = inlined_call_operand.hbm [shape: f32[2,8,32], index: 0, kind: input, shape index: {}]
  %s1 = inlined_call_operand.hbm [shape: f32[32,32], index: 1, kind: input, shape index: {}]
  %s2 = inlined_call_operand.hbm [shape: f32[1,32], index: 2, kind: input, shape index: {}]
  %s3 = inlined_call_operand.hbm [shape: f32[32,32], index: 3, kind: input, shape index: {}]
  %s4 = inlined_call_operand.hbm [shape: f32[1,32], index: 4, kind: input, shape index: {}]
  %s5 = inlined_call_operand.hbm [shape: f32[32,32], index: 5, kind: input, shape index: {}]
  %s6 = inlined_call_operand.hbm [shape: f32[1,32], index: 6, kind: input, shape index: {}]
  %s7 = inlined_call_operand.hbm [shape: f32[32,32], index: 7, kind: input, shape index: {}]
  %s8 = inlined_call_operand.hbm [shape: f32[1,32], index: 8, kind: input, shape index: {}]
  %s9 = inlined_call_operand.hbm [shape: f32[2,8,32], index: 9, kind: output, shape index: {}]
  %s10 = sld [smem:[#allocation0]]
  $region116: #{tpu_custom_call.1} parent=0
    _
  %s12 = ssub.s32 1, %s10
  %s13 = scalar_select 0, %s12, %s10
  $region1: #{tpu_custom_call.1} parent=0
    #allocation4 [shape = 'u8[8192]{0}', space=vmem, size = 0x2000, scoped, tag = 'input window, operand 0']
    #allocation5 [shape = 's32[2]{0}', space=sflag, size = 0x8, scoped, tag = 'scoped memory for tpu_custom_call.1']
    #allocation6 [shape = 's32[2]{0}', space=sflag, size = 0x8, scoped, tag = 'scoped memory for tpu_custom_call.1']
    #allocation7 [shape = 'u8[16384]{0}', space=vmem, size = 0x4000, scoped, tag = 'input window, operand 1, single buffered']
    #allocation8 [shape = 's32[1]{0}', space=sflag, size = 0x4, scoped, tag = 'scoped memory for tpu_custom_call.1']
    #allocation9 [shape = 'u8[512]{0}', space=vmem, size = 0x400, scoped, tag = 'input window, operand 2, single buffered']
    #allocation10 [shape = 'u8[16384]{0}', space=vmem, size = 0x4000, scoped, tag = 'input window, operand 3, single buffered']
    #allocation11 [shape = 's32[1]{0}', space=sflag, size = 0x4, scoped, tag = 'scoped memory for tpu_custom_call.1']
    #allocation12 [shape = 'u8[512]{0}', space=vmem, size = 0x400, scoped, tag = 'input window, operand 4, single buffered']
    #allocation13 [shape = 'u8[16384]{0}', space=vmem, size = 0x4000, scoped, tag = 'input window, operand 5, single buffered']
    #allocation14 [shape = 's32[1]{0}', space=sflag, size = 0x4, scoped, tag = 'scoped memory for tpu_custom_call.1']
    #allocation15 [shape = 'u8[512]{0}', space=vmem, size = 0x400, scoped, tag = 'input window, operand 6, single buffered']
    #allocation16 [shape = 'u8[16384]{0}', space=vmem, size = 0x4000, scoped, tag = 'input window, operand 7, single buffered']
    #allocation17 [shape = 's32[1]{0}', space=sflag, size = 0x4, scoped, tag = 'scoped memory for tpu_custom_call.1']
    #allocation18 [shape = 'u8[512]{0}', space=vmem, size = 0x400, scoped, tag = 'input window, operand 8, single buffered']
    #allocation19 [shape = 'u8[8192]{0}', space=vmem, size = 0x2000, scoped, tag = 'output window, operand 0']
    %14 = vsyncpa [#allocation5], 0
    %s15 = scalar_lea.sflag [#allocation5], 1
    %16 = vsyncpa %s15, 0
    %17 = vsyncpa [#allocation8], 0
    %18 = vsyncpa [#allocation11], 0
    %19 = vsyncpa [#allocation14], 0
    %20 = vsyncpa [#allocation17], 0
    %21 = vsyncpa [#allocation6], 0
    %s22 = scalar_lea.sflag [#allocation6], 1
    %23 = vsyncpa %s22, 0
    loop: start=0, step=1, limit=4
    $region2: #{tpu_custom_call.1} parent=1 // loop_pre_header
      _
    $region3: #{tpu_custom_call.1} parent=1 // loop_header
      %s25 = sphi 0, %s29
      %p26 = scmp.ge.s32.totalorder %s25, 4
      %s32 = sphi 0, %s44
      %s33 = sphi 0, %s40
      %s34 = sphi 0, %s32
      %s35 = sphi 0, %s33
      %s36 = sphi 0, %s34
      %s37 = sphi 0, %s35
      %s47 = sphi 0, %s49
      %s50 = sphi 0, %s47
      %s51 = sphi 0, %s50
      %s67 = sphi 0, %s51
      %s71 = sphi 0, %s71
      %s73 = sphi 0, %s71
      %s74 = sphi 0, %s73
      %s88 = sphi 0, %s74
      %s92 = sphi 0, %s92
      %s94 = sphi 0, %s92
      %s95 = sphi 0, %s94
      %s109 = sphi 0, %s95
      %s113 = sphi 0, %s113
      %s115 = sphi 0, %s113
      %s116 = sphi 0, %s115
      %s130 = sphi 0, %s116
      %s134 = sphi 0, %s134
      %s136 = sphi 0, %s134
      %s137 = sphi 0, %s136
      %s151 = sphi 0, %s137
      %s155 = sphi 0, %s155
      %s157 = sphi 0, %s155
      %s158 = sphi 0, %s157
      %s172 = sphi 0, %s158
      %s176 = sphi 0, %s176
      %s178 = sphi 0, %s176
      %s179 = sphi 0, %s178
      %s193 = sphi 0, %s179
      %s197 = sphi 0, %s197
      %s199 = sphi 0, %s197
      %s200 = sphi 0, %s199
      %s214 = sphi 0, %s200
      %s218 = sphi 0, %s218
      %s220 = sphi 0, %s218
      %s221 = sphi 0, %s220
      %s235 = sphi 0, %s221
      %s243 = sphi 0, %s245
      %s246 = sphi 0, %s243
      %s247 = sphi 0, %s246
      %s263 = sphi 0, %s247
    $region4: #{tpu_custom_call.1} parent=1 // loop_header_branch
      %28 = sbr.rel (%p26) target = $region8
    $region5: #{tpu_custom_call.1} parent=1 // loop_body
      %s30 = ssub.s32 %s25, 1
      %s31 = ssub.s32 %s25, 2
      %s38 = sadd.s32 1, %s33
      %p39 = scmp.ge.s32.totalorder %s38, 1
      %s40 = scalar_select %p39, 0, %s38
      %s41 = sadd.s32 1, %s32
      %s42 = scalar_select %p39, %s41, %s32
      %p43 = scmp.ge.s32.totalorder %s42, 2
      %s44 = scalar_select %p43, 0, %s42
      %s45 = ssub.s32 %s32, %s44
      %p46 = scmp.eq.s32.totalorder %s45, 0
      %s48 = sadd.s32 %s47, 1
      %s49 = scalar_select %p46, %s47, %s48
      %p52 = pneg %p46
      %p53 = scmp.eq.s32.totalorder %s25, 1
      %p54 = por %p52, %p53
      %p55 = scmp.ne.s32.totalorder %s47, %s50
      %p56 = scmp.eq.s32.totalorder %s25, 0
      %p57 = por %p55, %p56
      %p58 = scmp.ne.s32.totalorder %s47, %s50
      %p59 = scmp.eq.s32.totalorder %s30, 1
      %p60 = por %p58, %p59
      %p61 = scmp.ne.s32.totalorder %s50, %s51
      %p62 = scmp.eq.s32.totalorder %s30, 0
      %p63 = por %p61, %p62
      %p64 = scmp.ne.s32.totalorder %s50, %s51
      %p65 = scmp.eq.s32.totalorder %s31, 1
      %p66 = por %p64, %p65
      %p68 = scmp.ne.s32.totalorder %s51, %s67
      %p69 = scmp.eq.s32.totalorder %s31, 0
      %p70 = por %p68, %p69
      %s72 = sadd.s32 %s71, 1
      %p75 = scmp.eq.s32.totalorder %s25, 1
      %p76 = scmp.ne.s32.totalorder %s71, %s73
      %p77 = scmp.eq.s32.totalorder %s25, 0
      %p78 = por %p76, %p77
      %p79 = scmp.ne.s32.totalorder %s71, %s73
      %p80 = scmp.eq.s32.totalorder %s30, 1
      %p81 = por %p79, %p80
      %p82 = scmp.ne.s32.totalorder %s73, %s74
      %p83 = scmp.eq.s32.totalorder %s30, 0
      %p84 = por %p82, %p83
      %p85 = scmp.ne.s32.totalorder %s73, %s74
      %p86 = scmp.eq.s32.totalorder %s31, 1
      %p87 = por %p85, %p86
      %p89 = scmp.ne.s32.totalorder %s74, %s88
      %p90 = scmp.eq.s32.totalorder %s31, 0
      %p91 = por %p89, %p90
      %s93 = sadd.s32 %s92, 1
      %p96 = scmp.eq.s32.totalorder %s25, 1
      %p97 = scmp.ne.s32.totalorder %s92, %s94
      %p98 = scmp.eq.s32.totalorder %s25, 0
      %p99 = por %p97, %p98
      %p100 = scmp.ne.s32.totalorder %s92, %s94
      %p101 = scmp.eq.s32.totalorder %s30, 1
      %p102 = por %p100, %p101
      %p103 = scmp.ne.s32.totalorder %s94, %s95
      %p104 = scmp.eq.s32.totalorder %s30, 0
      %p105 = por %p103, %p104
      %p106 = scmp.ne.s32.totalorder %s94, %s95
      %p107 = scmp.eq.s32.totalorder %s31, 1
      %p108 = por %p106, %p107
      %p110 = scmp.ne.s32.totalorder %s95, %s109
      %p111 = scmp.eq.s32.totalorder %s31, 0
      %p112 = por %p110, %p111
      %s114 = sadd.s32 %s113, 1
      %p117 = scmp.eq.s32.totalorder %s25, 1
      %p118 = scmp.ne.s32.totalorder %s113, %s115
      %p119 = scmp.eq.s32.totalorder %s25, 0
      %p120 = por %p118, %p119
      %p121 = scmp.ne.s32.totalorder %s113, %s115
      %p122 = scmp.eq.s32.totalorder %s30, 1
      %p123 = por %p121, %p122
      %p124 = scmp.ne.s32.totalorder %s115, %s116
      %p125 = scmp.eq.s32.totalorder %s30, 0
      %p126 = por %p124, %p125
      %p127 = scmp.ne.s32.totalorder %s115, %s116
      %p128 = scmp.eq.s32.totalorder %s31, 1
      %p129 = por %p127, %p128
      %p131 = scmp.ne.s32.totalorder %s116, %s130
      %p132 = scmp.eq.s32.totalorder %s31, 0
      %p133 = por %p131, %p132
      %s135 = sadd.s32 %s134, 1
      %p138 = scmp.eq.s32.totalorder %s25, 1
      %p139 = scmp.ne.s32.totalorder %s134, %s136
      %p140 = scmp.eq.s32.totalorder %s25, 0
      %p141 = por %p139, %p140
      %p142 = scmp.ne.s32.totalorder %s134, %s136
      %p143 = scmp.eq.s32.totalorder %s30, 1
      %p144 = por %p142, %p143
      %p145 = scmp.ne.s32.totalorder %s136, %s137
      %p146 = scmp.eq.s32.totalorder %s30, 0
      %p147 = por %p145, %p146
      %p148 = scmp.ne.s32.totalorder %s136, %s137
      %p149 = scmp.eq.s32.totalorder %s31, 1
      %p150 = por %p148, %p149
      %p152 = scmp.ne.s32.totalorder %s137, %s151
      %p153 = scmp.eq.s32.totalorder %s31, 0
      %p154 = por %p152, %p153
      %s156 = sadd.s32 %s155, 1
      %p159 = scmp.eq.s32.totalorder %s25, 1
      %p160 = scmp.ne.s32.totalorder %s155, %s157
      %p161 = scmp.eq.s32.totalorder %s25, 0
      %p162 = por %p160, %p161
      %p163 = scmp.ne.s32.totalorder %s155, %s157
      %p164 = scmp.eq.s32.totalorder %s30, 1
      %p165 = por %p163, %p164
      %p166 = scmp.ne.s32.totalorder %s157, %s158
      %p167 = scmp.eq.s32.totalorder %s30, 0
      %p168 = por %p166, %p167
      %p169 = scmp.ne.s32.totalorder %s157, %s158
      %p170 = scmp.eq.s32.totalorder %s31, 1
      %p171 = por %p169, %p170
      %p173 = scmp.ne.s32.totalorder %s158, %s172
      %p174 = scmp.eq.s32.totalorder %s31, 0
      %p175 = por %p173, %p174
      %s177 = sadd.s32 %s176, 1
      %p180 = scmp.eq.s32.totalorder %s25, 1
      %p181 = scmp.ne.s32.totalorder %s176, %s178
      %p182 = scmp.eq.s32.totalorder %s25, 0
      %p183 = por %p181, %p182
      %p184 = scmp.ne.s32.totalorder %s176, %s178
      %p185 = scmp.eq.s32.totalorder %s30, 1
      %p186 = por %p184, %p185
      %p187 = scmp.ne.s32.totalorder %s178, %s179
      %p188 = scmp.eq.s32.totalorder %s30, 0
      %p189 = por %p187, %p188
      %p190 = scmp.ne.s32.totalorder %s178, %s179
      %p191 = scmp.eq.s32.totalorder %s31, 1
      %p192 = por %p190, %p191
      %p194 = scmp.ne.s32.totalorder %s179, %s193
      %p195 = scmp.eq.s32.totalorder %s31, 0
      %p196 = por %p194, %p195
      %s198 = sadd.s32 %s197, 1
      %p201 = scmp.eq.s32.totalorder %s25, 1
      %p202 = scmp.ne.s32.totalorder %s197, %s199
      %p203 = scmp.eq.s32.totalorder %s25, 0
      %p204 = por %p202, %p203
      %p205 = scmp.ne.s32.totalorder %s197, %s199
      %p206 = scmp.eq.s32.totalorder %s30, 1
      %p207 = por %p205, %p206
      %p208 = scmp.ne.s32.totalorder %s199, %s200
      %p209 = scmp.eq.s32.totalorder %s30, 0
      %p210 = por %p208, %p209
      %p211 = scmp.ne.s32.totalorder %s199, %s200
      %p212 = scmp.eq.s32.totalorder %s31, 1
      %p213 = por %p211, %p212
      %p215 = scmp.ne.s32.totalorder %s200, %s214
      %p216 = scmp.eq.s32.totalorder %s31, 0
      %p217 = por %p215, %p216
      %s219 = sadd.s32 %s218, 1
      %p222 = scmp.eq.s32.totalorder %s25, 1
      %p223 = scmp.ne.s32.totalorder %s218, %s220
      %p224 = scmp.eq.s32.totalorder %s25, 0
      %p225 = por %p223, %p224
      %p226 = scmp.ne.s32.totalorder %s218, %s220
      %p227 = scmp.eq.s32.totalorder %s30, 1
      %p228 = por %p226, %p227
      %p229 = scmp.ne.s32.totalorder %s220, %s221
      %p230 = scmp.eq.s32.totalorder %s30, 0
      %p231 = por %p229, %p230
      %p232 = scmp.ne.s32.totalorder %s220, %s221
      %p233 = scmp.eq.s32.totalorder %s31, 1
      %p234 = por %p232, %p233
      %p236 = scmp.ne.s32.totalorder %s221, %s235
      %p237 = scmp.eq.s32.totalorder %s31, 0
      %p238 = por %p236, %p237
      %s239 = ssub.s32 %s32, %s44
      %s240 = ssub.s32 %s33, %s40
      %s241 = sor.u32 %s239, %s240
      %p242 = scmp.eq.s32.totalorder %s241, 0
      %s244 = sadd.s32 %s243, 1
      %s245 = scalar_select %p242, %s243, %s244
      %p248 = pneg %p242
      %p249 = scmp.eq.s32.totalorder %s25, 1
      %p250 = por %p248, %p249
      %p251 = scmp.ne.s32.totalorder %s243, %s246
      %p252 = scmp.eq.s32.totalorder %s25, 0
      %p253 = por %p251, %p252
      %p254 = scmp.ne.s32.totalorder %s243, %s246
      %p255 = scmp.eq.s32.totalorder %s30, 1
      %p256 = por %p254, %p255
      %p257 = scmp.ne.s32.totalorder %s246, %s247
      %p258 = scmp.eq.s32.totalorder %s30, 0
      %p259 = por %p257, %p258
      %p260 = scmp.ne.s32.totalorder %s246, %s247
      %p261 = scmp.eq.s32.totalorder %s31, 1
      %p262 = por %p260, %p261
      %p264 = scmp.ne.s32.totalorder %s247, %s263
      %p265 = scmp.eq.s32.totalorder %s31, 0
      %p266 = por %p264, %p265
      %p267 = scmp.le.s32.totalorder 1, %s25
      %p268 = scmp.lt.s32.totalorder %s25, 3
      %p269 = pnand %p267, %p268
      %p270 = pneg %p269
      // Predicated region
      $region9: #{tpu_custom_call.1} parent=5 // pred_check
        _
      $region10: #{tpu_custom_call.1} parent=5 // pred_check_branch
        %272 = sbr.rel (%p269) target = $region12
      $region11: #{tpu_custom_call.1} parent=5 // pred_region
        %s273 = ssub.s32 %s25, 1
        // Predicated region
        $region13: #{tpu_custom_call.1} parent=11 // pred_check
          %p274 = pneg %p84
        $region14: #{tpu_custom_call.1} parent=11 // pred_check_branch
          %276 = sbr.rel (%p274) target = $region16
        $region15: #{tpu_custom_call.1} parent=11 // pred_region
          %s278 = ssub.s32 512, 512
          %279 = vsyncadd [#allocation8], %s278
          %s280 = sshll.u32 [#allocation7], 4
          %s281 = int_to_ptr.vmem [resolvable:$true] %s280
          %286 = dma.hbm_to_vmem [thread:$0]  %s1, 512, %s281, [#allocation8], 128, 128, 8
        $region16: #{tpu_custom_call.1} parent=11 // pred_fallthru
          _
        // Predicated region
        $region17: #{tpu_custom_call.1} parent=11 // pred_check
          %p287 = pneg %p105
        $region18: #{tpu_custom_call.1} parent=11 // pred_check_branch
          %289 = sbr.rel (%p287) target = $region20
        $region19: #{tpu_custom_call.1} parent=11 // pred_region
          %s291 = ssub.s32 16, 16
          %292 = vsyncadd [#allocation8], %s291
          %s294 = sshll.u32 [#allocation9], 4
          %s295 = int_to_ptr.vmem [resolvable:$true] %s294
          %297 = dma.hbm_to_vmem [thread:$0]  %s2, 16, %s295, [#allocation8]
        $region20: #{tpu_custom_call.1} parent=11 // pred_fallthru
          _
        // Predicated region
        $region21: #{tpu_custom_call.1} parent=11 // pred_check
          %p298 = pneg %p126
        $region22: #{tpu_custom_call.1} parent=11 // pred_check_branch
          %300 = sbr.rel (%p298) target = $region24
        $region23: #{tpu_custom_call.1} parent=11 // pred_region
          %s302 = ssub.s32 512, 512
          %303 = vsyncadd [#allocation11], %s302
          %s304 = sshll.u32 [#allocation10], 4
          %s305 = int_to_ptr.vmem [resolvable:$true] %s304
          %310 = dma.hbm_to_vmem [thread:$0]  %s3, 512, %s305, [#allocation11], 128, 128, 8
        $region24: #{tpu_custom_call.1} parent=11 // pred_fallthru
          _
        // Predicated region
        $region25: #{tpu_custom_call.1} parent=11 // pred_check
          %p311 = pneg %p147
        $region26: #{tpu_custom_call.1} parent=11 // pred_check_branch
          %313 = sbr.rel (%p311) target = $region28
        $region27: #{tpu_custom_call.1} parent=11 // pred_region
          %s315 = ssub.s32 16, 16
          %316 = vsyncadd [#allocation11], %s315
          %s318 = sshll.u32 [#allocation12], 4
          %s319 = int_to_ptr.vmem [resolvable:$true] %s318
          %321 = dma.hbm_to_vmem [thread:$0]  %s4, 16, %s319, [#allocation11]
        $region28: #{tpu_custom_call.1} parent=11 // pred_fallthru
          _
        // Predicated region
        $region29: #{tpu_custom_call.1} parent=11 // pred_check
          %p322 = pneg %p168
        $region30: #{tpu_custom_call.1} parent=11 // pred_check_branch
          %324 = sbr.rel (%p322) target = $region32
        $region31: #{tpu_custom_call.1} parent=11 // pred_region
          %s326 = ssub.s32 512, 512
          %327 = vsyncadd [#allocation14], %s326
          %s328 = sshll.u32 [#allocation13], 4
          %s329 = int_to_ptr.vmem [resolvable:$true] %s328
          %334 = dma.hbm_to_vmem [thread:$0]  %s5, 512, %s329, [#allocation14], 128, 128, 8
        $region32: #{tpu_custom_call.1} parent=11 // pred_fallthru
          _
        // Predicated region
        $region33: #{tpu_custom_call.1} parent=11 // pred_check
          %p335 = pneg %p189
        $region34: #{tpu_custom_call.1} parent=11 // pred_check_branch
          %337 = sbr.rel (%p335) target = $region36
        $region35: #{tpu_custom_call.1} parent=11 // pred_region
          %s339 = ssub.s32 16, 16
          %340 = vsyncadd [#allocation14], %s339
          %s342 = sshll.u32 [#allocation15], 4
          %s343 = int_to_ptr.vmem [resolvable:$true] %s342
          %345 = dma.hbm_to_vmem [thread:$0]  %s6, 16, %s343, [#allocation14]
        $region36: #{tpu_custom_call.1} parent=11 // pred_fallthru
          _
        // Predicated region
        $region37: #{tpu_custom_call.1} parent=11 // pred_check
          %p346 = pneg %p210
        $region38: #{tpu_custom_call.1} parent=11 // pred_check_branch
          %348 = sbr.rel (%p346) target = $region40
        $region39: #{tpu_custom_call.1} parent=11 // pred_region
          %s350 = ssub.s32 512, 512
          %351 = vsyncadd [#allocation17], %s350
          %s352 = sshll.u32 [#allocation16], 4
          %s353 = int_to_ptr.vmem [resolvable:$true] %s352
          %358 = dma.hbm_to_vmem [thread:$0]  %s7, 512, %s353, [#allocation17], 128, 128, 8
        $region40: #{tpu_custom_call.1} parent=11 // pred_fallthru
          _
        // Predicated region
        $region41: #{tpu_custom_call.1} parent=11 // pred_check
          %p359 = pneg %p231
        $region42: #{tpu_custom_call.1} parent=11 // pred_check_branch
          %361 = sbr.rel (%p359) target = $region44
        $region43: #{tpu_custom_call.1} parent=11 // pred_region
          %s363 = ssub.s32 16, 16
          %364 = vsyncadd [#allocation17], %s363
          %s366 = sshll.u32 [#allocation18], 4
          %s367 = int_to_ptr.vmem [resolvable:$true] %s366
          %369 = dma.hbm_to_vmem [thread:$0]  %s8, 16, %s367, [#allocation17]
        $region44: #{tpu_custom_call.1} parent=11 // pred_fallthru
          _
      $region12: #{tpu_custom_call.1} parent=5 // pred_fallthru
        _
      %p370 = scmp.lt.s32.totalorder %s25, 2
      // Predicated region
      $region45: #{tpu_custom_call.1} parent=5 // pred_check
        %p371 = pneg %p370
      $region46: #{tpu_custom_call.1} parent=5 // pred_check_branch
        %373 = sbr.rel (%p371) target = $region48
      $region47: #{tpu_custom_call.1} parent=5 // pred_region
        // Predicated region
        $region49: #{tpu_custom_call.1} parent=47 // pred_check
          %p374 = pneg %p57
        $region50: #{tpu_custom_call.1} parent=47 // pred_check_branch
          %376 = sbr.rel (%p374) target = $region52
        $region51: #{tpu_custom_call.1} parent=47 // pred_region
          %s377 = sand.u32 %s47, 1
          %s378 = scalar_lea.sflag [#allocation5], %s377
          %s379 = sand.u32 %s47, 1
          %s380 = smul.addr %s379, 8
          %s381 = scalar_lea.vmem [#allocation4], %s380
          %s383 = ssub.s32 128, 128
          %384 = vsyncadd %s378, %s383
          %s385 = smul.addr %s32, 128
          %s386 = scalar_lea.hbm %s0, %s385
          %s388 = sshll.u32 %s381, 4
          %s389 = int_to_ptr.vmem [resolvable:$true] %s388
          %391 = dma.hbm_to_vmem [thread:$0]  %s386, 128, %s389, %s378
        $region52: #{tpu_custom_call.1} parent=47 // pred_fallthru
          _
      $region48: #{tpu_custom_call.1} parent=5 // pred_fallthru
        _
      %p392 = scmp.le.s32.totalorder 1, %s25
      %p393 = scmp.lt.s32.totalorder %s25, 3
      %p394 = pnand %p392, %p393
      %p395 = pneg %p394
      // Predicated region
      $region53: #{tpu_custom_call.1} parent=5 // pred_check
        _
      $region54: #{tpu_custom_call.1} parent=5 // pred_check_branch
        %397 = sbr.rel (%p394) target = $region56
      $region55: #{tpu_custom_call.1} parent=5 // pred_region
        %s398 = ssub.s32 %s25, 1
        %s399 = sand.u32 %s50, 1
        %s400 = scalar_lea.sflag [#allocation5], %s399
        %s401 = sand.u32 %s50, 1
        %s402 = smul.addr %s401, 8
        %s403 = scalar_lea.vmem [#allocation4], %s402
        // Predicated region
        $region57: #{tpu_custom_call.1} parent=55 // pred_check
          %p404 = pneg %p63
        $region58: #{tpu_custom_call.1} parent=55 // pred_check_branch
          %406 = sbr.rel (%p404) target = $region60
        $region59: #{tpu_custom_call.1} parent=55 // pred_region
          %407 = dma.done %s400, 128
        $region60: #{tpu_custom_call.1} parent=55 // pred_fallthru
          _
        // Predicated region
        $region61: #{tpu_custom_call.1} parent=55 // pred_check
          %p408 = pneg %p84
        $region62: #{tpu_custom_call.1} parent=55 // pred_check_branch
          %410 = sbr.rel (%p408) target = $region64
        $region63: #{tpu_custom_call.1} parent=55 // pred_region
          %411 = dma.done [#allocation8], 512
        $region64: #{tpu_custom_call.1} parent=55 // pred_fallthru
          _
        // Predicated region
        $region65: #{tpu_custom_call.1} parent=55 // pred_check
          %p412 = pneg %p105
        $region66: #{tpu_custom_call.1} parent=55 // pred_check_branch
          %414 = sbr.rel (%p412) target = $region68
        $region67: #{tpu_custom_call.1} parent=55 // pred_region
          %415 = dma.done [#allocation8], 16
        $region68: #{tpu_custom_call.1} parent=55 // pred_fallthru
          _
        // Predicated region
        $region69: #{tpu_custom_call.1} parent=55 // pred_check
          %p416 = pneg %p126
        $region70: #{tpu_custom_call.1} parent=55 // pred_check_branch
          %418 = sbr.rel (%p416) target = $region72
        $region71: #{tpu_custom_call.1} parent=55 // pred_region
          %419 = dma.done [#allocation11], 512
        $region72: #{tpu_custom_call.1} parent=55 // pred_fallthru
          _
        // Predicated region
        $region73: #{tpu_custom_call.1} parent=55 // pred_check
          %p420 = pneg %p147
        $region74: #{tpu_custom_call.1} parent=55 // pred_check_branch
          %422 = sbr.rel (%p420) target = $region76
        $region75: #{tpu_custom_call.1} parent=55 // pred_region
          %423 = dma.done [#allocation11], 16
        $region76: #{tpu_custom_call.1} parent=55 // pred_fallthru
          _
        // Predicated region
        $region77: #{tpu_custom_call.1} parent=55 // pred_check
          %p424 = pneg %p168
        $region78: #{tpu_custom_call.1} parent=55 // pred_check_branch
          %426 = sbr.rel (%p424) target = $region80
        $region79: #{tpu_custom_call.1} parent=55 // pred_region
          %427 = dma.done [#allocation14], 512
        $region80: #{tpu_custom_call.1} parent=55 // pred_fallthru
          _
        // Predicated region
        $region81: #{tpu_custom_call.1} parent=55 // pred_check
          %p428 = pneg %p189
        $region82: #{tpu_custom_call.1} parent=55 // pred_check_branch
          %430 = sbr.rel (%p428) target = $region84
        $region83: #{tpu_custom_call.1} parent=55 // pred_region
          %431 = dma.done [#allocation14], 16
        $region84: #{tpu_custom_call.1} parent=55 // pred_fallthru
          _
        // Predicated region
        $region85: #{tpu_custom_call.1} parent=55 // pred_check
          %p432 = pneg %p210
        $region86: #{tpu_custom_call.1} parent=55 // pred_check_branch
          %434 = sbr.rel (%p432) target = $region88
        $region87: #{tpu_custom_call.1} parent=55 // pred_region
          %435 = dma.done [#allocation17], 512
        $region88: #{tpu_custom_call.1} parent=55 // pred_fallthru
          _
        // Predicated region
        $region89: #{tpu_custom_call.1} parent=55 // pred_check
          %p436 = pneg %p231
        $region90: #{tpu_custom_call.1} parent=55 // pred_check_branch
          %438 = sbr.rel (%p436) target = $region92
        $region91: #{tpu_custom_call.1} parent=55 // pred_region
          %439 = dma.done [#allocation17], 16
        $region92: #{tpu_custom_call.1} parent=55 // pred_fallthru
          _
        %s440 = sand.u32 %s50, 1
        %s441 = scalar_lea.sflag [#allocation5], %s440
        %s442 = sand.u32 %s50, 1
        %s443 = smul.addr %s442, 8
        %s444 = scalar_lea.vmem [#allocation4], %s443
        %p445 = pneg %p63
        %p446 = pneg %p60
        %p447 = pneg %p84
        %p448 = pneg %p81
        %p449 = pneg %p105
        %p450 = pneg %p102
        %p451 = pneg %p126
        %p452 = pneg %p123
        %p453 = pneg %p147
        %p454 = pneg %p144
        %p455 = pneg %p168
        %p456 = pneg %p165
        %p457 = pneg %p189
        %p458 = pneg %p186
        %p459 = pneg %p210
        %p460 = pneg %p207
        %p461 = pneg %p231
        %p462 = pneg %p228
        %p463 = pneg %p259
        %p464 = pneg %p256
        %s465 = sand.u32 %s246, 1
        %s466 = scalar_lea.sflag [#allocation6], %s465
        %s467 = sand.u32 %s246, 1
        %s468 = smul.addr %s467, 8
        %s469 = scalar_lea.vmem [#allocation19], %s468
        %p470 = scmp.eq.s32.totalorder %s35, 0
        // Predicated region
        $region93: #{tpu_custom_call.1} parent=55 // pred_check
          %p471 = pneg %p470
        $region94: #{tpu_custom_call.1} parent=55 // pred_check_branch
          %473 = sbr.rel (%p471) target = $region96
        $region95: #{tpu_custom_call.1} parent=55 // pred_region
          %v474 = vld [vmem:[%s403] sm:$0xff]
          %v475 = vld [vmem:[#allocation10] sm:$0xff]
          %v476 = vld [vmem:[#allocation10 + $0x8] sm:$0xff]
          %v477 = vld [vmem:[#allocation10 + $0x10] sm:$0xff]
          %v478 = vld [vmem:[#allocation10 + $0x18] sm:$0xff]
          %v479 = vld [vmem:[#allocation12] sm:$0x1]
          %v481 = vlaneseq
          %v482 = vshrl.u32 %v481, 7
          %v483 = vsub.s32 0, %v482
          %v484 = vrot.slane %v479, %v483
          %vm486 = vcmask 261120
          %v488 = vsel %vm486, %v474, 0
          %490 = vmatprep.subr.mxu0 0.0
          %v491 = vand.u32 %v475, 4294901760
          %492 = vmatpush1.msra.mxu0 %v491
          %493 = vmatprep.subr.mxu0 0.0
          %v494 = vand.u32 %v476, 4294901760
          %495 = vmatpush1.msra.mxu0 %v494
          %496 = vmatprep.subr.mxu0 0.0
          %v497 = vand.u32 %v477, 4294901760
          %498 = vmatpush1.msra.mxu0 %v497
          %499 = vmatprep.subr.mxu0 0.0
          %v500 = vand.u32 %v478, 4294901760
          %501 = vmatpush1.msra.mxu0 %v500
          %502 = vmatprep.subr.mxu0 0.0
          %503 = vmatpush1.msra.mxu0 0.0
          %504 = vmatprep.subr.mxu0 0.0
          %505 = vmatpush1.msra.mxu0 0.0
          %506 = vmatprep.subr.mxu0 0.0
          %507 = vmatpush1.msra.mxu0 0.0
          %508 = vmatprep.subr.mxu0 0.0
          %509 = vmatpush1.msra.mxu0 0.0
          %510 = vmatprep.subr.mxu0 0.0
          %511 = vmatpush1.msra.mxu0 0.0
          %512 = vmatprep.subr.mxu0 0.0
          %513 = vmatpush1.msra.mxu0 0.0
          %514 = vmatprep.subr.mxu0 0.0
          %515 = vmatpush1.msra.mxu0 0.0
          %516 = vmatprep.subr.mxu0 0.0
          %517 = vmatpush1.msra.mxu0 0.0
          %518 = vmatprep.subr.mxu0 0.0
          %519 = vmatpush1.msra.mxu0 0.0
          %520 = vmatprep.subr.mxu0 0.0
          %521 = vmatpush1.msra.mxu0 0.0
          %522 = vmatprep.subr.mxu0 0.0
          %523 = vmatpush1.msra.mxu0 0.0
          %524 = vmatprep.subr.mxu0 0.0
          %525 = vmatpush1.msra.mxu0 0.0
          %526 = vmatprep.subr.mxu0 0.0
          %527 = vmatpush1.msra.mxu0 0.0
          %528 = vmatprep.subr.mxu0 0.0
          %529 = vmatpush1.msra.mxu0 0.0
          %530 = vmatprep.subr.mxu0 0.0
          %531 = vmatpush1.msra.mxu0 0.0
          %532 = vmatprep.subr.mxu0 0.0
          %533 = vmatpush1.msra.mxu0 0.0
          %534 = vmatprep.subr.mxu0 0.0
          %535 = vmatpush1.msra.mxu0 0.0
          %536 = vmatprep.subr.mxu0 0.0
          %537 = vmatpush1.msra.mxu0 0.0
          %538 = vmatprep.subr.mxu0 0.0
          %539 = vmatpush1.msra.mxu0 0.0
          %540 = vmatprep.subr.mxu0 0.0
          %541 = vmatpush1.msra.mxu0 0.0
          %542 = vmatprep.subr.mxu0 0.0
          %543 = vmatpush1.msra.mxu0 0.0
          %544 = vmatprep.subr.mxu0 0.0
          %545 = vmatpush1.msra.mxu0 0.0
          %546 = vmatprep.subr.mxu0 0.0
          %547 = vmatpush1.msra.mxu0 0.0
          %548 = vmatprep.subr.mxu0 0.0
          %549 = vmatpush1.msra.mxu0 0.0
          %550 = vmatprep.subr.mxu0 0.0
          %551 = vmatpush1.msra.mxu0 0.0
          %552 = vmatprep.subr.mxu0 0.0
          %553 = vmatpush1.msra.mxu0 0.0
          %554 = vmatprep.subr.mxu0 0.0
          %555 = vmatpush1.msra.mxu0 0.0
          %556 = vmatprep.subr.mxu0 0.0
          %557 = vmatpush1.msra.mxu0 0.0
          %558 = vmatprep.mubr.f32.mxu0 0.0
          %v559 = vand.u32 %v488, 4294901760
          %v560 = vsub.f32 %v488, %v559
          %v561 = vand.u32 %v560, 4294901760
          %v562 = vsub.f32 %v560, %v561
          %v563 = vand.u32 %v562, 4294901760
          %564 = vmatmul.mubr.f32.gmra.mrb[0].mxu0 %v563
          %v565 = vpop.f32.mrb[0].mxu0
          %v566 = vadd.f32 %v484, %v565
          %v567 = vpop.f32.mrb[0].mxu0
          %568 = vdwg.mxu0
          %569 = vmatprep.subr.mxu0 0.0
          %v570 = vand.u32 %v475, 4294901760
          %v571 = vsub.f32 %v475, %v570
          %v572 = vand.u32 %v571, 4294901760
          %v573 = vsub.f32 %v571, %v572
          %v574 = vand.u32 %v573, 4294901760
          %575 = vmatpush1.msra.mxu0 %v574
          %576 = vmatprep.subr.mxu0 0.0
          %v577 = vand.u32 %v476, 4294901760
          %v578 = vsub.f32 %v476, %v577
          %v579 = vand.u32 %v578, 4294901760
          %v580 = vsub.f32 %v578, %v579
          %v581 = vand.u32 %v580, 4294901760
          %582 = vmatpush1.msra.mxu0 %v581
          %583 = vmatprep.subr.mxu0 0.0
          %v584 = vand.u32 %v477, 4294901760
          %v585 = vsub.f32 %v477, %v584
          %v586 = vand.u32 %v585, 4294901760
          %v587 = vsub.f32 %v585, %v586
          %v588 = vand.u32 %v587, 4294901760
          %589 = vmatpush1.msra.mxu0 %v588
          %590 = vmatprep.subr.mxu0 0.0
          %v591 = vand.u32 %v478, 4294901760
          %v592 = vsub.f32 %v478, %v591
          %v593 = vand.u32 %v592, 4294901760
          %v594 = vsub.f32 %v592, %v593
          %v595 = vand.u32 %v594, 4294901760
          %596 = vmatpush1.msra.mxu0 %v595
          %597 = vmatprep.subr.mxu0 0.0
          %598 = vmatpush1.msra.mxu0 0.0
          %599 = vmatprep.subr.mxu0 0.0
          %600 = vmatpush1.msra.mxu0 0.0
          %601 = vmatprep.subr.mxu0 0.0
          %602 = vmatpush1.msra.mxu0 0.0
          %603 = vmatprep.subr.mxu0 0.0
          %604 = vmatpush1.msra.mxu0 0.0
          %605 = vmatprep.subr.mxu0 0.0
          %606 = vmatpush1.msra.mxu0 0.0
          %607 = vmatprep.subr.mxu0 0.0
          %608 = vmatpush1.msra.mxu0 0.0
          %609 = vmatprep.subr.mxu0 0.0
          %610 = vmatpush1.msra.mxu0 0.0
          %611 = vmatprep.subr.mxu0 0.0
          %612 = vmatpush1.msra.mxu0 0.0
          %613 = vmatprep.subr.mxu0 0.0
          %614 = vmatpush1.msra.mxu0 0.0
          %615 = vmatprep.subr.mxu0 0.0
          %616 = vmatpush1.msra.mxu0 0.0
          %617 = vmatprep.subr.mxu0 0.0
          %618 = vmatpush1.msra.mxu0 0.0
          %619 = vmatprep.subr.mxu0 0.0
          %620 = vmatpush1.msra.mxu0 0.0
          %621 = vmatprep.subr.mxu0 0.0
          %622 = vmatpush1.msra.mxu0 0.0
          %623 = vmatprep.subr.mxu0 0.0
          %624 = vmatpush1.msra.mxu0 0.0
          %625 = vmatprep.subr.mxu0 0.0
          %626 = vmatpush1.msra.mxu0 0.0
          %627 = vmatprep.subr.mxu0 0.0
          %628 = vmatpush1.msra.mxu0 0.0
          %629 = vmatprep.subr.mxu0 0.0
          %630 = vmatpush1.msra.mxu0 0.0
          %631 = vmatprep.subr.mxu0 0.0
          %632 = vmatpush1.msra.mxu0 0.0
          %633 = vmatprep.subr.mxu0 0.0
          %634 = vmatpush1.msra.mxu0 0.0
          %635 = vmatprep.subr.mxu0 0.0
          %636 = vmatpush1.msra.mxu0 0.0
          %637 = vmatprep.subr.mxu0 0.0
          %638 = vmatpush1.msra.mxu0 0.0
          %639 = vmatprep.subr.mxu0 0.0
          %640 = vmatpush1.msra.mxu0 0.0
          %641 = vmatprep.subr.mxu0 0.0
          %642 = vmatpush1.msra.mxu0 0.0
          %643 = vmatprep.subr.mxu0 0.0
          %644 = vmatpush1.msra.mxu0 0.0
          %645 = vmatprep.subr.mxu0 0.0
          %646 = vmatpush1.msra.mxu0 0.0
          %647 = vmatprep.subr.mxu0 0.0
          %648 = vmatpush1.msra.mxu0 0.0
          %649 = vmatprep.subr.mxu0 0.0
          %650 = vmatpush1.msra.mxu0 0.0
          %651 = vmatprep.subr.mxu0 0.0
          %652 = vmatpush1.msra.mxu0 0.0
          %653 = vmatprep.mubr.f32.mxu0 0.0
          %v654 = vand.u32 %v488, 4294901760
          %655 = vmatmul.mubr.f32.gmra.mrb[0].mxu0 %v654
          %v656 = vpop.f32.mrb[0].mxu0
          %v657 = vadd.f32 %v566, %v656
          %v658 = vpop.f32.mrb[0].mxu0
          %659 = vdwg.mxu0
          %660 = vmatprep.subr.mxu0 0.0
          %v661 = vand.u32 %v475, 4294901760
          %v662 = vsub.f32 %v475, %v661
          %663 = vmatpush1.msra.mxu0 %v662
          %664 = vmatprep.subr.mxu0 0.0
          %v665 = vand.u32 %v476, 4294901760
          %v666 = vsub.f32 %v476, %v665
          %667 = vmatpush1.msra.mxu0 %v666
          %668 = vmatprep.subr.mxu0 0.0
          %v669 = vand.u32 %v477, 4294901760
          %v670 = vsub.f32 %v477, %v669
          %671 = vmatpush1.msra.mxu0 %v670
          %672 = vmatprep.subr.mxu0 0.0
          %v673 = vand.u32 %v478, 4294901760
          %v674 = vsub.f32 %v478, %v673
          %675 = vmatpush1.msra.mxu0 %v674
          %676 = vmatprep.subr.mxu0 0.0
          %677 = vmatpush1.msra.mxu0 0.0
          %678 = vmatprep.subr.mxu0 0.0
          %679 = vmatpush1.msra.mxu0 0.0
          %680 = vmatprep.subr.mxu0 0.0
          %681 = vmatpush1.msra.mxu0 0.0
          %682 = vmatprep.subr.mxu0 0.0
          %683 = vmatpush1.msra.mxu0 0.0
          %684 = vmatprep.subr.mxu0 0.0
          %685 = vmatpush1.msra.mxu0 0.0
          %686 = vmatprep.subr.mxu0 0.0
          %687 = vmatpush1.msra.mxu0 0.0
          %688 = vmatprep.subr.mxu0 0.0
          %689 = vmatpush1.msra.mxu0 0.0
          %690 = vmatprep.subr.mxu0 0.0
          %691 = vmatpush1.msra.mxu0 0.0
          %692 = vmatprep.subr.mxu0 0.0
          %693 = vmatpush1.msra.mxu0 0.0
          %694 = vmatprep.subr.mxu0 0.0
          %695 = vmatpush1.msra.mxu0 0.0
          %696 = vmatprep.subr.mxu0 0.0
          %697 = vmatpush1.msra.mxu0 0.0
          %698 = vmatprep.subr.mxu0 0.0
          %699 = vmatpush1.msra.mxu0 0.0
          %700 = vmatprep.subr.mxu0 0.0
          %701 = vmatpush1.msra.mxu0 0.0
          %702 = vmatprep.subr.mxu0 0.0
          %703 = vmatpush1.msra.mxu0 0.0
          %704 = vmatprep.subr.mxu0 0.0
          %705 = vmatpush1.msra.mxu0 0.0
          %706 = vmatprep.subr.mxu0 0.0
          %707 = vmatpush1.msra.mxu0 0.0
          %708 = vmatprep.subr.mxu0 0.0
          %709 = vmatpush1.msra.mxu0 0.0
          %710 = vmatprep.subr.mxu0 0.0
          %711 = vmatpush1.msra.mxu0 0.0
          %712 = vmatprep.subr.mxu0 0.0
          %713 = vmatpush1.msra.mxu0 0.0
          %714 = vmatprep.subr.mxu0 0.0
          %715 = vmatpush1.msra.mxu0 0.0
          %716 = vmatprep.subr.mxu0 0.0
          %717 = vmatpush1.msra.mxu0 0.0
          %718 = vmatprep.subr.mxu0 0.0
          %719 = vmatpush1.msra.mxu0 0.0
          %720 = vmatprep.subr.mxu0 0.0
          %721 = vmatpush1.msra.mxu0 0.0
          %722 = vmatprep.subr.mxu0 0.0
          %723 = vmatpush1.msra.mxu0 0.0
          %724 = vmatprep.subr.mxu0 0.0
          %725 = vmatpush1.msra.mxu0 0.0
          %726 = vmatprep.subr.mxu0 0.0
          %727 = vmatpush1.msra.mxu0 0.0
          %728 = vmatprep.subr.mxu0 0.0
          %729 = vmatpush1.msra.mxu0 0.0
          %730 = vmatprep.subr.mxu0 0.0
          %731 = vmatpush1.msra.mxu0 0.0
          %732 = vmatprep.mubr.f32.mxu0 0.0
          %v733 = vand.u32 %v488, 4294901760
          %v734 = vsub.f32 %v488, %v733
          %735 = vmatmul.mubr.f32.gmra.mrb[0].mxu0 %v734
          %v736 = vpop.f32.mrb[0].mxu0
          %v737 = vadd.f32 %v657, %v736
          %v738 = vpop.f32.mrb[0].mxu0
          %739 = vdwg.mxu0
          %740 = vmatprep.subr.mxu0 0.0
          %v741 = vand.u32 %v475, 4294901760
          %742 = vmatpush1.msra.mxu0 %v741
          %743 = vmatprep.subr.mxu0 0.0
          %v744 = vand.u32 %v476, 4294901760
          %745 = vmatpush1.msra.mxu0 %v744
          %746 = vmatprep.subr.mxu0 0.0
          %v747 = vand.u32 %v477, 4294901760
          %748 = vmatpush1.msra.mxu0 %v747
          %749 = vmatprep.subr.mxu0 0.0
          %v750 = vand.u32 %v478, 4294901760
          %751 = vmatpush1.msra.mxu0 %v750
          %752 = vmatprep.subr.mxu0 0.0
          %753 = vmatpush1.msra.mxu0 0.0
          %754 = vmatprep.subr.mxu0 0.0
          %755 = vmatpush1.msra.mxu0 0.0
          %756 = vmatprep.subr.mxu0 0.0
          %757 = vmatpush1.msra.mxu0 0.0
          %758 = vmatprep.subr.mxu0 0.0
          %759 = vmatpush1.msra.mxu0 0.0
          %760 = vmatprep.subr.mxu0 0.0
          %761 = vmatpush1.msra.mxu0 0.0
          %762 = vmatprep.subr.mxu0 0.0
          %763 = vmatpush1.msra.mxu0 0.0
          %764 = vmatprep.subr.mxu0 0.0
          %765 = vmatpush1.msra.mxu0 0.0
          %766 = vmatprep.subr.mxu0 0.0
          %767 = vmatpush1.msra.mxu0 0.0
          %768 = vmatprep.subr.mxu0 0.0
          %769 = vmatpush1.msra.mxu0 0.0
          %770 = vmatprep.subr.mxu0 0.0
          %771 = vmatpush1.msra.mxu0 0.0
          %772 = vmatprep.subr.mxu0 0.0
          %773 = vmatpush1.msra.mxu0 0.0
          %774 = vmatprep.subr.mxu0 0.0
          %775 = vmatpush1.msra.mxu0 0.0
          %776 = vmatprep.subr.mxu0 0.0
          %777 = vmatpush1.msra.mxu0 0.0
          %778 = vmatprep.subr.mxu0 0.0
          %779 = vmatpush1.msra.mxu0 0.0
          %780 = vmatprep.subr.mxu0 0.0
          %781 = vmatpush1.msra.mxu0 0.0
          %782 = vmatprep.subr.mxu0 0.0
          %783 = vmatpush1.msra.mxu0 0.0
          %784 = vmatprep.subr.mxu0 0.0
          %785 = vmatpush1.msra.mxu0 0.0
          %786 = vmatprep.subr.mxu0 0.0
          %787 = vmatpush1.msra.mxu0 0.0
          %788 = vmatprep.subr.mxu0 0.0
          %789 = vmatpush1.msra.mxu0 0.0
          %790 = vmatprep.subr.mxu0 0.0
          %791 = vmatpush1.msra.mxu0 0.0
          %792 = vmatprep.subr.mxu0 0.0
          %793 = vmatpush1.msra.mxu0 0.0
          %794 = vmatprep.subr.mxu0 0.0
          %795 = vmatpush1.msra.mxu0 0.0
          %796 = vmatprep.subr.mxu0 0.0
          %797 = vmatpush1.msra.mxu0 0.0
          %798 = vmatprep.subr.mxu0 0.0
          %799 = vmatpush1.msra.mxu0 0.0
          %800 = vmatprep.subr.mxu0 0.0
          %801 = vmatpush1.msra.mxu0 0.0
          %802 = vmatprep.subr.mxu0 0.0
          %803 = vmatpush1.msra.mxu0 0.0
          %804 = vmatprep.subr.mxu0 0.0
          %805 = vmatpush1.msra.mxu0 0.0
          %806 = vmatprep.subr.mxu0 0.0
          %807 = vmatpush1.msra.mxu0 0.0
          %808 = vmatprep.mubr.f32.mxu0 0.0
          %v809 = vand.u32 %v488, 4294901760
          %v810 = vsub.f32 %v488, %v809
          %v811 = vand.u32 %v810, 4294901760
          %812 = vmatmul.mubr.f32.gmra.mrb[0].mxu0 %v811
          %v813 = vpop.f32.mrb[0].mxu0
          %v814 = vadd.f32 %v737, %v813
          %v815 = vpop.f32.mrb[0].mxu0
          %816 = vdwg.mxu0
          %817 = vmatprep.subr.mxu0 0.0
          %v818 = vand.u32 %v475, 4294901760
          %v819 = vsub.f32 %v475, %v818
          %v820 = vand.u32 %v819, 4294901760
          %821 = vmatpush1.msra.mxu0 %v820
          %822 = vmatprep.subr.mxu0 0.0
          %v823 = vand.u32 %v476, 4294901760
          %v824 = vsub.f32 %v476, %v823
          %v825 = vand.u32 %v824, 4294901760
          %826 = vmatpush1.msra.mxu0 %v825
          %827 = vmatprep.subr.mxu0 0.0
          %v828 = vand.u32 %v477, 4294901760
          %v829 = vsub.f32 %v477, %v828
          %v830 = vand.u32 %v829, 4294901760
          %831 = vmatpush1.msra.mxu0 %v830
          %832 = vmatprep.subr.mxu0 0.0
          %v833 = vand.u32 %v478, 4294901760
          %v834 = vsub.f32 %v478, %v833
          %v835 = vand.u32 %v834, 4294901760
          %836 = vmatpush1.msra.mxu0 %v835
          %837 = vmatprep.subr.mxu0 0.0
          %838 = vmatpush1.msra.mxu0 0.0
          %839 = vmatprep.subr.mxu0 0.0
          %840 = vmatpush1.msra.mxu0 0.0
          %841 = vmatprep.subr.mxu0 0.0
          %842 = vmatpush1.msra.mxu0 0.0
          %843 = vmatprep.subr.mxu0 0.0
          %844 = vmatpush1.msra.mxu0 0.0
          %845 = vmatprep.subr.mxu0 0.0
          %846 = vmatpush1.msra.mxu0 0.0
          %847 = vmatprep.subr.mxu0 0.0
          %848 = vmatpush1.msra.mxu0 0.0
          %849 = vmatprep.subr.mxu0 0.0
          %850 = vmatpush1.msra.mxu0 0.0
          %851 = vmatprep.subr.mxu0 0.0
          %852 = vmatpush1.msra.mxu0 0.0
          %853 = vmatprep.subr.mxu0 0.0
          %854 = vmatpush1.msra.mxu0 0.0
          %855 = vmatprep.subr.mxu0 0.0
          %856 = vmatpush1.msra.mxu0 0.0
          %857 = vmatprep.subr.mxu0 0.0
          %858 = vmatpush1.msra.mxu0 0.0
          %859 = vmatprep.subr.mxu0 0.0
          %860 = vmatpush1.msra.mxu0 0.0
          %861 = vmatprep.subr.mxu0 0.0
          %862 = vmatpush1.msra.mxu0 0.0
          %863 = vmatprep.subr.mxu0 0.0
          %864 = vmatpush1.msra.mxu0 0.0
          %865 = vmatprep.subr.mxu0 0.0
          %866 = vmatpush1.msra.mxu0 0.0
          %867 = vmatprep.subr.mxu0 0.0
          %868 = vmatpush1.msra.mxu0 0.0
          %869 = vmatprep.subr.mxu0 0.0
          %870 = vmatpush1.msra.mxu0 0.0
          %871 = vmatprep.subr.mxu0 0.0
          %872 = vmatpush1.msra.mxu0 0.0
          %873 = vmatprep.subr.mxu0 0.0
          %874 = vmatpush1.msra.mxu0 0.0
          %875 = vmatprep.subr.mxu0 0.0
          %876 = vmatpush1.msra.mxu0 0.0
          %877 = vmatprep.subr.mxu0 0.0
          %878 = vmatpush1.msra.mxu0 0.0
          %879 = vmatprep.subr.mxu0 0.0
          %880 = vmatpush1.msra.mxu0 0.0
          %881 = vmatprep.subr.mxu0 0.0
          %882 = vmatpush1.msra.mxu0 0.0
          %883 = vmatprep.subr.mxu0 0.0
          %884 = vmatpush1.msra.mxu0 0.0
          %885 = vmatprep.subr.mxu0 0.0
          %886 = vmatpush1.msra.mxu0 0.0
          %887 = vmatprep.subr.mxu0 0.0
          %888 = vmatpush1.msra.mxu0 0.0
          %889 = vmatprep.subr.mxu0 0.0
          %890 = vmatpush1.msra.mxu0 0.0
          %891 = vmatprep.subr.mxu0 0.0
          %892 = vmatpush1.msra.mxu0 0.0
          %893 = vmatprep.mubr.f32.mxu0 0.0
          %v894 = vand.u32 %v488, 4294901760
          %895 = vmatmul.mubr.f32.gmra.mrb[0].mxu0 %v894
          %v896 = vpop.f32.mrb[0].mxu0
          %v897 = vadd.f32 %v814, %v896
          %v898 = vpop.f32.mrb[0].mxu0
          %899 = vdwg.mxu0
          %900 = vmatprep.subr.mxu0 0.0
          %v901 = vand.u32 %v475, 4294901760
          %902 = vmatpush1.msra.mxu0 %v901
          %903 = vmatprep.subr.mxu0 0.0
          %v904 = vand.u32 %v476, 4294901760
          %905 = vmatpush1.msra.mxu0 %v904
          %906 = vmatprep.subr.mxu0 0.0
          %v907 = vand.u32 %v477, 4294901760
          %908 = vmatpush1.msra.mxu0 %v907
          %909 = vmatprep.subr.mxu0 0.0
          %v910 = vand.u32 %v478, 4294901760
          %911 = vmatpush1.msra.mxu0 %v910
          %912 = vmatprep.subr.mxu0 0.0
          %913 = vmatpush1.msra.mxu0 0.0
          %914 = vmatprep.subr.mxu0 0.0
          %915 = vmatpush1.msra.mxu0 0.0
          %916 = vmatprep.subr.mxu0 0.0
          %917 = vmatpush1.msra.mxu0 0.0
          %918 = vmatprep.subr.mxu0 0.0
          %919 = vmatpush1.msra.mxu0 0.0
          %920 = vmatprep.subr.mxu0 0.0
          %921 = vmatpush1.msra.mxu0 0.0
          %922 = vmatprep.subr.mxu0 0.0
          %923 = vmatpush1.msra.mxu0 0.0
          %924 = vmatprep.subr.mxu0 0.0
          %925 = vmatpush1.msra.mxu0 0.0
          %926 = vmatprep.subr.mxu0 0.0
          %927 = vmatpush1.msra.mxu0 0.0
          %928 = vmatprep.subr.mxu0 0.0
          %929 = vmatpush1.msra.mxu0 0.0
          %930 = vmatprep.subr.mxu0 0.0
          %931 = vmatpush1.msra.mxu0 0.0
          %932 = vmatprep.subr.mxu0 0.0
          %933 = vmatpush1.msra.mxu0 0.0
          %934 = vmatprep.subr.mxu0 0.0
          %935 = vmatpush1.msra.mxu0 0.0
          %936 = vmatprep.subr.mxu0 0.0
          %937 = vmatpush1.msra.mxu0 0.0
          %938 = vmatprep.subr.mxu0 0.0
          %939 = vmatpush1.msra.mxu0 0.0
          %940 = vmatprep.subr.mxu0 0.0
          %941 = vmatpush1.msra.mxu0 0.0
          %942 = vmatprep.subr.mxu0 0.0
          %943 = vmatpush1.msra.mxu0 0.0
          %944 = vmatprep.subr.mxu0 0.0
          %945 = vmatpush1.msra.mxu0 0.0
          %946 = vmatprep.subr.mxu0 0.0
          %947 = vmatpush1.msra.mxu0 0.0
          %948 = vmatprep.subr.mxu0 0.0
          %949 = vmatpush1.msra.mxu0 0.0
          %950 = vmatprep.subr.mxu0 0.0
          %951 = vmatpush1.msra.mxu0 0.0
          %952 = vmatprep.subr.mxu0 0.0
          %953 = vmatpush1.msra.mxu0 0.0
          %954 = vmatprep.subr.mxu0 0.0
          %955 = vmatpush1.msra.mxu0 0.0
          %956 = vmatprep.subr.mxu0 0.0
          %957 = vmatpush1.msra.mxu0 0.0
          %958 = vmatprep.subr.mxu0 0.0
          %959 = vmatpush1.msra.mxu0 0.0
          %960 = vmatprep.subr.mxu0 0.0
          %961 = vmatpush1.msra.mxu0 0.0
          %962 = vmatprep.subr.mxu0 0.0
          %963 = vmatpush1.msra.mxu0 0.0
          %964 = vmatprep.subr.mxu0 0.0
          %965 = vmatpush1.msra.mxu0 0.0
          %966 = vmatprep.subr.mxu0 0.0
          %967 = vmatpush1.msra.mxu0 0.0
          %968 = vmatprep.mubr.f32.mxu0 0.0
          %v969 = vand.u32 %v488, 4294901760
          %970 = vmatmul.mubr.f32.gmra.mrb[0].mxu0 %v969
          %v971 = vpop.f32.mrb[0].mxu0
          %v972 = vadd.f32 %v897, %v971
          %v973 = vpop.f32.mrb[0].mxu0
          %974 = vdwg.mxu0
          %v975 = vld [vmem:[#allocation13] sm:$0xff]
          %v976 = vld [vmem:[#allocation13 + $0x8] sm:$0xff]
          %v977 = vld [vmem:[#allocation13 + $0x10] sm:$0xff]
          %v978 = vld [vmem:[#allocation13 + $0x18] sm:$0xff]
          %v979 = vld [vmem:[#allocation15] sm:$0x1]
          %v981 = vlaneseq
          %v982 = vshrl.u32 %v981, 7
          %v983 = vsub.s32 0, %v982
          %v984 = vrot.slane %v979, %v983
          %986 = vmatprep.subr.mxu0 0.0
          %v987 = vand.u32 %v975, 4294901760
          %988 = vmatpush1.msra.mxu0 %v987
          %989 = vmatprep.subr.mxu0 0.0
          %v990 = vand.u32 %v976, 4294901760
          %991 = vmatpush1.msra.mxu0 %v990
          %992 = vmatprep.subr.mxu0 0.0
          %v993 = vand.u32 %v977, 4294901760
          %994 = vmatpush1.msra.mxu0 %v993
          %995 = vmatprep.subr.mxu0 0.0
          %v996 = vand.u32 %v978, 4294901760
          %997 = vmatpush1.msra.mxu0 %v996
          %998 = vmatprep.subr.mxu0 0.0
          %999 = vmatpush1.msra.mxu0 0.0
          %1000 = vmatprep.subr.mxu0 0.0
          %1001 = vmatpush1.msra.mxu0 0.0
          %1002 = vmatprep.subr.mxu0 0.0
          %1003 = vmatpush1.msra.mxu0 0.0
          %1004 = vmatprep.subr.mxu0 0.0
          %1005 = vmatpush1.msra.mxu0 0.0
          %1006 = vmatprep.subr.mxu0 0.0
          %1007 = vmatpush1.msra.mxu0 0.0
          %1008 = vmatprep.subr.mxu0 0.0
          %1009 = vmatpush1.msra.mxu0 0.0
          %1010 = vmatprep.subr.mxu0 0.0
          %1011 = vmatpush1.msra.mxu0 0.0
          %1012 = vmatprep.subr.mxu0 0.0
          %1013 = vmatpush1.msra.mxu0 0.0
          %1014 = vmatprep.subr.mxu0 0.0
          %1015 = vmatpush1.msra.mxu0 0.0
          %1016 = vmatprep.subr.mxu0 0.0
          %1017 = vmatpush1.msra.mxu0 0.0
          %1018 = vmatprep.subr.mxu0 0.0
          %1019 = vmatpush1.msra.mxu0 0.0
          %1020 = vmatprep.subr.mxu0 0.0
          %1021 = vmatpush1.msra.mxu0 0.0
          %1022 = vmatprep.subr.mxu0 0.0
          %1023 = vmatpush1.msra.mxu0 0.0
          %1024 = vmatprep.subr.mxu0 0.0
          %1025 = vmatpush1.msra.mxu0 0.0
          %1026 = vmatprep.subr.mxu0 0.0
          %1027 = vmatpush1.msra.mxu0 0.0
          %1028 = vmatprep.subr.mxu0 0.0
          %1029 = vmatpush1.msra.mxu0 0.0
          %1030 = vmatprep.subr.mxu0 0.0
          %1031 = vmatpush1.msra.mxu0 0.0
          %1032 = vmatprep.subr.mxu0 0.0
          %1033 = vmatpush1.msra.mxu0 0.0
          %1034 = vmatprep.subr.mxu0 0.0
          %1035 = vmatpush1.msra.mxu0 0.0
          %1036 = vmatprep.subr.mxu0 0.0
          %1037 = vmatpush1.msra.mxu0 0.0
          %1038 = vmatprep.subr.mxu0 0.0
          %1039 = vmatpush1.msra.mxu0 0.0
          %1040 = vmatprep.subr.mxu0 0.0
          %1041 = vmatpush1.msra.mxu0 0.0
          %1042 = vmatprep.subr.mxu0 0.0
          %1043 = vmatpush1.msra.mxu0 0.0
          %1044 = vmatprep.subr.mxu0 0.0
          %1045 = vmatpush1.msra.mxu0 0.0
          %1046 = vmatprep.subr.mxu0 0.0
          %1047 = vmatpush1.msra.mxu0 0.0
          %1048 = vmatprep.subr.mxu0 0.0
          %1049 = vmatpush1.msra.mxu0 0.0
          %1050 = vmatprep.subr.mxu0 0.0
          %1051 = vmatpush1.msra.mxu0 0.0
          %1052 = vmatprep.subr.mxu0 0.0
          %1053 = vmatpush1.msra.mxu0 0.0
          %1054 = vmatprep.mubr.f32.mxu0 0.0
          %v1055 = vand.u32 %v488, 4294901760
          %v1056 = vsub.f32 %v488, %v1055
          %v1057 = vand.u32 %v1056, 4294901760
          %v1058 = vsub.f32 %v1056, %v1057
          %v1059 = vand.u32 %v1058, 4294901760
          %1060 = vmatmul.mubr.f32.gmra.mrb[0].mxu0 %v1059
          %v1061 = vpop.f32.mrb[0].mxu0
          %v1062 = vadd.f32 %v984, %v1061
          %v1063 = vpop.f32.mrb[0].mxu0
          %1064 = vdwg.mxu0
          %1065 = vmatprep.subr.mxu0 0.0
          %v1066 = vand.u32 %v975, 4294901760
          %v1067 = vsub.f32 %v975, %v1066
          %v1068 = vand.u32 %v1067, 4294901760
          %v1069 = vsub.f32 %v1067, %v1068
          %v1070 = vand.u32 %v1069, 4294901760
          %1071 = vmatpush1.msra.mxu0 %v1070
          %1072 = vmatprep.subr.mxu0 0.0
          %v1073 = vand.u32 %v976, 4294901760
          %v1074 = vsub.f32 %v976, %v1073
          %v1075 = vand.u32 %v1074, 4294901760
          %v1076 = vsub.f32 %v1074, %v1075
          %v1077 = vand.u32 %v1076, 4294901760
          %1078 = vmatpush1.msra.mxu0 %v1077
          %1079 = vmatprep.subr.mxu0 0.0
          %v1080 = vand.u32 %v977, 4294901760
          %v1081 = vsub.f32 %v977, %v1080
          %v1082 = vand.u32 %v1081, 4294901760
          %v1083 = vsub.f32 %v1081, %v1082
          %v1084 = vand.u32 %v1083, 4294901760
          %1085 = vmatpush1.msra.mxu0 %v1084
          %1086 = vmatprep.subr.mxu0 0.0
          %v1087 = vand.u32 %v978, 4294901760
          %v1088 = vsub.f32 %v978, %v1087
          %v1089 = vand.u32 %v1088, 4294901760
          %v1090 = vsub.f32 %v1088, %v1089
          %v1091 = vand.u32 %v1090, 4294901760
          %1092 = vmatpush1.msra.mxu0 %v1091
          %1093 = vmatprep.subr.mxu0 0.0
          %1094 = vmatpush1.msra.mxu0 0.0
          %1095 = vmatprep.subr.mxu0 0.0
          %1096 = vmatpush1.msra.mxu0 0.0
          %1097 = vmatprep.subr.mxu0 0.0
          %1098 = vmatpush1.msra.mxu0 0.0
          %1099 = vmatprep.subr.mxu0 0.0
          %1100 = vmatpush1.msra.mxu0 0.0
          %1101 = vmatprep.subr.mxu0 0.0
          %1102 = vmatpush1.msra.mxu0 0.0
          %1103 = vmatprep.subr.mxu0 0.0
          %1104 = vmatpush1.msra.mxu0 0.0
          %1105 = vmatprep.subr.mxu0 0.0
          %1106 = vmatpush1.msra.mxu0 0.0
          %1107 = vmatprep.subr.mxu0 0.0
          %1108 = vmatpush1.msra.mxu0 0.0
          %1109 = vmatprep.subr.mxu0 0.0
          %1110 = vmatpush1.msra.mxu0 0.0
          %1111 = vmatprep.subr.mxu0 0.0
          %1112 = vmatpush1.msra.mxu0 0.0
          %1113 = vmatprep.subr.mxu0 0.0
          %1114 = vmatpush1.msra.mxu0 0.0
          %1115 = vmatprep.subr.mxu0 0.0
          %1116 = vmatpush1.msra.mxu0 0.0
          %1117 = vmatprep.subr.mxu0 0.0
          %1118 = vmatpush1.msra.mxu0 0.0
          %1119 = vmatprep.subr.mxu0 0.0
          %1120 = vmatpush1.msra.mxu0 0.0
          %1121 = vmatprep.subr.mxu0 0.0
          %1122 = vmatpush1.msra.mxu0 0.0
          %1123 = vmatprep.subr.mxu0 0.0
          %1124 = vmatpush1.msra.mxu0 0.0
          %1125 = vmatprep.subr.mxu0 0.0
          %1126 = vmatpush1.msra.mxu0 0.0
          %1127 = vmatprep.subr.mxu0 0.0
          %1128 = vmatpush1.msra.mxu0 0.0
          %1129 = vmatprep.subr.mxu0 0.0
          %1130 = vmatpush1.msra.mxu0 0.0
          %1131 = vmatprep.subr.mxu0 0.0
          %1132 = vmatpush1.msra.mxu0 0.0
          %1133 = vmatprep.subr.mxu0 0.0
          %1134 = vmatpush1.msra.mxu0 0.0
          %1135 = vmatprep.subr.mxu0 0.0
          %1136 = vmatpush1.msra.mxu0 0.0
          %1137 = vmatprep.subr.mxu0 0.0
          %1138 = vmatpush1.msra.mxu0 0.0
          %1139 = vmatprep.subr.mxu0 0.0
          %1140 = vmatpush1.msra.mxu0 0.0
          %1141 = vmatprep.subr.mxu0 0.0
          %1142 = vmatpush1.msra.mxu0 0.0
          %1143 = vmatprep.subr.mxu0 0.0
          %1144 = vmatpush1.msra.mxu0 0.0
          %1145 = vmatprep.subr.mxu0 0.0
          %1146 = vmatpush1.msra.mxu0 0.0
          %1147 = vmatprep.subr.mxu0 0.0
          %1148 = vmatpush1.msra.mxu0 0.0
          %1149 = vmatprep.mubr.f32.mxu0 0.0
          %v1150 = vand.u32 %v488, 4294901760
          %1151 = vmatmul.mubr.f32.gmra.mrb[0].mxu0 %v1150
          %v1152 = vpop.f32.mrb[0].mxu0
          %v1153 = vadd.f32 %v1062, %v1152
          %v1154 = vpop.f32.mrb[0].mxu0
          %1155 = vdwg.mxu0
          %1156 = vmatprep.subr.mxu0 0.0
          %v1157 = vand.u32 %v975, 4294901760
          %v1158 = vsub.f32 %v975, %v1157
          %1159 = vmatpush1.msra.mxu0 %v1158
          %1160 = vmatprep.subr.mxu0 0.0
          %v1161 = vand.u32 %v976, 4294901760
          %v1162 = vsub.f32 %v976, %v1161
          %1163 = vmatpush1.msra.mxu0 %v1162
          %1164 = vmatprep.subr.mxu0 0.0
          %v1165 = vand.u32 %v977, 4294901760
          %v1166 = vsub.f32 %v977, %v1165
          %1167 = vmatpush1.msra.mxu0 %v1166
          %1168 = vmatprep.subr.mxu0 0.0
          %v1169 = vand.u32 %v978, 4294901760
          %v1170 = vsub.f32 %v978, %v1169
          %1171 = vmatpush1.msra.mxu0 %v1170
          %1172 = vmatprep.subr.mxu0 0.0
          %1173 = vmatpush1.msra.mxu0 0.0
          %1174 = vmatprep.subr.mxu0 0.0
          %1175 = vmatpush1.msra.mxu0 0.0
          %1176 = vmatprep.subr.mxu0 0.0
          %1177 = vmatpush1.msra.mxu0 0.0
          %1178 = vmatprep.subr.mxu0 0.0
          %1179 = vmatpush1.msra.mxu0 0.0
          %1180 = vmatprep.subr.mxu0 0.0
          %1181 = vmatpush1.msra.mxu0 0.0
          %1182 = vmatprep.subr.mxu0 0.0
          %1183 = vmatpush1.msra.mxu0 0.0
          %1184 = vmatprep.subr.mxu0 0.0
          %1185 = vmatpush1.msra.mxu0 0.0
          %1186 = vmatprep.subr.mxu0 0.0
          %1187 = vmatpush1.msra.mxu0 0.0
          %1188 = vmatprep.subr.mxu0 0.0
          %1189 = vmatpush1.msra.mxu0 0.0
          %1190 = vmatprep.subr.mxu0 0.0
          %1191 = vmatpush1.msra.mxu0 0.0
          %1192 = vmatprep.subr.mxu0 0.0
          %1193 = vmatpush1.msra.mxu0 0.0
          %1194 = vmatprep.subr.mxu0 0.0
          %1195 = vmatpush1.msra.mxu0 0.0
          %1196 = vmatprep.subr.mxu0 0.0
          %1197 = vmatpush1.msra.mxu0 0.0
          %1198 = vmatprep.subr.mxu0 0.0
          %1199 = vmatpush1.msra.mxu0 0.0
          %1200 = vmatprep.subr.mxu0 0.0
          %1201 = vmatpush1.msra.mxu0 0.0
          %1202 = vmatprep.subr.mxu0 0.0
          %1203 = vmatpush1.msra.mxu0 0.0
          %1204 = vmatprep.subr.mxu0 0.0
          %1205 = vmatpush1.msra.mxu0 0.0
          %1206 = vmatprep.subr.mxu0 0.0
          %1207 = vmatpush1.msra.mxu0 0.0
          %1208 = vmatprep.subr.mxu0 0.0
          %1209 = vmatpush1.msra.mxu0 0.0
          %1210 = vmatprep.subr.mxu0 0.0
          %1211 = vmatpush1.msra.mxu0 0.0
          %1212 = vmatprep.subr.mxu0 0.0
          %1213 = vmatpush1.msra.mxu0 0.0
          %1214 = vmatprep.subr.mxu0 0.0
          %1215 = vmatpush1.msra.mxu0 0.0
          %1216 = vmatprep.subr.mxu0 0.0
          %1217 = vmatpush1.msra.mxu0 0.0
          %1218 = vmatprep.subr.mxu0 0.0
          %1219 = vmatpush1.msra.mxu0 0.0
          %1220 = vmatprep.subr.mxu0 0.0
          %1221 = vmatpush1.msra.mxu0 0.0
          %1222 = vmatprep.subr.mxu0 0.0
          %1223 = vmatpush1.msra.mxu0 0.0
          %1224 = vmatprep.subr.mxu0 0.0
          %1225 = vmatpush1.msra.mxu0 0.0
          %1226 = vmatprep.subr.mxu0 0.0
          %1227 = vmatpush1.msra.mxu0 0.0
          %1228 = vmatprep.mubr.f32.mxu0 0.0
          %v1229 = vand.u32 %v488, 4294901760
          %v1230 = vsub.f32 %v488, %v1229
          %1231 = vmatmul.mubr.f32.gmra.mrb[0].mxu0 %v1230
          %v1232 = vpop.f32.mrb[0].mxu0
          %v1233 = vadd.f32 %v1153, %v1232
          %v1234 = vpop.f32.mrb[0].mxu0
          %1235 = vdwg.mxu0
          %1236 = vmatprep.subr.mxu0 0.0
          %v1237 = vand.u32 %v975, 4294901760
          %1238 = vmatpush1.msra.mxu0 %v1237
          %1239 = vmatprep.subr.mxu0 0.0
          %v1240 = vand.u32 %v976, 4294901760
          %1241 = vmatpush1.msra.mxu0 %v1240
          %1242 = vmatprep.subr.mxu0 0.0
          %v1243 = vand.u32 %v977, 4294901760
          %1244 = vmatpush1.msra.mxu0 %v1243
          %1245 = vmatprep.subr.mxu0 0.0
          %v1246 = vand.u32 %v978, 4294901760
          %1247 = vmatpush1.msra.mxu0 %v1246
          %1248 = vmatprep.subr.mxu0 0.0
          %1249 = vmatpush1.msra.mxu0 0.0
          %1250 = vmatprep.subr.mxu0 0.0
          %1251 = vmatpush1.msra.mxu0 0.0
          %1252 = vmatprep.subr.mxu0 0.0
          %1253 = vmatpush1.msra.mxu0 0.0
          %1254 = vmatprep.subr.mxu0 0.0
          %1255 = vmatpush1.msra.mxu0 0.0
          %1256 = vmatprep.subr.mxu0 0.0
          %1257 = vmatpush1.msra.mxu0 0.0
          %1258 = vmatprep.subr.mxu0 0.0
          %1259 = vmatpush1.msra.mxu0 0.0
          %1260 = vmatprep.subr.mxu0 0.0
          %1261 = vmatpush1.msra.mxu0 0.0
          %1262 = vmatprep.subr.mxu0 0.0
          %1263 = vmatpush1.msra.mxu0 0.0
          %1264 = vmatprep.subr.mxu0 0.0
          %1265 = vmatpush1.msra.mxu0 0.0
          %1266 = vmatprep.subr.mxu0 0.0
          %1267 = vmatpush1.msra.mxu0 0.0
          %1268 = vmatprep.subr.mxu0 0.0
          %1269 = vmatpush1.msra.mxu0 0.0
          %1270 = vmatprep.subr.mxu0 0.0
          %1271 = vmatpush1.msra.mxu0 0.0
          %1272 = vmatprep.subr.mxu0 0.0
          %1273 = vmatpush1.msra.mxu0 0.0
          %1274 = vmatprep.subr.mxu0 0.0
          %1275 = vmatpush1.msra.mxu0 0.0
          %1276 = vmatprep.subr.mxu0 0.0
          %1277 = vmatpush1.msra.mxu0 0.0
          %1278 = vmatprep.subr.mxu0 0.0
          %1279 = vmatpush1.msra.mxu0 0.0
          %1280 = vmatprep.subr.mxu0 0.0
          %1281 = vmatpush1.msra.mxu0 0.0
          %1282 = vmatprep.subr.mxu0 0.0
          %1283 = vmatpush1.msra.mxu0 0.0
          %1284 = vmatprep.subr.mxu0 0.0
          %1285 = vmatpush1.msra.mxu0 0.0
          %1286 = vmatprep.subr.mxu0 0.0
          %1287 = vmatpush1.msra.mxu0 0.0
          %1288 = vmatprep.subr.mxu0 0.0
          %1289 = vmatpush1.msra.mxu0 0.0
          %1290 = vmatprep.subr.mxu0 0.0
          %1291 = vmatpush1.msra.mxu0 0.0
          %1292 = vmatprep.subr.mxu0 0.0
          %1293 = vmatpush1.msra.mxu0 0.0
          %1294 = vmatprep.subr.mxu0 0.0
          %1295 = vmatpush1.msra.mxu0 0.0
          %1296 = vmatprep.subr.mxu0 0.0
          %1297 = vmatpush1.msra.mxu0 0.0
          %1298 = vmatprep.subr.mxu0 0.0
          %1299 = vmatpush1.msra.mxu0 0.0
          %1300 = vmatprep.subr.mxu0 0.0
          %1301 = vmatpush1.msra.mxu0 0.0
          %1302 = vmatprep.subr.mxu0 0.0
          %1303 = vmatpush1.msra.mxu0 0.0
          %1304 = vmatprep.mubr.f32.mxu0 0.0
          %v1305 = vand.u32 %v488, 4294901760
          %v1306 = vsub.f32 %v488, %v1305
          %v1307 = vand.u32 %v1306, 4294901760
          %1308 = vmatmul.mubr.f32.gmra.mrb[0].mxu0 %v1307
          %v1309 = vpop.f32.mrb[0].mxu0
          %v1310 = vadd.f32 %v1233, %v1309
          %v1311 = vpop.f32.mrb[0].mxu0
          %1312 = vdwg.mxu0
          %1313 = vmatprep.subr.mxu0 0.0
          %v1314 = vand.u32 %v975, 4294901760
          %v1315 = vsub.f32 %v975, %v1314
          %v1316 = vand.u32 %v1315, 4294901760
          %1317 = vmatpush1.msra.mxu0 %v1316
          %1318 = vmatprep.subr.mxu0 0.0
          %v1319 = vand.u32 %v976, 4294901760
          %v1320 = vsub.f32 %v976, %v1319
          %v1321 = vand.u32 %v1320, 4294901760
          %1322 = vmatpush1.msra.mxu0 %v1321
          %1323 = vmatprep.subr.mxu0 0.0
          %v1324 = vand.u32 %v977, 4294901760
          %v1325 = vsub.f32 %v977, %v1324
          %v1326 = vand.u32 %v1325, 4294901760
          %1327 = vmatpush1.msra.mxu0 %v1326
          %1328 = vmatprep.subr.mxu0 0.0
          %v1329 = vand.u32 %v978, 4294901760
          %v1330 = vsub.f32 %v978, %v1329
          %v1331 = vand.u32 %v1330, 4294901760
          %1332 = vmatpush1.msra.mxu0 %v1331
          %1333 = vmatprep.subr.mxu0 0.0
          %1334 = vmatpush1.msra.mxu0 0.0
          %1335 = vmatprep.subr.mxu0 0.0
          %1336 = vmatpush1.msra.mxu0 0.0
          %1337 = vmatprep.subr.mxu0 0.0
          %1338 = vmatpush1.msra.mxu0 0.0
          %1339 = vmatprep.subr.mxu0 0.0
          %1340 = vmatpush1.msra.mxu0 0.0
          %1341 = vmatprep.subr.mxu0 0.0
          %1342 = vmatpush1.msra.mxu0 0.0
          %1343 = vmatprep.subr.mxu0 0.0
          %1344 = vmatpush1.msra.mxu0 0.0
          %1345 = vmatprep.subr.mxu0 0.0
          %1346 = vmatpush1.msra.mxu0 0.0
          %1347 = vmatprep.subr.mxu0 0.0
          %1348 = vmatpush1.msra.mxu0 0.0
          %1349 = vmatprep.subr.mxu0 0.0
          %1350 = vmatpush1.msra.mxu0 0.0
          %1351 = vmatprep.subr.mxu0 0.0
          %1352 = vmatpush1.msra.mxu0 0.0
          %1353 = vmatprep.subr.mxu0 0.0
          %1354 = vmatpush1.msra.mxu0 0.0
          %1355 = vmatprep.subr.mxu0 0.0
          %1356 = vmatpush1.msra.mxu0 0.0
          %1357 = vmatprep.subr.mxu0 0.0
          %1358 = vmatpush1.msra.mxu0 0.0
          %1359 = vmatprep.subr.mxu0 0.0
          %1360 = vmatpush1.msra.mxu0 0.0
          %1361 = vmatprep.subr.mxu0 0.0
          %1362 = vmatpush1.msra.mxu0 0.0
          %1363 = vmatprep.subr.mxu0 0.0
          %1364 = vmatpush1.msra.mxu0 0.0
          %1365 = vmatprep.subr.mxu0 0.0
          %1366 = vmatpush1.msra.mxu0 0.0
          %1367 = vmatprep.subr.mxu0 0.0
          %1368 = vmatpush1.msra.mxu0 0.0
          %1369 = vmatprep.subr.mxu0 0.0
          %1370 = vmatpush1.msra.mxu0 0.0
          %1371 = vmatprep.subr.mxu0 0.0
          %1372 = vmatpush1.msra.mxu0 0.0
          %1373 = vmatprep.subr.mxu0 0.0
          %1374 = vmatpush1.msra.mxu0 0.0
          %1375 = vmatprep.subr.mxu0 0.0
          %1376 = vmatpush1.msra.mxu0 0.0
          %1377 = vmatprep.subr.mxu0 0.0
          %1378 = vmatpush1.msra.mxu0 0.0
          %1379 = vmatprep.subr.mxu0 0.0
          %1380 = vmatpush1.msra.mxu0 0.0
          %1381 = vmatprep.subr.mxu0 0.0
          %1382 = vmatpush1.msra.mxu0 0.0
          %1383 = vmatprep.subr.mxu0 0.0
          %1384 = vmatpush1.msra.mxu0 0.0
          %1385 = vmatprep.subr.mxu0 0.0
          %1386 = vmatpush1.msra.mxu0 0.0
          %1387 = vmatprep.subr.mxu0 0.0
          %1388 = vmatpush1.msra.mxu0 0.0
          %1389 = vmatprep.mubr.f32.mxu0 0.0
          %v1390 = vand.u32 %v488, 4294901760
          %1391 = vmatmul.mubr.f32.gmra.mrb[0].mxu0 %v1390
          %v1392 = vpop.f32.mrb[0].mxu0
          %v1393 = vadd.f32 %v1310, %v1392
          %v1394 = vpop.f32.mrb[0].mxu0
          %1395 = vdwg.mxu0
          %1396 = vmatprep.subr.mxu0 0.0
          %v1397 = vand.u32 %v975, 4294901760
          %1398 = vmatpush1.msra.mxu0 %v1397
          %1399 = vmatprep.subr.mxu0 0.0
          %v1400 = vand.u32 %v976, 4294901760
          %1401 = vmatpush1.msra.mxu0 %v1400
          %1402 = vmatprep.subr.mxu0 0.0
          %v1403 = vand.u32 %v977, 4294901760
          %1404 = vmatpush1.msra.mxu0 %v1403
          %1405 = vmatprep.subr.mxu0 0.0
          %v1406 = vand.u32 %v978, 4294901760
          %1407 = vmatpush1.msra.mxu0 %v1406
          %1408 = vmatprep.subr.mxu0 0.0
          %1409 = vmatpush1.msra.mxu0 0.0
          %1410 = vmatprep.subr.mxu0 0.0
          %1411 = vmatpush1.msra.mxu0 0.0
          %1412 = vmatprep.subr.mxu0 0.0
          %1413 = vmatpush1.msra.mxu0 0.0
          %1414 = vmatprep.subr.mxu0 0.0
          %1415 = vmatpush1.msra.mxu0 0.0
          %1416 = vmatprep.subr.mxu0 0.0
          %1417 = vmatpush1.msra.mxu0 0.0
          %1418 = vmatprep.subr.mxu0 0.0
          %1419 = vmatpush1.msra.mxu0 0.0
          %1420 = vmatprep.subr.mxu0 0.0
          %1421 = vmatpush1.msra.mxu0 0.0
          %1422 = vmatprep.subr.mxu0 0.0
          %1423 = vmatpush1.msra.mxu0 0.0
          %1424 = vmatprep.subr.mxu0 0.0
          %1425 = vmatpush1.msra.mxu0 0.0
          %1426 = vmatprep.subr.mxu0 0.0
          %1427 = vmatpush1.msra.mxu0 0.0
          %1428 = vmatprep.subr.mxu0 0.0
          %1429 = vmatpush1.msra.mxu0 0.0
          %1430 = vmatprep.subr.mxu0 0.0
          %1431 = vmatpush1.msra.mxu0 0.0
          %1432 = vmatprep.subr.mxu0 0.0
          %1433 = vmatpush1.msra.mxu0 0.0
          %1434 = vmatprep.subr.mxu0 0.0
          %1435 = vmatpush1.msra.mxu0 0.0
          %1436 = vmatprep.subr.mxu0 0.0
          %1437 = vmatpush1.msra.mxu0 0.0
          %1438 = vmatprep.subr.mxu0 0.0
          %1439 = vmatpush1.msra.mxu0 0.0
          %1440 = vmatprep.subr.mxu0 0.0
          %1441 = vmatpush1.msra.mxu0 0.0
          %1442 = vmatprep.subr.mxu0 0.0
          %1443 = vmatpush1.msra.mxu0 0.0
          %1444 = vmatprep.subr.mxu0 0.0
          %1445 = vmatpush1.msra.mxu0 0.0
          %1446 = vmatprep.subr.mxu0 0.0
          %1447 = vmatpush1.msra.mxu0 0.0
          %1448 = vmatprep.subr.mxu0 0.0
          %1449 = vmatpush1.msra.mxu0 0.0
          %1450 = vmatprep.subr.mxu0 0.0
          %1451 = vmatpush1.msra.mxu0 0.0
          %1452 = vmatprep.subr.mxu0 0.0
          %1453 = vmatpush1.msra.mxu0 0.0
          %1454 = vmatprep.subr.mxu0 0.0
          %1455 = vmatpush1.msra.mxu0 0.0
          %1456 = vmatprep.subr.mxu0 0.0
          %1457 = vmatpush1.msra.mxu0 0.0
          %1458 = vmatprep.subr.mxu0 0.0
          %1459 = vmatpush1.msra.mxu0 0.0
          %1460 = vmatprep.subr.mxu0 0.0
          %1461 = vmatpush1.msra.mxu0 0.0
          %1462 = vmatprep.subr.mxu0 0.0
          %1463 = vmatpush1.msra.mxu0 0.0
          %1464 = vmatprep.mubr.f32.mxu0 0.0
          %v1465 = vand.u32 %v488, 4294901760
          %1466 = vmatmul.mubr.f32.gmra.mrb[0].mxu0 %v1465
          %v1467 = vpop.f32.mrb[0].mxu0
          %v1468 = vadd.f32 %v1393, %v1467
          %v1469 = vpop.f32.mrb[0].mxu0
          %1470 = vdwg.mxu0
          %1472 = vrot.lane.b32.xlu0 %v972, 120
          %v1473 = vpop.permute.xlu0 %1472
          %1475 = vrot.lane.b32.xlu0 %v972, 112
          %v1476 = vpop.permute.xlu0 %1475
          %1478 = vrot.lane.b32.xlu0 %v972, 104
          %v1479 = vpop.permute.xlu0 %1478
          %v1481 = vcombine.low %v972, %v1476
          %v1482 = vcombine.high %v972, %v1476
          %v1484 = vunpack.c.l.s4 1983009808
          %v1485 = vunpack.c.0.s8 %v1484
          %v1486 = vlaneseq
          %v1487 = vshrl.u32 %v1486, 7
          %v1488 = vsub.s32 %v1485, %v1487
          %v1489 = vrot.slane %v1481, %v1488
          %v1491 = vunpack.c.l.s4 1983009808
          %v1492 = vunpack.c.0.s8 %v1491
          %v1493 = vlaneseq
          %v1494 = vshrl.u32 %v1493, 7
          %v1495 = vsub.s32 %v1492, %v1494
          %v1496 = vrot.slane %v1482, %v1495
          %v1497 = vcombine.low %v1473, %v1479
          %v1498 = vcombine.high %v1473, %v1479
          %v1500 = vunpack.c.l.s4 1983009808
          %v1501 = vunpack.c.0.s8 %v1500
          %v1502 = vlaneseq
          %v1503 = vshrl.u32 %v1502, 7
          %v1504 = vsub.s32 %v1501, %v1503
          %v1505 = vrot.slane %v1497, %v1504
          %v1507 = vunpack.c.l.s4 1983009808
          %v1508 = vunpack.c.0.s8 %v1507
          %v1509 = vlaneseq
          %v1510 = vshrl.u32 %v1509, 7
          %v1511 = vsub.s32 %v1508, %v1510
          %v1512 = vrot.slane %v1498, %v1511
          %v1513 = vcombine.low %v1489, %v1505
          %v1514 = vcombine.high %v1489, %v1505
          %v1516 = vunpack.c.l.s4 1934713408
          %v1517 = vunpack.c.0.s8 %v1516
          %v1518 = vlaneseq
          %v1519 = vshrl.u32 %v1518, 7
          %v1520 = vsub.s32 %v1517, %v1519
          %v1521 = vrot.slane %v1513, %v1520
          %v1523 = vunpack.c.l.s4 1934713408
          %v1524 = vunpack.c.0.s8 %v1523
          %v1525 = vlaneseq
          %v1526 = vshrl.u32 %v1525, 7
          %v1527 = vsub.s32 %v1524, %v1526
          %v1528 = vrot.slane %v1514, %v1527
          %v1529 = vcombine.low %v1496, %v1512
          %v1530 = vcombine.high %v1496, %v1512
          %v1532 = vunpack.c.l.s4 1934713408
          %v1533 = vunpack.c.0.s8 %v1532
          %v1534 = vlaneseq
          %v1535 = vshrl.u32 %v1534, 7
          %v1536 = vsub.s32 %v1533, %v1535
          %v1537 = vrot.slane %v1529, %v1536
          %v1539 = vunpack.c.l.s4 1934713408
          %v1540 = vunpack.c.0.s8 %v1539
          %v1541 = vlaneseq
          %v1542 = vshrl.u32 %v1541, 7
          %v1543 = vsub.s32 %v1540, %v1542
          %v1544 = vrot.slane %v1530, %v1543
          %v1545 = vcombine.high %v1521, 0.0
          %v1546 = vcombine.high %v1528, 0.0
          %v1547 = vcombine.high %v1537, 0.0
          %v1548 = vcombine.high %v1544, 0.0
          %1550 = vrot.lane.b32.xlu0 %v1468, 120
          %v1551 = vpop.permute.xlu0 %1550
          %1553 = vrot.lane.b32.xlu0 %v1468, 112
          %v1554 = vpop.permute.xlu0 %1553
          %1556 = vrot.lane.b32.xlu0 %v1468, 104
          %v1557 = vpop.permute.xlu0 %1556
          %v1559 = vcombine.low %v1468, %v1554
          %v1560 = vcombine.high %v1468, %v1554
          %v1562 = vunpack.c.l.s4 1983009808
          %v1563 = vunpack.c.0.s8 %v1562
          %v1564 = vlaneseq
          %v1565 = vshrl.u32 %v1564, 7
          %v1566 = vsub.s32 %v1563, %v1565
          %v1567 = vrot.slane %v1559, %v1566
          %v1569 = vunpack.c.l.s4 1983009808
          %v1570 = vunpack.c.0.s8 %v1569
          %v1571 = vlaneseq
          %v1572 = vshrl.u32 %v1571, 7
          %v1573 = vsub.s32 %v1570, %v1572
          %v1574 = vrot.slane %v1560, %v1573
          %v1575 = vcombine.low %v1551, %v1557
          %v1576 = vcombine.high %v1551, %v1557
          %v1578 = vunpack.c.l.s4 1983009808
          %v1579 = vunpack.c.0.s8 %v1578
          %v1580 = vlaneseq
          %v1581 = vshrl.u32 %v1580, 7
          %v1582 = vsub.s32 %v1579, %v1581
          %v1583 = vrot.slane %v1575, %v1582
          %v1585 = vunpack.c.l.s4 1983009808
          %v1586 = vunpack.c.0.s8 %v1585
          %v1587 = vlaneseq
          %v1588 = vshrl.u32 %v1587, 7
          %v1589 = vsub.s32 %v1586, %v1588
          %v1590 = vrot.slane %v1576, %v1589
          %v1591 = vcombine.low %v1567, %v1583
          %v1592 = vcombine.high %v1567, %v1583
          %v1594 = vunpack.c.l.s4 1934713408
          %v1595 = vunpack.c.0.s8 %v1594
          %v1596 = vlaneseq
          %v1597 = vshrl.u32 %v1596, 7
          %v1598 = vsub.s32 %v1595, %v1597
          %v1599 = vrot.slane %v1591, %v1598
          %v1601 = vunpack.c.l.s4 1934713408
          %v1602 = vunpack.c.0.s8 %v1601
          %v1603 = vlaneseq
          %v1604 = vshrl.u32 %v1603, 7
          %v1605 = vsub.s32 %v1602, %v1604
          %v1606 = vrot.slane %v1592, %v1605
          %v1607 = vcombine.low %v1574, %v1590
          %v1608 = vcombine.high %v1574, %v1590
          %v1610 = vunpack.c.l.s4 1934713408
          %v1611 = vunpack.c.0.s8 %v1610
          %v1612 = vlaneseq
          %v1613 = vshrl.u32 %v1612, 7
          %v1614 = vsub.s32 %v1611, %v1613
          %v1615 = vrot.slane %v1607, %v1614
          %v1617 = vunpack.c.l.s4 1934713408
          %v1618 = vunpack.c.0.s8 %v1617
          %v1619 = vlaneseq
          %v1620 = vshrl.u32 %v1619, 7
          %v1621 = vsub.s32 %v1618, %v1620
          %v1622 = vrot.slane %v1608, %v1621
          %v1623 = vcombine.high %v1599, 0.0
          %v1624 = vcombine.high %v1606, 0.0
          %v1625 = vcombine.high %v1615, 0.0
          %v1626 = vcombine.high %v1622, 0.0
          %1627 = vxpose.xlu0.b32.start [1/16] %v1521, 128
          %1628 = vxpose.xlu0.b32.cont [2/16] 0.0, 128
          %1629 = vxpose.xlu0.b32.cont [3/16] 0.0, 128
          %1630 = vxpose.xlu0.b32.cont [4/16] 0.0, 128
          %1631 = vxpose.xlu0.b32.cont [5/16] 0.0, 128
          %1632 = vxpose.xlu0.b32.cont [6/16] 0.0, 128
          %1633 = vxpose.xlu0.b32.cont [7/16] 0.0, 128
          %1634 = vxpose.xlu0.b32.cont [8/16] 0.0, 128
          %1635 = vxpose.xlu0.b32.cont [9/16] 0.0, 128
          %1636 = vxpose.xlu0.b32.cont [10/16] 0.0, 128
          %1637 = vxpose.xlu0.b32.cont [11/16] 0.0, 128
          %1638 = vxpose.xlu0.b32.cont [12/16] 0.0, 128
          %1639 = vxpose.xlu0.b32.cont [13/16] 0.0, 128
          %1640 = vxpose.xlu0.b32.cont [14/16] 0.0, 128
          %1641 = vxpose.xlu0.b32.cont [15/16] 0.0, 128
          %1642 = vxpose.xlu0.b32.end [16/16] 0.0, 128
          %v1643 = vpop.trf.xlu0
          %v1644 = vpop.trf.xlu0
          %v1645 = vpop.trf.xlu0
          %v1646 = vpop.trf.xlu0
          %v1647 = vpop.trf.xlu0
          %v1648 = vpop.trf.xlu0
          %v1649 = vpop.trf.xlu0
          %v1650 = vpop.trf.xlu0
          %v1651 = vpop.trf.xlu0
          %v1652 = vpop.trf.xlu0
          %v1653 = vpop.trf.xlu0
          %v1654 = vpop.trf.xlu0
          %v1655 = vpop.trf.xlu0
          %v1656 = vpop.trf.xlu0
          %v1657 = vpop.trf.xlu0
          %v1658 = vpop.trf.xlu0
          %1659 = vxpose.xlu0.b32.start [1/16] %v1545, 128
          %1660 = vxpose.xlu0.b32.cont [2/16] 0.0, 128
          %1661 = vxpose.xlu0.b32.cont [3/16] 0.0, 128
          %1662 = vxpose.xlu0.b32.cont [4/16] 0.0, 128
          %1663 = vxpose.xlu0.b32.cont [5/16] 0.0, 128
          %1664 = vxpose.xlu0.b32.cont [6/16] 0.0, 128
          %1665 = vxpose.xlu0.b32.cont [7/16] 0.0, 128
          %1666 = vxpose.xlu0.b32.cont [8/16] 0.0, 128
          %1667 = vxpose.xlu0.b32.cont [9/16] 0.0, 128
          %1668 = vxpose.xlu0.b32.cont [10/16] 0.0, 128
          %1669 = vxpose.xlu0.b32.cont [11/16] 0.0, 128
          %1670 = vxpose.xlu0.b32.cont [12/16] 0.0, 128
          %1671 = vxpose.xlu0.b32.cont [13/16] 0.0, 128
          %1672 = vxpose.xlu0.b32.cont [14/16] 0.0, 128
          %1673 = vxpose.xlu0.b32.cont [15/16] 0.0, 128
          %1674 = vxpose.xlu0.b32.end [16/16] 0.0, 128
          %v1675 = vpop.trf.xlu0
          %v1676 = vpop.trf.xlu0
          %v1677 = vpop.trf.xlu0
          %v1678 = vpop.trf.xlu0
          %v1679 = vpop.trf.xlu0
          %v1680 = vpop.trf.xlu0
          %v1681 = vpop.trf.xlu0
          %v1682 = vpop.trf.xlu0
          %v1683 = vpop.trf.xlu0
          %v1684 = vpop.trf.xlu0
          %v1685 = vpop.trf.xlu0
          %v1686 = vpop.trf.xlu0
          %v1687 = vpop.trf.xlu0
          %v1688 = vpop.trf.xlu0
          %v1689 = vpop.trf.xlu0
          %v1690 = vpop.trf.xlu0
          %1691 = vxpose.xlu0.b32.start [1/16] %v1528, 128
          %1692 = vxpose.xlu0.b32.cont [2/16] 0.0, 128
          %1693 = vxpose.xlu0.b32.cont [3/16] 0.0, 128
          %1694 = vxpose.xlu0.b32.cont [4/16] 0.0, 128
          %1695 = vxpose.xlu0.b32.cont [5/16] 0.0, 128
          %1696 = vxpose.xlu0.b32.cont [6/16] 0.0, 128
          %1697 = vxpose.xlu0.b32.cont [7/16] 0.0, 128
          %1698 = vxpose.xlu0.b32.cont [8/16] 0.0, 128
          %1699 = vxpose.xlu0.b32.cont [9/16] 0.0, 128
          %1700 = vxpose.xlu0.b32.cont [10/16] 0.0, 128
          %1701 = vxpose.xlu0.b32.cont [11/16] 0.0, 128
          %1702 = vxpose.xlu0.b32.cont [12/16] 0.0, 128
          %1703 = vxpose.xlu0.b32.cont [13/16] 0.0, 128
          %1704 = vxpose.xlu0.b32.cont [14/16] 0.0, 128
          %1705 = vxpose.xlu0.b32.cont [15/16] 0.0, 128
          %1706 = vxpose.xlu0.b32.end [16/16] 0.0, 128
          %v1707 = vpop.trf.xlu0
          %v1708 = vpop.trf.xlu0
          %v1709 = vpop.trf.xlu0
          %v1710 = vpop.trf.xlu0
          %v1711 = vpop.trf.xlu0
          %v1712 = vpop.trf.xlu0
          %v1713 = vpop.trf.xlu0
          %v1714 = vpop.trf.xlu0
          %v1715 = vpop.trf.xlu0
          %v1716 = vpop.trf.xlu0
          %v1717 = vpop.trf.xlu0
          %v1718 = vpop.trf.xlu0
          %v1719 = vpop.trf.xlu0
          %v1720 = vpop.trf.xlu0
          %v1721 = vpop.trf.xlu0
          %v1722 = vpop.trf.xlu0
          %1723 = vxpose.xlu0.b32.start [1/16] %v1546, 128
          %1724 = vxpose.xlu0.b32.cont [2/16] 0.0, 128
          %1725 = vxpose.xlu0.b32.cont [3/16] 0.0, 128
          %1726 = vxpose.xlu0.b32.cont [4/16] 0.0, 128
          %1727 = vxpose.xlu0.b32.cont [5/16] 0.0, 128
          %1728 = vxpose.xlu0.b32.cont [6/16] 0.0, 128
          %1729 = vxpose.xlu0.b32.cont [7/16] 0.0, 128
          %1730 = vxpose.xlu0.b32.cont [8/16] 0.0, 128
          %1731 = vxpose.xlu0.b32.cont [9/16] 0.0, 128
          %1732 = vxpose.xlu0.b32.cont [10/16] 0.0, 128
          %1733 = vxpose.xlu0.b32.cont [11/16] 0.0, 128
          %1734 = vxpose.xlu0.b32.cont [12/16] 0.0, 128
          %1735 = vxpose.xlu0.b32.cont [13/16] 0.0, 128
          %1736 = vxpose.xlu0.b32.cont [14/16] 0.0, 128
          %1737 = vxpose.xlu0.b32.cont [15/16] 0.0, 128
          %1738 = vxpose.xlu0.b32.end [16/16] 0.0, 128
          %v1739 = vpop.trf.xlu0
          %v1740 = vpop.trf.xlu0
          %v1741 = vpop.trf.xlu0
          %v1742 = vpop.trf.xlu0
          %v1743 = vpop.trf.xlu0
          %v1744 = vpop.trf.xlu0
          %v1745 = vpop.trf.xlu0
          %v1746 = vpop.trf.xlu0
          %v1747 = vpop.trf.xlu0
          %v1748 = vpop.trf.xlu0
          %v1749 = vpop.trf.xlu0
          %v1750 = vpop.trf.xlu0
          %v1751 = vpop.trf.xlu0
          %v1752 = vpop.trf.xlu0
          %v1753 = vpop.trf.xlu0
          %v1754 = vpop.trf.xlu0
          %1755 = vxpose.xlu0.b32.start [1/16] %v1537, 128
          %1756 = vxpose.xlu0.b32.cont [2/16] 0.0, 128
          %1757 = vxpose.xlu0.b32.cont [3/16] 0.0, 128
          %1758 = vxpose.xlu0.b32.cont [4/16] 0.0, 128
          %1759 = vxpose.xlu0.b32.cont [5/16] 0.0, 128
          %1760 = vxpose.xlu0.b32.cont [6/16] 0.0, 128
          %1761 = vxpose.xlu0.b32.cont [7/16] 0.0, 128
          %1762 = vxpose.xlu0.b32.cont [8/16] 0.0, 128
          %1763 = vxpose.xlu0.b32.cont [9/16] 0.0, 128
          %1764 = vxpose.xlu0.b32.cont [10/16] 0.0, 128
          %1765 = vxpose.xlu0.b32.cont [11/16] 0.0, 128
          %1766 = vxpose.xlu0.b32.cont [12/16] 0.0, 128
          %1767 = vxpose.xlu0.b32.cont [13/16] 0.0, 128
          %1768 = vxpose.xlu0.b32.cont [14/16] 0.0, 128
          %1769 = vxpose.xlu0.b32.cont [15/16] 0.0, 128
          %1770 = vxpose.xlu0.b32.end [16/16] 0.0, 128
          %v1771 = vpop.trf.xlu0
          %v1772 = vpop.trf.xlu0
          %v1773 = vpop.trf.xlu0
          %v1774 = vpop.trf.xlu0
          %v1775 = vpop.trf.xlu0
          %v1776 = vpop.trf.xlu0
          %v1777 = vpop.trf.xlu0
          %v1778 = vpop.trf.xlu0
          %v1779 = vpop.trf.xlu0
          %v1780 = vpop.trf.xlu0
          %v1781 = vpop.trf.xlu0
          %v1782 = vpop.trf.xlu0
          %v1783 = vpop.trf.xlu0
          %v1784 = vpop.trf.xlu0
          %v1785 = vpop.trf.xlu0
          %v1786 = vpop.trf.xlu0
          %1787 = vxpose.xlu0.b32.start [1/16] %v1547, 128
          %1788 = vxpose.xlu0.b32.cont [2/16] 0.0, 128
          %1789 = vxpose.xlu0.b32.cont [3/16] 0.0, 128
          %1790 = vxpose.xlu0.b32.cont [4/16] 0.0, 128
          %1791 = vxpose.xlu0.b32.cont [5/16] 0.0, 128
          %1792 = vxpose.xlu0.b32.cont [6/16] 0.0, 128
          %1793 = vxpose.xlu0.b32.cont [7/16] 0.0, 128
          %1794 = vxpose.xlu0.b32.cont [8/16] 0.0, 128
          %1795 = vxpose.xlu0.b32.cont [9/16] 0.0, 128
          %1796 = vxpose.xlu0.b32.cont [10/16] 0.0, 128
          %1797 = vxpose.xlu0.b32.cont [11/16] 0.0, 128
          %1798 = vxpose.xlu0.b32.cont [12/16] 0.0, 128
          %1799 = vxpose.xlu0.b32.cont [13/16] 0.0, 128
          %1800 = vxpose.xlu0.b32.cont [14/16] 0.0, 128
          %1801 = vxpose.xlu0.b32.cont [15/16] 0.0, 128
          %1802 = vxpose.xlu0.b32.end [16/16] 0.0, 128
          %v1803 = vpop.trf.xlu0
          %v1804 = vpop.trf.xlu0
          %v1805 = vpop.trf.xlu0
          %v1806 = vpop.trf.xlu0
          %v1807 = vpop.trf.xlu0
          %v1808 = vpop.trf.xlu0
          %v1809 = vpop.trf.xlu0
          %v1810 = vpop.trf.xlu0
          %v1811 = vpop.trf.xlu0
          %v1812 = vpop.trf.xlu0
          %v1813 = vpop.trf.xlu0
          %v1814 = vpop.trf.xlu0
          %v1815 = vpop.trf.xlu0
          %v1816 = vpop.trf.xlu0
          %v1817 = vpop.trf.xlu0
          %v1818 = vpop.trf.xlu0
          %1819 = vxpose.xlu0.b32.start [1/16] %v1544, 128
          %1820 = vxpose.xlu0.b32.cont [2/16] 0.0, 128
          %1821 = vxpose.xlu0.b32.cont [3/16] 0.0, 128
          %1822 = vxpose.xlu0.b32.cont [4/16] 0.0, 128
          %1823 = vxpose.xlu0.b32.cont [5/16] 0.0, 128
          %1824 = vxpose.xlu0.b32.cont [6/16] 0.0, 128
          %1825 = vxpose.xlu0.b32.cont [7/16] 0.0, 128
          %1826 = vxpose.xlu0.b32.cont [8/16] 0.0, 128
          %1827 = vxpose.xlu0.b32.cont [9/16] 0.0, 128
          %1828 = vxpose.xlu0.b32.cont [10/16] 0.0, 128
          %1829 = vxpose.xlu0.b32.cont [11/16] 0.0, 128
          %1830 = vxpose.xlu0.b32.cont [12/16] 0.0, 128
          %1831 = vxpose.xlu0.b32.cont [13/16] 0.0, 128
          %1832 = vxpose.xlu0.b32.cont [14/16] 0.0, 128
          %1833 = vxpose.xlu0.b32.cont [15/16] 0.0, 128
          %1834 = vxpose.xlu0.b32.end [16/16] 0.0, 128
          %v1835 = vpop.trf.xlu0
          %v1836 = vpop.trf.xlu0
          %v1837 = vpop.trf.xlu0
          %v1838 = vpop.trf.xlu0
          %v1839 = vpop.trf.xlu0
          %v1840 = vpop.trf.xlu0
          %v1841 = vpop.trf.xlu0
          %v1842 = vpop.trf.xlu0
          %v1843 = vpop.trf.xlu0
          %v1844 = vpop.trf.xlu0
          %v1845 = vpop.trf.xlu0
          %v1846 = vpop.trf.xlu0
          %v1847 = vpop.trf.xlu0
          %v1848 = vpop.trf.xlu0
          %v1849 = vpop.trf.xlu0
          %v1850 = vpop.trf.xlu0
          %1851 = vxpose.xlu0.b32.start [1/16] %v1548, 128
          %1852 = vxpose.xlu0.b32.cont [2/16] 0.0, 128
          %1853 = vxpose.xlu0.b32.cont [3/16] 0.0, 128
          %1854 = vxpose.xlu0.b32.cont [4/16] 0.0, 128
          %1855 = vxpose.xlu0.b32.cont [5/16] 0.0, 128
          %1856 = vxpose.xlu0.b32.cont [6/16] 0.0, 128
          %1857 = vxpose.xlu0.b32.cont [7/16] 0.0, 128
          %1858 = vxpose.xlu0.b32.cont [8/16] 0.0, 128
          %1859 = vxpose.xlu0.b32.cont [9/16] 0.0, 128
          %1860 = vxpose.xlu0.b32.cont [10/16] 0.0, 128
          %1861 = vxpose.xlu0.b32.cont [11/16] 0.0, 128
          %1862 = vxpose.xlu0.b32.cont [12/16] 0.0, 128
          %1863 = vxpose.xlu0.b32.cont [13/16] 0.0, 128
          %1864 = vxpose.xlu0.b32.cont [14/16] 0.0, 128
          %1865 = vxpose.xlu0.b32.cont [15/16] 0.0, 128
          %1866 = vxpose.xlu0.b32.end [16/16] 0.0, 128
          %v1867 = vpop.trf.xlu0
          %v1868 = vpop.trf.xlu0
          %v1869 = vpop.trf.xlu0
          %v1870 = vpop.trf.xlu0
          %v1871 = vpop.trf.xlu0
          %v1872 = vpop.trf.xlu0
          %v1873 = vpop.trf.xlu0
          %v1874 = vpop.trf.xlu0
          %v1875 = vpop.trf.xlu0
          %v1876 = vpop.trf.xlu0
          %v1877 = vpop.trf.xlu0
          %v1878 = vpop.trf.xlu0
          %v1879 = vpop.trf.xlu0
          %v1880 = vpop.trf.xlu0
          %v1881 = vpop.trf.xlu0
          %v1882 = vpop.trf.xlu0
          %v1883 = vcombine.low %v1643, %v1707
          %v1884 = vcombine.high %v1643, %v1707
          %v1886 = vunpack.c.l.s4 1983009808
          %v1887 = vunpack.c.0.s8 %v1886
          %v1888 = vlaneseq
          %v1889 = vshrl.u32 %v1888, 7
          %v1890 = vsub.s32 %v1887, %v1889
          %v1891 = vrot.slane %v1883, %v1890
          %v1893 = vunpack.c.l.s4 1983009808
          %v1894 = vunpack.c.0.s8 %v1893
          %v1895 = vlaneseq
          %v1896 = vshrl.u32 %v1895, 7
          %v1897 = vsub.s32 %v1894, %v1896
          %v1898 = vrot.slane %v1884, %v1897
          %v1899 = vcombine.low %v1675, %v1739
          %v1900 = vcombine.high %v1675, %v1739
          %v1902 = vunpack.c.l.s4 1983009808
          %v1903 = vunpack.c.0.s8 %v1902
          %v1904 = vlaneseq
          %v1905 = vshrl.u32 %v1904, 7
          %v1906 = vsub.s32 %v1903, %v1905
          %v1907 = vrot.slane %v1899, %v1906
          %v1909 = vunpack.c.l.s4 1983009808
          %v1910 = vunpack.c.0.s8 %v1909
          %v1911 = vlaneseq
          %v1912 = vshrl.u32 %v1911, 7
          %v1913 = vsub.s32 %v1910, %v1912
          %v1914 = vrot.slane %v1900, %v1913
          %v1915 = vcombine.low %v1771, %v1835
          %v1916 = vcombine.high %v1771, %v1835
          %v1918 = vunpack.c.l.s4 1983009808
          %v1919 = vunpack.c.0.s8 %v1918
          %v1920 = vlaneseq
          %v1921 = vshrl.u32 %v1920, 7
          %v1922 = vsub.s32 %v1919, %v1921
          %v1923 = vrot.slane %v1915, %v1922
          %v1925 = vunpack.c.l.s4 1983009808
          %v1926 = vunpack.c.0.s8 %v1925
          %v1927 = vlaneseq
          %v1928 = vshrl.u32 %v1927, 7
          %v1929 = vsub.s32 %v1926, %v1928
          %v1930 = vrot.slane %v1916, %v1929
          %v1931 = vcombine.low %v1803, %v1867
          %v1932 = vcombine.high %v1803, %v1867
          %v1934 = vunpack.c.l.s4 1983009808
          %v1935 = vunpack.c.0.s8 %v1934
          %v1936 = vlaneseq
          %v1937 = vshrl.u32 %v1936, 7
          %v1938 = vsub.s32 %v1935, %v1937
          %v1939 = vrot.slane %v1931, %v1938
          %v1941 = vunpack.c.l.s4 1983009808
          %v1942 = vunpack.c.0.s8 %v1941
          %v1943 = vlaneseq
          %v1944 = vshrl.u32 %v1943, 7
          %v1945 = vsub.s32 %v1942, %v1944
          %v1946 = vrot.slane %v1932, %v1945
          %v1947 = vcombine.low %v1891, %v1907
          %v1948 = vcombine.high %v1891, %v1907
          %v1950 = vunpack.c.l.s4 1934713408
          %v1951 = vunpack.c.0.s8 %v1950
          %v1952 = vlaneseq
          %v1953 = vshrl.u32 %v1952, 7
          %v1954 = vsub.s32 %v1951, %v1953
          %v1955 = vrot.slane %v1947, %v1954
          %v1957 = vunpack.c.l.s4 1934713408
          %v1958 = vunpack.c.0.s8 %v1957
          %v1959 = vlaneseq
          %v1960 = vshrl.u32 %v1959, 7
          %v1961 = vsub.s32 %v1958, %v1960
          %v1962 = vrot.slane %v1948, %v1961
          %v1963 = vcombine.low %v1898, %v1914
          %v1964 = vcombine.high %v1898, %v1914
          %v1966 = vunpack.c.l.s4 1934713408
          %v1967 = vunpack.c.0.s8 %v1966
          %v1968 = vlaneseq
          %v1969 = vshrl.u32 %v1968, 7
          %v1970 = vsub.s32 %v1967, %v1969
          %v1971 = vrot.slane %v1963, %v1970
          %v1973 = vunpack.c.l.s4 1934713408
          %v1974 = vunpack.c.0.s8 %v1973
          %v1975 = vlaneseq
          %v1976 = vshrl.u32 %v1975, 7
          %v1977 = vsub.s32 %v1974, %v1976
          %v1978 = vrot.slane %v1964, %v1977
          %v1979 = vcombine.low %v1923, %v1939
          %v1980 = vcombine.high %v1923, %v1939
          %v1982 = vunpack.c.l.s4 1934713408
          %v1983 = vunpack.c.0.s8 %v1982
          %v1984 = vlaneseq
          %v1985 = vshrl.u32 %v1984, 7
          %v1986 = vsub.s32 %v1983, %v1985
          %v1987 = vrot.slane %v1979, %v1986
          %v1989 = vunpack.c.l.s4 1934713408
          %v1990 = vunpack.c.0.s8 %v1989
          %v1991 = vlaneseq
          %v1992 = vshrl.u32 %v1991, 7
          %v1993 = vsub.s32 %v1990, %v1992
          %v1994 = vrot.slane %v1980, %v1993
          %v1995 = vcombine.low %v1930, %v1946
          %v1996 = vcombine.high %v1930, %v1946
          %v1998 = vunpack.c.l.s4 1934713408
          %v1999 = vunpack.c.0.s8 %v1998
          %v2000 = vlaneseq
          %v2001 = vshrl.u32 %v2000, 7
          %v2002 = vsub.s32 %v1999, %v2001
          %v2003 = vrot.slane %v1995, %v2002
          %v2005 = vunpack.c.l.s4 1934713408
          %v2006 = vunpack.c.0.s8 %v2005
          %v2007 = vlaneseq
          %v2008 = vshrl.u32 %v2007, 7
          %v2009 = vsub.s32 %v2006, %v2008
          %v2010 = vrot.slane %v1996, %v2009
          %v2011 = vcombine.low %v1955, %v1987
          %v2012 = vcombine.high %v1955, %v1987
          %v2013 = vcombine.low %v1962, %v1994
          %v2014 = vcombine.high %v1962, %v1994
          %v2015 = vcombine.low %v1971, %v2003
          %v2016 = vcombine.high %v1971, %v2003
          %v2017 = vcombine.low %v1978, %v2010
          %v2018 = vcombine.high %v1978, %v2010
          %2019 = vxpose.xlu0.b32.start [1/16] %v2011, 128
          %2020 = vxpose.xlu0.b32.cont [2/16] 0.0, 128
          %2021 = vxpose.xlu0.b32.cont [3/16] 0.0, 128
          %2022 = vxpose.xlu0.b32.cont [4/16] 0.0, 128
          %2023 = vxpose.xlu0.b32.cont [5/16] 0.0, 128
          %2024 = vxpose.xlu0.b32.cont [6/16] 0.0, 128
          %2025 = vxpose.xlu0.b32.cont [7/16] 0.0, 128
          %2026 = vxpose.xlu0.b32.cont [8/16] 0.0, 128
          %2027 = vxpose.xlu0.b32.cont [9/16] 0.0, 128
          %2028 = vxpose.xlu0.b32.cont [10/16] 0.0, 128
          %2029 = vxpose.xlu0.b32.cont [11/16] 0.0, 128
          %2030 = vxpose.xlu0.b32.cont [12/16] 0.0, 128
          %2031 = vxpose.xlu0.b32.cont [13/16] 0.0, 128
          %2032 = vxpose.xlu0.b32.cont [14/16] 0.0, 128
          %2033 = vxpose.xlu0.b32.cont [15/16] 0.0, 128
          %2034 = vxpose.xlu0.b32.end [16/16] 0.0, 128
          %v2035 = vpop.trf.xlu0
          %v2036 = vpop.trf.xlu0
          %v2037 = vpop.trf.xlu0
          %v2038 = vpop.trf.xlu0
          %v2039 = vpop.trf.xlu0
          %v2040 = vpop.trf.xlu0
          %v2041 = vpop.trf.xlu0
          %v2042 = vpop.trf.xlu0
          %v2043 = vpop.trf.xlu0
          %v2044 = vpop.trf.xlu0
          %v2045 = vpop.trf.xlu0
          %v2046 = vpop.trf.xlu0
          %v2047 = vpop.trf.xlu0
          %v2048 = vpop.trf.xlu0
          %v2049 = vpop.trf.xlu0
          %v2050 = vpop.trf.xlu0
          %2051 = vxpose.xlu0.b32.start [1/16] %v2012, 128
          %2052 = vxpose.xlu0.b32.cont [2/16] 0.0, 128
          %2053 = vxpose.xlu0.b32.cont [3/16] 0.0, 128
          %2054 = vxpose.xlu0.b32.cont [4/16] 0.0, 128
          %2055 = vxpose.xlu0.b32.cont [5/16] 0.0, 128
          %2056 = vxpose.xlu0.b32.cont [6/16] 0.0, 128
          %2057 = vxpose.xlu0.b32.cont [7/16] 0.0, 128
          %2058 = vxpose.xlu0.b32.cont [8/16] 0.0, 128
          %2059 = vxpose.xlu0.b32.cont [9/16] 0.0, 128
          %2060 = vxpose.xlu0.b32.cont [10/16] 0.0, 128
          %2061 = vxpose.xlu0.b32.cont [11/16] 0.0, 128
          %2062 = vxpose.xlu0.b32.cont [12/16] 0.0, 128
          %2063 = vxpose.xlu0.b32.cont [13/16] 0.0, 128
          %2064 = vxpose.xlu0.b32.cont [14/16] 0.0, 128
          %2065 = vxpose.xlu0.b32.cont [15/16] 0.0, 128
          %2066 = vxpose.xlu0.b32.end [16/16] 0.0, 128
          %v2067 = vpop.trf.xlu0
          %v2068 = vpop.trf.xlu0
          %v2069 = vpop.trf.xlu0
          %v2070 = vpop.trf.xlu0
          %v2071 = vpop.trf.xlu0
          %v2072 = vpop.trf.xlu0
          %v2073 = vpop.trf.xlu0
          %v2074 = vpop.trf.xlu0
          %v2075 = vpop.trf.xlu0
          %v2076 = vpop.trf.xlu0
          %v2077 = vpop.trf.xlu0
          %v2078 = vpop.trf.xlu0
          %v2079 = vpop.trf.xlu0
          %v2080 = vpop.trf.xlu0
          %v2081 = vpop.trf.xlu0
          %v2082 = vpop.trf.xlu0
          %2083 = vxpose.xlu0.b32.start [1/16] %v2013, 128
          %2084 = vxpose.xlu0.b32.cont [2/16] 0.0, 128
          %2085 = vxpose.xlu0.b32.cont [3/16] 0.0, 128
          %2086 = vxpose.xlu0.b32.cont [4/16] 0.0, 128
          %2087 = vxpose.xlu0.b32.cont [5/16] 0.0, 128
          %2088 = vxpose.xlu0.b32.cont [6/16] 0.0, 128
          %2089 = vxpose.xlu0.b32.cont [7/16] 0.0, 128
          %2090 = vxpose.xlu0.b32.cont [8/16] 0.0, 128
          %2091 = vxpose.xlu0.b32.cont [9/16] 0.0, 128
          %2092 = vxpose.xlu0.b32.cont [10/16] 0.0, 128
          %2093 = vxpose.xlu0.b32.cont [11/16] 0.0, 128
          %2094 = vxpose.xlu0.b32.cont [12/16] 0.0, 128
          %2095 = vxpose.xlu0.b32.cont [13/16] 0.0, 128
          %2096 = vxpose.xlu0.b32.cont [14/16] 0.0, 128
          %2097 = vxpose.xlu0.b32.cont [15/16] 0.0, 128
          %2098 = vxpose.xlu0.b32.end [16/16] 0.0, 128
          %v2099 = vpop.trf.xlu0
          %v2100 = vpop.trf.xlu0
          %v2101 = vpop.trf.xlu0
          %v2102 = vpop.trf.xlu0
          %v2103 = vpop.trf.xlu0
          %v2104 = vpop.trf.xlu0
          %v2105 = vpop.trf.xlu0
          %v2106 = vpop.trf.xlu0
          %v2107 = vpop.trf.xlu0
          %v2108 = vpop.trf.xlu0
          %v2109 = vpop.trf.xlu0
          %v2110 = vpop.trf.xlu0
          %v2111 = vpop.trf.xlu0
          %v2112 = vpop.trf.xlu0
          %v2113 = vpop.trf.xlu0
          %v2114 = vpop.trf.xlu0
          %2115 = vxpose.xlu0.b32.start [1/16] %v2014, 128
          %2116 = vxpose.xlu0.b32.cont [2/16] 0.0, 128
          %2117 = vxpose.xlu0.b32.cont [3/16] 0.0, 128
          %2118 = vxpose.xlu0.b32.cont [4/16] 0.0, 128
          %2119 = vxpose.xlu0.b32.cont [5/16] 0.0, 128
          %2120 = vxpose.xlu0.b32.cont [6/16] 0.0, 128
          %2121 = vxpose.xlu0.b32.cont [7/16] 0.0, 128
          %2122 = vxpose.xlu0.b32.cont [8/16] 0.0, 128
          %2123 = vxpose.xlu0.b32.cont [9/16] 0.0, 128
          %2124 = vxpose.xlu0.b32.cont [10/16] 0.0, 128
          %2125 = vxpose.xlu0.b32.cont [11/16] 0.0, 128
          %2126 = vxpose.xlu0.b32.cont [12/16] 0.0, 128
          %2127 = vxpose.xlu0.b32.cont [13/16] 0.0, 128
          %2128 = vxpose.xlu0.b32.cont [14/16] 0.0, 128
          %2129 = vxpose.xlu0.b32.cont [15/16] 0.0, 128
          %2130 = vxpose.xlu0.b32.end [16/16] 0.0, 128
          %v2131 = vpop.trf.xlu0
          %v2132 = vpop.trf.xlu0
          %v2133 = vpop.trf.xlu0
          %v2134 = vpop.trf.xlu0
          %v2135 = vpop.trf.xlu0
          %v2136 = vpop.trf.xlu0
          %v2137 = vpop.trf.xlu0
          %v2138 = vpop.trf.xlu0
          %v2139 = vpop.trf.xlu0
          %v2140 = vpop.trf.xlu0
          %v2141 = vpop.trf.xlu0
          %v2142 = vpop.trf.xlu0
          %v2143 = vpop.trf.xlu0
          %v2144 = vpop.trf.xlu0
          %v2145 = vpop.trf.xlu0
          %v2146 = vpop.trf.xlu0
          %2147 = vxpose.xlu0.b32.start [1/16] %v2015, 128
          %2148 = vxpose.xlu0.b32.cont [2/16] 0.0, 128
          %2149 = vxpose.xlu0.b32.cont [3/16] 0.0, 128
          %2150 = vxpose.xlu0.b32.cont [4/16] 0.0, 128
          %2151 = vxpose.xlu0.b32.cont [5/16] 0.0, 128
          %2152 = vxpose.xlu0.b32.cont [6/16] 0.0, 128
          %2153 = vxpose.xlu0.b32.cont [7/16] 0.0, 128
          %2154 = vxpose.xlu0.b32.cont [8/16] 0.0, 128
          %2155 = vxpose.xlu0.b32.cont [9/16] 0.0, 128
          %2156 = vxpose.xlu0.b32.cont [10/16] 0.0, 128
          %2157 = vxpose.xlu0.b32.cont [11/16] 0.0, 128
          %2158 = vxpose.xlu0.b32.cont [12/16] 0.0, 128
          %2159 = vxpose.xlu0.b32.cont [13/16] 0.0, 128
          %2160 = vxpose.xlu0.b32.cont [14/16] 0.0, 128
          %2161 = vxpose.xlu0.b32.cont [15/16] 0.0, 128
          %2162 = vxpose.xlu0.b32.end [16/16] 0.0, 128
          %v2163 = vpop.trf.xlu0
          %v2164 = vpop.trf.xlu0
          %v2165 = vpop.trf.xlu0
          %v2166 = vpop.trf.xlu0
          %v2167 = vpop.trf.xlu0
          %v2168 = vpop.trf.xlu0
          %v2169 = vpop.trf.xlu0
          %v2170 = vpop.trf.xlu0
          %v2171 = vpop.trf.xlu0
          %v2172 = vpop.trf.xlu0
          %v2173 = vpop.trf.xlu0
          %v2174 = vpop.trf.xlu0
          %v2175 = vpop.trf.xlu0
          %v2176 = vpop.trf.xlu0
          %v2177 = vpop.trf.xlu0
          %v2178 = vpop.trf.xlu0
          %2179 = vxpose.xlu0.b32.start [1/16] %v2016, 128
          %2180 = vxpose.xlu0.b32.cont [2/16] 0.0, 128
          %2181 = vxpose.xlu0.b32.cont [3/16] 0.0, 128
          %2182 = vxpose.xlu0.b32.cont [4/16] 0.0, 128
          %2183 = vxpose.xlu0.b32.cont [5/16] 0.0, 128
          %2184 = vxpose.xlu0.b32.cont [6/16] 0.0, 128
          %2185 = vxpose.xlu0.b32.cont [7/16] 0.0, 128
          %2186 = vxpose.xlu0.b32.cont [8/16] 0.0, 128
          %2187 = vxpose.xlu0.b32.cont [9/16] 0.0, 128
          %2188 = vxpose.xlu0.b32.cont [10/16] 0.0, 128
          %2189 = vxpose.xlu0.b32.cont [11/16] 0.0, 128
          %2190 = vxpose.xlu0.b32.cont [12/16] 0.0, 128
          %2191 = vxpose.xlu0.b32.cont [13/16] 0.0, 128
          %2192 = vxpose.xlu0.b32.cont [14/16] 0.0, 128
          %2193 = vxpose.xlu0.b32.cont [15/16] 0.0, 128
          %2194 = vxpose.xlu0.b32.end [16/16] 0.0, 128
          %v2195 = vpop.trf.xlu0
          %v2196 = vpop.trf.xlu0
          %v2197 = vpop.trf.xlu0
          %v2198 = vpop.trf.xlu0
          %v2199 = vpop.trf.xlu0
          %v2200 = vpop.trf.xlu0
          %v2201 = vpop.trf.xlu0
          %v2202 = vpop.trf.xlu0
          %v2203 = vpop.trf.xlu0
          %v2204 = vpop.trf.xlu0
          %v2205 = vpop.trf.xlu0
          %v2206 = vpop.trf.xlu0
          %v2207 = vpop.trf.xlu0
          %v2208 = vpop.trf.xlu0
          %v2209 = vpop.trf.xlu0
          %v2210 = vpop.trf.xlu0
          %2211 = vxpose.xlu0.b32.start [1/16] %v2017, 128
          %2212 = vxpose.xlu0.b32.cont [2/16] 0.0, 128
          %2213 = vxpose.xlu0.b32.cont [3/16] 0.0, 128
          %2214 = vxpose.xlu0.b32.cont [4/16] 0.0, 128
          %2215 = vxpose.xlu0.b32.cont [5/16] 0.0, 128
          %2216 = vxpose.xlu0.b32.cont [6/16] 0.0, 128
          %2217 = vxpose.xlu0.b32.cont [7/16] 0.0, 128
          %2218 = vxpose.xlu0.b32.cont [8/16] 0.0, 128
          %2219 = vxpose.xlu0.b32.cont [9/16] 0.0, 128
          %2220 = vxpose.xlu0.b32.cont [10/16] 0.0, 128
          %2221 = vxpose.xlu0.b32.cont [11/16] 0.0, 128
          %2222 = vxpose.xlu0.b32.cont [12/16] 0.0, 128
          %2223 = vxpose.xlu0.b32.cont [13/16] 0.0, 128
          %2224 = vxpose.xlu0.b32.cont [14/16] 0.0, 128
          %2225 = vxpose.xlu0.b32.cont [15/16] 0.0, 128
          %2226 = vxpose.xlu0.b32.end [16/16] 0.0, 128
          %v2227 = vpop.trf.xlu0
          %v2228 = vpop.trf.xlu0
          %v2229 = vpop.trf.xlu0
          %v2230 = vpop.trf.xlu0
          %v2231 = vpop.trf.xlu0
          %v2232 = vpop.trf.xlu0
          %v2233 = vpop.trf.xlu0
          %v2234 = vpop.trf.xlu0
          %v2235 = vpop.trf.xlu0
          %v2236 = vpop.trf.xlu0
          %v2237 = vpop.trf.xlu0
          %v2238 = vpop.trf.xlu0
          %v2239 = vpop.trf.xlu0
          %v2240 = vpop.trf.xlu0
          %v2241 = vpop.trf.xlu0
          %v2242 = vpop.trf.xlu0
          %2243 = vxpose.xlu0.b32.start [1/16] %v2018, 128
          %2244 = vxpose.xlu0.b32.cont [2/16] 0.0, 128
          %2245 = vxpose.xlu0.b32.cont [3/16] 0.0, 128
          %2246 = vxpose.xlu0.b32.cont [4/16] 0.0, 128
          %2247 = vxpose.xlu0.b32.cont [5/16] 0.0, 128
          %2248 = vxpose.xlu0.b32.cont [6/16] 0.0, 128
          %2249 = vxpose.xlu0.b32.cont [7/16] 0.0, 128
          %2250 = vxpose.xlu0.b32.cont [8/16] 0.0, 128
          %2251 = vxpose.xlu0.b32.cont [9/16] 0.0, 128
          %2252 = vxpose.xlu0.b32.cont [10/16] 0.0, 128
          %2253 = vxpose.xlu0.b32.cont [11/16] 0.0, 128
          %2254 = vxpose.xlu0.b32.cont [12/16] 0.0, 128
          %2255 = vxpose.xlu0.b32.cont [13/16] 0.0, 128
          %2256 = vxpose.xlu0.b32.cont [14/16] 0.0, 128
          %2257 = vxpose.xlu0.b32.cont [15/16] 0.0, 128
          %2258 = vxpose.xlu0.b32.end [16/16] 0.0, 128
          %v2259 = vpop.trf.xlu0
          %v2260 = vpop.trf.xlu0
          %v2261 = vpop.trf.xlu0
          %v2262 = vpop.trf.xlu0
          %v2263 = vpop.trf.xlu0
          %v2264 = vpop.trf.xlu0
          %v2265 = vpop.trf.xlu0
          %v2266 = vpop.trf.xlu0
          %v2267 = vpop.trf.xlu0
          %v2268 = vpop.trf.xlu0
          %v2269 = vpop.trf.xlu0
          %v2270 = vpop.trf.xlu0
          %v2271 = vpop.trf.xlu0
          %v2272 = vpop.trf.xlu0
          %v2273 = vpop.trf.xlu0
          %v2274 = vpop.trf.xlu0
          %v2275 = vcombine.low %v2035, %v2099
          %v2277 = vunpack.c.l.s4 1983009808
          %v2278 = vunpack.c.0.s8 %v2277
          %v2279 = vlaneseq
          %v2280 = vshrl.u32 %v2279, 7
          %v2281 = vsub.s32 %v2278, %v2280
          %v2282 = vrot.slane %v2275, %v2281
          %v2283 = vcombine.low %v2067, %v2131
          %v2285 = vunpack.c.l.s4 1983009808
          %v2286 = vunpack.c.0.s8 %v2285
          %v2287 = vlaneseq
          %v2288 = vshrl.u32 %v2287, 7
          %v2289 = vsub.s32 %v2286, %v2288
          %v2290 = vrot.slane %v2283, %v2289
          %v2291 = vcombine.low %v2163, %v2227
          %v2293 = vunpack.c.l.s4 1983009808
          %v2294 = vunpack.c.0.s8 %v2293
          %v2295 = vlaneseq
          %v2296 = vshrl.u32 %v2295, 7
          %v2297 = vsub.s32 %v2294, %v2296
          %v2298 = vrot.slane %v2291, %v2297
          %v2299 = vcombine.low %v2195, %v2259
          %v2301 = vunpack.c.l.s4 1983009808
          %v2302 = vunpack.c.0.s8 %v2301
          %v2303 = vlaneseq
          %v2304 = vshrl.u32 %v2303, 7
          %v2305 = vsub.s32 %v2302, %v2304
          %v2306 = vrot.slane %v2299, %v2305
          %v2307 = vcombine.low %v2282, %v2290
          %v2308 = vcombine.high %v2282, %v2290
          %v2310 = vunpack.c.l.s4 1934713408
          %v2311 = vunpack.c.0.s8 %v2310
          %v2312 = vlaneseq
          %v2313 = vshrl.u32 %v2312, 7
          %v2314 = vsub.s32 %v2311, %v2313
          %v2315 = vrot.slane %v2307, %v2314
          %v2317 = vunpack.c.l.s4 1934713408
          %v2318 = vunpack.c.0.s8 %v2317
          %v2319 = vlaneseq
          %v2320 = vshrl.u32 %v2319, 7
          %v2321 = vsub.s32 %v2318, %v2320
          %v2322 = vrot.slane %v2308, %v2321
          %v2323 = vcombine.low %v2298, %v2306
          %v2324 = vcombine.high %v2298, %v2306
          %v2326 = vunpack.c.l.s4 1934713408
          %v2327 = vunpack.c.0.s8 %v2326
          %v2328 = vlaneseq
          %v2329 = vshrl.u32 %v2328, 7
          %v2330 = vsub.s32 %v2327, %v2329
          %v2331 = vrot.slane %v2323, %v2330
          %v2333 = vunpack.c.l.s4 1934713408
          %v2334 = vunpack.c.0.s8 %v2333
          %v2335 = vlaneseq
          %v2336 = vshrl.u32 %v2335, 7
          %v2337 = vsub.s32 %v2334, %v2336
          %v2338 = vrot.slane %v2324, %v2337
          %v2339 = vcombine.low %v2315, %v2331
          %v2340 = vcombine.high %v2315, %v2331
          %v2341 = vcombine.low %v2322, %v2338
          %v2342 = vcombine.high %v2322, %v2338
          %vm2343 = vcmask 64512
          %2344 = vst.msk [vmem:[#allocation2] sm:$0xff] %vm2343, %v2339
          %2345 = vst.msk [vmem:[#allocation2 + $0x8] sm:$0xff] %vm2343, %v2340
          %2346 = vst.msk [vmem:[#allocation2 + $0x10] sm:$0xff] %vm2343, %v2341
          %2347 = vst.msk [vmem:[#allocation2 + $0x18] sm:$0xff] %vm2343, %v2342
          %v2348 = vcombine.low %v1599, %v1606
          %v2350 = vunpack.c.l.s4 1983009808
          %v2351 = vunpack.c.0.s8 %v2350
          %v2352 = vlaneseq
          %v2353 = vshrl.u32 %v2352, 7
          %v2354 = vsub.s32 %v2351, %v2353
          %v2355 = vrot.slane %v2348, %v2354
          %v2356 = vcombine.low %v1623, %v1624
          %v2358 = vunpack.c.l.s4 1983009808
          %v2359 = vunpack.c.0.s8 %v2358
          %v2360 = vlaneseq
          %v2361 = vshrl.u32 %v2360, 7
          %v2362 = vsub.s32 %v2359, %v2361
          %v2363 = vrot.slane %v2356, %v2362
          %v2364 = vcombine.low %v1615, %v1622
          %v2366 = vunpack.c.l.s4 1983009808
          %v2367 = vunpack.c.0.s8 %v2366
          %v2368 = vlaneseq
          %v2369 = vshrl.u32 %v2368, 7
          %v2370 = vsub.s32 %v2367, %v2369
          %v2371 = vrot.slane %v2364, %v2370
          %v2372 = vcombine.low %v1625, %v1626
          %v2374 = vunpack.c.l.s4 1983009808
          %v2375 = vunpack.c.0.s8 %v2374
          %v2376 = vlaneseq
          %v2377 = vshrl.u32 %v2376, 7
          %v2378 = vsub.s32 %v2375, %v2377
          %v2379 = vrot.slane %v2372, %v2378
          %v2380 = vcombine.low %v2355, %v2363
          %v2381 = vcombine.high %v2355, %v2363
          %v2383 = vunpack.c.l.s4 1934713408
          %v2384 = vunpack.c.0.s8 %v2383
          %v2385 = vlaneseq
          %v2386 = vshrl.u32 %v2385, 7
          %v2387 = vsub.s32 %v2384, %v2386
          %v2388 = vrot.slane %v2380, %v2387
          %v2390 = vunpack.c.l.s4 1934713408
          %v2391 = vunpack.c.0.s8 %v2390
          %v2392 = vlaneseq
          %v2393 = vshrl.u32 %v2392, 7
          %v2394 = vsub.s32 %v2391, %v2393
          %v2395 = vrot.slane %v2381, %v2394
          %v2396 = vcombine.low %v2371, %v2379
          %v2397 = vcombine.high %v2371, %v2379
          %v2399 = vunpack.c.l.s4 1934713408
          %v2400 = vunpack.c.0.s8 %v2399
          %v2401 = vlaneseq
          %v2402 = vshrl.u32 %v2401, 7
          %v2403 = vsub.s32 %v2400, %v2402
          %v2404 = vrot.slane %v2396, %v2403
          %v2406 = vunpack.c.l.s4 1934713408
          %v2407 = vunpack.c.0.s8 %v2406
          %v2408 = vlaneseq
          %v2409 = vshrl.u32 %v2408, 7
          %v2410 = vsub.s32 %v2407, %v2409
          %v2411 = vrot.slane %v2397, %v2410
          %v2412 = vcombine.low %v2388, %v2404
          %v2413 = vcombine.high %v2388, %v2404
          %v2414 = vcombine.low %v2395, %v2411
          %v2415 = vcombine.high %v2395, %v2411
          %2416 = vst.msk [vmem:[#allocation3] sm:$0xff] %vm2343, %v2412
          %2417 = vst.msk [vmem:[#allocation3 + $0x8] sm:$0xff] %vm2343, %v2413
          %2418 = vst.msk [vmem:[#allocation3 + $0x10] sm:$0xff] %vm2343, %v2414
          %2419 = vst.msk [vmem:[#allocation3 + $0x18] sm:$0xff] %vm2343, %v2415
        $region96: #{tpu_custom_call.1} parent=55 // pred_fallthru
          _
        %s2420 = smul.u32 %s35, 8
        %s2421 = scalar_lea.vmem %s403, %s2420 [#allocation4]
        %v2422 = vld [vmem:[%s2421] sm:$0xff]
        %v2423 = vld [vmem:[#allocation7] sm:$0xff]
        %v2424 = vld [vmem:[#allocation7 + $0x8] sm:$0xff]
        %v2425 = vld [vmem:[#allocation7 + $0x10] sm:$0xff]
        %v2426 = vld [vmem:[#allocation7 + $0x18] sm:$0xff]
        %v2427 = vld [vmem:[#allocation9] sm:$0x1]
        %v2429 = vlaneseq
        %v2430 = vshrl.u32 %v2429, 7
        %v2431 = vsub.s32 0, %v2430
        %v2432 = vrot.slane %v2427, %v2431
        %vm2434 = vcmask 261120
        %v2436 = vsel %vm2434, %v2422, 0
        %2438 = vmatprep.subr.mxu0 0.0
        %v2439 = vand.u32 %v2423, 4294901760
        %2440 = vmatpush1.msra.mxu0 %v2439
        %2441 = vmatprep.subr.mxu0 0.0
        %v2442 = vand.u32 %v2424, 4294901760
        %2443 = vmatpush1.msra.mxu0 %v2442
        %2444 = vmatprep.subr.mxu0 0.0
        %v2445 = vand.u32 %v2425, 4294901760
        %2446 = vmatpush1.msra.mxu0 %v2445
        %2447 = vmatprep.subr.mxu0 0.0
        %v2448 = vand.u32 %v2426, 4294901760
        %2449 = vmatpush1.msra.mxu0 %v2448
        %2450 = vmatprep.subr.mxu0 0.0
        %2451 = vmatpush1.msra.mxu0 0.0
        %2452 = vmatprep.subr.mxu0 0.0
        %2453 = vmatpush1.msra.mxu0 0.0
        %2454 = vmatprep.subr.mxu0 0.0
        %2455 = vmatpush1.msra.mxu0 0.0
        %2456 = vmatprep.subr.mxu0 0.0
        %2457 = vmatpush1.msra.mxu0 0.0
        %2458 = vmatprep.subr.mxu0 0.0
        %2459 = vmatpush1.msra.mxu0 0.0
        %2460 = vmatprep.subr.mxu0 0.0
        %2461 = vmatpush1.msra.mxu0 0.0
        %2462 = vmatprep.subr.mxu0 0.0
        %2463 = vmatpush1.msra.mxu0 0.0
        %2464 = vmatprep.subr.mxu0 0.0
        %2465 = vmatpush1.msra.mxu0 0.0
        %2466 = vmatprep.subr.mxu0 0.0
        %2467 = vmatpush1.msra.mxu0 0.0
        %2468 = vmatprep.subr.mxu0 0.0
        %2469 = vmatpush1.msra.mxu0 0.0
        %2470 = vmatprep.subr.mxu0 0.0
        %2471 = vmatpush1.msra.mxu0 0.0
        %2472 = vmatprep.subr.mxu0 0.0
        %2473 = vmatpush1.msra.mxu0 0.0
        %2474 = vmatprep.subr.mxu0 0.0
        %2475 = vmatpush1.msra.mxu0 0.0
        %2476 = vmatprep.subr.mxu0 0.0
        %2477 = vmatpush1.msra.mxu0 0.0
        %2478 = vmatprep.subr.mxu0 0.0
        %2479 = vmatpush1.msra.mxu0 0.0
        %2480 = vmatprep.subr.mxu0 0.0
        %2481 = vmatpush1.msra.mxu0 0.0
        %2482 = vmatprep.subr.mxu0 0.0
        %2483 = vmatpush1.msra.mxu0 0.0
        %2484 = vmatprep.subr.mxu0 0.0
        %2485 = vmatpush1.msra.mxu0 0.0
        %2486 = vmatprep.subr.mxu0 0.0
        %2487 = vmatpush1.msra.mxu0 0.0
        %2488 = vmatprep.subr.mxu0 0.0
        %2489 = vmatpush1.msra.mxu0 0.0
        %2490 = vmatprep.subr.mxu0 0.0
        %2491 = vmatpush1.msra.mxu0 0.0
        %2492 = vmatprep.subr.mxu0 0.0
        %2493 = vmatpush1.msra.mxu0 0.0
        %2494 = vmatprep.subr.mxu0 0.0
        %2495 = vmatpush1.msra.mxu0 0.0
        %2496 = vmatprep.subr.mxu0 0.0
        %2497 = vmatpush1.msra.mxu0 0.0
        %2498 = vmatprep.subr.mxu0 0.0
        %2499 = vmatpush1.msra.mxu0 0.0
        %2500 = vmatprep.subr.mxu0 0.0
        %2501 = vmatpush1.msra.mxu0 0.0
        %2502 = vmatprep.subr.mxu0 0.0
        %2503 = vmatpush1.msra.mxu0 0.0
        %2504 = vmatprep.subr.mxu0 0.0
        %2505 = vmatpush1.msra.mxu0 0.0
        %2506 = vmatprep.mubr.f32.mxu0 0.0
        %v2507 = vand.u32 %v2436, 4294901760
        %v2508 = vsub.f32 %v2436, %v2507
        %v2509 = vand.u32 %v2508, 4294901760
        %v2510 = vsub.f32 %v2508, %v2509
        %v2511 = vand.u32 %v2510, 4294901760
        %2512 = vmatmul.mubr.f32.gmra.mrb[0].mxu0 %v2511
        %v2513 = vpop.f32.mrb[0].mxu0
        %v2514 = vadd.f32 %v2432, %v2513
        %v2515 = vpop.f32.mrb[0].mxu0
        %2516 = vdwg.mxu0
        %2517 = vmatprep.subr.mxu0 0.0
        %v2518 = vand.u32 %v2423, 4294901760
        %v2519 = vsub.f32 %v2423, %v2518
        %v2520 = vand.u32 %v2519, 4294901760
        %v2521 = vsub.f32 %v2519, %v2520
        %v2522 = vand.u32 %v2521, 4294901760
        %2523 = vmatpush1.msra.mxu0 %v2522
        %2524 = vmatprep.subr.mxu0 0.0
        %v2525 = vand.u32 %v2424, 4294901760
        %v2526 = vsub.f32 %v2424, %v2525
        %v2527 = vand.u32 %v2526, 4294901760
        %v2528 = vsub.f32 %v2526, %v2527
        %v2529 = vand.u32 %v2528, 4294901760
        %2530 = vmatpush1.msra.mxu0 %v2529
        %2531 = vmatprep.subr.mxu0 0.0
        %v2532 = vand.u32 %v2425, 4294901760
        %v2533 = vsub.f32 %v2425, %v2532
        %v2534 = vand.u32 %v2533, 4294901760
        %v2535 = vsub.f32 %v2533, %v2534
        %v2536 = vand.u32 %v2535, 4294901760
        %2537 = vmatpush1.msra.mxu0 %v2536
        %2538 = vmatprep.subr.mxu0 0.0
        %v2539 = vand.u32 %v2426, 4294901760
        %v2540 = vsub.f32 %v2426, %v2539
        %v2541 = vand.u32 %v2540, 4294901760
        %v2542 = vsub.f32 %v2540, %v2541
        %v2543 = vand.u32 %v2542, 4294901760
        %2544 = vmatpush1.msra.mxu0 %v2543
        %2545 = vmatprep.subr.mxu0 0.0
        %2546 = vmatpush1.msra.mxu0 0.0
        %2547 = vmatprep.subr.mxu0 0.0
        %2548 = vmatpush1.msra.mxu0 0.0
        %2549 = vmatprep.subr.mxu0 0.0
        %2550 = vmatpush1.msra.mxu0 0.0
        %2551 = vmatprep.subr.mxu0 0.0
        %2552 = vmatpush1.msra.mxu0 0.0
        %2553 = vmatprep.subr.mxu0 0.0
        %2554 = vmatpush1.msra.mxu0 0.0
        %2555 = vmatprep.subr.mxu0 0.0
        %2556 = vmatpush1.msra.mxu0 0.0
        %2557 = vmatprep.subr.mxu0 0.0
        %2558 = vmatpush1.msra.mxu0 0.0
        %2559 = vmatprep.subr.mxu0 0.0
        %2560 = vmatpush1.msra.mxu0 0.0
        %2561 = vmatprep.subr.mxu0 0.0
        %2562 = vmatpush1.msra.mxu0 0.0
        %2563 = vmatprep.subr.mxu0 0.0
        %2564 = vmatpush1.msra.mxu0 0.0
        %2565 = vmatprep.subr.mxu0 0.0
        %2566 = vmatpush1.msra.mxu0 0.0
        %2567 = vmatprep.subr.mxu0 0.0
        %2568 = vmatpush1.msra.mxu0 0.0
        %2569 = vmatprep.subr.mxu0 0.0
        %2570 = vmatpush1.msra.mxu0 0.0
        %2571 = vmatprep.subr.mxu0 0.0
        %2572 = vmatpush1.msra.mxu0 0.0
        %2573 = vmatprep.subr.mxu0 0.0
        %2574 = vmatpush1.msra.mxu0 0.0
        %2575 = vmatprep.subr.mxu0 0.0
        %2576 = vmatpush1.msra.mxu0 0.0
        %2577 = vmatprep.subr.mxu0 0.0
        %2578 = vmatpush1.msra.mxu0 0.0
        %2579 = vmatprep.subr.mxu0 0.0
        %2580 = vmatpush1.msra.mxu0 0.0
        %2581 = vmatprep.subr.mxu0 0.0
        %2582 = vmatpush1.msra.mxu0 0.0
        %2583 = vmatprep.subr.mxu0 0.0
        %2584 = vmatpush1.msra.mxu0 0.0
        %2585 = vmatprep.subr.mxu0 0.0
        %2586 = vmatpush1.msra.mxu0 0.0
        %2587 = vmatprep.subr.mxu0 0.0
        %2588 = vmatpush1.msra.mxu0 0.0
        %2589 = vmatprep.subr.mxu0 0.0
        %2590 = vmatpush1.msra.mxu0 0.0
        %2591 = vmatprep.subr.mxu0 0.0
        %2592 = vmatpush1.msra.mxu0 0.0
        %2593 = vmatprep.subr.mxu0 0.0
        %2594 = vmatpush1.msra.mxu0 0.0
        %2595 = vmatprep.subr.mxu0 0.0
        %2596 = vmatpush1.msra.mxu0 0.0
        %2597 = vmatprep.subr.mxu0 0.0
        %2598 = vmatpush1.msra.mxu0 0.0
        %2599 = vmatprep.subr.mxu0 0.0
        %2600 = vmatpush1.msra.mxu0 0.0
        %2601 = vmatprep.mubr.f32.mxu0 0.0
        %v2602 = vand.u32 %v2436, 4294901760
        %2603 = vmatmul.mubr.f32.gmra.mrb[0].mxu0 %v2602
        %v2604 = vpop.f32.mrb[0].mxu0
        %v2605 = vadd.f32 %v2514, %v2604
        %v2606 = vpop.f32.mrb[0].mxu0
        %2607 = vdwg.mxu0
        %2608 = vmatprep.subr.mxu0 0.0
        %v2609 = vand.u32 %v2423, 4294901760
        %v2610 = vsub.f32 %v2423, %v2609
        %2611 = vmatpush1.msra.mxu0 %v2610
        %2612 = vmatprep.subr.mxu0 0.0
        %v2613 = vand.u32 %v2424, 4294901760
        %v2614 = vsub.f32 %v2424, %v2613
        %2615 = vmatpush1.msra.mxu0 %v2614
        %2616 = vmatprep.subr.mxu0 0.0
        %v2617 = vand.u32 %v2425, 4294901760
        %v2618 = vsub.f32 %v2425, %v2617
        %2619 = vmatpush1.msra.mxu0 %v2618
        %2620 = vmatprep.subr.mxu0 0.0
        %v2621 = vand.u32 %v2426, 4294901760
        %v2622 = vsub.f32 %v2426, %v2621
        %2623 = vmatpush1.msra.mxu0 %v2622
        %2624 = vmatprep.subr.mxu0 0.0
        %2625 = vmatpush1.msra.mxu0 0.0
        %2626 = vmatprep.subr.mxu0 0.0
        %2627 = vmatpush1.msra.mxu0 0.0
        %2628 = vmatprep.subr.mxu0 0.0
        %2629 = vmatpush1.msra.mxu0 0.0
        %2630 = vmatprep.subr.mxu0 0.0
        %2631 = vmatpush1.msra.mxu0 0.0
        %2632 = vmatprep.subr.mxu0 0.0
        %2633 = vmatpush1.msra.mxu0 0.0
        %2634 = vmatprep.subr.mxu0 0.0
        %2635 = vmatpush1.msra.mxu0 0.0
        %2636 = vmatprep.subr.mxu0 0.0
        %2637 = vmatpush1.msra.mxu0 0.0
        %2638 = vmatprep.subr.mxu0 0.0
        %2639 = vmatpush1.msra.mxu0 0.0
        %2640 = vmatprep.subr.mxu0 0.0
        %2641 = vmatpush1.msra.mxu0 0.0
        %2642 = vmatprep.subr.mxu0 0.0
        %2643 = vmatpush1.msra.mxu0 0.0
        %2644 = vmatprep.subr.mxu0 0.0
        %2645 = vmatpush1.msra.mxu0 0.0
        %2646 = vmatprep.subr.mxu0 0.0
        %2647 = vmatpush1.msra.mxu0 0.0
        %2648 = vmatprep.subr.mxu0 0.0
        %2649 = vmatpush1.msra.mxu0 0.0
        %2650 = vmatprep.subr.mxu0 0.0
        %2651 = vmatpush1.msra.mxu0 0.0
        %2652 = vmatprep.subr.mxu0 0.0
        %2653 = vmatpush1.msra.mxu0 0.0
        %2654 = vmatprep.subr.mxu0 0.0
        %2655 = vmatpush1.msra.mxu0 0.0
        %2656 = vmatprep.subr.mxu0 0.0
        %2657 = vmatpush1.msra.mxu0 0.0
        %2658 = vmatprep.subr.mxu0 0.0
        %2659 = vmatpush1.msra.mxu0 0.0
        %2660 = vmatprep.subr.mxu0 0.0
        %2661 = vmatpush1.msra.mxu0 0.0
        %2662 = vmatprep.subr.mxu0 0.0
        %2663 = vmatpush1.msra.mxu0 0.0
        %2664 = vmatprep.subr.mxu0 0.0
        %2665 = vmatpush1.msra.mxu0 0.0
        %2666 = vmatprep.subr.mxu0 0.0
        %2667 = vmatpush1.msra.mxu0 0.0
        %2668 = vmatprep.subr.mxu0 0.0
        %2669 = vmatpush1.msra.mxu0 0.0
        %2670 = vmatprep.subr.mxu0 0.0
        %2671 = vmatpush1.msra.mxu0 0.0
        %2672 = vmatprep.subr.mxu0 0.0
        %2673 = vmatpush1.msra.mxu0 0.0
        %2674 = vmatprep.subr.mxu0 0.0
        %2675 = vmatpush1.msra.mxu0 0.0
        %2676 = vmatprep.subr.mxu0 0.0
        %2677 = vmatpush1.msra.mxu0 0.0
        %2678 = vmatprep.subr.mxu0 0.0
        %2679 = vmatpush1.msra.mxu0 0.0
        %2680 = vmatprep.mubr.f32.mxu0 0.0
        %v2681 = vand.u32 %v2436, 4294901760
        %v2682 = vsub.f32 %v2436, %v2681
        %2683 = vmatmul.mubr.f32.gmra.mrb[0].mxu0 %v2682
        %v2684 = vpop.f32.mrb[0].mxu0
        %v2685 = vadd.f32 %v2605, %v2684
        %v2686 = vpop.f32.mrb[0].mxu0
        %2687 = vdwg.mxu0
        %2688 = vmatprep.subr.mxu0 0.0
        %v2689 = vand.u32 %v2423, 4294901760
        %2690 = vmatpush1.msra.mxu0 %v2689
        %2691 = vmatprep.subr.mxu0 0.0
        %v2692 = vand.u32 %v2424, 4294901760
        %2693 = vmatpush1.msra.mxu0 %v2692
        %2694 = vmatprep.subr.mxu0 0.0
        %v2695 = vand.u32 %v2425, 4294901760
        %2696 = vmatpush1.msra.mxu0 %v2695
        %2697 = vmatprep.subr.mxu0 0.0
        %v2698 = vand.u32 %v2426, 4294901760
        %2699 = vmatpush1.msra.mxu0 %v2698
        %2700 = vmatprep.subr.mxu0 0.0
        %2701 = vmatpush1.msra.mxu0 0.0
        %2702 = vmatprep.subr.mxu0 0.0
        %2703 = vmatpush1.msra.mxu0 0.0
        %2704 = vmatprep.subr.mxu0 0.0
        %2705 = vmatpush1.msra.mxu0 0.0
        %2706 = vmatprep.subr.mxu0 0.0
        %2707 = vmatpush1.msra.mxu0 0.0
        %2708 = vmatprep.subr.mxu0 0.0
        %2709 = vmatpush1.msra.mxu0 0.0
        %2710 = vmatprep.subr.mxu0 0.0
        %2711 = vmatpush1.msra.mxu0 0.0
        %2712 = vmatprep.subr.mxu0 0.0
        %2713 = vmatpush1.msra.mxu0 0.0
        %2714 = vmatprep.subr.mxu0 0.0
        %2715 = vmatpush1.msra.mxu0 0.0
        %2716 = vmatprep.subr.mxu0 0.0
        %2717 = vmatpush1.msra.mxu0 0.0
        %2718 = vmatprep.subr.mxu0 0.0
        %2719 = vmatpush1.msra.mxu0 0.0
        %2720 = vmatprep.subr.mxu0 0.0
        %2721 = vmatpush1.msra.mxu0 0.0
        %2722 = vmatprep.subr.mxu0 0.0
        %2723 = vmatpush1.msra.mxu0 0.0
        %2724 = vmatprep.subr.mxu0 0.0
        %2725 = vmatpush1.msra.mxu0 0.0
        %2726 = vmatprep.subr.mxu0 0.0
        %2727 = vmatpush1.msra.mxu0 0.0
        %2728 = vmatprep.subr.mxu0 0.0
        %2729 = vmatpush1.msra.mxu0 0.0
        %2730 = vmatprep.subr.mxu0 0.0
        %2731 = vmatpush1.msra.mxu0 0.0
        %2732 = vmatprep.subr.mxu0 0.0
        %2733 = vmatpush1.msra.mxu0 0.0
        %2734 = vmatprep.subr.mxu0 0.0
        %2735 = vmatpush1.msra.mxu0 0.0
        %2736 = vmatprep.subr.mxu0 0.0
        %2737 = vmatpush1.msra.mxu0 0.0
        %2738 = vmatprep.subr.mxu0 0.0
        %2739 = vmatpush1.msra.mxu0 0.0
        %2740 = vmatprep.subr.mxu0 0.0
        %2741 = vmatpush1.msra.mxu0 0.0
        %2742 = vmatprep.subr.mxu0 0.0
        %2743 = vmatpush1.msra.mxu0 0.0
        %2744 = vmatprep.subr.mxu0 0.0
        %2745 = vmatpush1.msra.mxu0 0.0
        %2746 = vmatprep.subr.mxu0 0.0
        %2747 = vmatpush1.msra.mxu0 0.0
        %2748 = vmatprep.subr.mxu0 0.0
        %2749 = vmatpush1.msra.mxu0 0.0
        %2750 = vmatprep.subr.mxu0 0.0
        %2751 = vmatpush1.msra.mxu0 0.0
        %2752 = vmatprep.subr.mxu0 0.0
        %2753 = vmatpush1.msra.mxu0 0.0
        %2754 = vmatprep.subr.mxu0 0.0
        %2755 = vmatpush1.msra.mxu0 0.0
        %2756 = vmatprep.mubr.f32.mxu0 0.0
        %v2757 = vand.u32 %v2436, 4294901760
        %v2758 = vsub.f32 %v2436, %v2757
        %v2759 = vand.u32 %v2758, 4294901760
        %2760 = vmatmul.mubr.f32.gmra.mrb[0].mxu0 %v2759
        %v2761 = vpop.f32.mrb[0].mxu0
        %v2762 = vadd.f32 %v2685, %v2761
        %v2763 = vpop.f32.mrb[0].mxu0
        %2764 = vdwg.mxu0
        %2765 = vmatprep.subr.mxu0 0.0
        %v2766 = vand.u32 %v2423, 4294901760
        %v2767 = vsub.f32 %v2423, %v2766
        %v2768 = vand.u32 %v2767, 4294901760
        %2769 = vmatpush1.msra.mxu0 %v2768
        %2770 = vmatprep.subr.mxu0 0.0
        %v2771 = vand.u32 %v2424, 4294901760
        %v2772 = vsub.f32 %v2424, %v2771
        %v2773 = vand.u32 %v2772, 4294901760
        %2774 = vmatpush1.msra.mxu0 %v2773
        %2775 = vmatprep.subr.mxu0 0.0
        %v2776 = vand.u32 %v2425, 4294901760
        %v2777 = vsub.f32 %v2425, %v2776
        %v2778 = vand.u32 %v2777, 4294901760
        %2779 = vmatpush1.msra.mxu0 %v2778
        %2780 = vmatprep.subr.mxu0 0.0
        %v2781 = vand.u32 %v2426, 4294901760
        %v2782 = vsub.f32 %v2426, %v2781
        %v2783 = vand.u32 %v2782, 4294901760
        %2784 = vmatpush1.msra.mxu0 %v2783
        %2785 = vmatprep.subr.mxu0 0.0
        %2786 = vmatpush1.msra.mxu0 0.0
        %2787 = vmatprep.subr.mxu0 0.0
        %2788 = vmatpush1.msra.mxu0 0.0
        %2789 = vmatprep.subr.mxu0 0.0
        %2790 = vmatpush1.msra.mxu0 0.0
        %2791 = vmatprep.subr.mxu0 0.0
        %2792 = vmatpush1.msra.mxu0 0.0
        %2793 = vmatprep.subr.mxu0 0.0
        %2794 = vmatpush1.msra.mxu0 0.0
        %2795 = vmatprep.subr.mxu0 0.0
        %2796 = vmatpush1.msra.mxu0 0.0
        %2797 = vmatprep.subr.mxu0 0.0
        %2798 = vmatpush1.msra.mxu0 0.0
        %2799 = vmatprep.subr.mxu0 0.0
        %2800 = vmatpush1.msra.mxu0 0.0
        %2801 = vmatprep.subr.mxu0 0.0
        %2802 = vmatpush1.msra.mxu0 0.0
        %2803 = vmatprep.subr.mxu0 0.0
        %2804 = vmatpush1.msra.mxu0 0.0
        %2805 = vmatprep.subr.mxu0 0.0
        %2806 = vmatpush1.msra.mxu0 0.0
        %2807 = vmatprep.subr.mxu0 0.0
        %2808 = vmatpush1.msra.mxu0 0.0
        %2809 = vmatprep.subr.mxu0 0.0
        %2810 = vmatpush1.msra.mxu0 0.0
        %2811 = vmatprep.subr.mxu0 0.0
        %2812 = vmatpush1.msra.mxu0 0.0
        %2813 = vmatprep.subr.mxu0 0.0
        %2814 = vmatpush1.msra.mxu0 0.0
        %2815 = vmatprep.subr.mxu0 0.0
        %2816 = vmatpush1.msra.mxu0 0.0
        %2817 = vmatprep.subr.mxu0 0.0
        %2818 = vmatpush1.msra.mxu0 0.0
        %2819 = vmatprep.subr.mxu0 0.0
        %2820 = vmatpush1.msra.mxu0 0.0
        %2821 = vmatprep.subr.mxu0 0.0
        %2822 = vmatpush1.msra.mxu0 0.0
        %2823 = vmatprep.subr.mxu0 0.0
        %2824 = vmatpush1.msra.mxu0 0.0
        %2825 = vmatprep.subr.mxu0 0.0
        %2826 = vmatpush1.msra.mxu0 0.0
        %2827 = vmatprep.subr.mxu0 0.0
        %2828 = vmatpush1.msra.mxu0 0.0
        %2829 = vmatprep.subr.mxu0 0.0
        %2830 = vmatpush1.msra.mxu0 0.0
        %2831 = vmatprep.subr.mxu0 0.0
        %2832 = vmatpush1.msra.mxu0 0.0
        %2833 = vmatprep.subr.mxu0 0.0
        %2834 = vmatpush1.msra.mxu0 0.0
        %2835 = vmatprep.subr.mxu0 0.0
        %2836 = vmatpush1.msra.mxu0 0.0
        %2837 = vmatprep.subr.mxu0 0.0
        %2838 = vmatpush1.msra.mxu0 0.0
        %2839 = vmatprep.subr.mxu0 0.0
        %2840 = vmatpush1.msra.mxu0 0.0
        %2841 = vmatprep.mubr.f32.mxu0 0.0
        %v2842 = vand.u32 %v2436, 4294901760
        %2843 = vmatmul.mubr.f32.gmra.mrb[0].mxu0 %v2842
        %v2844 = vpop.f32.mrb[0].mxu0
        %v2845 = vadd.f32 %v2762, %v2844
        %v2846 = vpop.f32.mrb[0].mxu0
        %2847 = vdwg.mxu0
        %2848 = vmatprep.subr.mxu0 0.0
        %v2849 = vand.u32 %v2423, 4294901760
        %2850 = vmatpush1.msra.mxu0 %v2849
        %2851 = vmatprep.subr.mxu0 0.0
        %v2852 = vand.u32 %v2424, 4294901760
        %2853 = vmatpush1.msra.mxu0 %v2852
        %2854 = vmatprep.subr.mxu0 0.0
        %v2855 = vand.u32 %v2425, 4294901760
        %2856 = vmatpush1.msra.mxu0 %v2855
        %2857 = vmatprep.subr.mxu0 0.0
        %v2858 = vand.u32 %v2426, 4294901760
        %2859 = vmatpush1.msra.mxu0 %v2858
        %2860 = vmatprep.subr.mxu0 0.0
        %2861 = vmatpush1.msra.mxu0 0.0
        %2862 = vmatprep.subr.mxu0 0.0
        %2863 = vmatpush1.msra.mxu0 0.0
        %2864 = vmatprep.subr.mxu0 0.0
        %2865 = vmatpush1.msra.mxu0 0.0
        %2866 = vmatprep.subr.mxu0 0.0
        %2867 = vmatpush1.msra.mxu0 0.0
        %2868 = vmatprep.subr.mxu0 0.0
        %2869 = vmatpush1.msra.mxu0 0.0
        %2870 = vmatprep.subr.mxu0 0.0
        %2871 = vmatpush1.msra.mxu0 0.0
        %2872 = vmatprep.subr.mxu0 0.0
        %2873 = vmatpush1.msra.mxu0 0.0
        %2874 = vmatprep.subr.mxu0 0.0
        %2875 = vmatpush1.msra.mxu0 0.0
        %2876 = vmatprep.subr.mxu0 0.0
        %2877 = vmatpush1.msra.mxu0 0.0
        %2878 = vmatprep.subr.mxu0 0.0
        %2879 = vmatpush1.msra.mxu0 0.0
        %2880 = vmatprep.subr.mxu0 0.0
        %2881 = vmatpush1.msra.mxu0 0.0
        %2882 = vmatprep.subr.mxu0 0.0
        %2883 = vmatpush1.msra.mxu0 0.0
        %2884 = vmatprep.subr.mxu0 0.0
        %2885 = vmatpush1.msra.mxu0 0.0
        %2886 = vmatprep.subr.mxu0 0.0
        %2887 = vmatpush1.msra.mxu0 0.0
        %2888 = vmatprep.subr.mxu0 0.0
        %2889 = vmatpush1.msra.mxu0 0.0
        %2890 = vmatprep.subr.mxu0 0.0
        %2891 = vmatpush1.msra.mxu0 0.0
        %2892 = vmatprep.subr.mxu0 0.0
        %2893 = vmatpush1.msra.mxu0 0.0
        %2894 = vmatprep.subr.mxu0 0.0
        %2895 = vmatpush1.msra.mxu0 0.0
        %2896 = vmatprep.subr.mxu0 0.0
        %2897 = vmatpush1.msra.mxu0 0.0
        %2898 = vmatprep.subr.mxu0 0.0
        %2899 = vmatpush1.msra.mxu0 0.0
        %2900 = vmatprep.subr.mxu0 0.0
        %2901 = vmatpush1.msra.mxu0 0.0
        %2902 = vmatprep.subr.mxu0 0.0
        %2903 = vmatpush1.msra.mxu0 0.0
        %2904 = vmatprep.subr.mxu0 0.0
        %2905 = vmatpush1.msra.mxu0 0.0
        %2906 = vmatprep.subr.mxu0 0.0
        %2907 = vmatpush1.msra.mxu0 0.0
        %2908 = vmatprep.subr.mxu0 0.0
        %2909 = vmatpush1.msra.mxu0 0.0
        %2910 = vmatprep.subr.mxu0 0.0
        %2911 = vmatpush1.msra.mxu0 0.0
        %2912 = vmatprep.subr.mxu0 0.0
        %2913 = vmatpush1.msra.mxu0 0.0
        %2914 = vmatprep.subr.mxu0 0.0
        %2915 = vmatpush1.msra.mxu0 0.0
        %2916 = vmatprep.mubr.f32.mxu0 0.0
        %v2917 = vand.u32 %v2436, 4294901760
        %2918 = vmatmul.mubr.f32.gmra.mrb[0].mxu0 %v2917
        %v2919 = vpop.f32.mrb[0].mxu0
        %v2920 = vadd.f32 %v2845, %v2919
        %v2921 = vpop.f32.mrb[0].mxu0
        %2922 = vdwg.mxu0
        %2924 = vrot.lane.b32.xlu0 %v2920, 120
        %v2925 = vpop.permute.xlu0 %2924
        %2927 = vrot.lane.b32.xlu0 %v2920, 112
        %v2928 = vpop.permute.xlu0 %2927
        %2930 = vrot.lane.b32.xlu0 %v2920, 104
        %v2931 = vpop.permute.xlu0 %2930
        %v2933 = vcombine.low %v2920, %v2928
        %v2934 = vcombine.high %v2920, %v2928
        %v2936 = vunpack.c.l.s4 1983009808
        %v2937 = vunpack.c.0.s8 %v2936
        %v2938 = vlaneseq
        %v2939 = vshrl.u32 %v2938, 7
        %v2940 = vsub.s32 %v2937, %v2939
        %v2941 = vrot.slane %v2933, %v2940
        %v2943 = vunpack.c.l.s4 1983009808
        %v2944 = vunpack.c.0.s8 %v2943
        %v2945 = vlaneseq
        %v2946 = vshrl.u32 %v2945, 7
        %v2947 = vsub.s32 %v2944, %v2946
        %v2948 = vrot.slane %v2934, %v2947
        %v2949 = vcombine.low %v2925, %v2931
        %v2950 = vcombine.high %v2925, %v2931
        %v2952 = vunpack.c.l.s4 1983009808
        %v2953 = vunpack.c.0.s8 %v2952
        %v2954 = vlaneseq
        %v2955 = vshrl.u32 %v2954, 7
        %v2956 = vsub.s32 %v2953, %v2955
        %v2957 = vrot.slane %v2949, %v2956
        %v2959 = vunpack.c.l.s4 1983009808
        %v2960 = vunpack.c.0.s8 %v2959
        %v2961 = vlaneseq
        %v2962 = vshrl.u32 %v2961, 7
        %v2963 = vsub.s32 %v2960, %v2962
        %v2964 = vrot.slane %v2950, %v2963
        %v2965 = vcombine.low %v2941, %v2957
        %v2966 = vcombine.high %v2941, %v2957
        %v2968 = vunpack.c.l.s4 1934713408
        %v2969 = vunpack.c.0.s8 %v2968
        %v2970 = vlaneseq
        %v2971 = vshrl.u32 %v2970, 7
        %v2972 = vsub.s32 %v2969, %v2971
        %v2973 = vrot.slane %v2965, %v2972
        %v2975 = vunpack.c.l.s4 1934713408
        %v2976 = vunpack.c.0.s8 %v2975
        %v2977 = vlaneseq
        %v2978 = vshrl.u32 %v2977, 7
        %v2979 = vsub.s32 %v2976, %v2978
        %v2980 = vrot.slane %v2966, %v2979
        %v2981 = vcombine.low %v2948, %v2964
        %v2982 = vcombine.high %v2948, %v2964
        %v2984 = vunpack.c.l.s4 1934713408
        %v2985 = vunpack.c.0.s8 %v2984
        %v2986 = vlaneseq
        %v2987 = vshrl.u32 %v2986, 7
        %v2988 = vsub.s32 %v2985, %v2987
        %v2989 = vrot.slane %v2981, %v2988
        %v2991 = vunpack.c.l.s4 1934713408
        %v2992 = vunpack.c.0.s8 %v2991
        %v2993 = vlaneseq
        %v2994 = vshrl.u32 %v2993, 7
        %v2995 = vsub.s32 %v2992, %v2994
        %v2996 = vrot.slane %v2982, %v2995
        %v2997 = vcombine.high %v2973, 0.0
        %v2998 = vcombine.high %v2980, 0.0
        %v2999 = vcombine.high %v2989, 0.0
        %v3000 = vcombine.high %v2996, 0.0
        %v3001 = vcombine.low %v2973, %v2980
        %v3003 = vunpack.c.l.s4 1983009808
        %v3004 = vunpack.c.0.s8 %v3003
        %v3005 = vlaneseq
        %v3006 = vshrl.u32 %v3005, 7
        %v3007 = vsub.s32 %v3004, %v3006
        %v3008 = vrot.slane %v3001, %v3007
        %v3009 = vcombine.low %v2997, %v2998
        %v3011 = vunpack.c.l.s4 1983009808
        %v3012 = vunpack.c.0.s8 %v3011
        %v3013 = vlaneseq
        %v3014 = vshrl.u32 %v3013, 7
        %v3015 = vsub.s32 %v3012, %v3014
        %v3016 = vrot.slane %v3009, %v3015
        %v3017 = vcombine.low %v2989, %v2996
        %v3019 = vunpack.c.l.s4 1983009808
        %v3020 = vunpack.c.0.s8 %v3019
        %v3021 = vlaneseq
        %v3022 = vshrl.u32 %v3021, 7
        %v3023 = vsub.s32 %v3020, %v3022
        %v3024 = vrot.slane %v3017, %v3023
        %v3025 = vcombine.low %v2999, %v3000
        %v3027 = vunpack.c.l.s4 1983009808
        %v3028 = vunpack.c.0.s8 %v3027
        %v3029 = vlaneseq
        %v3030 = vshrl.u32 %v3029, 7
        %v3031 = vsub.s32 %v3028, %v3030
        %v3032 = vrot.slane %v3025, %v3031
        %v3033 = vcombine.low %v3008, %v3016
        %v3034 = vcombine.high %v3008, %v3016
        %v3036 = vunpack.c.l.s4 1934713408
        %v3037 = vunpack.c.0.s8 %v3036
        %v3038 = vlaneseq
        %v3039 = vshrl.u32 %v3038, 7
        %v3040 = vsub.s32 %v3037, %v3039
        %v3041 = vrot.slane %v3033, %v3040
        %v3043 = vunpack.c.l.s4 1934713408
        %v3044 = vunpack.c.0.s8 %v3043
        %v3045 = vlaneseq
        %v3046 = vshrl.u32 %v3045, 7
        %v3047 = vsub.s32 %v3044, %v3046
        %v3048 = vrot.slane %v3034, %v3047
        %v3049 = vcombine.low %v3024, %v3032
        %v3050 = vcombine.high %v3024, %v3032
        %v3052 = vunpack.c.l.s4 1934713408
        %v3053 = vunpack.c.0.s8 %v3052
        %v3054 = vlaneseq
        %v3055 = vshrl.u32 %v3054, 7
        %v3056 = vsub.s32 %v3053, %v3055
        %v3057 = vrot.slane %v3049, %v3056
        %v3059 = vunpack.c.l.s4 1934713408
        %v3060 = vunpack.c.0.s8 %v3059
        %v3061 = vlaneseq
        %v3062 = vshrl.u32 %v3061, 7
        %v3063 = vsub.s32 %v3060, %v3062
        %v3064 = vrot.slane %v3050, %v3063
        %v3065 = vcombine.low %v3041, %v3057
        %v3066 = vcombine.high %v3041, %v3057
        %v3067 = vcombine.low %v3048, %v3064
        %v3068 = vcombine.high %v3048, %v3064
        %s3069 = sadd.s32 %s35, 1
        // While loop
        $region97: #{tpu_custom_call.1} parent=55 // loop_pre_header
          _
        $region98: #{tpu_custom_call.1} parent=55 // loop_header
          %s3071 = sphi 0, %s3073
          %p3072 = scmp.ge.s32.totalorder %s3071, %s3069
          %v3076 = vphi -1e+30, %v4919
          %v3077 = vphi -1e+30, %v4920
          %v3078 = vphi -1e+30, %v4921
          %v3079 = vphi -1e+30, %v4922
          %v3080 = vphi 0.0, %v4963
          %v3081 = vphi 0.0, %v4964
          %v3082 = vphi 0.0, %v4965
          %v3083 = vphi 0.0, %v4966
          %v3084 = vphi 0.0, %v6767
          %v3085 = vphi 0.0, %v6768
          %v3086 = vphi 0.0, %v6769
          %v3087 = vphi 0.0, %v6770
        $region99: #{tpu_custom_call.1} parent=55 // loop_header_branch
          %3075 = sbr.rel (%p3072) target = $region103
        $region100: #{tpu_custom_call.1} parent=55 // loop_body
          %s3088 = smul.u32 %s3071, 32
          %s3089 = scalar_lea.vmem [#allocation2], %s3088
          %v3090 = vld [vmem:[%s3089] sm:$0xff]
          %v3091 = vld [vmem:[%s3089 + $0x8] sm:$0xff]
          %v3092 = vld [vmem:[%s3089 + $0x10] sm:$0xff]
          %v3093 = vld [vmem:[%s3089 + $0x18] sm:$0xff]
          %s3094 = scalar_lea.vmem [#allocation3], %s3088
          %v3095 = vld [vmem:[%s3094] sm:$0xff]
          %v3096 = vld [vmem:[%s3094 + $0x8] sm:$0xff]
          %v3097 = vld [vmem:[%s3094 + $0x10] sm:$0xff]
          %v3098 = vld [vmem:[%s3094 + $0x18] sm:$0xff]
          %v3099 = vlaneseq
          %v3100 = vshrl.u32 %v3099, 7
          %v3101 = vstv %s2420
          %v3102 = vadd.s32 %v3101, %v3100
          %s3103 = smul.u32 %s3071, 8
          %v3104 = vlaneseq
          %v3105 = vand.u32 %v3104, 127
          %v3106 = vstv %s3103
          %v3107 = vadd.s32 %v3106, %v3105
          %vm3108 = vcmp.ge.s32.totalorder %v3102, %v3107
          %v3109 = vsel %vm3108, 0.0, -1e+30
          %vm3110 = vcmask 64512
          %v3112 = vsel %vm3110, %v3065, 0
          %3114 = vmatprep.subr.mxu0 0.0
          %v3115 = vand.u32 %v3090, 4294901760
          %3116 = vmatpush1.msra.mxu0 %v3115
          %3117 = vmatprep.subr.mxu0 0.0
          %3118 = vmatpush1.msra.mxu0 0.0
          %3119 = vmatprep.subr.mxu0 0.0
          %3120 = vmatpush1.msra.mxu0 0.0
          %3121 = vmatprep.subr.mxu0 0.0
          %3122 = vmatpush1.msra.mxu0 0.0
          %3123 = vmatprep.subr.mxu0 0.0
          %3124 = vmatpush1.msra.mxu0 0.0
          %3125 = vmatprep.subr.mxu0 0.0
          %3126 = vmatpush1.msra.mxu0 0.0
          %3127 = vmatprep.subr.mxu0 0.0
          %3128 = vmatpush1.msra.mxu0 0.0
          %3129 = vmatprep.subr.mxu0 0.0
          %3130 = vmatpush1.msra.mxu0 0.0
          %3131 = vmatprep.subr.mxu0 0.0
          %3132 = vmatpush1.msra.mxu0 0.0
          %3133 = vmatprep.subr.mxu0 0.0
          %3134 = vmatpush1.msra.mxu0 0.0
          %3135 = vmatprep.subr.mxu0 0.0
          %3136 = vmatpush1.msra.mxu0 0.0
          %3137 = vmatprep.subr.mxu0 0.0
          %3138 = vmatpush1.msra.mxu0 0.0
          %3139 = vmatprep.subr.mxu0 0.0
          %3140 = vmatpush1.msra.mxu0 0.0
          %3141 = vmatprep.subr.mxu0 0.0
          %3142 = vmatpush1.msra.mxu0 0.0
          %3143 = vmatprep.subr.mxu0 0.0
          %3144 = vmatpush1.msra.mxu0 0.0
          %3145 = vmatprep.subr.mxu0 0.0
          %3146 = vmatpush1.msra.mxu0 0.0
          %3147 = vmatprep.subr.mxu0 0.0
          %3148 = vmatpush1.msra.mxu0 0.0
          %3149 = vmatprep.subr.mxu0 0.0
          %3150 = vmatpush1.msra.mxu0 0.0
          %3151 = vmatprep.subr.mxu0 0.0
          %3152 = vmatpush1.msra.mxu0 0.0
          %3153 = vmatprep.subr.mxu0 0.0
          %3154 = vmatpush1.msra.mxu0 0.0
          %3155 = vmatprep.subr.mxu0 0.0
          %3156 = vmatpush1.msra.mxu0 0.0
          %3157 = vmatprep.subr.mxu0 0.0
          %3158 = vmatpush1.msra.mxu0 0.0
          %3159 = vmatprep.subr.mxu0 0.0
          %3160 = vmatpush1.msra.mxu0 0.0
          %3161 = vmatprep.subr.mxu0 0.0
          %3162 = vmatpush1.msra.mxu0 0.0
          %3163 = vmatprep.subr.mxu0 0.0
          %3164 = vmatpush1.msra.mxu0 0.0
          %3165 = vmatprep.subr.mxu0 0.0
          %3166 = vmatpush1.msra.mxu0 0.0
          %3167 = vmatprep.subr.mxu0 0.0
          %3168 = vmatpush1.msra.mxu0 0.0
          %3169 = vmatprep.subr.mxu0 0.0
          %3170 = vmatpush1.msra.mxu0 0.0
          %3171 = vmatprep.subr.mxu0 0.0
          %3172 = vmatpush1.msra.mxu0 0.0
          %3173 = vmatprep.subr.mxu0 0.0
          %3174 = vmatpush1.msra.mxu0 0.0
          %3175 = vmatprep.subr.mxu0 0.0
          %3176 = vmatpush1.msra.mxu0 0.0
          %3177 = vmatprep.subr.mxu0 0.0
          %3178 = vmatpush1.msra.mxu0 0.0
          %3179 = vmatprep.mubr.f32.mxu0 0.0
          %v3180 = vand.u32 %v3112, 4294901760
          %v3181 = vsub.f32 %v3112, %v3180
          %v3182 = vand.u32 %v3181, 4294901760
          %v3183 = vsub.f32 %v3181, %v3182
          %v3184 = vand.u32 %v3183, 4294901760
          %3185 = vmatmul.mubr.f32.gmra.mrb[0].mxu0 %v3184
          %v3186 = vpop.f32.mrb[0].mxu0
          %v3187 = vadd.f32 %v3109, %v3186
          %v3188 = vpop.f32.mrb[0].mxu0
          %3189 = vdwg.mxu0
          %3190 = vmatprep.subr.mxu0 0.0
          %v3191 = vand.u32 %v3090, 4294901760
          %v3192 = vsub.f32 %v3090, %v3191
          %v3193 = vand.u32 %v3192, 4294901760
          %v3194 = vsub.f32 %v3192, %v3193
          %v3195 = vand.u32 %v3194, 4294901760
          %3196 = vmatpush1.msra.mxu0 %v3195
          %3197 = vmatprep.subr.mxu0 0.0
          %3198 = vmatpush1.msra.mxu0 0.0
          %3199 = vmatprep.subr.mxu0 0.0
          %3200 = vmatpush1.msra.mxu0 0.0
          %3201 = vmatprep.subr.mxu0 0.0
          %3202 = vmatpush1.msra.mxu0 0.0
          %3203 = vmatprep.subr.mxu0 0.0
          %3204 = vmatpush1.msra.mxu0 0.0
          %3205 = vmatprep.subr.mxu0 0.0
          %3206 = vmatpush1.msra.mxu0 0.0
          %3207 = vmatprep.subr.mxu0 0.0
          %3208 = vmatpush1.msra.mxu0 0.0
          %3209 = vmatprep.subr.mxu0 0.0
          %3210 = vmatpush1.msra.mxu0 0.0
          %3211 = vmatprep.subr.mxu0 0.0
          %3212 = vmatpush1.msra.mxu0 0.0
          %3213 = vmatprep.subr.mxu0 0.0
          %3214 = vmatpush1.msra.mxu0 0.0
          %3215 = vmatprep.subr.mxu0 0.0
          %3216 = vmatpush1.msra.mxu0 0.0
          %3217 = vmatprep.subr.mxu0 0.0
          %3218 = vmatpush1.msra.mxu0 0.0
          %3219 = vmatprep.subr.mxu0 0.0
          %3220 = vmatpush1.msra.mxu0 0.0
          %3221 = vmatprep.subr.mxu0 0.0
          %3222 = vmatpush1.msra.mxu0 0.0
          %3223 = vmatprep.subr.mxu0 0.0
          %3224 = vmatpush1.msra.mxu0 0.0
          %3225 = vmatprep.subr.mxu0 0.0
          %3226 = vmatpush1.msra.mxu0 0.0
          %3227 = vmatprep.subr.mxu0 0.0
          %3228 = vmatpush1.msra.mxu0 0.0
          %3229 = vmatprep.subr.mxu0 0.0
          %3230 = vmatpush1.msra.mxu0 0.0
          %3231 = vmatprep.subr.mxu0 0.0
          %3232 = vmatpush1.msra.mxu0 0.0
          %3233 = vmatprep.subr.mxu0 0.0
          %3234 = vmatpush1.msra.mxu0 0.0
          %3235 = vmatprep.subr.mxu0 0.0
          %3236 = vmatpush1.msra.mxu0 0.0
          %3237 = vmatprep.subr.mxu0 0.0
          %3238 = vmatpush1.msra.mxu0 0.0
          %3239 = vmatprep.subr.mxu0 0.0
          %3240 = vmatpush1.msra.mxu0 0.0
          %3241 = vmatprep.subr.mxu0 0.0
          %3242 = vmatpush1.msra.mxu0 0.0
          %3243 = vmatprep.subr.mxu0 0.0
          %3244 = vmatpush1.msra.mxu0 0.0
          %3245 = vmatprep.subr.mxu0 0.0
          %3246 = vmatpush1.msra.mxu0 0.0
          %3247 = vmatprep.subr.mxu0 0.0
          %3248 = vmatpush1.msra.mxu0 0.0
          %3249 = vmatprep.subr.mxu0 0.0
          %3250 = vmatpush1.msra.mxu0 0.0
          %3251 = vmatprep.subr.mxu0 0.0
          %3252 = vmatpush1.msra.mxu0 0.0
          %3253 = vmatprep.subr.mxu0 0.0
          %3254 = vmatpush1.msra.mxu0 0.0
          %3255 = vmatprep.subr.mxu0 0.0
          %3256 = vmatpush1.msra.mxu0 0.0
          %3257 = vmatprep.subr.mxu0 0.0
          %3258 = vmatpush1.msra.mxu0 0.0
          %3259 = vmatprep.mubr.f32.mxu0 0.0
          %v3260 = vand.u32 %v3112, 4294901760
          %3261 = vmatmul.mubr.f32.gmra.mrb[0].mxu0 %v3260
          %v3262 = vpop.f32.mrb[0].mxu0
          %v3263 = vadd.f32 %v3187, %v3262
          %v3264 = vpop.f32.mrb[0].mxu0
          %3265 = vdwg.mxu0
          %3266 = vmatprep.subr.mxu0 0.0
          %v3267 = vand.u32 %v3090, 4294901760
          %v3268 = vsub.f32 %v3090, %v3267
          %3269 = vmatpush1.msra.mxu0 %v3268
          %3270 = vmatprep.subr.mxu0 0.0
          %3271 = vmatpush1.msra.mxu0 0.0
          %3272 = vmatprep.subr.mxu0 0.0
          %3273 = vmatpush1.msra.mxu0 0.0
          %3274 = vmatprep.subr.mxu0 0.0
          %3275 = vmatpush1.msra.mxu0 0.0
          %3276 = vmatprep.subr.mxu0 0.0
          %3277 = vmatpush1.msra.mxu0 0.0
          %3278 = vmatprep.subr.mxu0 0.0
          %3279 = vmatpush1.msra.mxu0 0.0
          %3280 = vmatprep.subr.mxu0 0.0
          %3281 = vmatpush1.msra.mxu0 0.0
          %3282 = vmatprep.subr.mxu0 0.0
          %3283 = vmatpush1.msra.mxu0 0.0
          %3284 = vmatprep.subr.mxu0 0.0
          %3285 = vmatpush1.msra.mxu0 0.0
          %3286 = vmatprep.subr.mxu0 0.0
          %3287 = vmatpush1.msra.mxu0 0.0
          %3288 = vmatprep.subr.mxu0 0.0
          %3289 = vmatpush1.msra.mxu0 0.0
          %3290 = vmatprep.subr.mxu0 0.0
          %3291 = vmatpush1.msra.mxu0 0.0
          %3292 = vmatprep.subr.mxu0 0.0
          %3293 = vmatpush1.msra.mxu0 0.0
          %3294 = vmatprep.subr.mxu0 0.0
          %3295 = vmatpush1.msra.mxu0 0.0
          %3296 = vmatprep.subr.mxu0 0.0
          %3297 = vmatpush1.msra.mxu0 0.0
          %3298 = vmatprep.subr.mxu0 0.0
          %3299 = vmatpush1.msra.mxu0 0.0
          %3300 = vmatprep.subr.mxu0 0.0
          %3301 = vmatpush1.msra.mxu0 0.0
          %3302 = vmatprep.subr.mxu0 0.0
          %3303 = vmatpush1.msra.mxu0 0.0
          %3304 = vmatprep.subr.mxu0 0.0
          %3305 = vmatpush1.msra.mxu0 0.0
          %3306 = vmatprep.subr.mxu0 0.0
          %3307 = vmatpush1.msra.mxu0 0.0
          %3308 = vmatprep.subr.mxu0 0.0
          %3309 = vmatpush1.msra.mxu0 0.0
          %3310 = vmatprep.subr.mxu0 0.0
          %3311 = vmatpush1.msra.mxu0 0.0
          %3312 = vmatprep.subr.mxu0 0.0
          %3313 = vmatpush1.msra.mxu0 0.0
          %3314 = vmatprep.subr.mxu0 0.0
          %3315 = vmatpush1.msra.mxu0 0.0
          %3316 = vmatprep.subr.mxu0 0.0
          %3317 = vmatpush1.msra.mxu0 0.0
          %3318 = vmatprep.subr.mxu0 0.0
          %3319 = vmatpush1.msra.mxu0 0.0
          %3320 = vmatprep.subr.mxu0 0.0
          %3321 = vmatpush1.msra.mxu0 0.0
          %3322 = vmatprep.subr.mxu0 0.0
          %3323 = vmatpush1.msra.mxu0 0.0
          %3324 = vmatprep.subr.mxu0 0.0
          %3325 = vmatpush1.msra.mxu0 0.0
          %3326 = vmatprep.subr.mxu0 0.0
          %3327 = vmatpush1.msra.mxu0 0.0
          %3328 = vmatprep.subr.mxu0 0.0
          %3329 = vmatpush1.msra.mxu0 0.0
          %3330 = vmatprep.subr.mxu0 0.0
          %3331 = vmatpush1.msra.mxu0 0.0
          %3332 = vmatprep.mubr.f32.mxu0 0.0
          %v3333 = vand.u32 %v3112, 4294901760
          %v3334 = vsub.f32 %v3112, %v3333
          %3335 = vmatmul.mubr.f32.gmra.mrb[0].mxu0 %v3334
          %v3336 = vpop.f32.mrb[0].mxu0
          %v3337 = vadd.f32 %v3263, %v3336
          %v3338 = vpop.f32.mrb[0].mxu0
          %3339 = vdwg.mxu0
          %3340 = vmatprep.subr.mxu0 0.0
          %v3341 = vand.u32 %v3090, 4294901760
          %3342 = vmatpush1.msra.mxu0 %v3341
          %3343 = vmatprep.subr.mxu0 0.0
          %3344 = vmatpush1.msra.mxu0 0.0
          %3345 = vmatprep.subr.mxu0 0.0
          %3346 = vmatpush1.msra.mxu0 0.0
          %3347 = vmatprep.subr.mxu0 0.0
          %3348 = vmatpush1.msra.mxu0 0.0
          %3349 = vmatprep.subr.mxu0 0.0
          %3350 = vmatpush1.msra.mxu0 0.0
          %3351 = vmatprep.subr.mxu0 0.0
          %3352 = vmatpush1.msra.mxu0 0.0
          %3353 = vmatprep.subr.mxu0 0.0
          %3354 = vmatpush1.msra.mxu0 0.0
          %3355 = vmatprep.subr.mxu0 0.0
          %3356 = vmatpush1.msra.mxu0 0.0
          %3357 = vmatprep.subr.mxu0 0.0
          %3358 = vmatpush1.msra.mxu0 0.0
          %3359 = vmatprep.subr.mxu0 0.0
          %3360 = vmatpush1.msra.mxu0 0.0
          %3361 = vmatprep.subr.mxu0 0.0
          %3362 = vmatpush1.msra.mxu0 0.0
          %3363 = vmatprep.subr.mxu0 0.0
          %3364 = vmatpush1.msra.mxu0 0.0
          %3365 = vmatprep.subr.mxu0 0.0
          %3366 = vmatpush1.msra.mxu0 0.0
          %3367 = vmatprep.subr.mxu0 0.0
          %3368 = vmatpush1.msra.mxu0 0.0
          %3369 = vmatprep.subr.mxu0 0.0
          %3370 = vmatpush1.msra.mxu0 0.0
          %3371 = vmatprep.subr.mxu0 0.0
          %3372 = vmatpush1.msra.mxu0 0.0
          %3373 = vmatprep.subr.mxu0 0.0
          %3374 = vmatpush1.msra.mxu0 0.0
          %3375 = vmatprep.subr.mxu0 0.0
          %3376 = vmatpush1.msra.mxu0 0.0
          %3377 = vmatprep.subr.mxu0 0.0
          %3378 = vmatpush1.msra.mxu0 0.0
          %3379 = vmatprep.subr.mxu0 0.0
          %3380 = vmatpush1.msra.mxu0 0.0
          %3381 = vmatprep.subr.mxu0 0.0
          %3382 = vmatpush1.msra.mxu0 0.0
          %3383 = vmatprep.subr.mxu0 0.0
          %3384 = vmatpush1.msra.mxu0 0.0
          %3385 = vmatprep.subr.mxu0 0.0
          %3386 = vmatpush1.msra.mxu0 0.0
          %3387 = vmatprep.subr.mxu0 0.0
          %3388 = vmatpush1.msra.mxu0 0.0
          %3389 = vmatprep.subr.mxu0 0.0
          %3390 = vmatpush1.msra.mxu0 0.0
          %3391 = vmatprep.subr.mxu0 0.0
          %3392 = vmatpush1.msra.mxu0 0.0
          %3393 = vmatprep.subr.mxu0 0.0
          %3394 = vmatpush1.msra.mxu0 0.0
          %3395 = vmatprep.subr.mxu0 0.0
          %3396 = vmatpush1.msra.mxu0 0.0
          %3397 = vmatprep.subr.mxu0 0.0
          %3398 = vmatpush1.msra.mxu0 0.0
          %3399 = vmatprep.subr.mxu0 0.0
          %3400 = vmatpush1.msra.mxu0 0.0
          %3401 = vmatprep.subr.mxu0 0.0
          %3402 = vmatpush1.msra.mxu0 0.0
          %3403 = vmatprep.subr.mxu0 0.0
          %3404 = vmatpush1.msra.mxu0 0.0
          %3405 = vmatprep.mubr.f32.mxu0 0.0
          %v3406 = vand.u32 %v3112, 4294901760
          %v3407 = vsub.f32 %v3112, %v3406
          %v3408 = vand.u32 %v3407, 4294901760
          %3409 = vmatmul.mubr.f32.gmra.mrb[0].mxu0 %v3408
          %v3410 = vpop.f32.mrb[0].mxu0
          %v3411 = vadd.f32 %v3337, %v3410
          %v3412 = vpop.f32.mrb[0].mxu0
          %3413 = vdwg.mxu0
          %3414 = vmatprep.subr.mxu0 0.0
          %v3415 = vand.u32 %v3090, 4294901760
          %v3416 = vsub.f32 %v3090, %v3415
          %v3417 = vand.u32 %v3416, 4294901760
          %3418 = vmatpush1.msra.mxu0 %v3417
          %3419 = vmatprep.subr.mxu0 0.0
          %3420 = vmatpush1.msra.mxu0 0.0
          %3421 = vmatprep.subr.mxu0 0.0
          %3422 = vmatpush1.msra.mxu0 0.0
          %3423 = vmatprep.subr.mxu0 0.0
          %3424 = vmatpush1.msra.mxu0 0.0
          %3425 = vmatprep.subr.mxu0 0.0
          %3426 = vmatpush1.msra.mxu0 0.0
          %3427 = vmatprep.subr.mxu0 0.0
          %3428 = vmatpush1.msra.mxu0 0.0
          %3429 = vmatprep.subr.mxu0 0.0
          %3430 = vmatpush1.msra.mxu0 0.0
          %3431 = vmatprep.subr.mxu0 0.0
          %3432 = vmatpush1.msra.mxu0 0.0
          %3433 = vmatprep.subr.mxu0 0.0
          %3434 = vmatpush1.msra.mxu0 0.0
          %3435 = vmatprep.subr.mxu0 0.0
          %3436 = vmatpush1.msra.mxu0 0.0
          %3437 = vmatprep.subr.mxu0 0.0
          %3438 = vmatpush1.msra.mxu0 0.0
          %3439 = vmatprep.subr.mxu0 0.0
          %3440 = vmatpush1.msra.mxu0 0.0
          %3441 = vmatprep.subr.mxu0 0.0
          %3442 = vmatpush1.msra.mxu0 0.0
          %3443 = vmatprep.subr.mxu0 0.0
          %3444 = vmatpush1.msra.mxu0 0.0
          %3445 = vmatprep.subr.mxu0 0.0
          %3446 = vmatpush1.msra.mxu0 0.0
          %3447 = vmatprep.subr.mxu0 0.0
          %3448 = vmatpush1.msra.mxu0 0.0
          %3449 = vmatprep.subr.mxu0 0.0
          %3450 = vmatpush1.msra.mxu0 0.0
          %3451 = vmatprep.subr.mxu0 0.0
          %3452 = vmatpush1.msra.mxu0 0.0
          %3453 = vmatprep.subr.mxu0 0.0
          %3454 = vmatpush1.msra.mxu0 0.0
          %3455 = vmatprep.subr.mxu0 0.0
          %3456 = vmatpush1.msra.mxu0 0.0
          %3457 = vmatprep.subr.mxu0 0.0
          %3458 = vmatpush1.msra.mxu0 0.0
          %3459 = vmatprep.subr.mxu0 0.0
          %3460 = vmatpush1.msra.mxu0 0.0
          %3461 = vmatprep.subr.mxu0 0.0
          %3462 = vmatpush1.msra.mxu0 0.0
          %3463 = vmatprep.subr.mxu0 0.0
          %3464 = vmatpush1.msra.mxu0 0.0
          %3465 = vmatprep.subr.mxu0 0.0
          %3466 = vmatpush1.msra.mxu0 0.0
          %3467 = vmatprep.subr.mxu0 0.0
          %3468 = vmatpush1.msra.mxu0 0.0
          %3469 = vmatprep.subr.mxu0 0.0
          %3470 = vmatpush1.msra.mxu0 0.0
          %3471 = vmatprep.subr.mxu0 0.0
          %3472 = vmatpush1.msra.mxu0 0.0
          %3473 = vmatprep.subr.mxu0 0.0
          %3474 = vmatpush1.msra.mxu0 0.0
          %3475 = vmatprep.subr.mxu0 0.0
          %3476 = vmatpush1.msra.mxu0 0.0
          %3477 = vmatprep.subr.mxu0 0.0
          %3478 = vmatpush1.msra.mxu0 0.0
          %3479 = vmatprep.subr.mxu0 0.0
          %3480 = vmatpush1.msra.mxu0 0.0
          %3481 = vmatprep.mubr.f32.mxu0 0.0
          %v3482 = vand.u32 %v3112, 4294901760
          %3483 = vmatmul.mubr.f32.gmra.mrb[0].mxu0 %v3482
          %v3484 = vpop.f32.mrb[0].mxu0
          %v3485 = vadd.f32 %v3411, %v3484
          %v3486 = vpop.f32.mrb[0].mxu0
          %3487 = vdwg.mxu0
          %3488 = vmatprep.subr.mxu0 0.0
          %v3489 = vand.u32 %v3090, 4294901760
          %3490 = vmatpush1.msra.mxu0 %v3489
          %3491 = vmatprep.subr.mxu0 0.0
          %3492 = vmatpush1.msra.mxu0 0.0
          %3493 = vmatprep.subr.mxu0 0.0
          %3494 = vmatpush1.msra.mxu0 0.0
          %3495 = vmatprep.subr.mxu0 0.0
          %3496 = vmatpush1.msra.mxu0 0.0
          %3497 = vmatprep.subr.mxu0 0.0
          %3498 = vmatpush1.msra.mxu0 0.0
          %3499 = vmatprep.subr.mxu0 0.0
          %3500 = vmatpush1.msra.mxu0 0.0
          %3501 = vmatprep.subr.mxu0 0.0
          %3502 = vmatpush1.msra.mxu0 0.0
          %3503 = vmatprep.subr.mxu0 0.0
          %3504 = vmatpush1.msra.mxu0 0.0
          %3505 = vmatprep.subr.mxu0 0.0
          %3506 = vmatpush1.msra.mxu0 0.0
          %3507 = vmatprep.subr.mxu0 0.0
          %3508 = vmatpush1.msra.mxu0 0.0
          %3509 = vmatprep.subr.mxu0 0.0
          %3510 = vmatpush1.msra.mxu0 0.0
          %3511 = vmatprep.subr.mxu0 0.0
          %3512 = vmatpush1.msra.mxu0 0.0
          %3513 = vmatprep.subr.mxu0 0.0
          %3514 = vmatpush1.msra.mxu0 0.0
          %3515 = vmatprep.subr.mxu0 0.0
          %3516 = vmatpush1.msra.mxu0 0.0
          %3517 = vmatprep.subr.mxu0 0.0
          %3518 = vmatpush1.msra.mxu0 0.0
          %3519 = vmatprep.subr.mxu0 0.0
          %3520 = vmatpush1.msra.mxu0 0.0
          %3521 = vmatprep.subr.mxu0 0.0
          %3522 = vmatpush1.msra.mxu0 0.0
          %3523 = vmatprep.subr.mxu0 0.0
          %3524 = vmatpush1.msra.mxu0 0.0
          %3525 = vmatprep.subr.mxu0 0.0
          %3526 = vmatpush1.msra.mxu0 0.0
          %3527 = vmatprep.subr.mxu0 0.0
          %3528 = vmatpush1.msra.mxu0 0.0
          %3529 = vmatprep.subr.mxu0 0.0
          %3530 = vmatpush1.msra.mxu0 0.0
          %3531 = vmatprep.subr.mxu0 0.0
          %3532 = vmatpush1.msra.mxu0 0.0
          %3533 = vmatprep.subr.mxu0 0.0
          %3534 = vmatpush1.msra.mxu0 0.0
          %3535 = vmatprep.subr.mxu0 0.0
          %3536 = vmatpush1.msra.mxu0 0.0
          %3537 = vmatprep.subr.mxu0 0.0
          %3538 = vmatpush1.msra.mxu0 0.0
          %3539 = vmatprep.subr.mxu0 0.0
          %3540 = vmatpush1.msra.mxu0 0.0
          %3541 = vmatprep.subr.mxu0 0.0
          %3542 = vmatpush1.msra.mxu0 0.0
          %3543 = vmatprep.subr.mxu0 0.0
          %3544 = vmatpush1.msra.mxu0 0.0
          %3545 = vmatprep.subr.mxu0 0.0
          %3546 = vmatpush1.msra.mxu0 0.0
          %3547 = vmatprep.subr.mxu0 0.0
          %3548 = vmatpush1.msra.mxu0 0.0
          %3549 = vmatprep.subr.mxu0 0.0
          %3550 = vmatpush1.msra.mxu0 0.0
          %3551 = vmatprep.subr.mxu0 0.0
          %3552 = vmatpush1.msra.mxu0 0.0
          %3553 = vmatprep.mubr.f32.mxu0 0.0
          %v3554 = vand.u32 %v3112, 4294901760
          %3555 = vmatmul.mubr.f32.gmra.mrb[0].mxu0 %v3554
          %v3556 = vpop.f32.mrb[0].mxu0
          %v3557 = vadd.f32 %v3485, %v3556
          %v3558 = vpop.f32.mrb[0].mxu0
          %3559 = vdwg.mxu0
          %v3561 = vsel %vm3110, %v3066, 0
          %3563 = vmatprep.subr.mxu0 0.0
          %v3564 = vand.u32 %v3091, 4294901760
          %3565 = vmatpush1.msra.mxu0 %v3564
          %3566 = vmatprep.subr.mxu0 0.0
          %3567 = vmatpush1.msra.mxu0 0.0
          %3568 = vmatprep.subr.mxu0 0.0
          %3569 = vmatpush1.msra.mxu0 0.0
          %3570 = vmatprep.subr.mxu0 0.0
          %3571 = vmatpush1.msra.mxu0 0.0
          %3572 = vmatprep.subr.mxu0 0.0
          %3573 = vmatpush1.msra.mxu0 0.0
          %3574 = vmatprep.subr.mxu0 0.0
          %3575 = vmatpush1.msra.mxu0 0.0
          %3576 = vmatprep.subr.mxu0 0.0
          %3577 = vmatpush1.msra.mxu0 0.0
          %3578 = vmatprep.subr.mxu0 0.0
          %3579 = vmatpush1.msra.mxu0 0.0
          %3580 = vmatprep.subr.mxu0 0.0
          %3581 = vmatpush1.msra.mxu0 0.0
          %3582 = vmatprep.subr.mxu0 0.0
          %3583 = vmatpush1.msra.mxu0 0.0
          %3584 = vmatprep.subr.mxu0 0.0
          %3585 = vmatpush1.msra.mxu0 0.0
          %3586 = vmatprep.subr.mxu0 0.0
          %3587 = vmatpush1.msra.mxu0 0.0
          %3588 = vmatprep.subr.mxu0 0.0
          %3589 = vmatpush1.msra.mxu0 0.0
          %3590 = vmatprep.subr.mxu0 0.0
          %3591 = vmatpush1.msra.mxu0 0.0
          %3592 = vmatprep.subr.mxu0 0.0
          %3593 = vmatpush1.msra.mxu0 0.0
          %3594 = vmatprep.subr.mxu0 0.0
          %3595 = vmatpush1.msra.mxu0 0.0
          %3596 = vmatprep.subr.mxu0 0.0
          %3597 = vmatpush1.msra.mxu0 0.0
          %3598 = vmatprep.subr.mxu0 0.0
          %3599 = vmatpush1.msra.mxu0 0.0
          %3600 = vmatprep.subr.mxu0 0.0
          %3601 = vmatpush1.msra.mxu0 0.0
          %3602 = vmatprep.subr.mxu0 0.0
          %3603 = vmatpush1.msra.mxu0 0.0
          %3604 = vmatprep.subr.mxu0 0.0
          %3605 = vmatpush1.msra.mxu0 0.0
          %3606 = vmatprep.subr.mxu0 0.0
          %3607 = vmatpush1.msra.mxu0 0.0
          %3608 = vmatprep.subr.mxu0 0.0
          %3609 = vmatpush1.msra.mxu0 0.0
          %3610 = vmatprep.subr.mxu0 0.0
          %3611 = vmatpush1.msra.mxu0 0.0
          %3612 = vmatprep.subr.mxu0 0.0
          %3613 = vmatpush1.msra.mxu0 0.0
          %3614 = vmatprep.subr.mxu0 0.0
          %3615 = vmatpush1.msra.mxu0 0.0
          %3616 = vmatprep.subr.mxu0 0.0
          %3617 = vmatpush1.msra.mxu0 0.0
          %3618 = vmatprep.subr.mxu0 0.0
          %3619 = vmatpush1.msra.mxu0 0.0
          %3620 = vmatprep.subr.mxu0 0.0
          %3621 = vmatpush1.msra.mxu0 0.0
          %3622 = vmatprep.subr.mxu0 0.0
          %3623 = vmatpush1.msra.mxu0 0.0
          %3624 = vmatprep.subr.mxu0 0.0
          %3625 = vmatpush1.msra.mxu0 0.0
          %3626 = vmatprep.subr.mxu0 0.0
          %3627 = vmatpush1.msra.mxu0 0.0
          %3628 = vmatprep.mubr.f32.mxu0 0.0
          %v3629 = vand.u32 %v3561, 4294901760
          %v3630 = vsub.f32 %v3561, %v3629
          %v3631 = vand.u32 %v3630, 4294901760
          %v3632 = vsub.f32 %v3630, %v3631
          %v3633 = vand.u32 %v3632, 4294901760
          %3634 = vmatmul.mubr.f32.gmra.mrb[0].mxu0 %v3633
          %v3635 = vpop.f32.mrb[0].mxu0
          %v3636 = vadd.f32 %v3109, %v3635
          %v3637 = vpop.f32.mrb[0].mxu0
          %3638 = vdwg.mxu0
          %3639 = vmatprep.subr.mxu0 0.0
          %v3640 = vand.u32 %v3091, 4294901760
          %v3641 = vsub.f32 %v3091, %v3640
          %v3642 = vand.u32 %v3641, 4294901760
          %v3643 = vsub.f32 %v3641, %v3642
          %v3644 = vand.u32 %v3643, 4294901760
          %3645 = vmatpush1.msra.mxu0 %v3644
          %3646 = vmatprep.subr.mxu0 0.0
          %3647 = vmatpush1.msra.mxu0 0.0
          %3648 = vmatprep.subr.mxu0 0.0
          %3649 = vmatpush1.msra.mxu0 0.0
          %3650 = vmatprep.subr.mxu0 0.0
          %3651 = vmatpush1.msra.mxu0 0.0
          %3652 = vmatprep.subr.mxu0 0.0
          %3653 = vmatpush1.msra.mxu0 0.0
          %3654 = vmatprep.subr.mxu0 0.0
          %3655 = vmatpush1.msra.mxu0 0.0
          %3656 = vmatprep.subr.mxu0 0.0
          %3657 = vmatpush1.msra.mxu0 0.0
          %3658 = vmatprep.subr.mxu0 0.0
          %3659 = vmatpush1.msra.mxu0 0.0
          %3660 = vmatprep.subr.mxu0 0.0
          %3661 = vmatpush1.msra.mxu0 0.0
          %3662 = vmatprep.subr.mxu0 0.0
          %3663 = vmatpush1.msra.mxu0 0.0
          %3664 = vmatprep.subr.mxu0 0.0
          %3665 = vmatpush1.msra.mxu0 0.0
          %3666 = vmatprep.subr.mxu0 0.0
          %3667 = vmatpush1.msra.mxu0 0.0
          %3668 = vmatprep.subr.mxu0 0.0
          %3669 = vmatpush1.msra.mxu0 0.0
          %3670 = vmatprep.subr.mxu0 0.0
          %3671 = vmatpush1.msra.mxu0 0.0
          %3672 = vmatprep.subr.mxu0 0.0
          %3673 = vmatpush1.msra.mxu0 0.0
          %3674 = vmatprep.subr.mxu0 0.0
          %3675 = vmatpush1.msra.mxu0 0.0
          %3676 = vmatprep.subr.mxu0 0.0
          %3677 = vmatpush1.msra.mxu0 0.0
          %3678 = vmatprep.subr.mxu0 0.0
          %3679 = vmatpush1.msra.mxu0 0.0
          %3680 = vmatprep.subr.mxu0 0.0
          %3681 = vmatpush1.msra.mxu0 0.0
          %3682 = vmatprep.subr.mxu0 0.0
          %3683 = vmatpush1.msra.mxu0 0.0
          %3684 = vmatprep.subr.mxu0 0.0
          %3685 = vmatpush1.msra.mxu0 0.0
          %3686 = vmatprep.subr.mxu0 0.0
          %3687 = vmatpush1.msra.mxu0 0.0
          %3688 = vmatprep.subr.mxu0 0.0
          %3689 = vmatpush1.msra.mxu0 0.0
          %3690 = vmatprep.subr.mxu0 0.0
          %3691 = vmatpush1.msra.mxu0 0.0
          %3692 = vmatprep.subr.mxu0 0.0
          %3693 = vmatpush1.msra.mxu0 0.0
          %3694 = vmatprep.subr.mxu0 0.0
          %3695 = vmatpush1.msra.mxu0 0.0
          %3696 = vmatprep.subr.mxu0 0.0
          %3697 = vmatpush1.msra.mxu0 0.0
          %3698 = vmatprep.subr.mxu0 0.0
          %3699 = vmatpush1.msra.mxu0 0.0
          %3700 = vmatprep.subr.mxu0 0.0
          %3701 = vmatpush1.msra.mxu0 0.0
          %3702 = vmatprep.subr.mxu0 0.0
          %3703 = vmatpush1.msra.mxu0 0.0
          %3704 = vmatprep.subr.mxu0 0.0
          %3705 = vmatpush1.msra.mxu0 0.0
          %3706 = vmatprep.subr.mxu0 0.0
          %3707 = vmatpush1.msra.mxu0 0.0
          %3708 = vmatprep.mubr.f32.mxu0 0.0
          %v3709 = vand.u32 %v3561, 4294901760
          %3710 = vmatmul.mubr.f32.gmra.mrb[0].mxu0 %v3709
          %v3711 = vpop.f32.mrb[0].mxu0
          %v3712 = vadd.f32 %v3636, %v3711
          %v3713 = vpop.f32.mrb[0].mxu0
          %3714 = vdwg.mxu0
          %3715 = vmatprep.subr.mxu0 0.0
          %v3716 = vand.u32 %v3091, 4294901760
          %v3717 = vsub.f32 %v3091, %v3716
          %3718 = vmatpush1.msra.mxu0 %v3717
          %3719 = vmatprep.subr.mxu0 0.0
          %3720 = vmatpush1.msra.mxu0 0.0
          %3721 = vmatprep.subr.mxu0 0.0
          %3722 = vmatpush1.msra.mxu0 0.0
          %3723 = vmatprep.subr.mxu0 0.0
          %3724 = vmatpush1.msra.mxu0 0.0
          %3725 = vmatprep.subr.mxu0 0.0
          %3726 = vmatpush1.msra.mxu0 0.0
          %3727 = vmatprep.subr.mxu0 0.0
          %3728 = vmatpush1.msra.mxu0 0.0
          %3729 = vmatprep.subr.mxu0 0.0
          %3730 = vmatpush1.msra.mxu0 0.0
          %3731 = vmatprep.subr.mxu0 0.0
          %3732 = vmatpush1.msra.mxu0 0.0
          %3733 = vmatprep.subr.mxu0 0.0
          %3734 = vmatpush1.msra.mxu0 0.0
          %3735 = vmatprep.subr.mxu0 0.0
          %3736 = vmatpush1.msra.mxu0 0.0
          %3737 = vmatprep.subr.mxu0 0.0
          %3738 = vmatpush1.msra.mxu0 0.0
          %3739 = vmatprep.subr.mxu0 0.0
          %3740 = vmatpush1.msra.mxu0 0.0
          %3741 = vmatprep.subr.mxu0 0.0
          %3742 = vmatpush1.msra.mxu0 0.0
          %3743 = vmatprep.subr.mxu0 0.0
          %3744 = vmatpush1.msra.mxu0 0.0
          %3745 = vmatprep.subr.mxu0 0.0
          %3746 = vmatpush1.msra.mxu0 0.0
          %3747 = vmatprep.subr.mxu0 0.0
          %3748 = vmatpush1.msra.mxu0 0.0
          %3749 = vmatprep.subr.mxu0 0.0
          %3750 = vmatpush1.msra.mxu0 0.0
          %3751 = vmatprep.subr.mxu0 0.0
          %3752 = vmatpush1.msra.mxu0 0.0
          %3753 = vmatprep.subr.mxu0 0.0
          %3754 = vmatpush1.msra.mxu0 0.0
          %3755 = vmatprep.subr.mxu0 0.0
          %3756 = vmatpush1.msra.mxu0 0.0
          %3757 = vmatprep.subr.mxu0 0.0
          %3758 = vmatpush1.msra.mxu0 0.0
          %3759 = vmatprep.subr.mxu0 0.0
          %3760 = vmatpush1.msra.mxu0 0.0
          %3761 = vmatprep.subr.mxu0 0.0
          %3762 = vmatpush1.msra.mxu0 0.0
          %3763 = vmatprep.subr.mxu0 0.0
          %3764 = vmatpush1.msra.mxu0 0.0
          %3765 = vmatprep.subr.mxu0 0.0
          %3766 = vmatpush1.msra.mxu0 0.0
          %3767 = vmatprep.subr.mxu0 0.0
          %3768 = vmatpush1.msra.mxu0 0.0
          %3769 = vmatprep.subr.mxu0 0.0
          %3770 = vmatpush1.msra.mxu0 0.0
          %3771 = vmatprep.subr.mxu0 0.0
          %3772 = vmatpush1.msra.mxu0 0.0
          %3773 = vmatprep.subr.mxu0 0.0
          %3774 = vmatpush1.msra.mxu0 0.0
          %3775 = vmatprep.subr.mxu0 0.0
          %3776 = vmatpush1.msra.mxu0 0.0
          %3777 = vmatprep.subr.mxu0 0.0
          %3778 = vmatpush1.msra.mxu0 0.0
          %3779 = vmatprep.subr.mxu0 0.0
          %3780 = vmatpush1.msra.mxu0 0.0
          %3781 = vmatprep.mubr.f32.mxu0 0.0
          %v3782 = vand.u32 %v3561, 4294901760
          %v3783 = vsub.f32 %v3561, %v3782
          %3784 = vmatmul.mubr.f32.gmra.mrb[0].mxu0 %v3783
          %v3785 = vpop.f32.mrb[0].mxu0
          %v3786 = vadd.f32 %v3712, %v3785
          %v3787 = vpop.f32.mrb[0].mxu0
          %3788 = vdwg.mxu0
          %3789 = vmatprep.subr.mxu0 0.0
          %v3790 = vand.u32 %v3091, 4294901760
          %3791 = vmatpush1.msra.mxu0 %v3790
          %3792 = vmatprep.subr.mxu0 0.0
          %3793 = vmatpush1.msra.mxu0 0.0
          %3794 = vmatprep.subr.mxu0 0.0
          %3795 = vmatpush1.msra.mxu0 0.0
          %3796 = vmatprep.subr.mxu0 0.0
          %3797 = vmatpush1.msra.mxu0 0.0
          %3798 = vmatprep.subr.mxu0 0.0
          %3799 = vmatpush1.msra.mxu0 0.0
          %3800 = vmatprep.subr.mxu0 0.0
          %3801 = vmatpush1.msra.mxu0 0.0
          %3802 = vmatprep.subr.mxu0 0.0
          %3803 = vmatpush1.msra.mxu0 0.0
          %3804 = vmatprep.subr.mxu0 0.0
          %3805 = vmatpush1.msra.mxu0 0.0
          %3806 = vmatprep.subr.mxu0 0.0
          %3807 = vmatpush1.msra.mxu0 0.0
          %3808 = vmatprep.subr.mxu0 0.0
          %3809 = vmatpush1.msra.mxu0 0.0
          %3810 = vmatprep.subr.mxu0 0.0
          %3811 = vmatpush1.msra.mxu0 0.0
          %3812 = vmatprep.subr.mxu0 0.0
          %3813 = vmatpush1.msra.mxu0 0.0
          %3814 = vmatprep.subr.mxu0 0.0
          %3815 = vmatpush1.msra.mxu0 0.0
          %3816 = vmatprep.subr.mxu0 0.0
          %3817 = vmatpush1.msra.mxu0 0.0
          %3818 = vmatprep.subr.mxu0 0.0
          %3819 = vmatpush1.msra.mxu0 0.0
          %3820 = vmatprep.subr.mxu0 0.0
          %3821 = vmatpush1.msra.mxu0 0.0
          %3822 = vmatprep.subr.mxu0 0.0
          %3823 = vmatpush1.msra.mxu0 0.0
          %3824 = vmatprep.subr.mxu0 0.0
          %3825 = vmatpush1.msra.mxu0 0.0
          %3826 = vmatprep.subr.mxu0 0.0
          %3827 = vmatpush1.msra.mxu0 0.0
          %3828 = vmatprep.subr.mxu0 0.0
          %3829 = vmatpush1.msra.mxu0 0.0
          %3830 = vmatprep.subr.mxu0 0.0
          %3831 = vmatpush1.msra.mxu0 0.0
          %3832 = vmatprep.subr.mxu0 0.0
          %3833 = vmatpush1.msra.mxu0 0.0
          %3834 = vmatprep.subr.mxu0 0.0
          %3835 = vmatpush1.msra.mxu0 0.0
          %3836 = vmatprep.subr.mxu0 0.0
          %3837 = vmatpush1.msra.mxu0 0.0
          %3838 = vmatprep.subr.mxu0 0.0
          %3839 = vmatpush1.msra.mxu0 0.0
          %3840 = vmatprep.subr.mxu0 0.0
          %3841 = vmatpush1.msra.mxu0 0.0
          %3842 = vmatprep.subr.mxu0 0.0
          %3843 = vmatpush1.msra.mxu0 0.0
          %3844 = vmatprep.subr.mxu0 0.0
          %3845 = vmatpush1.msra.mxu0 0.0
          %3846 = vmatprep.subr.mxu0 0.0
          %3847 = vmatpush1.msra.mxu0 0.0
          %3848 = vmatprep.subr.mxu0 0.0
          %3849 = vmatpush1.msra.mxu0 0.0
          %3850 = vmatprep.subr.mxu0 0.0
          %3851 = vmatpush1.msra.mxu0 0.0
          %3852 = vmatprep.subr.mxu0 0.0
          %3853 = vmatpush1.msra.mxu0 0.0
          %3854 = vmatprep.mubr.f32.mxu0 0.0
          %v3855 = vand.u32 %v3561, 4294901760
          %v3856 = vsub.f32 %v3561, %v3855
          %v3857 = vand.u32 %v3856, 4294901760
          %3858 = vmatmul.mubr.f32.gmra.mrb[0].mxu0 %v3857
          %v3859 = vpop.f32.mrb[0].mxu0
          %v3860 = vadd.f32 %v3786, %v3859
          %v3861 = vpop.f32.mrb[0].mxu0
          %3862 = vdwg.mxu0
          %3863 = vmatprep.subr.mxu0 0.0
          %v3864 = vand.u32 %v3091, 4294901760
          %v3865 = vsub.f32 %v3091, %v3864
          %v3866 = vand.u32 %v3865, 4294901760
          %3867 = vmatpush1.msra.mxu0 %v3866
          %3868 = vmatprep.subr.mxu0 0.0
          %3869 = vmatpush1.msra.mxu0 0.0
          %3870 = vmatprep.subr.mxu0 0.0
          %3871 = vmatpush1.msra.mxu0 0.0
          %3872 = vmatprep.subr.mxu0 0.0
          %3873 = vmatpush1.msra.mxu0 0.0
          %3874 = vmatprep.subr.mxu0 0.0
          %3875 = vmatpush1.msra.mxu0 0.0
          %3876 = vmatprep.subr.mxu0 0.0
          %3877 = vmatpush1.msra.mxu0 0.0
          %3878 = vmatprep.subr.mxu0 0.0
          %3879 = vmatpush1.msra.mxu0 0.0
          %3880 = vmatprep.subr.mxu0 0.0
          %3881 = vmatpush1.msra.mxu0 0.0
          %3882 = vmatprep.subr.mxu0 0.0
          %3883 = vmatpush1.msra.mxu0 0.0
          %3884 = vmatprep.subr.mxu0 0.0
          %3885 = vmatpush1.msra.mxu0 0.0
          %3886 = vmatprep.subr.mxu0 0.0
          %3887 = vmatpush1.msra.mxu0 0.0
          %3888 = vmatprep.subr.mxu0 0.0
          %3889 = vmatpush1.msra.mxu0 0.0
          %3890 = vmatprep.subr.mxu0 0.0
          %3891 = vmatpush1.msra.mxu0 0.0
          %3892 = vmatprep.subr.mxu0 0.0
          %3893 = vmatpush1.msra.mxu0 0.0
          %3894 = vmatprep.subr.mxu0 0.0
          %3895 = vmatpush1.msra.mxu0 0.0
          %3896 = vmatprep.subr.mxu0 0.0
          %3897 = vmatpush1.msra.mxu0 0.0
          %3898 = vmatprep.subr.mxu0 0.0
          %3899 = vmatpush1.msra.mxu0 0.0
          %3900 = vmatprep.subr.mxu0 0.0
          %3901 = vmatpush1.msra.mxu0 0.0
          %3902 = vmatprep.subr.mxu0 0.0
          %3903 = vmatpush1.msra.mxu0 0.0
          %3904 = vmatprep.subr.mxu0 0.0
          %3905 = vmatpush1.msra.mxu0 0.0
          %3906 = vmatprep.subr.mxu0 0.0
          %3907 = vmatpush1.msra.mxu0 0.0
          %3908 = vmatprep.subr.mxu0 0.0
          %3909 = vmatpush1.msra.mxu0 0.0
          %3910 = vmatprep.subr.mxu0 0.0
          %3911 = vmatpush1.msra.mxu0 0.0
          %3912 = vmatprep.subr.mxu0 0.0
          %3913 = vmatpush1.msra.mxu0 0.0
          %3914 = vmatprep.subr.mxu0 0.0
          %3915 = vmatpush1.msra.mxu0 0.0
          %3916 = vmatprep.subr.mxu0 0.0
          %3917 = vmatpush1.msra.mxu0 0.0
          %3918 = vmatprep.subr.mxu0 0.0
          %3919 = vmatpush1.msra.mxu0 0.0
          %3920 = vmatprep.subr.mxu0 0.0
          %3921 = vmatpush1.msra.mxu0 0.0
          %3922 = vmatprep.subr.mxu0 0.0
          %3923 = vmatpush1.msra.mxu0 0.0
          %3924 = vmatprep.subr.mxu0 0.0
          %3925 = vmatpush1.msra.mxu0 0.0
          %3926 = vmatprep.subr.mxu0 0.0
          %3927 = vmatpush1.msra.mxu0 0.0
          %3928 = vmatprep.subr.mxu0 0.0
          %3929 = vmatpush1.msra.mxu0 0.0
          %3930 = vmatprep.mubr.f32.mxu0 0.0
          %v3931 = vand.u32 %v3561, 4294901760
          %3932 = vmatmul.mubr.f32.gmra.mrb[0].mxu0 %v3931
          %v3933 = vpop.f32.mrb[0].mxu0
          %v3934 = vadd.f32 %v3860, %v3933
          %v3935 = vpop.f32.mrb[0].mxu0
          %3936 = vdwg.mxu0
          %3937 = vmatprep.subr.mxu0 0.0
          %v3938 = vand.u32 %v3091, 4294901760
          %3939 = vmatpush1.msra.mxu0 %v3938
          %3940 = vmatprep.subr.mxu0 0.0
          %3941 = vmatpush1.msra.mxu0 0.0
          %3942 = vmatprep.subr.mxu0 0.0
          %3943 = vmatpush1.msra.mxu0 0.0
          %3944 = vmatprep.subr.mxu0 0.0
          %3945 = vmatpush1.msra.mxu0 0.0
          %3946 = vmatprep.subr.mxu0 0.0
          %3947 = vmatpush1.msra.mxu0 0.0
          %3948 = vmatprep.subr.mxu0 0.0
          %3949 = vmatpush1.msra.mxu0 0.0
          %3950 = vmatprep.subr.mxu0 0.0
          %3951 = vmatpush1.msra.mxu0 0.0
          %3952 = vmatprep.subr.mxu0 0.0
          %3953 = vmatpush1.msra.mxu0 0.0
          %3954 = vmatprep.subr.mxu0 0.0
          %3955 = vmatpush1.msra.mxu0 0.0
          %3956 = vmatprep.subr.mxu0 0.0
          %3957 = vmatpush1.msra.mxu0 0.0
          %3958 = vmatprep.subr.mxu0 0.0
          %3959 = vmatpush1.msra.mxu0 0.0
          %3960 = vmatprep.subr.mxu0 0.0
          %3961 = vmatpush1.msra.mxu0 0.0
          %3962 = vmatprep.subr.mxu0 0.0
          %3963 = vmatpush1.msra.mxu0 0.0
          %3964 = vmatprep.subr.mxu0 0.0
          %3965 = vmatpush1.msra.mxu0 0.0
          %3966 = vmatprep.subr.mxu0 0.0
          %3967 = vmatpush1.msra.mxu0 0.0
          %3968 = vmatprep.subr.mxu0 0.0
          %3969 = vmatpush1.msra.mxu0 0.0
          %3970 = vmatprep.subr.mxu0 0.0
          %3971 = vmatpush1.msra.mxu0 0.0
          %3972 = vmatprep.subr.mxu0 0.0
          %3973 = vmatpush1.msra.mxu0 0.0
          %3974 = vmatprep.subr.mxu0 0.0
          %3975 = vmatpush1.msra.mxu0 0.0
          %3976 = vmatprep.subr.mxu0 0.0
          %3977 = vmatpush1.msra.mxu0 0.0
          %3978 = vmatprep.subr.mxu0 0.0
          %3979 = vmatpush1.msra.mxu0 0.0
          %3980 = vmatprep.subr.mxu0 0.0
          %3981 = vmatpush1.msra.mxu0 0.0
          %3982 = vmatprep.subr.mxu0 0.0
          %3983 = vmatpush1.msra.mxu0 0.0
          %3984 = vmatprep.subr.mxu0 0.0
          %3985 = vmatpush1.msra.mxu0 0.0
          %3986 = vmatprep.subr.mxu0 0.0
          %3987 = vmatpush1.msra.mxu0 0.0
          %3988 = vmatprep.subr.mxu0 0.0
          %3989 = vmatpush1.msra.mxu0 0.0
          %3990 = vmatprep.subr.mxu0 0.0
          %3991 = vmatpush1.msra.mxu0 0.0
          %3992 = vmatprep.subr.mxu0 0.0
          %3993 = vmatpush1.msra.mxu0 0.0
          %3994 = vmatprep.subr.mxu0 0.0
          %3995 = vmatpush1.msra.mxu0 0.0
          %3996 = vmatprep.subr.mxu0 0.0
          %3997 = vmatpush1.msra.mxu0 0.0
          %3998 = vmatprep.subr.mxu0 0.0
          %3999 = vmatpush1.msra.mxu0 0.0
          %4000 = vmatprep.subr.mxu0 0.0
          %4001 = vmatpush1.msra.mxu0 0.0
          %4002 = vmatprep.mubr.f32.mxu0 0.0
          %v4003 = vand.u32 %v3561, 4294901760
          %4004 = vmatmul.mubr.f32.gmra.mrb[0].mxu0 %v4003
          %v4005 = vpop.f32.mrb[0].mxu0
          %v4006 = vadd.f32 %v3934, %v4005
          %v4007 = vpop.f32.mrb[0].mxu0
          %4008 = vdwg.mxu0
          %v4010 = vsel %vm3110, %v3067, 0
          %4012 = vmatprep.subr.mxu0 0.0
          %v4013 = vand.u32 %v3092, 4294901760
          %4014 = vmatpush1.msra.mxu0 %v4013
          %4015 = vmatprep.subr.mxu0 0.0
          %4016 = vmatpush1.msra.mxu0 0.0
          %4017 = vmatprep.subr.mxu0 0.0
          %4018 = vmatpush1.msra.mxu0 0.0
          %4019 = vmatprep.subr.mxu0 0.0
          %4020 = vmatpush1.msra.mxu0 0.0
          %4021 = vmatprep.subr.mxu0 0.0
          %4022 = vmatpush1.msra.mxu0 0.0
          %4023 = vmatprep.subr.mxu0 0.0
          %4024 = vmatpush1.msra.mxu0 0.0
          %4025 = vmatprep.subr.mxu0 0.0
          %4026 = vmatpush1.msra.mxu0 0.0
          %4027 = vmatprep.subr.mxu0 0.0
          %4028 = vmatpush1.msra.mxu0 0.0
          %4029 = vmatprep.subr.mxu0 0.0
          %4030 = vmatpush1.msra.mxu0 0.0
          %4031 = vmatprep.subr.mxu0 0.0
          %4032 = vmatpush1.msra.mxu0 0.0
          %4033 = vmatprep.subr.mxu0 0.0
          %4034 = vmatpush1.msra.mxu0 0.0
          %4035 = vmatprep.subr.mxu0 0.0
          %4036 = vmatpush1.msra.mxu0 0.0
          %4037 = vmatprep.subr.mxu0 0.0
          %4038 = vmatpush1.msra.mxu0 0.0
          %4039 = vmatprep.subr.mxu0 0.0
          %4040 = vmatpush1.msra.mxu0 0.0
          %4041 = vmatprep.subr.mxu0 0.0
          %4042 = vmatpush1.msra.mxu0 0.0
          %4043 = vmatprep.subr.mxu0 0.0
          %4044 = vmatpush1.msra.mxu0 0.0
          %4045 = vmatprep.subr.mxu0 0.0
          %4046 = vmatpush1.msra.mxu0 0.0
          %4047 = vmatprep.subr.mxu0 0.0
          %4048 = vmatpush1.msra.mxu0 0.0
          %4049 = vmatprep.subr.mxu0 0.0
          %4050 = vmatpush1.msra.mxu0 0.0
          %4051 = vmatprep.subr.mxu0 0.0
          %4052 = vmatpush1.msra.mxu0 0.0
          %4053 = vmatprep.subr.mxu0 0.0
          %4054 = vmatpush1.msra.mxu0 0.0
          %4055 = vmatprep.subr.mxu0 0.0
          %4056 = vmatpush1.msra.mxu0 0.0
          %4057 = vmatprep.subr.mxu0 0.0
          %4058 = vmatpush1.msra.mxu0 0.0
          %4059 = vmatprep.subr.mxu0 0.0
          %4060 = vmatpush1.msra.mxu0 0.0
          %4061 = vmatprep.subr.mxu0 0.0
          %4062 = vmatpush1.msra.mxu0 0.0
          %4063 = vmatprep.subr.mxu0 0.0
          %4064 = vmatpush1.msra.mxu0 0.0
          %4065 = vmatprep.subr.mxu0 0.0
          %4066 = vmatpush1.msra.mxu0 0.0
          %4067 = vmatprep.subr.mxu0 0.0
          %4068 = vmatpush1.msra.mxu0 0.0
          %4069 = vmatprep.subr.mxu0 0.0
          %4070 = vmatpush1.msra.mxu0 0.0
          %4071 = vmatprep.subr.mxu0 0.0
          %4072 = vmatpush1.msra.mxu0 0.0
          %4073 = vmatprep.subr.mxu0 0.0
          %4074 = vmatpush1.msra.mxu0 0.0
          %4075 = vmatprep.subr.mxu0 0.0
          %4076 = vmatpush1.msra.mxu0 0.0
          %4077 = vmatprep.mubr.f32.mxu0 0.0
          %v4078 = vand.u32 %v4010, 4294901760
          %v4079 = vsub.f32 %v4010, %v4078
          %v4080 = vand.u32 %v4079, 4294901760
          %v4081 = vsub.f32 %v4079, %v4080
          %v4082 = vand.u32 %v4081, 4294901760
          %4083 = vmatmul.mubr.f32.gmra.mrb[0].mxu0 %v4082
          %v4084 = vpop.f32.mrb[0].mxu0
          %v4085 = vadd.f32 %v3109, %v4084
          %v4086 = vpop.f32.mrb[0].mxu0
          %4087 = vdwg.mxu0
          %4088 = vmatprep.subr.mxu0 0.0
          %v4089 = vand.u32 %v3092, 4294901760
          %v4090 = vsub.f32 %v3092, %v4089
          %v4091 = vand.u32 %v4090, 4294901760
          %v4092 = vsub.f32 %v4090, %v4091
          %v4093 = vand.u32 %v4092, 4294901760
          %4094 = vmatpush1.msra.mxu0 %v4093
          %4095 = vmatprep.subr.mxu0 0.0
          %4096 = vmatpush1.msra.mxu0 0.0
          %4097 = vmatprep.subr.mxu0 0.0
          %4098 = vmatpush1.msra.mxu0 0.0
          %4099 = vmatprep.subr.mxu0 0.0
          %4100 = vmatpush1.msra.mxu0 0.0
          %4101 = vmatprep.subr.mxu0 0.0
          %4102 = vmatpush1.msra.mxu0 0.0
          %4103 = vmatprep.subr.mxu0 0.0
          %4104 = vmatpush1.msra.mxu0 0.0
          %4105 = vmatprep.subr.mxu0 0.0
          %4106 = vmatpush1.msra.mxu0 0.0
          %4107 = vmatprep.subr.mxu0 0.0
          %4108 = vmatpush1.msra.mxu0 0.0
          %4109 = vmatprep.subr.mxu0 0.0
          %4110 = vmatpush1.msra.mxu0 0.0
          %4111 = vmatprep.subr.mxu0 0.0
          %4112 = vmatpush1.msra.mxu0 0.0
          %4113 = vmatprep.subr.mxu0 0.0
          %4114 = vmatpush1.msra.mxu0 0.0
          %4115 = vmatprep.subr.mxu0 0.0
          %4116 = vmatpush1.msra.mxu0 0.0
          %4117 = vmatprep.subr.mxu0 0.0
          %4118 = vmatpush1.msra.mxu0 0.0
          %4119 = vmatprep.subr.mxu0 0.0
          %4120 = vmatpush1.msra.mxu0 0.0
          %4121 = vmatprep.subr.mxu0 0.0
          %4122 = vmatpush1.msra.mxu0 0.0
          %4123 = vmatprep.subr.mxu0 0.0
          %4124 = vmatpush1.msra.mxu0 0.0
          %4125 = vmatprep.subr.mxu0 0.0
          %4126 = vmatpush1.msra.mxu0 0.0
          %4127 = vmatprep.subr.mxu0 0.0
          %4128 = vmatpush1.msra.mxu0 0.0
          %4129 = vmatprep.subr.mxu0 0.0
          %4130 = vmatpush1.msra.mxu0 0.0
          %4131 = vmatprep.subr.mxu0 0.0
          %4132 = vmatpush1.msra.mxu0 0.0
          %4133 = vmatprep.subr.mxu0 0.0
          %4134 = vmatpush1.msra.mxu0 0.0
          %4135 = vmatprep.subr.mxu0 0.0
          %4136 = vmatpush1.msra.mxu0 0.0
          %4137 = vmatprep.subr.mxu0 0.0
          %4138 = vmatpush1.msra.mxu0 0.0
          %4139 = vmatprep.subr.mxu0 0.0
          %4140 = vmatpush1.msra.mxu0 0.0
          %4141 = vmatprep.subr.mxu0 0.0
          %4142 = vmatpush1.msra.mxu0 0.0
          %4143 = vmatprep.subr.mxu0 0.0
          %4144 = vmatpush1.msra.mxu0 0.0
          %4145 = vmatprep.subr.mxu0 0.0
          %4146 = vmatpush1.msra.mxu0 0.0
          %4147 = vmatprep.subr.mxu0 0.0
          %4148 = vmatpush1.msra.mxu0 0.0
          %4149 = vmatprep.subr.mxu0 0.0
          %4150 = vmatpush1.msra.mxu0 0.0
          %4151 = vmatprep.subr.mxu0 0.0
          %4152 = vmatpush1.msra.mxu0 0.0
          %4153 = vmatprep.subr.mxu0 0.0
          %4154 = vmatpush1.msra.mxu0 0.0
          %4155 = vmatprep.subr.mxu0 0.0
          %4156 = vmatpush1.msra.mxu0 0.0
          %4157 = vmatprep.mubr.f32.mxu0 0.0
          %v4158 = vand.u32 %v4010, 4294901760
          %4159 = vmatmul.mubr.f32.gmra.mrb[0].mxu0 %v4158
          %v4160 = vpop.f32.mrb[0].mxu0
          %v4161 = vadd.f32 %v4085, %v4160
          %v4162 = vpop.f32.mrb[0].mxu0
          %4163 = vdwg.mxu0
          %4164 = vmatprep.subr.mxu0 0.0
          %v4165 = vand.u32 %v3092, 4294901760
          %v4166 = vsub.f32 %v3092, %v4165
          %4167 = vmatpush1.msra.mxu0 %v4166
          %4168 = vmatprep.subr.mxu0 0.0
          %4169 = vmatpush1.msra.mxu0 0.0
          %4170 = vmatprep.subr.mxu0 0.0
          %4171 = vmatpush1.msra.mxu0 0.0
          %4172 = vmatprep.subr.mxu0 0.0
          %4173 = vmatpush1.msra.mxu0 0.0
          %4174 = vmatprep.subr.mxu0 0.0
          %4175 = vmatpush1.msra.mxu0 0.0
          %4176 = vmatprep.subr.mxu0 0.0
          %4177 = vmatpush1.msra.mxu0 0.0
          %4178 = vmatprep.subr.mxu0 0.0
          %4179 = vmatpush1.msra.mxu0 0.0
          %4180 = vmatprep.subr.mxu0 0.0
          %4181 = vmatpush1.msra.mxu0 0.0
          %4182 = vmatprep.subr.mxu0 0.0
          %4183 = vmatpush1.msra.mxu0 0.0
          %4184 = vmatprep.subr.mxu0 0.0
          %4185 = vmatpush1.msra.mxu0 0.0
          %4186 = vmatprep.subr.mxu0 0.0
          %4187 = vmatpush1.msra.mxu0 0.0
          %4188 = vmatprep.subr.mxu0 0.0
          %4189 = vmatpush1.msra.mxu0 0.0
          %4190 = vmatprep.subr.mxu0 0.0
          %4191 = vmatpush1.msra.mxu0 0.0
          %4192 = vmatprep.subr.mxu0 0.0
          %4193 = vmatpush1.msra.mxu0 0.0
          %4194 = vmatprep.subr.mxu0 0.0
          %4195 = vmatpush1.msra.mxu0 0.0
          %4196 = vmatprep.subr.mxu0 0.0
          %4197 = vmatpush1.msra.mxu0 0.0
          %4198 = vmatprep.subr.mxu0 0.0
          %4199 = vmatpush1.msra.mxu0 0.0
          %4200 = vmatprep.subr.mxu0 0.0
          %4201 = vmatpush1.msra.mxu0 0.0
          %4202 = vmatprep.subr.mxu0 0.0
          %4203 = vmatpush1.msra.mxu0 0.0
          %4204 = vmatprep.subr.mxu0 0.0
          %4205 = vmatpush1.msra.mxu0 0.0
          %4206 = vmatprep.subr.mxu0 0.0
          %4207 = vmatpush1.msra.mxu0 0.0
          %4208 = vmatprep.subr.mxu0 0.0
          %4209 = vmatpush1.msra.mxu0 0.0
          %4210 = vmatprep.subr.mxu0 0.0
          %4211 = vmatpush1.msra.mxu0 0.0
          %4212 = vmatprep.subr.mxu0 0.0
          %4213 = vmatpush1.msra.mxu0 0.0
          %4214 = vmatprep.subr.mxu0 0.0
          %4215 = vmatpush1.msra.mxu0 0.0
          %4216 = vmatprep.subr.mxu0 0.0
          %4217 = vmatpush1.msra.mxu0 0.0
          %4218 = vmatprep.subr.mxu0 0.0
          %4219 = vmatpush1.msra.mxu0 0.0
          %4220 = vmatprep.subr.mxu0 0.0
          %4221 = vmatpush1.msra.mxu0 0.0
          %4222 = vmatprep.subr.mxu0 0.0
          %4223 = vmatpush1.msra.mxu0 0.0
          %4224 = vmatprep.subr.mxu0 0.0
          %4225 = vmatpush1.msra.mxu0 0.0
          %4226 = vmatprep.subr.mxu0 0.0
          %4227 = vmatpush1.msra.mxu0 0.0
          %4228 = vmatprep.subr.mxu0 0.0
          %4229 = vmatpush1.msra.mxu0 0.0
          %4230 = vmatprep.mubr.f32.mxu0 0.0
          %v4231 = vand.u32 %v4010, 4294901760
          %v4232 = vsub.f32 %v4010, %v4231
          %4233 = vmatmul.mubr.f32.gmra.mrb[0].mxu0 %v4232
          %v4234 = vpop.f32.mrb[0].mxu0
          %v4235 = vadd.f32 %v4161, %v4234
          %v4236 = vpop.f32.mrb[0].mxu0
          %4237 = vdwg.mxu0
          %4238 = vmatprep.subr.mxu0 0.0
          %v4239 = vand.u32 %v3092, 4294901760
          %4240 = vmatpush1.msra.mxu0 %v4239
          %4241 = vmatprep.subr.mxu0 0.0
          %4242 = vmatpush1.msra.mxu0 0.0
          %4243 = vmatprep.subr.mxu0 0.0
          %4244 = vmatpush1.msra.mxu0 0.0
          %4245 = vmatprep.subr.mxu0 0.0
          %4246 = vmatpush1.msra.mxu0 0.0
          %4247 = vmatprep.subr.mxu0 0.0
          %4248 = vmatpush1.msra.mxu0 0.0
          %4249 = vmatprep.subr.mxu0 0.0
          %4250 = vmatpush1.msra.mxu0 0.0
          %4251 = vmatprep.subr.mxu0 0.0
          %4252 = vmatpush1.msra.mxu0 0.0
          %4253 = vmatprep.subr.mxu0 0.0
          %4254 = vmatpush1.msra.mxu0 0.0
          %4255 = vmatprep.subr.mxu0 0.0
          %4256 = vmatpush1.msra.mxu0 0.0
          %4257 = vmatprep.subr.mxu0 0.0
          %4258 = vmatpush1.msra.mxu0 0.0
          %4259 = vmatprep.subr.mxu0 0.0
          %4260 = vmatpush1.msra.mxu0 0.0
          %4261 = vmatprep.subr.mxu0 0.0
          %4262 = vmatpush1.msra.mxu0 0.0
          %4263 = vmatprep.subr.mxu0 0.0
          %4264 = vmatpush1.msra.mxu0 0.0
          %4265 = vmatprep.subr.mxu0 0.0
          %4266 = vmatpush1.msra.mxu0 0.0
          %4267 = vmatprep.subr.mxu0 0.0
          %4268 = vmatpush1.msra.mxu0 0.0
          %4269 = vmatprep.subr.mxu0 0.0
          %4270 = vmatpush1.msra.mxu0 0.0
          %4271 = vmatprep.subr.mxu0 0.0
          %4272 = vmatpush1.msra.mxu0 0.0
          %4273 = vmatprep.subr.mxu0 0.0
          %4274 = vmatpush1.msra.mxu0 0.0
          %4275 = vmatprep.subr.mxu0 0.0
          %4276 = vmatpush1.msra.mxu0 0.0
          %4277 = vmatprep.subr.mxu0 0.0
          %4278 = vmatpush1.msra.mxu0 0.0
          %4279 = vmatprep.subr.mxu0 0.0
          %4280 = vmatpush1.msra.mxu0 0.0
          %4281 = vmatprep.subr.mxu0 0.0
          %4282 = vmatpush1.msra.mxu0 0.0
          %4283 = vmatprep.subr.mxu0 0.0
          %4284 = vmatpush1.msra.mxu0 0.0
          %4285 = vmatprep.subr.mxu0 0.0
          %4286 = vmatpush1.msra.mxu0 0.0
          %4287 = vmatprep.subr.mxu0 0.0
          %4288 = vmatpush1.msra.mxu0 0.0
          %4289 = vmatprep.subr.mxu0 0.0
          %4290 = vmatpush1.msra.mxu0 0.0
          %4291 = vmatprep.subr.mxu0 0.0
          %4292 = vmatpush1.msra.mxu0 0.0
          %4293 = vmatprep.subr.mxu0 0.0
          %4294 = vmatpush1.msra.mxu0 0.0
          %4295 = vmatprep.subr.mxu0 0.0
          %4296 = vmatpush1.msra.mxu0 0.0
          %4297 = vmatprep.subr.mxu0 0.0
          %4298 = vmatpush1.msra.mxu0 0.0
          %4299 = vmatprep.subr.mxu0 0.0
          %4300 = vmatpush1.msra.mxu0 0.0
          %4301 = vmatprep.subr.mxu0 0.0
          %4302 = vmatpush1.msra.mxu0 0.0
          %4303 = vmatprep.mubr.f32.mxu0 0.0
          %v4304 = vand.u32 %v4010, 4294901760
          %v4305 = vsub.f32 %v4010, %v4304
          %v4306 = vand.u32 %v4305, 4294901760
          %4307 = vmatmul.mubr.f32.gmra.mrb[0].mxu0 %v4306
          %v4308 = vpop.f32.mrb[0].mxu0
          %v4309 = vadd.f32 %v4235, %v4308
          %v4310 = vpop.f32.mrb[0].mxu0
          %4311 = vdwg.mxu0
          %4312 = vmatprep.subr.mxu0 0.0
          %v4313 = vand.u32 %v3092, 4294901760
          %v4314 = vsub.f32 %v3092, %v4313
          %v4315 = vand.u32 %v4314, 4294901760
          %4316 = vmatpush1.msra.mxu0 %v4315
          %4317 = vmatprep.subr.mxu0 0.0
          %4318 = vmatpush1.msra.mxu0 0.0
          %4319 = vmatprep.subr.mxu0 0.0
          %4320 = vmatpush1.msra.mxu0 0.0
          %4321 = vmatprep.subr.mxu0 0.0
          %4322 = vmatpush1.msra.mxu0 0.0
          %4323 = vmatprep.subr.mxu0 0.0
          %4324 = vmatpush1.msra.mxu0 0.0
          %4325 = vmatprep.subr.mxu0 0.0
          %4326 = vmatpush1.msra.mxu0 0.0
          %4327 = vmatprep.subr.mxu0 0.0
          %4328 = vmatpush1.msra.mxu0 0.0
          %4329 = vmatprep.subr.mxu0 0.0
          %4330 = vmatpush1.msra.mxu0 0.0
          %4331 = vmatprep.subr.mxu0 0.0
          %4332 = vmatpush1.msra.mxu0 0.0
          %4333 = vmatprep.subr.mxu0 0.0
          %4334 = vmatpush1.msra.mxu0 0.0
          %4335 = vmatprep.subr.mxu0 0.0
          %4336 = vmatpush1.msra.mxu0 0.0
          %4337 = vmatprep.subr.mxu0 0.0
          %4338 = vmatpush1.msra.mxu0 0.0
          %4339 = vmatprep.subr.mxu0 0.0
          %4340 = vmatpush1.msra.mxu0 0.0
          %4341 = vmatprep.subr.mxu0 0.0
          %4342 = vmatpush1.msra.mxu0 0.0
          %4343 = vmatprep.subr.mxu0 0.0
          %4344 = vmatpush1.msra.mxu0 0.0
          %4345 = vmatprep.subr.mxu0 0.0
          %4346 = vmatpush1.msra.mxu0 0.0
          %4347 = vmatprep.subr.mxu0 0.0
          %4348 = vmatpush1.msra.mxu0 0.0
          %4349 = vmatprep.subr.mxu0 0.0
          %4350 = vmatpush1.msra.mxu0 0.0
          %4351 = vmatprep.subr.mxu0 0.0
          %4352 = vmatpush1.msra.mxu0 0.0
          %4353 = vmatprep.subr.mxu0 0.0
          %4354 = vmatpush1.msra.mxu0 0.0
          %4355 = vmatprep.subr.mxu0 0.0
          %4356 = vmatpush1.msra.mxu0 0.0
          %4357 = vmatprep.subr.mxu0 0.0
          %4358 = vmatpush1.msra.mxu0 0.0
          %4359 = vmatprep.subr.mxu0 0.0
          %4360 = vmatpush1.msra.mxu0 0.0
          %4361 = vmatprep.subr.mxu0 0.0
          %4362 = vmatpush1.msra.mxu0 0.0
          %4363 = vmatprep.subr.mxu0 0.0
          %4364 = vmatpush1.msra.mxu0 0.0
          %4365 = vmatprep.subr.mxu0 0.0
          %4366 = vmatpush1.msra.mxu0 0.0
          %4367 = vmatprep.subr.mxu0 0.0
          %4368 = vmatpush1.msra.mxu0 0.0
          %4369 = vmatprep.subr.mxu0 0.0
          %4370 = vmatpush1.msra.mxu0 0.0
          %4371 = vmatprep.subr.mxu0 0.0
          %4372 = vmatpush1.msra.mxu0 0.0
          %4373 = vmatprep.subr.mxu0 0.0
          %4374 = vmatpush1.msra.mxu0 0.0
          %4375 = vmatprep.subr.mxu0 0.0
          %4376 = vmatpush1.msra.mxu0 0.0
          %4377 = vmatprep.subr.mxu0 0.0
          %4378 = vmatpush1.msra.mxu0 0.0
          %4379 = vmatprep.mubr.f32.mxu0 0.0
          %v4380 = vand.u32 %v4010, 4294901760
          %4381 = vmatmul.mubr.f32.gmra.mrb[0].mxu0 %v4380
          %v4382 = vpop.f32.mrb[0].mxu0
          %v4383 = vadd.f32 %v4309, %v4382
          %v4384 = vpop.f32.mrb[0].mxu0
          %4385 = vdwg.mxu0
          %4386 = vmatprep.subr.mxu0 0.0
          %v4387 = vand.u32 %v3092, 4294901760
          %4388 = vmatpush1.msra.mxu0 %v4387
          %4389 = vmatprep.subr.mxu0 0.0
          %4390 = vmatpush1.msra.mxu0 0.0
          %4391 = vmatprep.subr.mxu0 0.0
          %4392 = vmatpush1.msra.mxu0 0.0
          %4393 = vmatprep.subr.mxu0 0.0
          %4394 = vmatpush1.msra.mxu0 0.0
          %4395 = vmatprep.subr.mxu0 0.0
          %4396 = vmatpush1.msra.mxu0 0.0
          %4397 = vmatprep.subr.mxu0 0.0
          %4398 = vmatpush1.msra.mxu0 0.0
          %4399 = vmatprep.subr.mxu0 0.0
          %4400 = vmatpush1.msra.mxu0 0.0
          %4401 = vmatprep.subr.mxu0 0.0
          %4402 = vmatpush1.msra.mxu0 0.0
          %4403 = vmatprep.subr.mxu0 0.0
          %4404 = vmatpush1.msra.mxu0 0.0
          %4405 = vmatprep.subr.mxu0 0.0
          %4406 = vmatpush1.msra.mxu0 0.0
          %4407 = vmatprep.subr.mxu0 0.0
          %4408 = vmatpush1.msra.mxu0 0.0
          %4409 = vmatprep.subr.mxu0 0.0
          %4410 = vmatpush1.msra.mxu0 0.0
          %4411 = vmatprep.subr.mxu0 0.0
          %4412 = vmatpush1.msra.mxu0 0.0
          %4413 = vmatprep.subr.mxu0 0.0
          %4414 = vmatpush1.msra.mxu0 0.0
          %4415 = vmatprep.subr.mxu0 0.0
          %4416 = vmatpush1.msra.mxu0 0.0
          %4417 = vmatprep.subr.mxu0 0.0
          %4418 = vmatpush1.msra.mxu0 0.0
          %4419 = vmatprep.subr.mxu0 0.0
          %4420 = vmatpush1.msra.mxu0 0.0
          %4421 = vmatprep.subr.mxu0 0.0
          %4422 = vmatpush1.msra.mxu0 0.0
          %4423 = vmatprep.subr.mxu0 0.0
          %4424 = vmatpush1.msra.mxu0 0.0
          %4425 = vmatprep.subr.mxu0 0.0
          %4426 = vmatpush1.msra.mxu0 0.0
          %4427 = vmatprep.subr.mxu0 0.0
          %4428 = vmatpush1.msra.mxu0 0.0
          %4429 = vmatprep.subr.mxu0 0.0
          %4430 = vmatpush1.msra.mxu0 0.0
          %4431 = vmatprep.subr.mxu0 0.0
          %4432 = vmatpush1.msra.mxu0 0.0
          %4433 = vmatprep.subr.mxu0 0.0
          %4434 = vmatpush1.msra.mxu0 0.0
          %4435 = vmatprep.subr.mxu0 0.0
          %4436 = vmatpush1.msra.mxu0 0.0
          %4437 = vmatprep.subr.mxu0 0.0
          %4438 = vmatpush1.msra.mxu0 0.0
          %4439 = vmatprep.subr.mxu0 0.0
          %4440 = vmatpush1.msra.mxu0 0.0
          %4441 = vmatprep.subr.mxu0 0.0
          %4442 = vmatpush1.msra.mxu0 0.0
          %4443 = vmatprep.subr.mxu0 0.0
          %4444 = vmatpush1.msra.mxu0 0.0
          %4445 = vmatprep.subr.mxu0 0.0
          %4446 = vmatpush1.msra.mxu0 0.0
          %4447 = vmatprep.subr.mxu0 0.0
          %4448 = vmatpush1.msra.mxu0 0.0
          %4449 = vmatprep.subr.mxu0 0.0
          %4450 = vmatpush1.msra.mxu0 0.0
          %4451 = vmatprep.mubr.f32.mxu0 0.0
          %v4452 = vand.u32 %v4010, 4294901760
          %4453 = vmatmul.mubr.f32.gmra.mrb[0].mxu0 %v4452
          %v4454 = vpop.f32.mrb[0].mxu0
          %v4455 = vadd.f32 %v4383, %v4454
          %v4456 = vpop.f32.mrb[0].mxu0
          %4457 = vdwg.mxu0
          %v4459 = vsel %vm3110, %v3068, 0
          %4461 = vmatprep.subr.mxu0 0.0
          %v4462 = vand.u32 %v3093, 4294901760
          %4463 = vmatpush1.msra.mxu0 %v4462
          %4464 = vmatprep.subr.mxu0 0.0
          %4465 = vmatpush1.msra.mxu0 0.0
          %4466 = vmatprep.subr.mxu0 0.0
          %4467 = vmatpush1.msra.mxu0 0.0
          %4468 = vmatprep.subr.mxu0 0.0
          %4469 = vmatpush1.msra.mxu0 0.0
          %4470 = vmatprep.subr.mxu0 0.0
          %4471 = vmatpush1.msra.mxu0 0.0
          %4472 = vmatprep.subr.mxu0 0.0
          %4473 = vmatpush1.msra.mxu0 0.0
          %4474 = vmatprep.subr.mxu0 0.0
          %4475 = vmatpush1.msra.mxu0 0.0
          %4476 = vmatprep.subr.mxu0 0.0
          %4477 = vmatpush1.msra.mxu0 0.0
          %4478 = vmatprep.subr.mxu0 0.0
          %4479 = vmatpush1.msra.mxu0 0.0
          %4480 = vmatprep.subr.mxu0 0.0
          %4481 = vmatpush1.msra.mxu0 0.0
          %4482 = vmatprep.subr.mxu0 0.0
          %4483 = vmatpush1.msra.mxu0 0.0
          %4484 = vmatprep.subr.mxu0 0.0
          %4485 = vmatpush1.msra.mxu0 0.0
          %4486 = vmatprep.subr.mxu0 0.0
          %4487 = vmatpush1.msra.mxu0 0.0
          %4488 = vmatprep.subr.mxu0 0.0
          %4489 = vmatpush1.msra.mxu0 0.0
          %4490 = vmatprep.subr.mxu0 0.0
          %4491 = vmatpush1.msra.mxu0 0.0
          %4492 = vmatprep.subr.mxu0 0.0
          %4493 = vmatpush1.msra.mxu0 0.0
          %4494 = vmatprep.subr.mxu0 0.0
          %4495 = vmatpush1.msra.mxu0 0.0
          %4496 = vmatprep.subr.mxu0 0.0
          %4497 = vmatpush1.msra.mxu0 0.0
          %4498 = vmatprep.subr.mxu0 0.0
          %4499 = vmatpush1.msra.mxu0 0.0
          %4500 = vmatprep.subr.mxu0 0.0
          %4501 = vmatpush1.msra.mxu0 0.0
          %4502 = vmatprep.subr.mxu0 0.0
          %4503 = vmatpush1.msra.mxu0 0.0
          %4504 = vmatprep.subr.mxu0 0.0
          %4505 = vmatpush1.msra.mxu0 0.0
          %4506 = vmatprep.subr.mxu0 0.0
          %4507 = vmatpush1.msra.mxu0 0.0
          %4508 = vmatprep.subr.mxu0 0.0
          %4509 = vmatpush1.msra.mxu0 0.0
          %4510 = vmatprep.subr.mxu0 0.0
          %4511 = vmatpush1.msra.mxu0 0.0
          %4512 = vmatprep.subr.mxu0 0.0
          %4513 = vmatpush1.msra.mxu0 0.0
          %4514 = vmatprep.subr.mxu0 0.0
          %4515 = vmatpush1.msra.mxu0 0.0
          %4516 = vmatprep.subr.mxu0 0.0
          %4517 = vmatpush1.msra.mxu0 0.0
          %4518 = vmatprep.subr.mxu0 0.0
          %4519 = vmatpush1.msra.mxu0 0.0
          %4520 = vmatprep.subr.mxu0 0.0
          %4521 = vmatpush1.msra.mxu0 0.0
          %4522 = vmatprep.subr.mxu0 0.0
          %4523 = vmatpush1.msra.mxu0 0.0
          %4524 = vmatprep.subr.mxu0 0.0
          %4525 = vmatpush1.msra.mxu0 0.0
          %4526 = vmatprep.mubr.f32.mxu0 0.0
          %v4527 = vand.u32 %v4459, 4294901760
          %v4528 = vsub.f32 %v4459, %v4527
          %v4529 = vand.u32 %v4528, 4294901760
          %v4530 = vsub.f32 %v4528, %v4529
          %v4531 = vand.u32 %v4530, 4294901760
          %4532 = vmatmul.mubr.f32.gmra.mrb[0].mxu0 %v4531
          %v4533 = vpop.f32.mrb[0].mxu0
          %v4534 = vadd.f32 %v3109, %v4533
          %v4535 = vpop.f32.mrb[0].mxu0
          %4536 = vdwg.mxu0
          %4537 = vmatprep.subr.mxu0 0.0
          %v4538 = vand.u32 %v3093, 4294901760
          %v4539 = vsub.f32 %v3093, %v4538
          %v4540 = vand.u32 %v4539, 4294901760
          %v4541 = vsub.f32 %v4539, %v4540
          %v4542 = vand.u32 %v4541, 4294901760
          %4543 = vmatpush1.msra.mxu0 %v4542
          %4544 = vmatprep.subr.mxu0 0.0
          %4545 = vmatpush1.msra.mxu0 0.0
          %4546 = vmatprep.subr.mxu0 0.0
          %4547 = vmatpush1.msra.mxu0 0.0
          %4548 = vmatprep.subr.mxu0 0.0
          %4549 = vmatpush1.msra.mxu0 0.0
          %4550 = vmatprep.subr.mxu0 0.0
          %4551 = vmatpush1.msra.mxu0 0.0
          %4552 = vmatprep.subr.mxu0 0.0
          %4553 = vmatpush1.msra.mxu0 0.0
          %4554 = vmatprep.subr.mxu0 0.0
          %4555 = vmatpush1.msra.mxu0 0.0
          %4556 = vmatprep.subr.mxu0 0.0
          %4557 = vmatpush1.msra.mxu0 0.0
          %4558 = vmatprep.subr.mxu0 0.0
          %4559 = vmatpush1.msra.mxu0 0.0
          %4560 = vmatprep.subr.mxu0 0.0
          %4561 = vmatpush1.msra.mxu0 0.0
          %4562 = vmatprep.subr.mxu0 0.0
          %4563 = vmatpush1.msra.mxu0 0.0
          %4564 = vmatprep.subr.mxu0 0.0
          %4565 = vmatpush1.msra.mxu0 0.0
          %4566 = vmatprep.subr.mxu0 0.0
          %4567 = vmatpush1.msra.mxu0 0.0
          %4568 = vmatprep.subr.mxu0 0.0
          %4569 = vmatpush1.msra.mxu0 0.0
          %4570 = vmatprep.subr.mxu0 0.0
          %4571 = vmatpush1.msra.mxu0 0.0
          %4572 = vmatprep.subr.mxu0 0.0
          %4573 = vmatpush1.msra.mxu0 0.0
          %4574 = vmatprep.subr.mxu0 0.0
          %4575 = vmatpush1.msra.mxu0 0.0
          %4576 = vmatprep.subr.mxu0 0.0
          %4577 = vmatpush1.msra.mxu0 0.0
          %4578 = vmatprep.subr.mxu0 0.0
          %4579 = vmatpush1.msra.mxu0 0.0
          %4580 = vmatprep.subr.mxu0 0.0
          %4581 = vmatpush1.msra.mxu0 0.0
          %4582 = vmatprep.subr.mxu0 0.0
          %4583 = vmatpush1.msra.mxu0 0.0
          %4584 = vmatprep.subr.mxu0 0.0
          %4585 = vmatpush1.msra.mxu0 0.0
          %4586 = vmatprep.subr.mxu0 0.0
          %4587 = vmatpush1.msra.mxu0 0.0
          %4588 = vmatprep.subr.mxu0 0.0
          %4589 = vmatpush1.msra.mxu0 0.0
          %4590 = vmatprep.subr.mxu0 0.0
          %4591 = vmatpush1.msra.mxu0 0.0
          %4592 = vmatprep.subr.mxu0 0.0
          %4593 = vmatpush1.msra.mxu0 0.0
          %4594 = vmatprep.subr.mxu0 0.0
          %4595 = vmatpush1.msra.mxu0 0.0
          %4596 = vmatprep.subr.mxu0 0.0
          %4597 = vmatpush1.msra.mxu0 0.0
          %4598 = vmatprep.subr.mxu0 0.0
          %4599 = vmatpush1.msra.mxu0 0.0
          %4600 = vmatprep.subr.mxu0 0.0
          %4601 = vmatpush1.msra.mxu0 0.0
          %4602 = vmatprep.subr.mxu0 0.0
          %4603 = vmatpush1.msra.mxu0 0.0
          %4604 = vmatprep.subr.mxu0 0.0
          %4605 = vmatpush1.msra.mxu0 0.0
          %4606 = vmatprep.mubr.f32.mxu0 0.0
          %v4607 = vand.u32 %v4459, 4294901760
          %4608 = vmatmul.mubr.f32.gmra.mrb[0].mxu0 %v4607
          %v4609 = vpop.f32.mrb[0].mxu0
          %v4610 = vadd.f32 %v4534, %v4609
          %v4611 = vpop.f32.mrb[0].mxu0
          %4612 = vdwg.mxu0
          %4613 = vmatprep.subr.mxu0 0.0
          %v4614 = vand.u32 %v3093, 4294901760
          %v4615 = vsub.f32 %v3093, %v4614
          %4616 = vmatpush1.msra.mxu0 %v4615
          %4617 = vmatprep.subr.mxu0 0.0
          %4618 = vmatpush1.msra.mxu0 0.0
          %4619 = vmatprep.subr.mxu0 0.0
          %4620 = vmatpush1.msra.mxu0 0.0
          %4621 = vmatprep.subr.mxu0 0.0
          %4622 = vmatpush1.msra.mxu0 0.0
          %4623 = vmatprep.subr.mxu0 0.0
          %4624 = vmatpush1.msra.mxu0 0.0
          %4625 = vmatprep.subr.mxu0 0.0
          %4626 = vmatpush1.msra.mxu0 0.0
          %4627 = vmatprep.subr.mxu0 0.0
          %4628 = vmatpush1.msra.mxu0 0.0
          %4629 = vmatprep.subr.mxu0 0.0
          %4630 = vmatpush1.msra.mxu0 0.0
          %4631 = vmatprep.subr.mxu0 0.0
          %4632 = vmatpush1.msra.mxu0 0.0
          %4633 = vmatprep.subr.mxu0 0.0
          %4634 = vmatpush1.msra.mxu0 0.0
          %4635 = vmatprep.subr.mxu0 0.0
          %4636 = vmatpush1.msra.mxu0 0.0
          %4637 = vmatprep.subr.mxu0 0.0
          %4638 = vmatpush1.msra.mxu0 0.0
          %4639 = vmatprep.subr.mxu0 0.0
          %4640 = vmatpush1.msra.mxu0 0.0
          %4641 = vmatprep.subr.mxu0 0.0
          %4642 = vmatpush1.msra.mxu0 0.0
          %4643 = vmatprep.subr.mxu0 0.0
          %4644 = vmatpush1.msra.mxu0 0.0
          %4645 = vmatprep.subr.mxu0 0.0
          %4646 = vmatpush1.msra.mxu0 0.0
          %4647 = vmatprep.subr.mxu0 0.0
          %4648 = vmatpush1.msra.mxu0 0.0
          %4649 = vmatprep.subr.mxu0 0.0
          %4650 = vmatpush1.msra.mxu0 0.0
          %4651 = vmatprep.subr.mxu0 0.0
          %4652 = vmatpush1.msra.mxu0 0.0
          %4653 = vmatprep.subr.mxu0 0.0
          %4654 = vmatpush1.msra.mxu0 0.0
          %4655 = vmatprep.subr.mxu0 0.0
          %4656 = vmatpush1.msra.mxu0 0.0
          %4657 = vmatprep.subr.mxu0 0.0
          %4658 = vmatpush1.msra.mxu0 0.0
          %4659 = vmatprep.subr.mxu0 0.0
          %4660 = vmatpush1.msra.mxu0 0.0
          %4661 = vmatprep.subr.mxu0 0.0
          %4662 = vmatpush1.msra.mxu0 0.0
          %4663 = vmatprep.subr.mxu0 0.0
          %4664 = vmatpush1.msra.mxu0 0.0
          %4665 = vmatprep.subr.mxu0 0.0
          %4666 = vmatpush1.msra.mxu0 0.0
          %4667 = vmatprep.subr.mxu0 0.0
          %4668 = vmatpush1.msra.mxu0 0.0
          %4669 = vmatprep.subr.mxu0 0.0
          %4670 = vmatpush1.msra.mxu0 0.0
          %4671 = vmatprep.subr.mxu0 0.0
          %4672 = vmatpush1.msra.mxu0 0.0
          %4673 = vmatprep.subr.mxu0 0.0
          %4674 = vmatpush1.msra.mxu0 0.0
          %4675 = vmatprep.subr.mxu0 0.0
          %4676 = vmatpush1.msra.mxu0 0.0
          %4677 = vmatprep.subr.mxu0 0.0
          %4678 = vmatpush1.msra.mxu0 0.0
          %4679 = vmatprep.mubr.f32.mxu0 0.0
          %v4680 = vand.u32 %v4459, 4294901760
          %v4681 = vsub.f32 %v4459, %v4680
          %4682 = vmatmul.mubr.f32.gmra.mrb[0].mxu0 %v4681
          %v4683 = vpop.f32.mrb[0].mxu0
          %v4684 = vadd.f32 %v4610, %v4683
          %v4685 = vpop.f32.mrb[0].mxu0
          %4686 = vdwg.mxu0
          %4687 = vmatprep.subr.mxu0 0.0
          %v4688 = vand.u32 %v3093, 4294901760
          %4689 = vmatpush1.msra.mxu0 %v4688
          %4690 = vmatprep.subr.mxu0 0.0
          %4691 = vmatpush1.msra.mxu0 0.0
          %4692 = vmatprep.subr.mxu0 0.0
          %4693 = vmatpush1.msra.mxu0 0.0
          %4694 = vmatprep.subr.mxu0 0.0
          %4695 = vmatpush1.msra.mxu0 0.0
          %4696 = vmatprep.subr.mxu0 0.0
          %4697 = vmatpush1.msra.mxu0 0.0
          %4698 = vmatprep.subr.mxu0 0.0
          %4699 = vmatpush1.msra.mxu0 0.0
          %4700 = vmatprep.subr.mxu0 0.0
          %4701 = vmatpush1.msra.mxu0 0.0
          %4702 = vmatprep.subr.mxu0 0.0
          %4703 = vmatpush1.msra.mxu0 0.0
          %4704 = vmatprep.subr.mxu0 0.0
          %4705 = vmatpush1.msra.mxu0 0.0
          %4706 = vmatprep.subr.mxu0 0.0
          %4707 = vmatpush1.msra.mxu0 0.0
          %4708 = vmatprep.subr.mxu0 0.0
          %4709 = vmatpush1.msra.mxu0 0.0
          %4710 = vmatprep.subr.mxu0 0.0
          %4711 = vmatpush1.msra.mxu0 0.0
          %4712 = vmatprep.subr.mxu0 0.0
          %4713 = vmatpush1.msra.mxu0 0.0
          %4714 = vmatprep.subr.mxu0 0.0
          %4715 = vmatpush1.msra.mxu0 0.0
          %4716 = vmatprep.subr.mxu0 0.0
          %4717 = vmatpush1.msra.mxu0 0.0
          %4718 = vmatprep.subr.mxu0 0.0
          %4719 = vmatpush1.msra.mxu0 0.0
          %4720 = vmatprep.subr.mxu0 0.0
          %4721 = vmatpush1.msra.mxu0 0.0
          %4722 = vmatprep.subr.mxu0 0.0
          %4723 = vmatpush1.msra.mxu0 0.0
          %4724 = vmatprep.subr.mxu0 0.0
          %4725 = vmatpush1.msra.mxu0 0.0
          %4726 = vmatprep.subr.mxu0 0.0
          %4727 = vmatpush1.msra.mxu0 0.0
          %4728 = vmatprep.subr.mxu0 0.0
          %4729 = vmatpush1.msra.mxu0 0.0
          %4730 = vmatprep.subr.mxu0 0.0
          %4731 = vmatpush1.msra.mxu0 0.0
          %4732 = vmatprep.subr.mxu0 0.0
          %4733 = vmatpush1.msra.mxu0 0.0
          %4734 = vmatprep.subr.mxu0 0.0
          %4735 = vmatpush1.msra.mxu0 0.0
          %4736 = vmatprep.subr.mxu0 0.0
          %4737 = vmatpush1.msra.mxu0 0.0
          %4738 = vmatprep.subr.mxu0 0.0
          %4739 = vmatpush1.msra.mxu0 0.0
          %4740 = vmatprep.subr.mxu0 0.0
          %4741 = vmatpush1.msra.mxu0 0.0
          %4742 = vmatprep.subr.mxu0 0.0
          %4743 = vmatpush1.msra.mxu0 0.0
          %4744 = vmatprep.subr.mxu0 0.0
          %4745 = vmatpush1.msra.mxu0 0.0
          %4746 = vmatprep.subr.mxu0 0.0
          %4747 = vmatpush1.msra.mxu0 0.0
          %4748 = vmatprep.subr.mxu0 0.0
          %4749 = vmatpush1.msra.mxu0 0.0
          %4750 = vmatprep.subr.mxu0 0.0
          %4751 = vmatpush1.msra.mxu0 0.0
          %4752 = vmatprep.mubr.f32.mxu0 0.0
          %v4753 = vand.u32 %v4459, 4294901760
          %v4754 = vsub.f32 %v4459, %v4753
          %v4755 = vand.u32 %v4754, 4294901760
          %4756 = vmatmul.mubr.f32.gmra.mrb[0].mxu0 %v4755
          %v4757 = vpop.f32.mrb[0].mxu0
          %v4758 = vadd.f32 %v4684, %v4757
          %v4759 = vpop.f32.mrb[0].mxu0
          %4760 = vdwg.mxu0
          %4761 = vmatprep.subr.mxu0 0.0
          %v4762 = vand.u32 %v3093, 4294901760
          %v4763 = vsub.f32 %v3093, %v4762
          %v4764 = vand.u32 %v4763, 4294901760
          %4765 = vmatpush1.msra.mxu0 %v4764
          %4766 = vmatprep.subr.mxu0 0.0
          %4767 = vmatpush1.msra.mxu0 0.0
          %4768 = vmatprep.subr.mxu0 0.0
          %4769 = vmatpush1.msra.mxu0 0.0
          %4770 = vmatprep.subr.mxu0 0.0
          %4771 = vmatpush1.msra.mxu0 0.0
          %4772 = vmatprep.subr.mxu0 0.0
          %4773 = vmatpush1.msra.mxu0 0.0
          %4774 = vmatprep.subr.mxu0 0.0
          %4775 = vmatpush1.msra.mxu0 0.0
          %4776 = vmatprep.subr.mxu0 0.0
          %4777 = vmatpush1.msra.mxu0 0.0
          %4778 = vmatprep.subr.mxu0 0.0
          %4779 = vmatpush1.msra.mxu0 0.0
          %4780 = vmatprep.subr.mxu0 0.0
          %4781 = vmatpush1.msra.mxu0 0.0
          %4782 = vmatprep.subr.mxu0 0.0
          %4783 = vmatpush1.msra.mxu0 0.0
          %4784 = vmatprep.subr.mxu0 0.0
          %4785 = vmatpush1.msra.mxu0 0.0
          %4786 = vmatprep.subr.mxu0 0.0
          %4787 = vmatpush1.msra.mxu0 0.0
          %4788 = vmatprep.subr.mxu0 0.0
          %4789 = vmatpush1.msra.mxu0 0.0
          %4790 = vmatprep.subr.mxu0 0.0
          %4791 = vmatpush1.msra.mxu0 0.0
          %4792 = vmatprep.subr.mxu0 0.0
          %4793 = vmatpush1.msra.mxu0 0.0
          %4794 = vmatprep.subr.mxu0 0.0
          %4795 = vmatpush1.msra.mxu0 0.0
          %4796 = vmatprep.subr.mxu0 0.0
          %4797 = vmatpush1.msra.mxu0 0.0
          %4798 = vmatprep.subr.mxu0 0.0
          %4799 = vmatpush1.msra.mxu0 0.0
          %4800 = vmatprep.subr.mxu0 0.0
          %4801 = vmatpush1.msra.mxu0 0.0
          %4802 = vmatprep.subr.mxu0 0.0
          %4803 = vmatpush1.msra.mxu0 0.0
          %4804 = vmatprep.subr.mxu0 0.0
          %4805 = vmatpush1.msra.mxu0 0.0
          %4806 = vmatprep.subr.mxu0 0.0
          %4807 = vmatpush1.msra.mxu0 0.0
          %4808 = vmatprep.subr.mxu0 0.0
          %4809 = vmatpush1.msra.mxu0 0.0
          %4810 = vmatprep.subr.mxu0 0.0
          %4811 = vmatpush1.msra.mxu0 0.0
          %4812 = vmatprep.subr.mxu0 0.0
          %4813 = vmatpush1.msra.mxu0 0.0
          %4814 = vmatprep.subr.mxu0 0.0
          %4815 = vmatpush1.msra.mxu0 0.0
          %4816 = vmatprep.subr.mxu0 0.0
          %4817 = vmatpush1.msra.mxu0 0.0
          %4818 = vmatprep.subr.mxu0 0.0
          %4819 = vmatpush1.msra.mxu0 0.0
          %4820 = vmatprep.subr.mxu0 0.0
          %4821 = vmatpush1.msra.mxu0 0.0
          %4822 = vmatprep.subr.mxu0 0.0
          %4823 = vmatpush1.msra.mxu0 0.0
          %4824 = vmatprep.subr.mxu0 0.0
          %4825 = vmatpush1.msra.mxu0 0.0
          %4826 = vmatprep.subr.mxu0 0.0
          %4827 = vmatpush1.msra.mxu0 0.0
          %4828 = vmatprep.mubr.f32.mxu0 0.0
          %v4829 = vand.u32 %v4459, 4294901760
          %4830 = vmatmul.mubr.f32.gmra.mrb[0].mxu0 %v4829
          %v4831 = vpop.f32.mrb[0].mxu0
          %v4832 = vadd.f32 %v4758, %v4831
          %v4833 = vpop.f32.mrb[0].mxu0
          %4834 = vdwg.mxu0
          %4835 = vmatprep.subr.mxu0 0.0
          %v4836 = vand.u32 %v3093, 4294901760
          %4837 = vmatpush1.msra.mxu0 %v4836
          %4838 = vmatprep.subr.mxu0 0.0
          %4839 = vmatpush1.msra.mxu0 0.0
          %4840 = vmatprep.subr.mxu0 0.0
          %4841 = vmatpush1.msra.mxu0 0.0
          %4842 = vmatprep.subr.mxu0 0.0
          %4843 = vmatpush1.msra.mxu0 0.0
          %4844 = vmatprep.subr.mxu0 0.0
          %4845 = vmatpush1.msra.mxu0 0.0
          %4846 = vmatprep.subr.mxu0 0.0
          %4847 = vmatpush1.msra.mxu0 0.0
          %4848 = vmatprep.subr.mxu0 0.0
          %4849 = vmatpush1.msra.mxu0 0.0
          %4850 = vmatprep.subr.mxu0 0.0
          %4851 = vmatpush1.msra.mxu0 0.0
          %4852 = vmatprep.subr.mxu0 0.0
          %4853 = vmatpush1.msra.mxu0 0.0
          %4854 = vmatprep.subr.mxu0 0.0
          %4855 = vmatpush1.msra.mxu0 0.0
          %4856 = vmatprep.subr.mxu0 0.0
          %4857 = vmatpush1.msra.mxu0 0.0
          %4858 = vmatprep.subr.mxu0 0.0
          %4859 = vmatpush1.msra.mxu0 0.0
          %4860 = vmatprep.subr.mxu0 0.0
          %4861 = vmatpush1.msra.mxu0 0.0
          %4862 = vmatprep.subr.mxu0 0.0
          %4863 = vmatpush1.msra.mxu0 0.0
          %4864 = vmatprep.subr.mxu0 0.0
          %4865 = vmatpush1.msra.mxu0 0.0
          %4866 = vmatprep.subr.mxu0 0.0
          %4867 = vmatpush1.msra.mxu0 0.0
          %4868 = vmatprep.subr.mxu0 0.0
          %4869 = vmatpush1.msra.mxu0 0.0
          %4870 = vmatprep.subr.mxu0 0.0
          %4871 = vmatpush1.msra.mxu0 0.0
          %4872 = vmatprep.subr.mxu0 0.0
          %4873 = vmatpush1.msra.mxu0 0.0
          %4874 = vmatprep.subr.mxu0 0.0
          %4875 = vmatpush1.msra.mxu0 0.0
          %4876 = vmatprep.subr.mxu0 0.0
          %4877 = vmatpush1.msra.mxu0 0.0
          %4878 = vmatprep.subr.mxu0 0.0
          %4879 = vmatpush1.msra.mxu0 0.0
          %4880 = vmatprep.subr.mxu0 0.0
          %4881 = vmatpush1.msra.mxu0 0.0
          %4882 = vmatprep.subr.mxu0 0.0
          %4883 = vmatpush1.msra.mxu0 0.0
          %4884 = vmatprep.subr.mxu0 0.0
          %4885 = vmatpush1.msra.mxu0 0.0
          %4886 = vmatprep.subr.mxu0 0.0
          %4887 = vmatpush1.msra.mxu0 0.0
          %4888 = vmatprep.subr.mxu0 0.0
          %4889 = vmatpush1.msra.mxu0 0.0
          %4890 = vmatprep.subr.mxu0 0.0
          %4891 = vmatpush1.msra.mxu0 0.0
          %4892 = vmatprep.subr.mxu0 0.0
          %4893 = vmatpush1.msra.mxu0 0.0
          %4894 = vmatprep.subr.mxu0 0.0
          %4895 = vmatpush1.msra.mxu0 0.0
          %4896 = vmatprep.subr.mxu0 0.0
          %4897 = vmatpush1.msra.mxu0 0.0
          %4898 = vmatprep.subr.mxu0 0.0
          %4899 = vmatpush1.msra.mxu0 0.0
          %4900 = vmatprep.mubr.f32.mxu0 0.0
          %v4901 = vand.u32 %v4459, 4294901760
          %4902 = vmatmul.mubr.f32.gmra.mrb[0].mxu0 %v4901
          %v4903 = vpop.f32.mrb[0].mxu0
          %v4904 = vadd.f32 %v4832, %v4903
          %v4905 = vpop.f32.mrb[0].mxu0
          %4906 = vdwg.mxu0
          %v4907 = vsel %vm3110, %v3557, -inf
          %4908 = vmax.xlane.f32.xlu0 %v4907
          %v4909 = vpop.xlane.xlu0 %4908
          %v4910 = vsel %vm3110, %v4006, -inf
          %4911 = vmax.xlane.f32.xlu0 %v4910
          %v4912 = vpop.xlane.xlu0 %4911
          %v4913 = vsel %vm3110, %v4455, -inf
          %4914 = vmax.xlane.f32.xlu0 %v4913
          %v4915 = vpop.xlane.xlu0 %4914
          %v4916 = vsel %vm3110, %v4904, -inf
          %4917 = vmax.xlane.f32.xlu0 %v4916
          %v4918 = vpop.xlane.xlu0 %4917
          %v4919 = vmax.f32 %v3076, %v4909
          %v4920 = vmax.f32 %v3077, %v4912
          %v4921 = vmax.f32 %v3078, %v4915
          %v4922 = vmax.f32 %v3079, %v4918
          %v4923 = vsub.f32 %v3076, %v4919
          %v4924 = vsub.f32 %v3077, %v4920
          %v4925 = vsub.f32 %v3078, %v4921
          %v4926 = vsub.f32 %v3079, %v4922
          %v4927 = vmul.f32 %v4923, 1.442695
          %v4928 = vpow.pop %v4927
          %v4929 = vmul.f32 %v4924, 1.442695
          %v4930 = vpow.pop %v4929
          %v4931 = vmul.f32 %v4925, 1.442695
          %v4932 = vpow.pop %v4931
          %v4933 = vmul.f32 %v4926, 1.442695
          %v4934 = vpow.pop %v4933
          %v4935 = vsub.f32 %v3557, %v4919
          %v4936 = vsub.f32 %v4006, %v4920
          %v4937 = vsub.f32 %v4455, %v4921
          %v4938 = vsub.f32 %v4904, %v4922
          %v4939 = vmul.f32 %v4935, 1.442695
          %v4940 = vpow.pop %v4939
          %v4941 = vmul.f32 %v4936, 1.442695
          %v4942 = vpow.pop %v4941
          %v4943 = vmul.f32 %v4937, 1.442695
          %v4944 = vpow.pop %v4943
          %v4945 = vmul.f32 %v4938, 1.442695
          %v4946 = vpow.pop %v4945
          %v4947 = vmul.f32 %v4928, %v3080
          %v4948 = vmul.f32 %v4930, %v3081
          %v4949 = vmul.f32 %v4932, %v3082
          %v4950 = vmul.f32 %v4934, %v3083
          %v4951 = vsel %vm3110, %v4940, 0.0
          %4952 = vadd.xlane.f32.xlu0 %v4951
          %v4953 = vpop.xlane.xlu0 %4952
          %v4954 = vsel %vm3110, %v4942, 0.0
          %4955 = vadd.xlane.f32.xlu0 %v4954
          %v4956 = vpop.xlane.xlu0 %4955
          %v4957 = vsel %vm3110, %v4944, 0.0
          %4958 = vadd.xlane.f32.xlu0 %v4957
          %v4959 = vpop.xlane.xlu0 %4958
          %v4960 = vsel %vm3110, %v4946, 0.0
          %4961 = vadd.xlane.f32.xlu0 %v4960
          %v4962 = vpop.xlane.xlu0 %4961
          %v4963 = vadd.f32 %v4947, %v4953
          %v4964 = vadd.f32 %v4948, %v4956
          %v4965 = vadd.f32 %v4949, %v4959
          %v4966 = vadd.f32 %v4950, %v4962
          %v4967 = vmul.f32 %v4928, %v3084
          %v4968 = vmul.f32 %v4930, %v3085
          %v4969 = vmul.f32 %v4932, %v3086
          %v4970 = vmul.f32 %v4934, %v3087
          %v4972 = vsel %vm3110, %v4940, 0
          %4974 = vmatprep.subr.mxu0 0.0
          %v4975 = vand.u32 %v3095, 4294901760
          %4976 = vmatpush1.msra.mxu0 %v4975
          %4977 = vmatprep.subr.mxu0 0.0
          %4978 = vmatpush1.msra.mxu0 0.0
          %4979 = vmatprep.subr.mxu0 0.0
          %4980 = vmatpush1.msra.mxu0 0.0
          %4981 = vmatprep.subr.mxu0 0.0
          %4982 = vmatpush1.msra.mxu0 0.0
          %4983 = vmatprep.subr.mxu0 0.0
          %4984 = vmatpush1.msra.mxu0 0.0
          %4985 = vmatprep.subr.mxu0 0.0
          %4986 = vmatpush1.msra.mxu0 0.0
          %4987 = vmatprep.subr.mxu0 0.0
          %4988 = vmatpush1.msra.mxu0 0.0
          %4989 = vmatprep.subr.mxu0 0.0
          %4990 = vmatpush1.msra.mxu0 0.0
          %4991 = vmatprep.subr.mxu0 0.0
          %4992 = vmatpush1.msra.mxu0 0.0
          %4993 = vmatprep.subr.mxu0 0.0
          %4994 = vmatpush1.msra.mxu0 0.0
          %4995 = vmatprep.subr.mxu0 0.0
          %4996 = vmatpush1.msra.mxu0 0.0
          %4997 = vmatprep.subr.mxu0 0.0
          %4998 = vmatpush1.msra.mxu0 0.0
          %4999 = vmatprep.subr.mxu0 0.0
          %5000 = vmatpush1.msra.mxu0 0.0
          %5001 = vmatprep.subr.mxu0 0.0
          %5002 = vmatpush1.msra.mxu0 0.0
          %5003 = vmatprep.subr.mxu0 0.0
          %5004 = vmatpush1.msra.mxu0 0.0
          %5005 = vmatprep.subr.mxu0 0.0
          %5006 = vmatpush1.msra.mxu0 0.0
          %5007 = vmatprep.subr.mxu0 0.0
          %5008 = vmatpush1.msra.mxu0 0.0
          %5009 = vmatprep.subr.mxu0 0.0
          %5010 = vmatpush1.msra.mxu0 0.0
          %5011 = vmatprep.subr.mxu0 0.0
          %5012 = vmatpush1.msra.mxu0 0.0
          %5013 = vmatprep.subr.mxu0 0.0
          %5014 = vmatpush1.msra.mxu0 0.0
          %5015 = vmatprep.subr.mxu0 0.0
          %5016 = vmatpush1.msra.mxu0 0.0
          %5017 = vmatprep.subr.mxu0 0.0
          %5018 = vmatpush1.msra.mxu0 0.0
          %5019 = vmatprep.subr.mxu0 0.0
          %5020 = vmatpush1.msra.mxu0 0.0
          %5021 = vmatprep.subr.mxu0 0.0
          %5022 = vmatpush1.msra.mxu0 0.0
          %5023 = vmatprep.subr.mxu0 0.0
          %5024 = vmatpush1.msra.mxu0 0.0
          %5025 = vmatprep.subr.mxu0 0.0
          %5026 = vmatpush1.msra.mxu0 0.0
          %5027 = vmatprep.subr.mxu0 0.0
          %5028 = vmatpush1.msra.mxu0 0.0
          %5029 = vmatprep.subr.mxu0 0.0
          %5030 = vmatpush1.msra.mxu0 0.0
          %5031 = vmatprep.subr.mxu0 0.0
          %5032 = vmatpush1.msra.mxu0 0.0
          %5033 = vmatprep.subr.mxu0 0.0
          %5034 = vmatpush1.msra.mxu0 0.0
          %5035 = vmatprep.subr.mxu0 0.0
          %5036 = vmatpush1.msra.mxu0 0.0
          %5037 = vmatprep.subr.mxu0 0.0
          %5038 = vmatpush1.msra.mxu0 0.0
          %5039 = vmatprep.mubr.f32.mxu0 0.0
          %v5040 = vand.u32 %v4972, 4294901760
          %v5041 = vsub.f32 %v4972, %v5040
          %v5042 = vand.u32 %v5041, 4294901760
          %v5043 = vsub.f32 %v5041, %v5042
          %v5044 = vand.u32 %v5043, 4294901760
          %5045 = vmatmul.mubr.f32.gmra.mrb[0].mxu0 %v5044
          %v5046 = vpop.f32.mrb[0].mxu0
          %v5047 = vadd.f32 0.0, %v5046
          %v5048 = vpop.f32.mrb[0].mxu0
          %5049 = vdwg.mxu0
          %5050 = vmatprep.subr.mxu0 0.0
          %v5051 = vand.u32 %v3095, 4294901760
          %v5052 = vsub.f32 %v3095, %v5051
          %v5053 = vand.u32 %v5052, 4294901760
          %v5054 = vsub.f32 %v5052, %v5053
          %v5055 = vand.u32 %v5054, 4294901760
          %5056 = vmatpush1.msra.mxu0 %v5055
          %5057 = vmatprep.subr.mxu0 0.0
          %5058 = vmatpush1.msra.mxu0 0.0
          %5059 = vmatprep.subr.mxu0 0.0
          %5060 = vmatpush1.msra.mxu0 0.0
          %5061 = vmatprep.subr.mxu0 0.0
          %5062 = vmatpush1.msra.mxu0 0.0
          %5063 = vmatprep.subr.mxu0 0.0
          %5064 = vmatpush1.msra.mxu0 0.0
          %5065 = vmatprep.subr.mxu0 0.0
          %5066 = vmatpush1.msra.mxu0 0.0
          %5067 = vmatprep.subr.mxu0 0.0
          %5068 = vmatpush1.msra.mxu0 0.0
          %5069 = vmatprep.subr.mxu0 0.0
          %5070 = vmatpush1.msra.mxu0 0.0
          %5071 = vmatprep.subr.mxu0 0.0
          %5072 = vmatpush1.msra.mxu0 0.0
          %5073 = vmatprep.subr.mxu0 0.0
          %5074 = vmatpush1.msra.mxu0 0.0
          %5075 = vmatprep.subr.mxu0 0.0
          %5076 = vmatpush1.msra.mxu0 0.0
          %5077 = vmatprep.subr.mxu0 0.0
          %5078 = vmatpush1.msra.mxu0 0.0
          %5079 = vmatprep.subr.mxu0 0.0
          %5080 = vmatpush1.msra.mxu0 0.0
          %5081 = vmatprep.subr.mxu0 0.0
          %5082 = vmatpush1.msra.mxu0 0.0
          %5083 = vmatprep.subr.mxu0 0.0
          %5084 = vmatpush1.msra.mxu0 0.0
          %5085 = vmatprep.subr.mxu0 0.0
          %5086 = vmatpush1.msra.mxu0 0.0
          %5087 = vmatprep.subr.mxu0 0.0
          %5088 = vmatpush1.msra.mxu0 0.0
          %5089 = vmatprep.subr.mxu0 0.0
          %5090 = vmatpush1.msra.mxu0 0.0
          %5091 = vmatprep.subr.mxu0 0.0
          %5092 = vmatpush1.msra.mxu0 0.0
          %5093 = vmatprep.subr.mxu0 0.0
          %5094 = vmatpush1.msra.mxu0 0.0
          %5095 = vmatprep.subr.mxu0 0.0
          %5096 = vmatpush1.msra.mxu0 0.0
          %5097 = vmatprep.subr.mxu0 0.0
          %5098 = vmatpush1.msra.mxu0 0.0
          %5099 = vmatprep.subr.mxu0 0.0
          %5100 = vmatpush1.msra.mxu0 0.0
          %5101 = vmatprep.subr.mxu0 0.0
          %5102 = vmatpush1.msra.mxu0 0.0
          %5103 = vmatprep.subr.mxu0 0.0
          %5104 = vmatpush1.msra.mxu0 0.0
          %5105 = vmatprep.subr.mxu0 0.0
          %5106 = vmatpush1.msra.mxu0 0.0
          %5107 = vmatprep.subr.mxu0 0.0
          %5108 = vmatpush1.msra.mxu0 0.0
          %5109 = vmatprep.subr.mxu0 0.0
          %5110 = vmatpush1.msra.mxu0 0.0
          %5111 = vmatprep.subr.mxu0 0.0
          %5112 = vmatpush1.msra.mxu0 0.0
          %5113 = vmatprep.subr.mxu0 0.0
          %5114 = vmatpush1.msra.mxu0 0.0
          %5115 = vmatprep.subr.mxu0 0.0
          %5116 = vmatpush1.msra.mxu0 0.0
          %5117 = vmatprep.subr.mxu0 0.0
          %5118 = vmatpush1.msra.mxu0 0.0
          %5119 = vmatprep.mubr.f32.mxu0 0.0
          %v5120 = vand.u32 %v4972, 4294901760
          %5121 = vmatmul.mubr.f32.gmra.mrb[0].mxu0 %v5120
          %v5122 = vpop.f32.mrb[0].mxu0
          %v5123 = vadd.f32 %v5047, %v5122
          %v5124 = vpop.f32.mrb[0].mxu0
          %5125 = vdwg.mxu0
          %5126 = vmatprep.subr.mxu0 0.0
          %v5127 = vand.u32 %v3095, 4294901760
          %v5128 = vsub.f32 %v3095, %v5127
          %5129 = vmatpush1.msra.mxu0 %v5128
          %5130 = vmatprep.subr.mxu0 0.0
          %5131 = vmatpush1.msra.mxu0 0.0
          %5132 = vmatprep.subr.mxu0 0.0
          %5133 = vmatpush1.msra.mxu0 0.0
          %5134 = vmatprep.subr.mxu0 0.0
          %5135 = vmatpush1.msra.mxu0 0.0
          %5136 = vmatprep.subr.mxu0 0.0
          %5137 = vmatpush1.msra.mxu0 0.0
          %5138 = vmatprep.subr.mxu0 0.0
          %5139 = vmatpush1.msra.mxu0 0.0
          %5140 = vmatprep.subr.mxu0 0.0
          %5141 = vmatpush1.msra.mxu0 0.0
          %5142 = vmatprep.subr.mxu0 0.0
          %5143 = vmatpush1.msra.mxu0 0.0
          %5144 = vmatprep.subr.mxu0 0.0
          %5145 = vmatpush1.msra.mxu0 0.0
          %5146 = vmatprep.subr.mxu0 0.0
          %5147 = vmatpush1.msra.mxu0 0.0
          %5148 = vmatprep.subr.mxu0 0.0
          %5149 = vmatpush1.msra.mxu0 0.0
          %5150 = vmatprep.subr.mxu0 0.0
          %5151 = vmatpush1.msra.mxu0 0.0
          %5152 = vmatprep.subr.mxu0 0.0
          %5153 = vmatpush1.msra.mxu0 0.0
          %5154 = vmatprep.subr.mxu0 0.0
          %5155 = vmatpush1.msra.mxu0 0.0
          %5156 = vmatprep.subr.mxu0 0.0
          %5157 = vmatpush1.msra.mxu0 0.0
          %5158 = vmatprep.subr.mxu0 0.0
          %5159 = vmatpush1.msra.mxu0 0.0
          %5160 = vmatprep.subr.mxu0 0.0
          %5161 = vmatpush1.msra.mxu0 0.0
          %5162 = vmatprep.subr.mxu0 0.0
          %5163 = vmatpush1.msra.mxu0 0.0
          %5164 = vmatprep.subr.mxu0 0.0
          %5165 = vmatpush1.msra.mxu0 0.0
          %5166 = vmatprep.subr.mxu0 0.0
          %5167 = vmatpush1.msra.mxu0 0.0
          %5168 = vmatprep.subr.mxu0 0.0
          %5169 = vmatpush1.msra.mxu0 0.0
          %5170 = vmatprep.subr.mxu0 0.0
          %5171 = vmatpush1.msra.mxu0 0.0
          %5172 = vmatprep.subr.mxu0 0.0
          %5173 = vmatpush1.msra.mxu0 0.0
          %5174 = vmatprep.subr.mxu0 0.0
          %5175 = vmatpush1.msra.mxu0 0.0
          %5176 = vmatprep.subr.mxu0 0.0
          %5177 = vmatpush1.msra.mxu0 0.0
          %5178 = vmatprep.subr.mxu0 0.0
          %5179 = vmatpush1.msra.mxu0 0.0
          %5180 = vmatprep.subr.mxu0 0.0
          %5181 = vmatpush1.msra.mxu0 0.0
          %5182 = vmatprep.subr.mxu0 0.0
          %5183 = vmatpush1.msra.mxu0 0.0
          %5184 = vmatprep.subr.mxu0 0.0
          %5185 = vmatpush1.msra.mxu0 0.0
          %5186 = vmatprep.subr.mxu0 0.0
          %5187 = vmatpush1.msra.mxu0 0.0
          %5188 = vmatprep.subr.mxu0 0.0
          %5189 = vmatpush1.msra.mxu0 0.0
          %5190 = vmatprep.subr.mxu0 0.0
          %5191 = vmatpush1.msra.mxu0 0.0
          %5192 = vmatprep.mubr.f32.mxu0 0.0
          %v5193 = vand.u32 %v4972, 4294901760
          %v5194 = vsub.f32 %v4972, %v5193
          %5195 = vmatmul.mubr.f32.gmra.mrb[0].mxu0 %v5194
          %v5196 = vpop.f32.mrb[0].mxu0
          %v5197 = vadd.f32 %v5123, %v5196
          %v5198 = vpop.f32.mrb[0].mxu0
          %5199 = vdwg.mxu0
          %5200 = vmatprep.subr.mxu0 0.0
          %v5201 = vand.u32 %v3095, 4294901760
          %5202 = vmatpush1.msra.mxu0 %v5201
          %5203 = vmatprep.subr.mxu0 0.0
          %5204 = vmatpush1.msra.mxu0 0.0
          %5205 = vmatprep.subr.mxu0 0.0
          %5206 = vmatpush1.msra.mxu0 0.0
          %5207 = vmatprep.subr.mxu0 0.0
          %5208 = vmatpush1.msra.mxu0 0.0
          %5209 = vmatprep.subr.mxu0 0.0
          %5210 = vmatpush1.msra.mxu0 0.0
          %5211 = vmatprep.subr.mxu0 0.0
          %5212 = vmatpush1.msra.mxu0 0.0
          %5213 = vmatprep.subr.mxu0 0.0
          %5214 = vmatpush1.msra.mxu0 0.0
          %5215 = vmatprep.subr.mxu0 0.0
          %5216 = vmatpush1.msra.mxu0 0.0
          %5217 = vmatprep.subr.mxu0 0.0
          %5218 = vmatpush1.msra.mxu0 0.0
          %5219 = vmatprep.subr.mxu0 0.0
          %5220 = vmatpush1.msra.mxu0 0.0
          %5221 = vmatprep.subr.mxu0 0.0
          %5222 = vmatpush1.msra.mxu0 0.0
          %5223 = vmatprep.subr.mxu0 0.0
          %5224 = vmatpush1.msra.mxu0 0.0
          %5225 = vmatprep.subr.mxu0 0.0
          %5226 = vmatpush1.msra.mxu0 0.0
          %5227 = vmatprep.subr.mxu0 0.0
          %5228 = vmatpush1.msra.mxu0 0.0
          %5229 = vmatprep.subr.mxu0 0.0
          %5230 = vmatpush1.msra.mxu0 0.0
          %5231 = vmatprep.subr.mxu0 0.0
          %5232 = vmatpush1.msra.mxu0 0.0
          %5233 = vmatprep.subr.mxu0 0.0
          %5234 = vmatpush1.msra.mxu0 0.0
          %5235 = vmatprep.subr.mxu0 0.0
          %5236 = vmatpush1.msra.mxu0 0.0
          %5237 = vmatprep.subr.mxu0 0.0
          %5238 = vmatpush1.msra.mxu0 0.0
          %5239 = vmatprep.subr.mxu0 0.0
          %5240 = vmatpush1.msra.mxu0 0.0
          %5241 = vmatprep.subr.mxu0 0.0
          %5242 = vmatpush1.msra.mxu0 0.0
          %5243 = vmatprep.subr.mxu0 0.0
          %5244 = vmatpush1.msra.mxu0 0.0
          %5245 = vmatprep.subr.mxu0 0.0
          %5246 = vmatpush1.msra.mxu0 0.0
          %5247 = vmatprep.subr.mxu0 0.0
          %5248 = vmatpush1.msra.mxu0 0.0
          %5249 = vmatprep.subr.mxu0 0.0
          %5250 = vmatpush1.msra.mxu0 0.0
          %5251 = vmatprep.subr.mxu0 0.0
          %5252 = vmatpush1.msra.mxu0 0.0
          %5253 = vmatprep.subr.mxu0 0.0
          %5254 = vmatpush1.msra.mxu0 0.0
          %5255 = vmatprep.subr.mxu0 0.0
          %5256 = vmatpush1.msra.mxu0 0.0
          %5257 = vmatprep.subr.mxu0 0.0
          %5258 = vmatpush1.msra.mxu0 0.0
          %5259 = vmatprep.subr.mxu0 0.0
          %5260 = vmatpush1.msra.mxu0 0.0
          %5261 = vmatprep.subr.mxu0 0.0
          %5262 = vmatpush1.msra.mxu0 0.0
          %5263 = vmatprep.subr.mxu0 0.0
          %5264 = vmatpush1.msra.mxu0 0.0
          %5265 = vmatprep.mubr.f32.mxu0 0.0
          %v5266 = vand.u32 %v4972, 4294901760
          %v5267 = vsub.f32 %v4972, %v5266
          %v5268 = vand.u32 %v5267, 4294901760
          %5269 = vmatmul.mubr.f32.gmra.mrb[0].mxu0 %v5268
          %v5270 = vpop.f32.mrb[0].mxu0
          %v5271 = vadd.f32 %v5197, %v5270
          %v5272 = vpop.f32.mrb[0].mxu0
          %5273 = vdwg.mxu0
          %5274 = vmatprep.subr.mxu0 0.0
          %v5275 = vand.u32 %v3095, 4294901760
          %v5276 = vsub.f32 %v3095, %v5275
          %v5277 = vand.u32 %v5276, 4294901760
          %5278 = vmatpush1.msra.mxu0 %v5277
          %5279 = vmatprep.subr.mxu0 0.0
          %5280 = vmatpush1.msra.mxu0 0.0
          %5281 = vmatprep.subr.mxu0 0.0
          %5282 = vmatpush1.msra.mxu0 0.0
          %5283 = vmatprep.subr.mxu0 0.0
          %5284 = vmatpush1.msra.mxu0 0.0
          %5285 = vmatprep.subr.mxu0 0.0
          %5286 = vmatpush1.msra.mxu0 0.0
          %5287 = vmatprep.subr.mxu0 0.0
          %5288 = vmatpush1.msra.mxu0 0.0
          %5289 = vmatprep.subr.mxu0 0.0
          %5290 = vmatpush1.msra.mxu0 0.0
          %5291 = vmatprep.subr.mxu0 0.0
          %5292 = vmatpush1.msra.mxu0 0.0
          %5293 = vmatprep.subr.mxu0 0.0
          %5294 = vmatpush1.msra.mxu0 0.0
          %5295 = vmatprep.subr.mxu0 0.0
          %5296 = vmatpush1.msra.mxu0 0.0
          %5297 = vmatprep.subr.mxu0 0.0
          %5298 = vmatpush1.msra.mxu0 0.0
          %5299 = vmatprep.subr.mxu0 0.0
          %5300 = vmatpush1.msra.mxu0 0.0
          %5301 = vmatprep.subr.mxu0 0.0
          %5302 = vmatpush1.msra.mxu0 0.0
          %5303 = vmatprep.subr.mxu0 0.0
          %5304 = vmatpush1.msra.mxu0 0.0
          %5305 = vmatprep.subr.mxu0 0.0
          %5306 = vmatpush1.msra.mxu0 0.0
          %5307 = vmatprep.subr.mxu0 0.0
          %5308 = vmatpush1.msra.mxu0 0.0
          %5309 = vmatprep.subr.mxu0 0.0
          %5310 = vmatpush1.msra.mxu0 0.0
          %5311 = vmatprep.subr.mxu0 0.0
          %5312 = vmatpush1.msra.mxu0 0.0
          %5313 = vmatprep.subr.mxu0 0.0
          %5314 = vmatpush1.msra.mxu0 0.0
          %5315 = vmatprep.subr.mxu0 0.0
          %5316 = vmatpush1.msra.mxu0 0.0
          %5317 = vmatprep.subr.mxu0 0.0
          %5318 = vmatpush1.msra.mxu0 0.0
          %5319 = vmatprep.subr.mxu0 0.0
          %5320 = vmatpush1.msra.mxu0 0.0
          %5321 = vmatprep.subr.mxu0 0.0
          %5322 = vmatpush1.msra.mxu0 0.0
          %5323 = vmatprep.subr.mxu0 0.0
          %5324 = vmatpush1.msra.mxu0 0.0
          %5325 = vmatprep.subr.mxu0 0.0
          %5326 = vmatpush1.msra.mxu0 0.0
          %5327 = vmatprep.subr.mxu0 0.0
          %5328 = vmatpush1.msra.mxu0 0.0
          %5329 = vmatprep.subr.mxu0 0.0
          %5330 = vmatpush1.msra.mxu0 0.0
          %5331 = vmatprep.subr.mxu0 0.0
          %5332 = vmatpush1.msra.mxu0 0.0
          %5333 = vmatprep.subr.mxu0 0.0
          %5334 = vmatpush1.msra.mxu0 0.0
          %5335 = vmatprep.subr.mxu0 0.0
          %5336 = vmatpush1.msra.mxu0 0.0
          %5337 = vmatprep.subr.mxu0 0.0
          %5338 = vmatpush1.msra.mxu0 0.0
          %5339 = vmatprep.subr.mxu0 0.0
          %5340 = vmatpush1.msra.mxu0 0.0
          %5341 = vmatprep.mubr.f32.mxu0 0.0
          %v5342 = vand.u32 %v4972, 4294901760
          %5343 = vmatmul.mubr.f32.gmra.mrb[0].mxu0 %v5342
          %v5344 = vpop.f32.mrb[0].mxu0
          %v5345 = vadd.f32 %v5271, %v5344
          %v5346 = vpop.f32.mrb[0].mxu0
          %5347 = vdwg.mxu0
          %5348 = vmatprep.subr.mxu0 0.0
          %v5349 = vand.u32 %v3095, 4294901760
          %5350 = vmatpush1.msra.mxu0 %v5349
          %5351 = vmatprep.subr.mxu0 0.0
          %5352 = vmatpush1.msra.mxu0 0.0
          %5353 = vmatprep.subr.mxu0 0.0
          %5354 = vmatpush1.msra.mxu0 0.0
          %5355 = vmatprep.subr.mxu0 0.0
          %5356 = vmatpush1.msra.mxu0 0.0
          %5357 = vmatprep.subr.mxu0 0.0
          %5358 = vmatpush1.msra.mxu0 0.0
          %5359 = vmatprep.subr.mxu0 0.0
          %5360 = vmatpush1.msra.mxu0 0.0
          %5361 = vmatprep.subr.mxu0 0.0
          %5362 = vmatpush1.msra.mxu0 0.0
          %5363 = vmatprep.subr.mxu0 0.0
          %5364 = vmatpush1.msra.mxu0 0.0
          %5365 = vmatprep.subr.mxu0 0.0
          %5366 = vmatpush1.msra.mxu0 0.0
          %5367 = vmatprep.subr.mxu0 0.0
          %5368 = vmatpush1.msra.mxu0 0.0
          %5369 = vmatprep.subr.mxu0 0.0
          %5370 = vmatpush1.msra.mxu0 0.0
          %5371 = vmatprep.subr.mxu0 0.0
          %5372 = vmatpush1.msra.mxu0 0.0
          %5373 = vmatprep.subr.mxu0 0.0
          %5374 = vmatpush1.msra.mxu0 0.0
          %5375 = vmatprep.subr.mxu0 0.0
          %5376 = vmatpush1.msra.mxu0 0.0
          %5377 = vmatprep.subr.mxu0 0.0
          %5378 = vmatpush1.msra.mxu0 0.0
          %5379 = vmatprep.subr.mxu0 0.0
          %5380 = vmatpush1.msra.mxu0 0.0
          %5381 = vmatprep.subr.mxu0 0.0
          %5382 = vmatpush1.msra.mxu0 0.0
          %5383 = vmatprep.subr.mxu0 0.0
          %5384 = vmatpush1.msra.mxu0 0.0
          %5385 = vmatprep.subr.mxu0 0.0
          %5386 = vmatpush1.msra.mxu0 0.0
          %5387 = vmatprep.subr.mxu0 0.0
          %5388 = vmatpush1.msra.mxu0 0.0
          %5389 = vmatprep.subr.mxu0 0.0
          %5390 = vmatpush1.msra.mxu0 0.0
          %5391 = vmatprep.subr.mxu0 0.0
          %5392 = vmatpush1.msra.mxu0 0.0
          %5393 = vmatprep.subr.mxu0 0.0
          %5394 = vmatpush1.msra.mxu0 0.0
          %5395 = vmatprep.subr.mxu0 0.0
          %5396 = vmatpush1.msra.mxu0 0.0
          %5397 = vmatprep.subr.mxu0 0.0
          %5398 = vmatpush1.msra.mxu0 0.0
          %5399 = vmatprep.subr.mxu0 0.0
          %5400 = vmatpush1.msra.mxu0 0.0
          %5401 = vmatprep.subr.mxu0 0.0
          %5402 = vmatpush1.msra.mxu0 0.0
          %5403 = vmatprep.subr.mxu0 0.0
          %5404 = vmatpush1.msra.mxu0 0.0
          %5405 = vmatprep.subr.mxu0 0.0
          %5406 = vmatpush1.msra.mxu0 0.0
          %5407 = vmatprep.subr.mxu0 0.0
          %5408 = vmatpush1.msra.mxu0 0.0
          %5409 = vmatprep.subr.mxu0 0.0
          %5410 = vmatpush1.msra.mxu0 0.0
          %5411 = vmatprep.subr.mxu0 0.0
          %5412 = vmatpush1.msra.mxu0 0.0
          %5413 = vmatprep.mubr.f32.mxu0 0.0
          %v5414 = vand.u32 %v4972, 4294901760
          %5415 = vmatmul.mubr.f32.gmra.mrb[0].mxu0 %v5414
          %v5416 = vpop.f32.mrb[0].mxu0
          %v5417 = vadd.f32 %v5345, %v5416
          %v5418 = vpop.f32.mrb[0].mxu0
          %5419 = vdwg.mxu0
          %v5421 = vsel %vm3110, %v4942, 0
          %5423 = vmatprep.subr.mxu0 0.0
          %v5424 = vand.u32 %v3096, 4294901760
          %5425 = vmatpush1.msra.mxu0 %v5424
          %5426 = vmatprep.subr.mxu0 0.0
          %5427 = vmatpush1.msra.mxu0 0.0
          %5428 = vmatprep.subr.mxu0 0.0
          %5429 = vmatpush1.msra.mxu0 0.0
          %5430 = vmatprep.subr.mxu0 0.0
          %5431 = vmatpush1.msra.mxu0 0.0
          %5432 = vmatprep.subr.mxu0 0.0
          %5433 = vmatpush1.msra.mxu0 0.0
          %5434 = vmatprep.subr.mxu0 0.0
          %5435 = vmatpush1.msra.mxu0 0.0
          %5436 = vmatprep.subr.mxu0 0.0
          %5437 = vmatpush1.msra.mxu0 0.0
          %5438 = vmatprep.subr.mxu0 0.0
          %5439 = vmatpush1.msra.mxu0 0.0
          %5440 = vmatprep.subr.mxu0 0.0
          %5441 = vmatpush1.msra.mxu0 0.0
          %5442 = vmatprep.subr.mxu0 0.0
          %5443 = vmatpush1.msra.mxu0 0.0
          %5444 = vmatprep.subr.mxu0 0.0
          %5445 = vmatpush1.msra.mxu0 0.0
          %5446 = vmatprep.subr.mxu0 0.0
          %5447 = vmatpush1.msra.mxu0 0.0
          %5448 = vmatprep.subr.mxu0 0.0
          %5449 = vmatpush1.msra.mxu0 0.0
          %5450 = vmatprep.subr.mxu0 0.0
          %5451 = vmatpush1.msra.mxu0 0.0
          %5452 = vmatprep.subr.mxu0 0.0
          %5453 = vmatpush1.msra.mxu0 0.0
          %5454 = vmatprep.subr.mxu0 0.0
          %5455 = vmatpush1.msra.mxu0 0.0
          %5456 = vmatprep.subr.mxu0 0.0
          %5457 = vmatpush1.msra.mxu0 0.0
          %5458 = vmatprep.subr.mxu0 0.0
          %5459 = vmatpush1.msra.mxu0 0.0
          %5460 = vmatprep.subr.mxu0 0.0
          %5461 = vmatpush1.msra.mxu0 0.0
          %5462 = vmatprep.subr.mxu0 0.0
          %5463 = vmatpush1.msra.mxu0 0.0
          %5464 = vmatprep.subr.mxu0 0.0
          %5465 = vmatpush1.msra.mxu0 0.0
          %5466 = vmatprep.subr.mxu0 0.0
          %5467 = vmatpush1.msra.mxu0 0.0
          %5468 = vmatprep.subr.mxu0 0.0
          %5469 = vmatpush1.msra.mxu0 0.0
          %5470 = vmatprep.subr.mxu0 0.0
          %5471 = vmatpush1.msra.mxu0 0.0
          %5472 = vmatprep.subr.mxu0 0.0
          %5473 = vmatpush1.msra.mxu0 0.0
          %5474 = vmatprep.subr.mxu0 0.0
          %5475 = vmatpush1.msra.mxu0 0.0
          %5476 = vmatprep.subr.mxu0 0.0
          %5477 = vmatpush1.msra.mxu0 0.0
          %5478 = vmatprep.subr.mxu0 0.0
          %5479 = vmatpush1.msra.mxu0 0.0
          %5480 = vmatprep.subr.mxu0 0.0
          %5481 = vmatpush1.msra.mxu0 0.0
          %5482 = vmatprep.subr.mxu0 0.0
          %5483 = vmatpush1.msra.mxu0 0.0
          %5484 = vmatprep.subr.mxu0 0.0
          %5485 = vmatpush1.msra.mxu0 0.0
          %5486 = vmatprep.subr.mxu0 0.0
          %5487 = vmatpush1.msra.mxu0 0.0
          %5488 = vmatprep.mubr.f32.mxu0 0.0
          %v5489 = vand.u32 %v5421, 4294901760
          %v5490 = vsub.f32 %v5421, %v5489
          %v5491 = vand.u32 %v5490, 4294901760
          %v5492 = vsub.f32 %v5490, %v5491
          %v5493 = vand.u32 %v5492, 4294901760
          %5494 = vmatmul.mubr.f32.gmra.mrb[0].mxu0 %v5493
          %v5495 = vpop.f32.mrb[0].mxu0
          %v5496 = vadd.f32 0.0, %v5495
          %v5497 = vpop.f32.mrb[0].mxu0
          %5498 = vdwg.mxu0
          %5499 = vmatprep.subr.mxu0 0.0
          %v5500 = vand.u32 %v3096, 4294901760
          %v5501 = vsub.f32 %v3096, %v5500
          %v5502 = vand.u32 %v5501, 4294901760
          %v5503 = vsub.f32 %v5501, %v5502
          %v5504 = vand.u32 %v5503, 4294901760
          %5505 = vmatpush1.msra.mxu0 %v5504
          %5506 = vmatprep.subr.mxu0 0.0
          %5507 = vmatpush1.msra.mxu0 0.0
          %5508 = vmatprep.subr.mxu0 0.0
          %5509 = vmatpush1.msra.mxu0 0.0
          %5510 = vmatprep.subr.mxu0 0.0
          %5511 = vmatpush1.msra.mxu0 0.0
          %5512 = vmatprep.subr.mxu0 0.0
          %5513 = vmatpush1.msra.mxu0 0.0
          %5514 = vmatprep.subr.mxu0 0.0
          %5515 = vmatpush1.msra.mxu0 0.0
          %5516 = vmatprep.subr.mxu0 0.0
          %5517 = vmatpush1.msra.mxu0 0.0
          %5518 = vmatprep.subr.mxu0 0.0
          %5519 = vmatpush1.msra.mxu0 0.0
          %5520 = vmatprep.subr.mxu0 0.0
          %5521 = vmatpush1.msra.mxu0 0.0
          %5522 = vmatprep.subr.mxu0 0.0
          %5523 = vmatpush1.msra.mxu0 0.0
          %5524 = vmatprep.subr.mxu0 0.0
          %5525 = vmatpush1.msra.mxu0 0.0
          %5526 = vmatprep.subr.mxu0 0.0
          %5527 = vmatpush1.msra.mxu0 0.0
          %5528 = vmatprep.subr.mxu0 0.0
          %5529 = vmatpush1.msra.mxu0 0.0
          %5530 = vmatprep.subr.mxu0 0.0
          %5531 = vmatpush1.msra.mxu0 0.0
          %5532 = vmatprep.subr.mxu0 0.0
          %5533 = vmatpush1.msra.mxu0 0.0
          %5534 = vmatprep.subr.mxu0 0.0
          %5535 = vmatpush1.msra.mxu0 0.0
          %5536 = vmatprep.subr.mxu0 0.0
          %5537 = vmatpush1.msra.mxu0 0.0
          %5538 = vmatprep.subr.mxu0 0.0
          %5539 = vmatpush1.msra.mxu0 0.0
          %5540 = vmatprep.subr.mxu0 0.0
          %5541 = vmatpush1.msra.mxu0 0.0
          %5542 = vmatprep.subr.mxu0 0.0
          %5543 = vmatpush1.msra.mxu0 0.0
          %5544 = vmatprep.subr.mxu0 0.0
          %5545 = vmatpush1.msra.mxu0 0.0
          %5546 = vmatprep.subr.mxu0 0.0
          %5547 = vmatpush1.msra.mxu0 0.0
          %5548 = vmatprep.subr.mxu0 0.0
          %5549 = vmatpush1.msra.mxu0 0.0
          %5550 = vmatprep.subr.mxu0 0.0
          %5551 = vmatpush1.msra.mxu0 0.0
          %5552 = vmatprep.subr.mxu0 0.0
          %5553 = vmatpush1.msra.mxu0 0.0
          %5554 = vmatprep.subr.mxu0 0.0
          %5555 = vmatpush1.msra.mxu0 0.0
          %5556 = vmatprep.subr.mxu0 0.0
          %5557 = vmatpush1.msra.mxu0 0.0
          %5558 = vmatprep.subr.mxu0 0.0
          %5559 = vmatpush1.msra.mxu0 0.0
          %5560 = vmatprep.subr.mxu0 0.0
          %5561 = vmatpush1.msra.mxu0 0.0
          %5562 = vmatprep.subr.mxu0 0.0
          %5563 = vmatpush1.msra.mxu0 0.0
          %5564 = vmatprep.subr.mxu0 0.0
          %5565 = vmatpush1.msra.mxu0 0.0
          %5566 = vmatprep.subr.mxu0 0.0
          %5567 = vmatpush1.msra.mxu0 0.0
          %5568 = vmatprep.mubr.f32.mxu0 0.0
          %v5569 = vand.u32 %v5421, 4294901760
          %5570 = vmatmul.mubr.f32.gmra.mrb[0].mxu0 %v5569
          %v5571 = vpop.f32.mrb[0].mxu0
          %v5572 = vadd.f32 %v5496, %v5571
          %v5573 = vpop.f32.mrb[0].mxu0
          %5574 = vdwg.mxu0
          %5575 = vmatprep.subr.mxu0 0.0
          %v5576 = vand.u32 %v3096, 4294901760
          %v5577 = vsub.f32 %v3096, %v5576
          %5578 = vmatpush1.msra.mxu0 %v5577
          %5579 = vmatprep.subr.mxu0 0.0
          %5580 = vmatpush1.msra.mxu0 0.0
          %5581 = vmatprep.subr.mxu0 0.0
          %5582 = vmatpush1.msra.mxu0 0.0
          %5583 = vmatprep.subr.mxu0 0.0
          %5584 = vmatpush1.msra.mxu0 0.0
          %5585 = vmatprep.subr.mxu0 0.0
          %5586 = vmatpush1.msra.mxu0 0.0
          %5587 = vmatprep.subr.mxu0 0.0
          %5588 = vmatpush1.msra.mxu0 0.0
          %5589 = vmatprep.subr.mxu0 0.0
          %5590 = vmatpush1.msra.mxu0 0.0
          %5591 = vmatprep.subr.mxu0 0.0
          %5592 = vmatpush1.msra.mxu0 0.0
          %5593 = vmatprep.subr.mxu0 0.0
          %5594 = vmatpush1.msra.mxu0 0.0
          %5595 = vmatprep.subr.mxu0 0.0
          %5596 = vmatpush1.msra.mxu0 0.0
          %5597 = vmatprep.subr.mxu0 0.0
          %5598 = vmatpush1.msra.mxu0 0.0
          %5599 = vmatprep.subr.mxu0 0.0
          %5600 = vmatpush1.msra.mxu0 0.0
          %5601 = vmatprep.subr.mxu0 0.0
          %5602 = vmatpush1.msra.mxu0 0.0
          %5603 = vmatprep.subr.mxu0 0.0
          %5604 = vmatpush1.msra.mxu0 0.0
          %5605 = vmatprep.subr.mxu0 0.0
          %5606 = vmatpush1.msra.mxu0 0.0
          %5607 = vmatprep.subr.mxu0 0.0
          %5608 = vmatpush1.msra.mxu0 0.0
          %5609 = vmatprep.subr.mxu0 0.0
          %5610 = vmatpush1.msra.mxu0 0.0
          %5611 = vmatprep.subr.mxu0 0.0
          %5612 = vmatpush1.msra.mxu0 0.0
          %5613 = vmatprep.subr.mxu0 0.0
          %5614 = vmatpush1.msra.mxu0 0.0
          %5615 = vmatprep.subr.mxu0 0.0
          %5616 = vmatpush1.msra.mxu0 0.0
          %5617 = vmatprep.subr.mxu0 0.0
          %5618 = vmatpush1.msra.mxu0 0.0
          %5619 = vmatprep.subr.mxu0 0.0
          %5620 = vmatpush1.msra.mxu0 0.0
          %5621 = vmatprep.subr.mxu0 0.0
          %5622 = vmatpush1.msra.mxu0 0.0
          %5623 = vmatprep.subr.mxu0 0.0
          %5624 = vmatpush1.msra.mxu0 0.0
          %5625 = vmatprep.subr.mxu0 0.0
          %5626 = vmatpush1.msra.mxu0 0.0
          %5627 = vmatprep.subr.mxu0 0.0
          %5628 = vmatpush1.msra.mxu0 0.0
          %5629 = vmatprep.subr.mxu0 0.0
          %5630 = vmatpush1.msra.mxu0 0.0
          %5631 = vmatprep.subr.mxu0 0.0
          %5632 = vmatpush1.msra.mxu0 0.0
          %5633 = vmatprep.subr.mxu0 0.0
          %5634 = vmatpush1.msra.mxu0 0.0
          %5635 = vmatprep.subr.mxu0 0.0
          %5636 = vmatpush1.msra.mxu0 0.0
          %5637 = vmatprep.subr.mxu0 0.0
          %5638 = vmatpush1.msra.mxu0 0.0
          %5639 = vmatprep.subr.mxu0 0.0
          %5640 = vmatpush1.msra.mxu0 0.0
          %5641 = vmatprep.mubr.f32.mxu0 0.0
          %v5642 = vand.u32 %v5421, 4294901760
          %v5643 = vsub.f32 %v5421, %v5642
          %5644 = vmatmul.mubr.f32.gmra.mrb[0].mxu0 %v5643
          %v5645 = vpop.f32.mrb[0].mxu0
          %v5646 = vadd.f32 %v5572, %v5645
          %v5647 = vpop.f32.mrb[0].mxu0
          %5648 = vdwg.mxu0
          %5649 = vmatprep.subr.mxu0 0.0
          %v5650 = vand.u32 %v3096, 4294901760
          %5651 = vmatpush1.msra.mxu0 %v5650
          %5652 = vmatprep.subr.mxu0 0.0
          %5653 = vmatpush1.msra.mxu0 0.0
          %5654 = vmatprep.subr.mxu0 0.0
          %5655 = vmatpush1.msra.mxu0 0.0
          %5656 = vmatprep.subr.mxu0 0.0
          %5657 = vmatpush1.msra.mxu0 0.0
          %5658 = vmatprep.subr.mxu0 0.0
          %5659 = vmatpush1.msra.mxu0 0.0
          %5660 = vmatprep.subr.mxu0 0.0
          %5661 = vmatpush1.msra.mxu0 0.0
          %5662 = vmatprep.subr.mxu0 0.0
          %5663 = vmatpush1.msra.mxu0 0.0
          %5664 = vmatprep.subr.mxu0 0.0
          %5665 = vmatpush1.msra.mxu0 0.0
          %5666 = vmatprep.subr.mxu0 0.0
          %5667 = vmatpush1.msra.mxu0 0.0
          %5668 = vmatprep.subr.mxu0 0.0
          %5669 = vmatpush1.msra.mxu0 0.0
          %5670 = vmatprep.subr.mxu0 0.0
          %5671 = vmatpush1.msra.mxu0 0.0
          %5672 = vmatprep.subr.mxu0 0.0
          %5673 = vmatpush1.msra.mxu0 0.0
          %5674 = vmatprep.subr.mxu0 0.0
          %5675 = vmatpush1.msra.mxu0 0.0
          %5676 = vmatprep.subr.mxu0 0.0
          %5677 = vmatpush1.msra.mxu0 0.0
          %5678 = vmatprep.subr.mxu0 0.0
          %5679 = vmatpush1.msra.mxu0 0.0
          %5680 = vmatprep.subr.mxu0 0.0
          %5681 = vmatpush1.msra.mxu0 0.0
          %5682 = vmatprep.subr.mxu0 0.0
          %5683 = vmatpush1.msra.mxu0 0.0
          %5684 = vmatprep.subr.mxu0 0.0
          %5685 = vmatpush1.msra.mxu0 0.0
          %5686 = vmatprep.subr.mxu0 0.0
          %5687 = vmatpush1.msra.mxu0 0.0
          %5688 = vmatprep.subr.mxu0 0.0
          %5689 = vmatpush1.msra.mxu0 0.0
          %5690 = vmatprep.subr.mxu0 0.0
          %5691 = vmatpush1.msra.mxu0 0.0
          %5692 = vmatprep.subr.mxu0 0.0
          %5693 = vmatpush1.msra.mxu0 0.0
          %5694 = vmatprep.subr.mxu0 0.0
          %5695 = vmatpush1.msra.mxu0 0.0
          %5696 = vmatprep.subr.mxu0 0.0
          %5697 = vmatpush1.msra.mxu0 0.0
          %5698 = vmatprep.subr.mxu0 0.0
          %5699 = vmatpush1.msra.mxu0 0.0
          %5700 = vmatprep.subr.mxu0 0.0
          %5701 = vmatpush1.msra.mxu0 0.0
          %5702 = vmatprep.subr.mxu0 0.0
          %5703 = vmatpush1.msra.mxu0 0.0
          %5704 = vmatprep.subr.mxu0 0.0
          %5705 = vmatpush1.msra.mxu0 0.0
          %5706 = vmatprep.subr.mxu0 0.0
          %5707 = vmatpush1.msra.mxu0 0.0
          %5708 = vmatprep.subr.mxu0 0.0
          %5709 = vmatpush1.msra.mxu0 0.0
          %5710 = vmatprep.subr.mxu0 0.0
          %5711 = vmatpush1.msra.mxu0 0.0
          %5712 = vmatprep.subr.mxu0 0.0
          %5713 = vmatpush1.msra.mxu0 0.0
          %5714 = vmatprep.mubr.f32.mxu0 0.0
          %v5715 = vand.u32 %v5421, 4294901760
          %v5716 = vsub.f32 %v5421, %v5715
          %v5717 = vand.u32 %v5716, 4294901760
          %5718 = vmatmul.mubr.f32.gmra.mrb[0].mxu0 %v5717
          %v5719 = vpop.f32.mrb[0].mxu0
          %v5720 = vadd.f32 %v5646, %v5719
          %v5721 = vpop.f32.mrb[0].mxu0
          %5722 = vdwg.mxu0
          %5723 = vmatprep.subr.mxu0 0.0
          %v5724 = vand.u32 %v3096, 4294901760
          %v5725 = vsub.f32 %v3096, %v5724
          %v5726 = vand.u32 %v5725, 4294901760
          %5727 = vmatpush1.msra.mxu0 %v5726
          %5728 = vmatprep.subr.mxu0 0.0
          %5729 = vmatpush1.msra.mxu0 0.0
          %5730 = vmatprep.subr.mxu0 0.0
          %5731 = vmatpush1.msra.mxu0 0.0
          %5732 = vmatprep.subr.mxu0 0.0
          %5733 = vmatpush1.msra.mxu0 0.0
          %5734 = vmatprep.subr.mxu0 0.0
          %5735 = vmatpush1.msra.mxu0 0.0
          %5736 = vmatprep.subr.mxu0 0.0
          %5737 = vmatpush1.msra.mxu0 0.0
          %5738 = vmatprep.subr.mxu0 0.0
          %5739 = vmatpush1.msra.mxu0 0.0
          %5740 = vmatprep.subr.mxu0 0.0
          %5741 = vmatpush1.msra.mxu0 0.0
          %5742 = vmatprep.subr.mxu0 0.0
          %5743 = vmatpush1.msra.mxu0 0.0
          %5744 = vmatprep.subr.mxu0 0.0
          %5745 = vmatpush1.msra.mxu0 0.0
          %5746 = vmatprep.subr.mxu0 0.0
          %5747 = vmatpush1.msra.mxu0 0.0
          %5748 = vmatprep.subr.mxu0 0.0
          %5749 = vmatpush1.msra.mxu0 0.0
          %5750 = vmatprep.subr.mxu0 0.0
          %5751 = vmatpush1.msra.mxu0 0.0
          %5752 = vmatprep.subr.mxu0 0.0
          %5753 = vmatpush1.msra.mxu0 0.0
          %5754 = vmatprep.subr.mxu0 0.0
          %5755 = vmatpush1.msra.mxu0 0.0
          %5756 = vmatprep.subr.mxu0 0.0
          %5757 = vmatpush1.msra.mxu0 0.0
          %5758 = vmatprep.subr.mxu0 0.0
          %5759 = vmatpush1.msra.mxu0 0.0
          %5760 = vmatprep.subr.mxu0 0.0
          %5761 = vmatpush1.msra.mxu0 0.0
          %5762 = vmatprep.subr.mxu0 0.0
          %5763 = vmatpush1.msra.mxu0 0.0
          %5764 = vmatprep.subr.mxu0 0.0
          %5765 = vmatpush1.msra.mxu0 0.0
          %5766 = vmatprep.subr.mxu0 0.0
          %5767 = vmatpush1.msra.mxu0 0.0
          %5768 = vmatprep.subr.mxu0 0.0
          %5769 = vmatpush1.msra.mxu0 0.0
          %5770 = vmatprep.subr.mxu0 0.0
          %5771 = vmatpush1.msra.mxu0 0.0
          %5772 = vmatprep.subr.mxu0 0.0
          %5773 = vmatpush1.msra.mxu0 0.0
          %5774 = vmatprep.subr.mxu0 0.0
          %5775 = vmatpush1.msra.mxu0 0.0
          %5776 = vmatprep.subr.mxu0 0.0
          %5777 = vmatpush1.msra.mxu0 0.0
          %5778 = vmatprep.subr.mxu0 0.0
          %5779 = vmatpush1.msra.mxu0 0.0
          %5780 = vmatprep.subr.mxu0 0.0
          %5781 = vmatpush1.msra.mxu0 0.0
          %5782 = vmatprep.subr.mxu0 0.0
          %5783 = vmatpush1.msra.mxu0 0.0
          %5784 = vmatprep.subr.mxu0 0.0
          %5785 = vmatpush1.msra.mxu0 0.0
          %5786 = vmatprep.subr.mxu0 0.0
          %5787 = vmatpush1.msra.mxu0 0.0
          %5788 = vmatprep.subr.mxu0 0.0
          %5789 = vmatpush1.msra.mxu0 0.0
          %5790 = vmatprep.mubr.f32.mxu0 0.0
          %v5791 = vand.u32 %v5421, 4294901760
          %5792 = vmatmul.mubr.f32.gmra.mrb[0].mxu0 %v5791
          %v5793 = vpop.f32.mrb[0].mxu0
          %v5794 = vadd.f32 %v5720, %v5793
          %v5795 = vpop.f32.mrb[0].mxu0
          %5796 = vdwg.mxu0
          %5797 = vmatprep.subr.mxu0 0.0
          %v5798 = vand.u32 %v3096, 4294901760
          %5799 = vmatpush1.msra.mxu0 %v5798
          %5800 = vmatprep.subr.mxu0 0.0
          %5801 = vmatpush1.msra.mxu0 0.0
          %5802 = vmatprep.subr.mxu0 0.0
          %5803 = vmatpush1.msra.mxu0 0.0
          %5804 = vmatprep.subr.mxu0 0.0
          %5805 = vmatpush1.msra.mxu0 0.0
          %5806 = vmatprep.subr.mxu0 0.0
          %5807 = vmatpush1.msra.mxu0 0.0
          %5808 = vmatprep.subr.mxu0 0.0
          %5809 = vmatpush1.msra.mxu0 0.0
          %5810 = vmatprep.subr.mxu0 0.0
          %5811 = vmatpush1.msra.mxu0 0.0
          %5812 = vmatprep.subr.mxu0 0.0
          %5813 = vmatpush1.msra.mxu0 0.0
          %5814 = vmatprep.subr.mxu0 0.0
          %5815 = vmatpush1.msra.mxu0 0.0
          %5816 = vmatprep.subr.mxu0 0.0
          %5817 = vmatpush1.msra.mxu0 0.0
          %5818 = vmatprep.subr.mxu0 0.0
          %5819 = vmatpush1.msra.mxu0 0.0
          %5820 = vmatprep.subr.mxu0 0.0
          %5821 = vmatpush1.msra.mxu0 0.0
          %5822 = vmatprep.subr.mxu0 0.0
          %5823 = vmatpush1.msra.mxu0 0.0
          %5824 = vmatprep.subr.mxu0 0.0
          %5825 = vmatpush1.msra.mxu0 0.0
          %5826 = vmatprep.subr.mxu0 0.0
          %5827 = vmatpush1.msra.mxu0 0.0
          %5828 = vmatprep.subr.mxu0 0.0
          %5829 = vmatpush1.msra.mxu0 0.0
          %5830 = vmatprep.subr.mxu0 0.0
          %5831 = vmatpush1.msra.mxu0 0.0
          %5832 = vmatprep.subr.mxu0 0.0
          %5833 = vmatpush1.msra.mxu0 0.0
          %5834 = vmatprep.subr.mxu0 0.0
          %5835 = vmatpush1.msra.mxu0 0.0
          %5836 = vmatprep.subr.mxu0 0.0
          %5837 = vmatpush1.msra.mxu0 0.0
          %5838 = vmatprep.subr.mxu0 0.0
          %5839 = vmatpush1.msra.mxu0 0.0
          %5840 = vmatprep.subr.mxu0 0.0
          %5841 = vmatpush1.msra.mxu0 0.0
          %5842 = vmatprep.subr.mxu0 0.0
          %5843 = vmatpush1.msra.mxu0 0.0
          %5844 = vmatprep.subr.mxu0 0.0
          %5845 = vmatpush1.msra.mxu0 0.0
          %5846 = vmatprep.subr.mxu0 0.0
          %5847 = vmatpush1.msra.mxu0 0.0
          %5848 = vmatprep.subr.mxu0 0.0
          %5849 = vmatpush1.msra.mxu0 0.0
          %5850 = vmatprep.subr.mxu0 0.0
          %5851 = vmatpush1.msra.mxu0 0.0
          %5852 = vmatprep.subr.mxu0 0.0
          %5853 = vmatpush1.msra.mxu0 0.0
          %5854 = vmatprep.subr.mxu0 0.0
          %5855 = vmatpush1.msra.mxu0 0.0
          %5856 = vmatprep.subr.mxu0 0.0
          %5857 = vmatpush1.msra.mxu0 0.0
          %5858 = vmatprep.subr.mxu0 0.0
          %5859 = vmatpush1.msra.mxu0 0.0
          %5860 = vmatprep.subr.mxu0 0.0
          %5861 = vmatpush1.msra.mxu0 0.0
          %5862 = vmatprep.mubr.f32.mxu0 0.0
          %v5863 = vand.u32 %v5421, 4294901760
          %5864 = vmatmul.mubr.f32.gmra.mrb[0].mxu0 %v5863
          %v5865 = vpop.f32.mrb[0].mxu0
          %v5866 = vadd.f32 %v5794, %v5865
          %v5867 = vpop.f32.mrb[0].mxu0
          %5868 = vdwg.mxu0
          %v5870 = vsel %vm3110, %v4944, 0
          %5872 = vmatprep.subr.mxu0 0.0
          %v5873 = vand.u32 %v3097, 4294901760
          %5874 = vmatpush1.msra.mxu0 %v5873
          %5875 = vmatprep.subr.mxu0 0.0
          %5876 = vmatpush1.msra.mxu0 0.0
          %5877 = vmatprep.subr.mxu0 0.0
          %5878 = vmatpush1.msra.mxu0 0.0
          %5879 = vmatprep.subr.mxu0 0.0
          %5880 = vmatpush1.msra.mxu0 0.0
          %5881 = vmatprep.subr.mxu0 0.0
          %5882 = vmatpush1.msra.mxu0 0.0
          %5883 = vmatprep.subr.mxu0 0.0
          %5884 = vmatpush1.msra.mxu0 0.0
          %5885 = vmatprep.subr.mxu0 0.0
          %5886 = vmatpush1.msra.mxu0 0.0
          %5887 = vmatprep.subr.mxu0 0.0
          %5888 = vmatpush1.msra.mxu0 0.0
          %5889 = vmatprep.subr.mxu0 0.0
          %5890 = vmatpush1.msra.mxu0 0.0
          %5891 = vmatprep.subr.mxu0 0.0
          %5892 = vmatpush1.msra.mxu0 0.0
          %5893 = vmatprep.subr.mxu0 0.0
          %5894 = vmatpush1.msra.mxu0 0.0
          %5895 = vmatprep.subr.mxu0 0.0
          %5896 = vmatpush1.msra.mxu0 0.0
          %5897 = vmatprep.subr.mxu0 0.0
          %5898 = vmatpush1.msra.mxu0 0.0
          %5899 = vmatprep.subr.mxu0 0.0
          %5900 = vmatpush1.msra.mxu0 0.0
          %5901 = vmatprep.subr.mxu0 0.0
          %5902 = vmatpush1.msra.mxu0 0.0
          %5903 = vmatprep.subr.mxu0 0.0
          %5904 = vmatpush1.msra.mxu0 0.0
          %5905 = vmatprep.subr.mxu0 0.0
          %5906 = vmatpush1.msra.mxu0 0.0
          %5907 = vmatprep.subr.mxu0 0.0
          %5908 = vmatpush1.msra.mxu0 0.0
          %5909 = vmatprep.subr.mxu0 0.0
          %5910 = vmatpush1.msra.mxu0 0.0
          %5911 = vmatprep.subr.mxu0 0.0
          %5912 = vmatpush1.msra.mxu0 0.0
          %5913 = vmatprep.subr.mxu0 0.0
          %5914 = vmatpush1.msra.mxu0 0.0
          %5915 = vmatprep.subr.mxu0 0.0
          %5916 = vmatpush1.msra.mxu0 0.0
          %5917 = vmatprep.subr.mxu0 0.0
          %5918 = vmatpush1.msra.mxu0 0.0
          %5919 = vmatprep.subr.mxu0 0.0
          %5920 = vmatpush1.msra.mxu0 0.0
          %5921 = vmatprep.subr.mxu0 0.0
          %5922 = vmatpush1.msra.mxu0 0.0
          %5923 = vmatprep.subr.mxu0 0.0
          %5924 = vmatpush1.msra.mxu0 0.0
          %5925 = vmatprep.subr.mxu0 0.0
          %5926 = vmatpush1.msra.mxu0 0.0
          %5927 = vmatprep.subr.mxu0 0.0
          %5928 = vmatpush1.msra.mxu0 0.0
          %5929 = vmatprep.subr.mxu0 0.0
          %5930 = vmatpush1.msra.mxu0 0.0
          %5931 = vmatprep.subr.mxu0 0.0
          %5932 = vmatpush1.msra.mxu0 0.0
          %5933 = vmatprep.subr.mxu0 0.0
          %5934 = vmatpush1.msra.mxu0 0.0
          %5935 = vmatprep.subr.mxu0 0.0
          %5936 = vmatpush1.msra.mxu0 0.0
          %5937 = vmatprep.mubr.f32.mxu0 0.0
          %v5938 = vand.u32 %v5870, 4294901760
          %v5939 = vsub.f32 %v5870, %v5938
          %v5940 = vand.u32 %v5939, 4294901760
          %v5941 = vsub.f32 %v5939, %v5940
          %v5942 = vand.u32 %v5941, 4294901760
          %5943 = vmatmul.mubr.f32.gmra.mrb[0].mxu0 %v5942
          %v5944 = vpop.f32.mrb[0].mxu0
          %v5945 = vadd.f32 0.0, %v5944
          %v5946 = vpop.f32.mrb[0].mxu0
          %5947 = vdwg.mxu0
          %5948 = vmatprep.subr.mxu0 0.0
          %v5949 = vand.u32 %v3097, 4294901760
          %v5950 = vsub.f32 %v3097, %v5949
          %v5951 = vand.u32 %v5950, 4294901760
          %v5952 = vsub.f32 %v5950, %v5951
          %v5953 = vand.u32 %v5952, 4294901760
          %5954 = vmatpush1.msra.mxu0 %v5953
          %5955 = vmatprep.subr.mxu0 0.0
          %5956 = vmatpush1.msra.mxu0 0.0
          %5957 = vmatprep.subr.mxu0 0.0
          %5958 = vmatpush1.msra.mxu0 0.0
          %5959 = vmatprep.subr.mxu0 0.0
          %5960 = vmatpush1.msra.mxu0 0.0
          %5961 = vmatprep.subr.mxu0 0.0
          %5962 = vmatpush1.msra.mxu0 0.0
          %5963 = vmatprep.subr.mxu0 0.0
          %5964 = vmatpush1.msra.mxu0 0.0
          %5965 = vmatprep.subr.mxu0 0.0
          %5966 = vmatpush1.msra.mxu0 0.0
          %5967 = vmatprep.subr.mxu0 0.0
          %5968 = vmatpush1.msra.mxu0 0.0
          %5969 = vmatprep.subr.mxu0 0.0
          %5970 = vmatpush1.msra.mxu0 0.0
          %5971 = vmatprep.subr.mxu0 0.0
          %5972 = vmatpush1.msra.mxu0 0.0
          %5973 = vmatprep.subr.mxu0 0.0
          %5974 = vmatpush1.msra.mxu0 0.0
          %5975 = vmatprep.subr.mxu0 0.0
          %5976 = vmatpush1.msra.mxu0 0.0
          %5977 = vmatprep.subr.mxu0 0.0
          %5978 = vmatpush1.msra.mxu0 0.0
          %5979 = vmatprep.subr.mxu0 0.0
          %5980 = vmatpush1.msra.mxu0 0.0
          %5981 = vmatprep.subr.mxu0 0.0
          %5982 = vmatpush1.msra.mxu0 0.0
          %5983 = vmatprep.subr.mxu0 0.0
          %5984 = vmatpush1.msra.mxu0 0.0
          %5985 = vmatprep.subr.mxu0 0.0
          %5986 = vmatpush1.msra.mxu0 0.0
          %5987 = vmatprep.subr.mxu0 0.0
          %5988 = vmatpush1.msra.mxu0 0.0
          %5989 = vmatprep.subr.mxu0 0.0
          %5990 = vmatpush1.msra.mxu0 0.0
          %5991 = vmatprep.subr.mxu0 0.0
          %5992 = vmatpush1.msra.mxu0 0.0
          %5993 = vmatprep.subr.mxu0 0.0
          %5994 = vmatpush1.msra.mxu0 0.0
          %5995 = vmatprep.subr.mxu0 0.0
          %5996 = vmatpush1.msra.mxu0 0.0
          %5997 = vmatprep.subr.mxu0 0.0
          %5998 = vmatpush1.msra.mxu0 0.0
          %5999 = vmatprep.subr.mxu0 0.0
          %6000 = vmatpush1.msra.mxu0 0.0
          %6001 = vmatprep.subr.mxu0 0.0
          %6002 = vmatpush1.msra.mxu0 0.0
          %6003 = vmatprep.subr.mxu0 0.0
          %6004 = vmatpush1.msra.mxu0 0.0
          %6005 = vmatprep.subr.mxu0 0.0
          %6006 = vmatpush1.msra.mxu0 0.0
          %6007 = vmatprep.subr.mxu0 0.0
          %6008 = vmatpush1.msra.mxu0 0.0
          %6009 = vmatprep.subr.mxu0 0.0
          %6010 = vmatpush1.msra.mxu0 0.0
          %6011 = vmatprep.subr.mxu0 0.0
          %6012 = vmatpush1.msra.mxu0 0.0
          %6013 = vmatprep.subr.mxu0 0.0
          %6014 = vmatpush1.msra.mxu0 0.0
          %6015 = vmatprep.subr.mxu0 0.0
          %6016 = vmatpush1.msra.mxu0 0.0
          %6017 = vmatprep.mubr.f32.mxu0 0.0
          %v6018 = vand.u32 %v5870, 4294901760
          %6019 = vmatmul.mubr.f32.gmra.mrb[0].mxu0 %v6018
          %v6020 = vpop.f32.mrb[0].mxu0
          %v6021 = vadd.f32 %v5945, %v6020
          %v6022 = vpop.f32.mrb[0].mxu0
          %6023 = vdwg.mxu0
          %6024 = vmatprep.subr.mxu0 0.0
          %v6025 = vand.u32 %v3097, 4294901760
          %v6026 = vsub.f32 %v3097, %v6025
          %6027 = vmatpush1.msra.mxu0 %v6026
          %6028 = vmatprep.subr.mxu0 0.0
          %6029 = vmatpush1.msra.mxu0 0.0
          %6030 = vmatprep.subr.mxu0 0.0
          %6031 = vmatpush1.msra.mxu0 0.0
          %6032 = vmatprep.subr.mxu0 0.0
          %6033 = vmatpush1.msra.mxu0 0.0
          %6034 = vmatprep.subr.mxu0 0.0
          %6035 = vmatpush1.msra.mxu0 0.0
          %6036 = vmatprep.subr.mxu0 0.0
          %6037 = vmatpush1.msra.mxu0 0.0
          %6038 = vmatprep.subr.mxu0 0.0
          %6039 = vmatpush1.msra.mxu0 0.0
          %6040 = vmatprep.subr.mxu0 0.0
          %6041 = vmatpush1.msra.mxu0 0.0
          %6042 = vmatprep.subr.mxu0 0.0
          %6043 = vmatpush1.msra.mxu0 0.0
          %6044 = vmatprep.subr.mxu0 0.0
          %6045 = vmatpush1.msra.mxu0 0.0
          %6046 = vmatprep.subr.mxu0 0.0
          %6047 = vmatpush1.msra.mxu0 0.0
          %6048 = vmatprep.subr.mxu0 0.0
          %6049 = vmatpush1.msra.mxu0 0.0
          %6050 = vmatprep.subr.mxu0 0.0
          %6051 = vmatpush1.msra.mxu0 0.0
          %6052 = vmatprep.subr.mxu0 0.0
          %6053 = vmatpush1.msra.mxu0 0.0
          %6054 = vmatprep.subr.mxu0 0.0
          %6055 = vmatpush1.msra.mxu0 0.0
          %6056 = vmatprep.subr.mxu0 0.0
          %6057 = vmatpush1.msra.mxu0 0.0
          %6058 = vmatprep.subr.mxu0 0.0
          %6059 = vmatpush1.msra.mxu0 0.0
          %6060 = vmatprep.subr.mxu0 0.0
          %6061 = vmatpush1.msra.mxu0 0.0
          %6062 = vmatprep.subr.mxu0 0.0
          %6063 = vmatpush1.msra.mxu0 0.0
          %6064 = vmatprep.subr.mxu0 0.0
          %6065 = vmatpush1.msra.mxu0 0.0
          %6066 = vmatprep.subr.mxu0 0.0
          %6067 = vmatpush1.msra.mxu0 0.0
          %6068 = vmatprep.subr.mxu0 0.0
          %6069 = vmatpush1.msra.mxu0 0.0
          %6070 = vmatprep.subr.mxu0 0.0
          %6071 = vmatpush1.msra.mxu0 0.0
          %6072 = vmatprep.subr.mxu0 0.0
          %6073 = vmatpush1.msra.mxu0 0.0
          %6074 = vmatprep.subr.mxu0 0.0
          %6075 = vmatpush1.msra.mxu0 0.0
          %6076 = vmatprep.subr.mxu0 0.0
          %6077 = vmatpush1.msra.mxu0 0.0
          %6078 = vmatprep.subr.mxu0 0.0
          %6079 = vmatpush1.msra.mxu0 0.0
          %6080 = vmatprep.subr.mxu0 0.0
          %6081 = vmatpush1.msra.mxu0 0.0
          %6082 = vmatprep.subr.mxu0 0.0
          %6083 = vmatpush1.msra.mxu0 0.0
          %6084 = vmatprep.subr.mxu0 0.0
          %6085 = vmatpush1.msra.mxu0 0.0
          %6086 = vmatprep.subr.mxu0 0.0
          %6087 = vmatpush1.msra.mxu0 0.0
          %6088 = vmatprep.subr.mxu0 0.0
          %6089 = vmatpush1.msra.mxu0 0.0
          %6090 = vmatprep.mubr.f32.mxu0 0.0
          %v6091 = vand.u32 %v5870, 4294901760
          %v6092 = vsub.f32 %v5870, %v6091
          %6093 = vmatmul.mubr.f32.gmra.mrb[0].mxu0 %v6092
          %v6094 = vpop.f32.mrb[0].mxu0
          %v6095 = vadd.f32 %v6021, %v6094
          %v6096 = vpop.f32.mrb[0].mxu0
          %6097 = vdwg.mxu0
          %6098 = vmatprep.subr.mxu0 0.0
          %v6099 = vand.u32 %v3097, 4294901760
          %6100 = vmatpush1.msra.mxu0 %v6099
          %6101 = vmatprep.subr.mxu0 0.0
          %6102 = vmatpush1.msra.mxu0 0.0
          %6103 = vmatprep.subr.mxu0 0.0
          %6104 = vmatpush1.msra.mxu0 0.0
          %6105 = vmatprep.subr.mxu0 0.0
          %6106 = vmatpush1.msra.mxu0 0.0
          %6107 = vmatprep.subr.mxu0 0.0
          %6108 = vmatpush1.msra.mxu0 0.0
          %6109 = vmatprep.subr.mxu0 0.0
          %6110 = vmatpush1.msra.mxu0 0.0
          %6111 = vmatprep.subr.mxu0 0.0
          %6112 = vmatpush1.msra.mxu0 0.0
          %6113 = vmatprep.subr.mxu0 0.0
          %6114 = vmatpush1.msra.mxu0 0.0
          %6115 = vmatprep.subr.mxu0 0.0
          %6116 = vmatpush1.msra.mxu0 0.0
          %6117 = vmatprep.subr.mxu0 0.0
          %6118 = vmatpush1.msra.mxu0 0.0
          %6119 = vmatprep.subr.mxu0 0.0
          %6120 = vmatpush1.msra.mxu0 0.0
          %6121 = vmatprep.subr.mxu0 0.0
          %6122 = vmatpush1.msra.mxu0 0.0
          %6123 = vmatprep.subr.mxu0 0.0
          %6124 = vmatpush1.msra.mxu0 0.0
          %6125 = vmatprep.subr.mxu0 0.0
          %6126 = vmatpush1.msra.mxu0 0.0
          %6127 = vmatprep.subr.mxu0 0.0
          %6128 = vmatpush1.msra.mxu0 0.0
          %6129 = vmatprep.subr.mxu0 0.0
          %6130 = vmatpush1.msra.mxu0 0.0
          %6131 = vmatprep.subr.mxu0 0.0
          %6132 = vmatpush1.msra.mxu0 0.0
          %6133 = vmatprep.subr.mxu0 0.0
          %6134 = vmatpush1.msra.mxu0 0.0
          %6135 = vmatprep.subr.mxu0 0.0
          %6136 = vmatpush1.msra.mxu0 0.0
          %6137 = vmatprep.subr.mxu0 0.0
          %6138 = vmatpush1.msra.mxu0 0.0
          %6139 = vmatprep.subr.mxu0 0.0
          %6140 = vmatpush1.msra.mxu0 0.0
          %6141 = vmatprep.subr.mxu0 0.0
          %6142 = vmatpush1.msra.mxu0 0.0
          %6143 = vmatprep.subr.mxu0 0.0
          %6144 = vmatpush1.msra.mxu0 0.0
          %6145 = vmatprep.subr.mxu0 0.0
          %6146 = vmatpush1.msra.mxu0 0.0
          %6147 = vmatprep.subr.mxu0 0.0
          %6148 = vmatpush1.msra.mxu0 0.0
          %6149 = vmatprep.subr.mxu0 0.0
          %6150 = vmatpush1.msra.mxu0 0.0
          %6151 = vmatprep.subr.mxu0 0.0
          %6152 = vmatpush1.msra.mxu0 0.0
          %6153 = vmatprep.subr.mxu0 0.0
          %6154 = vmatpush1.msra.mxu0 0.0
          %6155 = vmatprep.subr.mxu0 0.0
          %6156 = vmatpush1.msra.mxu0 0.0
          %6157 = vmatprep.subr.mxu0 0.0
          %6158 = vmatpush1.msra.mxu0 0.0
          %6159 = vmatprep.subr.mxu0 0.0
          %6160 = vmatpush1.msra.mxu0 0.0
          %6161 = vmatprep.subr.mxu0 0.0
          %6162 = vmatpush1.msra.mxu0 0.0
          %6163 = vmatprep.mubr.f32.mxu0 0.0
          %v6164 = vand.u32 %v5870, 4294901760
          %v6165 = vsub.f32 %v5870, %v6164
          %v6166 = vand.u32 %v6165, 4294901760
          %6167 = vmatmul.mubr.f32.gmra.mrb[0].mxu0 %v6166
          %v6168 = vpop.f32.mrb[0].mxu0
          %v6169 = vadd.f32 %v6095, %v6168
          %v6170 = vpop.f32.mrb[0].mxu0
          %6171 = vdwg.mxu0
          %6172 = vmatprep.subr.mxu0 0.0
          %v6173 = vand.u32 %v3097, 4294901760
          %v6174 = vsub.f32 %v3097, %v6173
          %v6175 = vand.u32 %v6174, 4294901760
          %6176 = vmatpush1.msra.mxu0 %v6175
          %6177 = vmatprep.subr.mxu0 0.0
          %6178 = vmatpush1.msra.mxu0 0.0
          %6179 = vmatprep.subr.mxu0 0.0
          %6180 = vmatpush1.msra.mxu0 0.0
          %6181 = vmatprep.subr.mxu0 0.0
          %6182 = vmatpush1.msra.mxu0 0.0
          %6183 = vmatprep.subr.mxu0 0.0
          %6184 = vmatpush1.msra.mxu0 0.0
          %6185 = vmatprep.subr.mxu0 0.0
          %6186 = vmatpush1.msra.mxu0 0.0
          %6187 = vmatprep.subr.mxu0 0.0
          %6188 = vmatpush1.msra.mxu0 0.0
          %6189 = vmatprep.subr.mxu0 0.0
          %6190 = vmatpush1.msra.mxu0 0.0
          %6191 = vmatprep.subr.mxu0 0.0
          %6192 = vmatpush1.msra.mxu0 0.0
          %6193 = vmatprep.subr.mxu0 0.0
          %6194 = vmatpush1.msra.mxu0 0.0
          %6195 = vmatprep.subr.mxu0 0.0
          %6196 = vmatpush1.msra.mxu0 0.0
          %6197 = vmatprep.subr.mxu0 0.0
          %6198 = vmatpush1.msra.mxu0 0.0
          %6199 = vmatprep.subr.mxu0 0.0
          %6200 = vmatpush1.msra.mxu0 0.0
          %6201 = vmatprep.subr.mxu0 0.0
          %6202 = vmatpush1.msra.mxu0 0.0
          %6203 = vmatprep.subr.mxu0 0.0
          %6204 = vmatpush1.msra.mxu0 0.0
          %6205 = vmatprep.subr.mxu0 0.0
          %6206 = vmatpush1.msra.mxu0 0.0
          %6207 = vmatprep.subr.mxu0 0.0
          %6208 = vmatpush1.msra.mxu0 0.0
          %6209 = vmatprep.subr.mxu0 0.0
          %6210 = vmatpush1.msra.mxu0 0.0
          %6211 = vmatprep.subr.mxu0 0.0
          %6212 = vmatpush1.msra.mxu0 0.0
          %6213 = vmatprep.subr.mxu0 0.0
          %6214 = vmatpush1.msra.mxu0 0.0
          %6215 = vmatprep.subr.mxu0 0.0
          %6216 = vmatpush1.msra.mxu0 0.0
          %6217 = vmatprep.subr.mxu0 0.0
          %6218 = vmatpush1.msra.mxu0 0.0
          %6219 = vmatprep.subr.mxu0 0.0
          %6220 = vmatpush1.msra.mxu0 0.0
          %6221 = vmatprep.subr.mxu0 0.0
          %6222 = vmatpush1.msra.mxu0 0.0
          %6223 = vmatprep.subr.mxu0 0.0
          %6224 = vmatpush1.msra.mxu0 0.0
          %6225 = vmatprep.subr.mxu0 0.0
          %6226 = vmatpush1.msra.mxu0 0.0
          %6227 = vmatprep.subr.mxu0 0.0
          %6228 = vmatpush1.msra.mxu0 0.0
          %6229 = vmatprep.subr.mxu0 0.0
          %6230 = vmatpush1.msra.mxu0 0.0
          %6231 = vmatprep.subr.mxu0 0.0
          %6232 = vmatpush1.msra.mxu0 0.0
          %6233 = vmatprep.subr.mxu0 0.0
          %6234 = vmatpush1.msra.mxu0 0.0
          %6235 = vmatprep.subr.mxu0 0.0
          %6236 = vmatpush1.msra.mxu0 0.0
          %6237 = vmatprep.subr.mxu0 0.0
          %6238 = vmatpush1.msra.mxu0 0.0
          %6239 = vmatprep.mubr.f32.mxu0 0.0
          %v6240 = vand.u32 %v5870, 4294901760
          %6241 = vmatmul.mubr.f32.gmra.mrb[0].mxu0 %v6240
          %v6242 = vpop.f32.mrb[0].mxu0
          %v6243 = vadd.f32 %v6169, %v6242
          %v6244 = vpop.f32.mrb[0].mxu0
          %6245 = vdwg.mxu0
          %6246 = vmatprep.subr.mxu0 0.0
          %v6247 = vand.u32 %v3097, 4294901760
          %6248 = vmatpush1.msra.mxu0 %v6247
          %6249 = vmatprep.subr.mxu0 0.0
          %6250 = vmatpush1.msra.mxu0 0.0
          %6251 = vmatprep.subr.mxu0 0.0
          %6252 = vmatpush1.msra.mxu0 0.0
          %6253 = vmatprep.subr.mxu0 0.0
          %6254 = vmatpush1.msra.mxu0 0.0
          %6255 = vmatprep.subr.mxu0 0.0
          %6256 = vmatpush1.msra.mxu0 0.0
          %6257 = vmatprep.subr.mxu0 0.0
          %6258 = vmatpush1.msra.mxu0 0.0
          %6259 = vmatprep.subr.mxu0 0.0
          %6260 = vmatpush1.msra.mxu0 0.0
          %6261 = vmatprep.subr.mxu0 0.0
          %6262 = vmatpush1.msra.mxu0 0.0
          %6263 = vmatprep.subr.mxu0 0.0
          %6264 = vmatpush1.msra.mxu0 0.0
          %6265 = vmatprep.subr.mxu0 0.0
          %6266 = vmatpush1.msra.mxu0 0.0
          %6267 = vmatprep.subr.mxu0 0.0
          %6268 = vmatpush1.msra.mxu0 0.0
          %6269 = vmatprep.subr.mxu0 0.0
          %6270 = vmatpush1.msra.mxu0 0.0
          %6271 = vmatprep.subr.mxu0 0.0
          %6272 = vmatpush1.msra.mxu0 0.0
          %6273 = vmatprep.subr.mxu0 0.0
          %6274 = vmatpush1.msra.mxu0 0.0
          %6275 = vmatprep.subr.mxu0 0.0
          %6276 = vmatpush1.msra.mxu0 0.0
          %6277 = vmatprep.subr.mxu0 0.0
          %6278 = vmatpush1.msra.mxu0 0.0
          %6279 = vmatprep.subr.mxu0 0.0
          %6280 = vmatpush1.msra.mxu0 0.0
          %6281 = vmatprep.subr.mxu0 0.0
          %6282 = vmatpush1.msra.mxu0 0.0
          %6283 = vmatprep.subr.mxu0 0.0
          %6284 = vmatpush1.msra.mxu0 0.0
          %6285 = vmatprep.subr.mxu0 0.0
          %6286 = vmatpush1.msra.mxu0 0.0
          %6287 = vmatprep.subr.mxu0 0.0
          %6288 = vmatpush1.msra.mxu0 0.0
          %6289 = vmatprep.subr.mxu0 0.0
          %6290 = vmatpush1.msra.mxu0 0.0
          %6291 = vmatprep.subr.mxu0 0.0
          %6292 = vmatpush1.msra.mxu0 0.0
          %6293 = vmatprep.subr.mxu0 0.0
          %6294 = vmatpush1.msra.mxu0 0.0
          %6295 = vmatprep.subr.mxu0 0.0
          %6296 = vmatpush1.msra.mxu0 0.0
          %6297 = vmatprep.subr.mxu0 0.0
          %6298 = vmatpush1.msra.mxu0 0.0
          %6299 = vmatprep.subr.mxu0 0.0
          %6300 = vmatpush1.msra.mxu0 0.0
          %6301 = vmatprep.subr.mxu0 0.0
          %6302 = vmatpush1.msra.mxu0 0.0
          %6303 = vmatprep.subr.mxu0 0.0
          %6304 = vmatpush1.msra.mxu0 0.0
          %6305 = vmatprep.subr.mxu0 0.0
          %6306 = vmatpush1.msra.mxu0 0.0
          %6307 = vmatprep.subr.mxu0 0.0
          %6308 = vmatpush1.msra.mxu0 0.0
          %6309 = vmatprep.subr.mxu0 0.0
          %6310 = vmatpush1.msra.mxu0 0.0
          %6311 = vmatprep.mubr.f32.mxu0 0.0
          %v6312 = vand.u32 %v5870, 4294901760
          %6313 = vmatmul.mubr.f32.gmra.mrb[0].mxu0 %v6312
          %v6314 = vpop.f32.mrb[0].mxu0
          %v6315 = vadd.f32 %v6243, %v6314
          %v6316 = vpop.f32.mrb[0].mxu0
          %6317 = vdwg.mxu0
          %v6319 = vsel %vm3110, %v4946, 0
          %6321 = vmatprep.subr.mxu0 0.0
          %v6322 = vand.u32 %v3098, 4294901760
          %6323 = vmatpush1.msra.mxu0 %v6322
          %6324 = vmatprep.subr.mxu0 0.0
          %6325 = vmatpush1.msra.mxu0 0.0
          %6326 = vmatprep.subr.mxu0 0.0
          %6327 = vmatpush1.msra.mxu0 0.0
          %6328 = vmatprep.subr.mxu0 0.0
          %6329 = vmatpush1.msra.mxu0 0.0
          %6330 = vmatprep.subr.mxu0 0.0
          %6331 = vmatpush1.msra.mxu0 0.0
          %6332 = vmatprep.subr.mxu0 0.0
          %6333 = vmatpush1.msra.mxu0 0.0
          %6334 = vmatprep.subr.mxu0 0.0
          %6335 = vmatpush1.msra.mxu0 0.0
          %6336 = vmatprep.subr.mxu0 0.0
          %6337 = vmatpush1.msra.mxu0 0.0
          %6338 = vmatprep.subr.mxu0 0.0
          %6339 = vmatpush1.msra.mxu0 0.0
          %6340 = vmatprep.subr.mxu0 0.0
          %6341 = vmatpush1.msra.mxu0 0.0
          %6342 = vmatprep.subr.mxu0 0.0
          %6343 = vmatpush1.msra.mxu0 0.0
          %6344 = vmatprep.subr.mxu0 0.0
          %6345 = vmatpush1.msra.mxu0 0.0
          %6346 = vmatprep.subr.mxu0 0.0
          %6347 = vmatpush1.msra.mxu0 0.0
          %6348 = vmatprep.subr.mxu0 0.0
          %6349 = vmatpush1.msra.mxu0 0.0
          %6350 = vmatprep.subr.mxu0 0.0
          %6351 = vmatpush1.msra.mxu0 0.0
          %6352 = vmatprep.subr.mxu0 0.0
          %6353 = vmatpush1.msra.mxu0 0.0
          %6354 = vmatprep.subr.mxu0 0.0
          %6355 = vmatpush1.msra.mxu0 0.0
          %6356 = vmatprep.subr.mxu0 0.0
          %6357 = vmatpush1.msra.mxu0 0.0
          %6358 = vmatprep.subr.mxu0 0.0
          %6359 = vmatpush1.msra.mxu0 0.0
          %6360 = vmatprep.subr.mxu0 0.0
          %6361 = vmatpush1.msra.mxu0 0.0
          %6362 = vmatprep.subr.mxu0 0.0
          %6363 = vmatpush1.msra.mxu0 0.0
          %6364 = vmatprep.subr.mxu0 0.0
          %6365 = vmatpush1.msra.mxu0 0.0
          %6366 = vmatprep.subr.mxu0 0.0
          %6367 = vmatpush1.msra.mxu0 0.0
          %6368 = vmatprep.subr.mxu0 0.0
          %6369 = vmatpush1.msra.mxu0 0.0
          %6370 = vmatprep.subr.mxu0 0.0
          %6371 = vmatpush1.msra.mxu0 0.0
          %6372 = vmatprep.subr.mxu0 0.0
          %6373 = vmatpush1.msra.mxu0 0.0
          %6374 = vmatprep.subr.mxu0 0.0
          %6375 = vmatpush1.msra.mxu0 0.0
          %6376 = vmatprep.subr.mxu0 0.0
          %6377 = vmatpush1.msra.mxu0 0.0
          %6378 = vmatprep.subr.mxu0 0.0
          %6379 = vmatpush1.msra.mxu0 0.0
          %6380 = vmatprep.subr.mxu0 0.0
          %6381 = vmatpush1.msra.mxu0 0.0
          %6382 = vmatprep.subr.mxu0 0.0
          %6383 = vmatpush1.msra.mxu0 0.0
          %6384 = vmatprep.subr.mxu0 0.0
          %6385 = vmatpush1.msra.mxu0 0.0
          %6386 = vmatprep.mubr.f32.mxu0 0.0
          %v6387 = vand.u32 %v6319, 4294901760
          %v6388 = vsub.f32 %v6319, %v6387
          %v6389 = vand.u32 %v6388, 4294901760
          %v6390 = vsub.f32 %v6388, %v6389
          %v6391 = vand.u32 %v6390, 4294901760
          %6392 = vmatmul.mubr.f32.gmra.mrb[0].mxu0 %v6391
          %v6393 = vpop.f32.mrb[0].mxu0
          %v6394 = vadd.f32 0.0, %v6393
          %v6395 = vpop.f32.mrb[0].mxu0
          %6396 = vdwg.mxu0
          %6397 = vmatprep.subr.mxu0 0.0
          %v6398 = vand.u32 %v3098, 4294901760
          %v6399 = vsub.f32 %v3098, %v6398
          %v6400 = vand.u32 %v6399, 4294901760
          %v6401 = vsub.f32 %v6399, %v6400
          %v6402 = vand.u32 %v6401, 4294901760
          %6403 = vmatpush1.msra.mxu0 %v6402
          %6404 = vmatprep.subr.mxu0 0.0
          %6405 = vmatpush1.msra.mxu0 0.0
          %6406 = vmatprep.subr.mxu0 0.0
          %6407 = vmatpush1.msra.mxu0 0.0
          %6408 = vmatprep.subr.mxu0 0.0
          %6409 = vmatpush1.msra.mxu0 0.0
          %6410 = vmatprep.subr.mxu0 0.0
          %6411 = vmatpush1.msra.mxu0 0.0
          %6412 = vmatprep.subr.mxu0 0.0
          %6413 = vmatpush1.msra.mxu0 0.0
          %6414 = vmatprep.subr.mxu0 0.0
          %6415 = vmatpush1.msra.mxu0 0.0
          %6416 = vmatprep.subr.mxu0 0.0
          %6417 = vmatpush1.msra.mxu0 0.0
          %6418 = vmatprep.subr.mxu0 0.0
          %6419 = vmatpush1.msra.mxu0 0.0
          %6420 = vmatprep.subr.mxu0 0.0
          %6421 = vmatpush1.msra.mxu0 0.0
          %6422 = vmatprep.subr.mxu0 0.0
          %6423 = vmatpush1.msra.mxu0 0.0
          %6424 = vmatprep.subr.mxu0 0.0
          %6425 = vmatpush1.msra.mxu0 0.0
          %6426 = vmatprep.subr.mxu0 0.0
          %6427 = vmatpush1.msra.mxu0 0.0
          %6428 = vmatprep.subr.mxu0 0.0
          %6429 = vmatpush1.msra.mxu0 0.0
          %6430 = vmatprep.subr.mxu0 0.0
          %6431 = vmatpush1.msra.mxu0 0.0
          %6432 = vmatprep.subr.mxu0 0.0
          %6433 = vmatpush1.msra.mxu0 0.0
          %6434 = vmatprep.subr.mxu0 0.0
          %6435 = vmatpush1.msra.mxu0 0.0
          %6436 = vmatprep.subr.mxu0 0.0
          %6437 = vmatpush1.msra.mxu0 0.0
          %6438 = vmatprep.subr.mxu0 0.0
          %6439 = vmatpush1.msra.mxu0 0.0
          %6440 = vmatprep.subr.mxu0 0.0
          %6441 = vmatpush1.msra.mxu0 0.0
          %6442 = vmatprep.subr.mxu0 0.0
          %6443 = vmatpush1.msra.mxu0 0.0
          %6444 = vmatprep.subr.mxu0 0.0
          %6445 = vmatpush1.msra.mxu0 0.0
          %6446 = vmatprep.subr.mxu0 0.0
          %6447 = vmatpush1.msra.mxu0 0.0
          %6448 = vmatprep.subr.mxu0 0.0
          %6449 = vmatpush1.msra.mxu0 0.0
          %6450 = vmatprep.subr.mxu0 0.0
          %6451 = vmatpush1.msra.mxu0 0.0
          %6452 = vmatprep.subr.mxu0 0.0
          %6453 = vmatpush1.msra.mxu0 0.0
          %6454 = vmatprep.subr.mxu0 0.0
          %6455 = vmatpush1.msra.mxu0 0.0
          %6456 = vmatprep.subr.mxu0 0.0
          %6457 = vmatpush1.msra.mxu0 0.0
          %6458 = vmatprep.subr.mxu0 0.0
          %6459 = vmatpush1.msra.mxu0 0.0
          %6460 = vmatprep.subr.mxu0 0.0
          %6461 = vmatpush1.msra.mxu0 0.0
          %6462 = vmatprep.subr.mxu0 0.0
          %6463 = vmatpush1.msra.mxu0 0.0
          %6464 = vmatprep.subr.mxu0 0.0
          %6465 = vmatpush1.msra.mxu0 0.0
          %6466 = vmatprep.mubr.f32.mxu0 0.0
          %v6467 = vand.u32 %v6319, 4294901760
          %6468 = vmatmul.mubr.f32.gmra.mrb[0].mxu0 %v6467
          %v6469 = vpop.f32.mrb[0].mxu0
          %v6470 = vadd.f32 %v6394, %v6469
          %v6471 = vpop.f32.mrb[0].mxu0
          %6472 = vdwg.mxu0
          %6473 = vmatprep.subr.mxu0 0.0
          %v6474 = vand.u32 %v3098, 4294901760
          %v6475 = vsub.f32 %v3098, %v6474
          %6476 = vmatpush1.msra.mxu0 %v6475
          %6477 = vmatprep.subr.mxu0 0.0
          %6478 = vmatpush1.msra.mxu0 0.0
          %6479 = vmatprep.subr.mxu0 0.0
          %6480 = vmatpush1.msra.mxu0 0.0
          %6481 = vmatprep.subr.mxu0 0.0
          %6482 = vmatpush1.msra.mxu0 0.0
          %6483 = vmatprep.subr.mxu0 0.0
          %6484 = vmatpush1.msra.mxu0 0.0
          %6485 = vmatprep.subr.mxu0 0.0
          %6486 = vmatpush1.msra.mxu0 0.0
          %6487 = vmatprep.subr.mxu0 0.0
          %6488 = vmatpush1.msra.mxu0 0.0
          %6489 = vmatprep.subr.mxu0 0.0
          %6490 = vmatpush1.msra.mxu0 0.0
          %6491 = vmatprep.subr.mxu0 0.0
          %6492 = vmatpush1.msra.mxu0 0.0
          %6493 = vmatprep.subr.mxu0 0.0
          %6494 = vmatpush1.msra.mxu0 0.0
          %6495 = vmatprep.subr.mxu0 0.0
          %6496 = vmatpush1.msra.mxu0 0.0
          %6497 = vmatprep.subr.mxu0 0.0
          %6498 = vmatpush1.msra.mxu0 0.0
          %6499 = vmatprep.subr.mxu0 0.0
          %6500 = vmatpush1.msra.mxu0 0.0
          %6501 = vmatprep.subr.mxu0 0.0
          %6502 = vmatpush1.msra.mxu0 0.0
          %6503 = vmatprep.subr.mxu0 0.0
          %6504 = vmatpush1.msra.mxu0 0.0
          %6505 = vmatprep.subr.mxu0 0.0
          %6506 = vmatpush1.msra.mxu0 0.0
          %6507 = vmatprep.subr.mxu0 0.0
          %6508 = vmatpush1.msra.mxu0 0.0
          %6509 = vmatprep.subr.mxu0 0.0
          %6510 = vmatpush1.msra.mxu0 0.0
          %6511 = vmatprep.subr.mxu0 0.0
          %6512 = vmatpush1.msra.mxu0 0.0
          %6513 = vmatprep.subr.mxu0 0.0
          %6514 = vmatpush1.msra.mxu0 0.0
          %6515 = vmatprep.subr.mxu0 0.0
          %6516 = vmatpush1.msra.mxu0 0.0
          %6517 = vmatprep.subr.mxu0 0.0
          %6518 = vmatpush1.msra.mxu0 0.0
          %6519 = vmatprep.subr.mxu0 0.0
          %6520 = vmatpush1.msra.mxu0 0.0
          %6521 = vmatprep.subr.mxu0 0.0
          %6522 = vmatpush1.msra.mxu0 0.0
          %6523 = vmatprep.subr.mxu0 0.0
          %6524 = vmatpush1.msra.mxu0 0.0
          %6525 = vmatprep.subr.mxu0 0.0
          %6526 = vmatpush1.msra.mxu0 0.0
          %6527 = vmatprep.subr.mxu0 0.0
          %6528 = vmatpush1.msra.mxu0 0.0
          %6529 = vmatprep.subr.mxu0 0.0
          %6530 = vmatpush1.msra.mxu0 0.0
          %6531 = vmatprep.subr.mxu0 0.0
          %6532 = vmatpush1.msra.mxu0 0.0
          %6533 = vmatprep.subr.mxu0 0.0
          %6534 = vmatpush1.msra.mxu0 0.0
          %6535 = vmatprep.subr.mxu0 0.0
          %6536 = vmatpush1.msra.mxu0 0.0
          %6537 = vmatprep.subr.mxu0 0.0
          %6538 = vmatpush1.msra.mxu0 0.0
          %6539 = vmatprep.mubr.f32.mxu0 0.0
          %v6540 = vand.u32 %v6319, 4294901760
          %v6541 = vsub.f32 %v6319, %v6540
          %6542 = vmatmul.mubr.f32.gmra.mrb[0].mxu0 %v6541
          %v6543 = vpop.f32.mrb[0].mxu0
          %v6544 = vadd.f32 %v6470, %v6543
          %v6545 = vpop.f32.mrb[0].mxu0
          %6546 = vdwg.mxu0
          %6547 = vmatprep.subr.mxu0 0.0
          %v6548 = vand.u32 %v3098, 4294901760
          %6549 = vmatpush1.msra.mxu0 %v6548
          %6550 = vmatprep.subr.mxu0 0.0
          %6551 = vmatpush1.msra.mxu0 0.0
          %6552 = vmatprep.subr.mxu0 0.0
          %6553 = vmatpush1.msra.mxu0 0.0
          %6554 = vmatprep.subr.mxu0 0.0
          %6555 = vmatpush1.msra.mxu0 0.0
          %6556 = vmatprep.subr.mxu0 0.0
          %6557 = vmatpush1.msra.mxu0 0.0
          %6558 = vmatprep.subr.mxu0 0.0
          %6559 = vmatpush1.msra.mxu0 0.0
          %6560 = vmatprep.subr.mxu0 0.0
          %6561 = vmatpush1.msra.mxu0 0.0
          %6562 = vmatprep.subr.mxu0 0.0
          %6563 = vmatpush1.msra.mxu0 0.0
          %6564 = vmatprep.subr.mxu0 0.0
          %6565 = vmatpush1.msra.mxu0 0.0
          %6566 = vmatprep.subr.mxu0 0.0
          %6567 = vmatpush1.msra.mxu0 0.0
          %6568 = vmatprep.subr.mxu0 0.0
          %6569 = vmatpush1.msra.mxu0 0.0
          %6570 = vmatprep.subr.mxu0 0.0
          %6571 = vmatpush1.msra.mxu0 0.0
          %6572 = vmatprep.subr.mxu0 0.0
          %6573 = vmatpush1.msra.mxu0 0.0
          %6574 = vmatprep.subr.mxu0 0.0
          %6575 = vmatpush1.msra.mxu0 0.0
          %6576 = vmatprep.subr.mxu0 0.0
          %6577 = vmatpush1.msra.mxu0 0.0
          %6578 = vmatprep.subr.mxu0 0.0
          %6579 = vmatpush1.msra.mxu0 0.0
          %6580 = vmatprep.subr.mxu0 0.0
          %6581 = vmatpush1.msra.mxu0 0.0
          %6582 = vmatprep.subr.mxu0 0.0
          %6583 = vmatpush1.msra.mxu0 0.0
          %6584 = vmatprep.subr.mxu0 0.0
          %6585 = vmatpush1.msra.mxu0 0.0
          %6586 = vmatprep.subr.mxu0 0.0
          %6587 = vmatpush1.msra.mxu0 0.0
          %6588 = vmatprep.subr.mxu0 0.0
          %6589 = vmatpush1.msra.mxu0 0.0
          %6590 = vmatprep.subr.mxu0 0.0
          %6591 = vmatpush1.msra.mxu0 0.0
          %6592 = vmatprep.subr.mxu0 0.0
          %6593 = vmatpush1.msra.mxu0 0.0
          %6594 = vmatprep.subr.mxu0 0.0
          %6595 = vmatpush1.msra.mxu0 0.0
          %6596 = vmatprep.subr.mxu0 0.0
          %6597 = vmatpush1.msra.mxu0 0.0
          %6598 = vmatprep.subr.mxu0 0.0
          %6599 = vmatpush1.msra.mxu0 0.0
          %6600 = vmatprep.subr.mxu0 0.0
          %6601 = vmatpush1.msra.mxu0 0.0
          %6602 = vmatprep.subr.mxu0 0.0
          %6603 = vmatpush1.msra.mxu0 0.0
          %6604 = vmatprep.subr.mxu0 0.0
          %6605 = vmatpush1.msra.mxu0 0.0
          %6606 = vmatprep.subr.mxu0 0.0
          %6607 = vmatpush1.msra.mxu0 0.0
          %6608 = vmatprep.subr.mxu0 0.0
          %6609 = vmatpush1.msra.mxu0 0.0
          %6610 = vmatprep.subr.mxu0 0.0
          %6611 = vmatpush1.msra.mxu0 0.0
          %6612 = vmatprep.mubr.f32.mxu0 0.0
          %v6613 = vand.u32 %v6319, 4294901760
          %v6614 = vsub.f32 %v6319, %v6613
          %v6615 = vand.u32 %v6614, 4294901760
          %6616 = vmatmul.mubr.f32.gmra.mrb[0].mxu0 %v6615
          %v6617 = vpop.f32.mrb[0].mxu0
          %v6618 = vadd.f32 %v6544, %v6617
          %v6619 = vpop.f32.mrb[0].mxu0
          %6620 = vdwg.mxu0
          %6621 = vmatprep.subr.mxu0 0.0
          %v6622 = vand.u32 %v3098, 4294901760
          %v6623 = vsub.f32 %v3098, %v6622
          %v6624 = vand.u32 %v6623, 4294901760
          %6625 = vmatpush1.msra.mxu0 %v6624
          %6626 = vmatprep.subr.mxu0 0.0
          %6627 = vmatpush1.msra.mxu0 0.0
          %6628 = vmatprep.subr.mxu0 0.0
          %6629 = vmatpush1.msra.mxu0 0.0
          %6630 = vmatprep.subr.mxu0 0.0
          %6631 = vmatpush1.msra.mxu0 0.0
          %6632 = vmatprep.subr.mxu0 0.0
          %6633 = vmatpush1.msra.mxu0 0.0
          %6634 = vmatprep.subr.mxu0 0.0
          %6635 = vmatpush1.msra.mxu0 0.0
          %6636 = vmatprep.subr.mxu0 0.0
          %6637 = vmatpush1.msra.mxu0 0.0
          %6638 = vmatprep.subr.mxu0 0.0
          %6639 = vmatpush1.msra.mxu0 0.0
          %6640 = vmatprep.subr.mxu0 0.0
          %6641 = vmatpush1.msra.mxu0 0.0
          %6642 = vmatprep.subr.mxu0 0.0
          %6643 = vmatpush1.msra.mxu0 0.0
          %6644 = vmatprep.subr.mxu0 0.0
          %6645 = vmatpush1.msra.mxu0 0.0
          %6646 = vmatprep.subr.mxu0 0.0
          %6647 = vmatpush1.msra.mxu0 0.0
          %6648 = vmatprep.subr.mxu0 0.0
          %6649 = vmatpush1.msra.mxu0 0.0
          %6650 = vmatprep.subr.mxu0 0.0
          %6651 = vmatpush1.msra.mxu0 0.0
          %6652 = vmatprep.subr.mxu0 0.0
          %6653 = vmatpush1.msra.mxu0 0.0
          %6654 = vmatprep.subr.mxu0 0.0
          %6655 = vmatpush1.msra.mxu0 0.0
          %6656 = vmatprep.subr.mxu0 0.0
          %6657 = vmatpush1.msra.mxu0 0.0
          %6658 = vmatprep.subr.mxu0 0.0
          %6659 = vmatpush1.msra.mxu0 0.0
          %6660 = vmatprep.subr.mxu0 0.0
          %6661 = vmatpush1.msra.mxu0 0.0
          %6662 = vmatprep.subr.mxu0 0.0
          %6663 = vmatpush1.msra.mxu0 0.0
          %6664 = vmatprep.subr.mxu0 0.0
          %6665 = vmatpush1.msra.mxu0 0.0
          %6666 = vmatprep.subr.mxu0 0.0
          %6667 = vmatpush1.msra.mxu0 0.0
          %6668 = vmatprep.subr.mxu0 0.0
          %6669 = vmatpush1.msra.mxu0 0.0
          %6670 = vmatprep.subr.mxu0 0.0
          %6671 = vmatpush1.msra.mxu0 0.0
          %6672 = vmatprep.subr.mxu0 0.0
          %6673 = vmatpush1.msra.mxu0 0.0
          %6674 = vmatprep.subr.mxu0 0.0
          %6675 = vmatpush1.msra.mxu0 0.0
          %6676 = vmatprep.subr.mxu0 0.0
          %6677 = vmatpush1.msra.mxu0 0.0
          %6678 = vmatprep.subr.mxu0 0.0
          %6679 = vmatpush1.msra.mxu0 0.0
          %6680 = vmatprep.subr.mxu0 0.0
          %6681 = vmatpush1.msra.mxu0 0.0
          %6682 = vmatprep.subr.mxu0 0.0
          %6683 = vmatpush1.msra.mxu0 0.0
          %6684 = vmatprep.subr.mxu0 0.0
          %6685 = vmatpush1.msra.mxu0 0.0
          %6686 = vmatprep.subr.mxu0 0.0
          %6687 = vmatpush1.msra.mxu0 0.0
          %6688 = vmatprep.mubr.f32.mxu0 0.0
          %v6689 = vand.u32 %v6319, 4294901760
          %6690 = vmatmul.mubr.f32.gmra.mrb[0].mxu0 %v6689
          %v6691 = vpop.f32.mrb[0].mxu0
          %v6692 = vadd.f32 %v6618, %v6691
          %v6693 = vpop.f32.mrb[0].mxu0
          %6694 = vdwg.mxu0
          %6695 = vmatprep.subr.mxu0 0.0
          %v6696 = vand.u32 %v3098, 4294901760
          %6697 = vmatpush1.msra.mxu0 %v6696
          %6698 = vmatprep.subr.mxu0 0.0
          %6699 = vmatpush1.msra.mxu0 0.0
          %6700 = vmatprep.subr.mxu0 0.0
          %6701 = vmatpush1.msra.mxu0 0.0
          %6702 = vmatprep.subr.mxu0 0.0
          %6703 = vmatpush1.msra.mxu0 0.0
          %6704 = vmatprep.subr.mxu0 0.0
          %6705 = vmatpush1.msra.mxu0 0.0
          %6706 = vmatprep.subr.mxu0 0.0
          %6707 = vmatpush1.msra.mxu0 0.0
          %6708 = vmatprep.subr.mxu0 0.0
          %6709 = vmatpush1.msra.mxu0 0.0
          %6710 = vmatprep.subr.mxu0 0.0
          %6711 = vmatpush1.msra.mxu0 0.0
          %6712 = vmatprep.subr.mxu0 0.0
          %6713 = vmatpush1.msra.mxu0 0.0
          %6714 = vmatprep.subr.mxu0 0.0
          %6715 = vmatpush1.msra.mxu0 0.0
          %6716 = vmatprep.subr.mxu0 0.0
          %6717 = vmatpush1.msra.mxu0 0.0
          %6718 = vmatprep.subr.mxu0 0.0
          %6719 = vmatpush1.msra.mxu0 0.0
          %6720 = vmatprep.subr.mxu0 0.0
          %6721 = vmatpush1.msra.mxu0 0.0
          %6722 = vmatprep.subr.mxu0 0.0
          %6723 = vmatpush1.msra.mxu0 0.0
          %6724 = vmatprep.subr.mxu0 0.0
          %6725 = vmatpush1.msra.mxu0 0.0
          %6726 = vmatprep.subr.mxu0 0.0
          %6727 = vmatpush1.msra.mxu0 0.0
          %6728 = vmatprep.subr.mxu0 0.0
          %6729 = vmatpush1.msra.mxu0 0.0
          %6730 = vmatprep.subr.mxu0 0.0
          %6731 = vmatpush1.msra.mxu0 0.0
          %6732 = vmatprep.subr.mxu0 0.0
          %6733 = vmatpush1.msra.mxu0 0.0
          %6734 = vmatprep.subr.mxu0 0.0
          %6735 = vmatpush1.msra.mxu0 0.0
          %6736 = vmatprep.subr.mxu0 0.0
          %6737 = vmatpush1.msra.mxu0 0.0
          %6738 = vmatprep.subr.mxu0 0.0
          %6739 = vmatpush1.msra.mxu0 0.0
          %6740 = vmatprep.subr.mxu0 0.0
          %6741 = vmatpush1.msra.mxu0 0.0
          %6742 = vmatprep.subr.mxu0 0.0
          %6743 = vmatpush1.msra.mxu0 0.0
          %6744 = vmatprep.subr.mxu0 0.0
          %6745 = vmatpush1.msra.mxu0 0.0
          %6746 = vmatprep.subr.mxu0 0.0
          %6747 = vmatpush1.msra.mxu0 0.0
          %6748 = vmatprep.subr.mxu0 0.0
          %6749 = vmatpush1.msra.mxu0 0.0
          %6750 = vmatprep.subr.mxu0 0.0
          %6751 = vmatpush1.msra.mxu0 0.0
          %6752 = vmatprep.subr.mxu0 0.0
          %6753 = vmatpush1.msra.mxu0 0.0
          %6754 = vmatprep.subr.mxu0 0.0
          %6755 = vmatpush1.msra.mxu0 0.0
          %6756 = vmatprep.subr.mxu0 0.0
          %6757 = vmatpush1.msra.mxu0 0.0
          %6758 = vmatprep.subr.mxu0 0.0
          %6759 = vmatpush1.msra.mxu0 0.0
          %6760 = vmatprep.mubr.f32.mxu0 0.0
          %v6761 = vand.u32 %v6319, 4294901760
          %6762 = vmatmul.mubr.f32.gmra.mrb[0].mxu0 %v6761
          %v6763 = vpop.f32.mrb[0].mxu0
          %v6764 = vadd.f32 %v6692, %v6763
          %v6765 = vpop.f32.mrb[0].mxu0
          %6766 = vdwg.mxu0
          %v6767 = vadd.f32 %v4967, %v5417
          %v6768 = vadd.f32 %v4968, %v5866
          %v6769 = vadd.f32 %v4969, %v6315
          %v6770 = vadd.f32 %v4970, %v6764
        $region101: #{tpu_custom_call.1} parent=55 // loop_footer
          %s3073 = sadd.s32 %s3071, 1
        $region102: #{tpu_custom_call.1} parent=55 // loop_footer_branch
          %3070 = sbr.rel target = $region98
        $region103: #{tpu_custom_call.1} parent=55 // loop_exit
          _
        %v6771 = vrcp.pop %v3080
        %v6772 = vmul.f32 %v3084, %v6771
        %v6773 = vrcp.pop %v3081
        %v6774 = vmul.f32 %v3085, %v6773
        %v6775 = vrcp.pop %v3082
        %v6776 = vmul.f32 %v3086, %v6775
        %v6777 = vrcp.pop %v3083
        %v6778 = vmul.f32 %v3087, %v6777
        %v6779 = vcombine.low %v6772, %v6776
        %v6780 = vcombine.high %v6772, %v6776
        %v6782 = vunpack.c.l.s4 1983009808
        %v6783 = vunpack.c.0.s8 %v6782
        %v6784 = vlaneseq
        %v6785 = vshrl.u32 %v6784, 7
        %v6786 = vsub.s32 %v6783, %v6785
        %v6787 = vrot.slane %v6779, %v6786
        %v6789 = vunpack.c.l.s4 1983009808
        %v6790 = vunpack.c.0.s8 %v6789
        %v6791 = vlaneseq
        %v6792 = vshrl.u32 %v6791, 7
        %v6793 = vsub.s32 %v6790, %v6792
        %v6794 = vrot.slane %v6780, %v6793
        %v6795 = vcombine.low %v6774, %v6778
        %v6796 = vcombine.high %v6774, %v6778
        %v6798 = vunpack.c.l.s4 1983009808
        %v6799 = vunpack.c.0.s8 %v6798
        %v6800 = vlaneseq
        %v6801 = vshrl.u32 %v6800, 7
        %v6802 = vsub.s32 %v6799, %v6801
        %v6803 = vrot.slane %v6795, %v6802
        %v6805 = vunpack.c.l.s4 1983009808
        %v6806 = vunpack.c.0.s8 %v6805
        %v6807 = vlaneseq
        %v6808 = vshrl.u32 %v6807, 7
        %v6809 = vsub.s32 %v6806, %v6808
        %v6810 = vrot.slane %v6796, %v6809
        %v6811 = vcombine.low %v6787, %v6803
        %v6812 = vcombine.high %v6787, %v6803
        %v6814 = vunpack.c.l.s4 1934713408
        %v6815 = vunpack.c.0.s8 %v6814
        %v6816 = vlaneseq
        %v6817 = vshrl.u32 %v6816, 7
        %v6818 = vsub.s32 %v6815, %v6817
        %v6819 = vrot.slane %v6811, %v6818
        %v6821 = vunpack.c.l.s4 1934713408
        %v6822 = vunpack.c.0.s8 %v6821
        %v6823 = vlaneseq
        %v6824 = vshrl.u32 %v6823, 7
        %v6825 = vsub.s32 %v6822, %v6824
        %v6826 = vrot.slane %v6812, %v6825
        %v6827 = vcombine.low %v6794, %v6810
        %v6828 = vcombine.high %v6794, %v6810
        %v6830 = vunpack.c.l.s4 1934713408
        %v6831 = vunpack.c.0.s8 %v6830
        %v6832 = vlaneseq
        %v6833 = vshrl.u32 %v6832, 7
        %v6834 = vsub.s32 %v6831, %v6833
        %v6835 = vrot.slane %v6827, %v6834
        %v6837 = vunpack.c.l.s4 1934713408
        %v6838 = vunpack.c.0.s8 %v6837
        %v6839 = vlaneseq
        %v6840 = vshrl.u32 %v6839, 7
        %v6841 = vsub.s32 %v6838, %v6840
        %v6842 = vrot.slane %v6828, %v6841
        %v6843 = vcombine.high %v6819, 0.0
        %v6844 = vcombine.high %v6826, 0.0
        %v6845 = vcombine.high %v6835, 0.0
        %v6846 = vcombine.high %v6842, 0.0
        %v6847 = vcombine.low %v6819, %v6826
        %v6849 = vunpack.c.l.s4 1983009808
        %v6850 = vunpack.c.0.s8 %v6849
        %v6851 = vlaneseq
        %v6852 = vshrl.u32 %v6851, 7
        %v6853 = vsub.s32 %v6850, %v6852
        %v6854 = vrot.slane %v6847, %v6853
        %v6855 = vcombine.low %v6843, %v6844
        %v6857 = vunpack.c.l.s4 1983009808
        %v6858 = vunpack.c.0.s8 %v6857
        %v6859 = vlaneseq
        %v6860 = vshrl.u32 %v6859, 7
        %v6861 = vsub.s32 %v6858, %v6860
        %v6862 = vrot.slane %v6855, %v6861
        %v6863 = vcombine.low %v6835, %v6842
        %v6865 = vunpack.c.l.s4 1983009808
        %v6866 = vunpack.c.0.s8 %v6865
        %v6867 = vlaneseq
        %v6868 = vshrl.u32 %v6867, 7
        %v6869 = vsub.s32 %v6866, %v6868
        %v6870 = vrot.slane %v6863, %v6869
        %v6871 = vcombine.low %v6845, %v6846
        %v6873 = vunpack.c.l.s4 1983009808
        %v6874 = vunpack.c.0.s8 %v6873
        %v6875 = vlaneseq
        %v6876 = vshrl.u32 %v6875, 7
        %v6877 = vsub.s32 %v6874, %v6876
        %v6878 = vrot.slane %v6871, %v6877
        %v6879 = vcombine.low %v6854, %v6862
        %v6880 = vcombine.high %v6854, %v6862
        %v6882 = vunpack.c.l.s4 1934713408
        %v6883 = vunpack.c.0.s8 %v6882
        %v6884 = vlaneseq
        %v6885 = vshrl.u32 %v6884, 7
        %v6886 = vsub.s32 %v6883, %v6885
        %v6887 = vrot.slane %v6879, %v6886
        %v6889 = vunpack.c.l.s4 1934713408
        %v6890 = vunpack.c.0.s8 %v6889
        %v6891 = vlaneseq
        %v6892 = vshrl.u32 %v6891, 7
        %v6893 = vsub.s32 %v6890, %v6892
        %v6894 = vrot.slane %v6880, %v6893
        %v6895 = vcombine.low %v6870, %v6878
        %v6896 = vcombine.high %v6870, %v6878
        %v6898 = vunpack.c.l.s4 1934713408
        %v6899 = vunpack.c.0.s8 %v6898
        %v6900 = vlaneseq
        %v6901 = vshrl.u32 %v6900, 7
        %v6902 = vsub.s32 %v6899, %v6901
        %v6903 = vrot.slane %v6895, %v6902
        %v6905 = vunpack.c.l.s4 1934713408
        %v6906 = vunpack.c.0.s8 %v6905
        %v6907 = vlaneseq
        %v6908 = vshrl.u32 %v6907, 7
        %v6909 = vsub.s32 %v6906, %v6908
        %v6910 = vrot.slane %v6896, %v6909
        %v6911 = vcombine.low %v6887, %v6903
        %v6912 = vcombine.high %v6887, %v6903
        %v6913 = vcombine.low %v6894, %v6910
        %v6914 = vcombine.high %v6894, %v6910
        %6916 = vrot.lane.b32.xlu0 %v6912, 8
        %v6917 = vpop.permute.xlu0 %6916
        %6920 = vrot.lane.b32.xlu0 %v6913, 16
        %v6921 = vpop.permute.xlu0 %6920
        %6924 = vrot.lane.b32.xlu0 %v6914, 24
        %v6925 = vpop.permute.xlu0 %6924
        %vm6927 = vcmask 64512
        %v6928 = vsel %vm6927, %v6911, %v6917
        %vm6929 = vcmask 130048
        %v6930 = vsel %vm6929, %v6928, %v6921
        %vm6931 = vcmask 195584
        %v6932 = vsel %vm6931, %v6930, %v6925
        %v6933 = vld [vmem:[#allocation16] sm:$0xff]
        %v6934 = vld [vmem:[#allocation16 + $0x8] sm:$0xff]
        %v6935 = vld [vmem:[#allocation16 + $0x10] sm:$0xff]
        %v6936 = vld [vmem:[#allocation16 + $0x18] sm:$0xff]
        %v6937 = vld [vmem:[#allocation18] sm:$0x1]
        %v6939 = vlaneseq
        %v6940 = vshrl.u32 %v6939, 7
        %v6941 = vsub.s32 0, %v6940
        %v6942 = vrot.slane %v6937, %v6941
        %v6945 = vsel %vm2434, %v6932, 0
        %6947 = vmatprep.subr.mxu0 0.0
        %v6948 = vand.u32 %v6933, 4294901760
        %6949 = vmatpush1.msra.mxu0 %v6948
        %6950 = vmatprep.subr.mxu0 0.0
        %v6951 = vand.u32 %v6934, 4294901760
        %6952 = vmatpush1.msra.mxu0 %v6951
        %6953 = vmatprep.subr.mxu0 0.0
        %v6954 = vand.u32 %v6935, 4294901760
        %6955 = vmatpush1.msra.mxu0 %v6954
        %6956 = vmatprep.subr.mxu0 0.0
        %v6957 = vand.u32 %v6936, 4294901760
        %6958 = vmatpush1.msra.mxu0 %v6957
        %6959 = vmatprep.subr.mxu0 0.0
        %6960 = vmatpush1.msra.mxu0 0.0
        %6961 = vmatprep.subr.mxu0 0.0
        %6962 = vmatpush1.msra.mxu0 0.0
        %6963 = vmatprep.subr.mxu0 0.0
        %6964 = vmatpush1.msra.mxu0 0.0
        %6965 = vmatprep.subr.mxu0 0.0
        %6966 = vmatpush1.msra.mxu0 0.0
        %6967 = vmatprep.subr.mxu0 0.0
        %6968 = vmatpush1.msra.mxu0 0.0
        %6969 = vmatprep.subr.mxu0 0.0
        %6970 = vmatpush1.msra.mxu0 0.0
        %6971 = vmatprep.subr.mxu0 0.0
        %6972 = vmatpush1.msra.mxu0 0.0
        %6973 = vmatprep.subr.mxu0 0.0
        %6974 = vmatpush1.msra.mxu0 0.0
        %6975 = vmatprep.subr.mxu0 0.0
        %6976 = vmatpush1.msra.mxu0 0.0
        %6977 = vmatprep.subr.mxu0 0.0
        %6978 = vmatpush1.msra.mxu0 0.0
        %6979 = vmatprep.subr.mxu0 0.0
        %6980 = vmatpush1.msra.mxu0 0.0
        %6981 = vmatprep.subr.mxu0 0.0
        %6982 = vmatpush1.msra.mxu0 0.0
        %6983 = vmatprep.subr.mxu0 0.0
        %6984 = vmatpush1.msra.mxu0 0.0
        %6985 = vmatprep.subr.mxu0 0.0
        %6986 = vmatpush1.msra.mxu0 0.0
        %6987 = vmatprep.subr.mxu0 0.0
        %6988 = vmatpush1.msra.mxu0 0.0
        %6989 = vmatprep.subr.mxu0 0.0
        %6990 = vmatpush1.msra.mxu0 0.0
        %6991 = vmatprep.subr.mxu0 0.0
        %6992 = vmatpush1.msra.mxu0 0.0
        %6993 = vmatprep.subr.mxu0 0.0
        %6994 = vmatpush1.msra.mxu0 0.0
        %6995 = vmatprep.subr.mxu0 0.0
        %6996 = vmatpush1.msra.mxu0 0.0
        %6997 = vmatprep.subr.mxu0 0.0
        %6998 = vmatpush1.msra.mxu0 0.0
        %6999 = vmatprep.subr.mxu0 0.0
        %7000 = vmatpush1.msra.mxu0 0.0
        %7001 = vmatprep.subr.mxu0 0.0
        %7002 = vmatpush1.msra.mxu0 0.0
        %7003 = vmatprep.subr.mxu0 0.0
        %7004 = vmatpush1.msra.mxu0 0.0
        %7005 = vmatprep.subr.mxu0 0.0
        %7006 = vmatpush1.msra.mxu0 0.0
        %7007 = vmatprep.subr.mxu0 0.0
        %7008 = vmatpush1.msra.mxu0 0.0
        %7009 = vmatprep.subr.mxu0 0.0
        %7010 = vmatpush1.msra.mxu0 0.0
        %7011 = vmatprep.subr.mxu0 0.0
        %7012 = vmatpush1.msra.mxu0 0.0
        %7013 = vmatprep.subr.mxu0 0.0
        %7014 = vmatpush1.msra.mxu0 0.0
        %7015 = vmatprep.mubr.f32.mxu0 0.0
        %v7016 = vand.u32 %v6945, 4294901760
        %v7017 = vsub.f32 %v6945, %v7016
        %v7018 = vand.u32 %v7017, 4294901760
        %v7019 = vsub.f32 %v7017, %v7018
        %v7020 = vand.u32 %v7019, 4294901760
        %7021 = vmatmul.mubr.f32.gmra.mrb[0].mxu0 %v7020
        %v7022 = vpop.f32.mrb[0].mxu0
        %v7023 = vadd.f32 %v6942, %v7022
        %v7024 = vpop.f32.mrb[0].mxu0
        %7025 = vdwg.mxu0
        %7026 = vmatprep.subr.mxu0 0.0
        %v7027 = vand.u32 %v6933, 4294901760
        %v7028 = vsub.f32 %v6933, %v7027
        %v7029 = vand.u32 %v7028, 4294901760
        %v7030 = vsub.f32 %v7028, %v7029
        %v7031 = vand.u32 %v7030, 4294901760
        %7032 = vmatpush1.msra.mxu0 %v7031
        %7033 = vmatprep.subr.mxu0 0.0
        %v7034 = vand.u32 %v6934, 4294901760
        %v7035 = vsub.f32 %v6934, %v7034
        %v7036 = vand.u32 %v7035, 4294901760
        %v7037 = vsub.f32 %v7035, %v7036
        %v7038 = vand.u32 %v7037, 4294901760
        %7039 = vmatpush1.msra.mxu0 %v7038
        %7040 = vmatprep.subr.mxu0 0.0
        %v7041 = vand.u32 %v6935, 4294901760
        %v7042 = vsub.f32 %v6935, %v7041
        %v7043 = vand.u32 %v7042, 4294901760
        %v7044 = vsub.f32 %v7042, %v7043
        %v7045 = vand.u32 %v7044, 4294901760
        %7046 = vmatpush1.msra.mxu0 %v7045
        %7047 = vmatprep.subr.mxu0 0.0
        %v7048 = vand.u32 %v6936, 4294901760
        %v7049 = vsub.f32 %v6936, %v7048
        %v7050 = vand.u32 %v7049, 4294901760
        %v7051 = vsub.f32 %v7049, %v7050
        %v7052 = vand.u32 %v7051, 4294901760
        %7053 = vmatpush1.msra.mxu0 %v7052
        %7054 = vmatprep.subr.mxu0 0.0
        %7055 = vmatpush1.msra.mxu0 0.0
        %7056 = vmatprep.subr.mxu0 0.0
        %7057 = vmatpush1.msra.mxu0 0.0
        %7058 = vmatprep.subr.mxu0 0.0
        %7059 = vmatpush1.msra.mxu0 0.0
        %7060 = vmatprep.subr.mxu0 0.0
        %7061 = vmatpush1.msra.mxu0 0.0
        %7062 = vmatprep.subr.mxu0 0.0
        %7063 = vmatpush1.msra.mxu0 0.0
        %7064 = vmatprep.subr.mxu0 0.0
        %7065 = vmatpush1.msra.mxu0 0.0
        %7066 = vmatprep.subr.mxu0 0.0
        %7067 = vmatpush1.msra.mxu0 0.0
        %7068 = vmatprep.subr.mxu0 0.0
        %7069 = vmatpush1.msra.mxu0 0.0
        %7070 = vmatprep.subr.mxu0 0.0
        %7071 = vmatpush1.msra.mxu0 0.0
        %7072 = vmatprep.subr.mxu0 0.0
        %7073 = vmatpush1.msra.mxu0 0.0
        %7074 = vmatprep.subr.mxu0 0.0
        %7075 = vmatpush1.msra.mxu0 0.0
        %7076 = vmatprep.subr.mxu0 0.0
        %7077 = vmatpush1.msra.mxu0 0.0
        %7078 = vmatprep.subr.mxu0 0.0
        %7079 = vmatpush1.msra.mxu0 0.0
        %7080 = vmatprep.subr.mxu0 0.0
        %7081 = vmatpush1.msra.mxu0 0.0
        %7082 = vmatprep.subr.mxu0 0.0
        %7083 = vmatpush1.msra.mxu0 0.0
        %7084 = vmatprep.subr.mxu0 0.0
        %7085 = vmatpush1.msra.mxu0 0.0
        %7086 = vmatprep.subr.mxu0 0.0
        %7087 = vmatpush1.msra.mxu0 0.0
        %7088 = vmatprep.subr.mxu0 0.0
        %7089 = vmatpush1.msra.mxu0 0.0
        %7090 = vmatprep.subr.mxu0 0.0
        %7091 = vmatpush1.msra.mxu0 0.0
        %7092 = vmatprep.subr.mxu0 0.0
        %7093 = vmatpush1.msra.mxu0 0.0
        %7094 = vmatprep.subr.mxu0 0.0
        %7095 = vmatpush1.msra.mxu0 0.0
        %7096 = vmatprep.subr.mxu0 0.0
        %7097 = vmatpush1.msra.mxu0 0.0
        %7098 = vmatprep.subr.mxu0 0.0
        %7099 = vmatpush1.msra.mxu0 0.0
        %7100 = vmatprep.subr.mxu0 0.0
        %7101 = vmatpush1.msra.mxu0 0.0
        %7102 = vmatprep.subr.mxu0 0.0
        %7103 = vmatpush1.msra.mxu0 0.0
        %7104 = vmatprep.subr.mxu0 0.0
        %7105 = vmatpush1.msra.mxu0 0.0
        %7106 = vmatprep.subr.mxu0 0.0
        %7107 = vmatpush1.msra.mxu0 0.0
        %7108 = vmatprep.subr.mxu0 0.0
        %7109 = vmatpush1.msra.mxu0 0.0
        %7110 = vmatprep.mubr.f32.mxu0 0.0
        %v7111 = vand.u32 %v6945, 4294901760
        %7112 = vmatmul.mubr.f32.gmra.mrb[0].mxu0 %v7111
        %v7113 = vpop.f32.mrb[0].mxu0
        %v7114 = vadd.f32 %v7023, %v7113
        %v7115 = vpop.f32.mrb[0].mxu0
        %7116 = vdwg.mxu0
        %7117 = vmatprep.subr.mxu0 0.0
        %v7118 = vand.u32 %v6933, 4294901760
        %v7119 = vsub.f32 %v6933, %v7118
        %7120 = vmatpush1.msra.mxu0 %v7119
        %7121 = vmatprep.subr.mxu0 0.0
        %v7122 = vand.u32 %v6934, 4294901760
        %v7123 = vsub.f32 %v6934, %v7122
        %7124 = vmatpush1.msra.mxu0 %v7123
        %7125 = vmatprep.subr.mxu0 0.0
        %v7126 = vand.u32 %v6935, 4294901760
        %v7127 = vsub.f32 %v6935, %v7126
        %7128 = vmatpush1.msra.mxu0 %v7127
        %7129 = vmatprep.subr.mxu0 0.0
        %v7130 = vand.u32 %v6936, 4294901760
        %v7131 = vsub.f32 %v6936, %v7130
        %7132 = vmatpush1.msra.mxu0 %v7131
        %7133 = vmatprep.subr.mxu0 0.0
        %7134 = vmatpush1.msra.mxu0 0.0
        %7135 = vmatprep.subr.mxu0 0.0
        %7136 = vmatpush1.msra.mxu0 0.0
        %7137 = vmatprep.subr.mxu0 0.0
        %7138 = vmatpush1.msra.mxu0 0.0
        %7139 = vmatprep.subr.mxu0 0.0
        %7140 = vmatpush1.msra.mxu0 0.0
        %7141 = vmatprep.subr.mxu0 0.0
        %7142 = vmatpush1.msra.mxu0 0.0
        %7143 = vmatprep.subr.mxu0 0.0
        %7144 = vmatpush1.msra.mxu0 0.0
        %7145 = vmatprep.subr.mxu0 0.0
        %7146 = vmatpush1.msra.mxu0 0.0
        %7147 = vmatprep.subr.mxu0 0.0
        %7148 = vmatpush1.msra.mxu0 0.0
        %7149 = vmatprep.subr.mxu0 0.0
        %7150 = vmatpush1.msra.mxu0 0.0
        %7151 = vmatprep.subr.mxu0 0.0
        %7152 = vmatpush1.msra.mxu0 0.0
        %7153 = vmatprep.subr.mxu0 0.0
        %7154 = vmatpush1.msra.mxu0 0.0
        %7155 = vmatprep.subr.mxu0 0.0
        %7156 = vmatpush1.msra.mxu0 0.0
        %7157 = vmatprep.subr.mxu0 0.0
        %7158 = vmatpush1.msra.mxu0 0.0
        %7159 = vmatprep.subr.mxu0 0.0
        %7160 = vmatpush1.msra.mxu0 0.0
        %7161 = vmatprep.subr.mxu0 0.0
        %7162 = vmatpush1.msra.mxu0 0.0
        %7163 = vmatprep.subr.mxu0 0.0
        %7164 = vmatpush1.msra.mxu0 0.0
        %7165 = vmatprep.subr.mxu0 0.0
        %7166 = vmatpush1.msra.mxu0 0.0
        %7167 = vmatprep.subr.mxu0 0.0
        %7168 = vmatpush1.msra.mxu0 0.0
        %7169 = vmatprep.subr.mxu0 0.0
        %7170 = vmatpush1.msra.mxu0 0.0
        %7171 = vmatprep.subr.mxu0 0.0
        %7172 = vmatpush1.msra.mxu0 0.0
        %7173 = vmatprep.subr.mxu0 0.0
        %7174 = vmatpush1.msra.mxu0 0.0
        %7175 = vmatprep.subr.mxu0 0.0
        %7176 = vmatpush1.msra.mxu0 0.0
        %7177 = vmatprep.subr.mxu0 0.0
        %7178 = vmatpush1.msra.mxu0 0.0
        %7179 = vmatprep.subr.mxu0 0.0
        %7180 = vmatpush1.msra.mxu0 0.0
        %7181 = vmatprep.subr.mxu0 0.0
        %7182 = vmatpush1.msra.mxu0 0.0
        %7183 = vmatprep.subr.mxu0 0.0
        %7184 = vmatpush1.msra.mxu0 0.0
        %7185 = vmatprep.subr.mxu0 0.0
        %7186 = vmatpush1.msra.mxu0 0.0
        %7187 = vmatprep.subr.mxu0 0.0
        %7188 = vmatpush1.msra.mxu0 0.0
        %7189 = vmatprep.mubr.f32.mxu0 0.0
        %v7190 = vand.u32 %v6945, 4294901760
        %v7191 = vsub.f32 %v6945, %v7190
        %7192 = vmatmul.mubr.f32.gmra.mrb[0].mxu0 %v7191
        %v7193 = vpop.f32.mrb[0].mxu0
        %v7194 = vadd.f32 %v7114, %v7193
        %v7195 = vpop.f32.mrb[0].mxu0
        %7196 = vdwg.mxu0
        %7197 = vmatprep.subr.mxu0 0.0
        %v7198 = vand.u32 %v6933, 4294901760
        %7199 = vmatpush1.msra.mxu0 %v7198
        %7200 = vmatprep.subr.mxu0 0.0
        %v7201 = vand.u32 %v6934, 4294901760
        %7202 = vmatpush1.msra.mxu0 %v7201
        %7203 = vmatprep.subr.mxu0 0.0
        %v7204 = vand.u32 %v6935, 4294901760
        %7205 = vmatpush1.msra.mxu0 %v7204
        %7206 = vmatprep.subr.mxu0 0.0
        %v7207 = vand.u32 %v6936, 4294901760
        %7208 = vmatpush1.msra.mxu0 %v7207
        %7209 = vmatprep.subr.mxu0 0.0
        %7210 = vmatpush1.msra.mxu0 0.0
        %7211 = vmatprep.subr.mxu0 0.0
        %7212 = vmatpush1.msra.mxu0 0.0
        %7213 = vmatprep.subr.mxu0 0.0
        %7214 = vmatpush1.msra.mxu0 0.0
        %7215 = vmatprep.subr.mxu0 0.0
        %7216 = vmatpush1.msra.mxu0 0.0
        %7217 = vmatprep.subr.mxu0 0.0
        %7218 = vmatpush1.msra.mxu0 0.0
        %7219 = vmatprep.subr.mxu0 0.0
        %7220 = vmatpush1.msra.mxu0 0.0
        %7221 = vmatprep.subr.mxu0 0.0
        %7222 = vmatpush1.msra.mxu0 0.0
        %7223 = vmatprep.subr.mxu0 0.0
        %7224 = vmatpush1.msra.mxu0 0.0
        %7225 = vmatprep.subr.mxu0 0.0
        %7226 = vmatpush1.msra.mxu0 0.0
        %7227 = vmatprep.subr.mxu0 0.0
        %7228 = vmatpush1.msra.mxu0 0.0
        %7229 = vmatprep.subr.mxu0 0.0
        %7230 = vmatpush1.msra.mxu0 0.0
        %7231 = vmatprep.subr.mxu0 0.0
        %7232 = vmatpush1.msra.mxu0 0.0
        %7233 = vmatprep.subr.mxu0 0.0
        %7234 = vmatpush1.msra.mxu0 0.0
        %7235 = vmatprep.subr.mxu0 0.0
        %7236 = vmatpush1.msra.mxu0 0.0
        %7237 = vmatprep.subr.mxu0 0.0
        %7238 = vmatpush1.msra.mxu0 0.0
        %7239 = vmatprep.subr.mxu0 0.0
        %7240 = vmatpush1.msra.mxu0 0.0
        %7241 = vmatprep.subr.mxu0 0.0
        %7242 = vmatpush1.msra.mxu0 0.0
        %7243 = vmatprep.subr.mxu0 0.0
        %7244 = vmatpush1.msra.mxu0 0.0
        %7245 = vmatprep.subr.mxu0 0.0
        %7246 = vmatpush1.msra.mxu0 0.0
        %7247 = vmatprep.subr.mxu0 0.0
        %7248 = vmatpush1.msra.mxu0 0.0
        %7249 = vmatprep.subr.mxu0 0.0
        %7250 = vmatpush1.msra.mxu0 0.0
        %7251 = vmatprep.subr.mxu0 0.0
        %7252 = vmatpush1.msra.mxu0 0.0
        %7253 = vmatprep.subr.mxu0 0.0
        %7254 = vmatpush1.msra.mxu0 0.0
        %7255 = vmatprep.subr.mxu0 0.0
        %7256 = vmatpush1.msra.mxu0 0.0
        %7257 = vmatprep.subr.mxu0 0.0
        %7258 = vmatpush1.msra.mxu0 0.0
        %7259 = vmatprep.subr.mxu0 0.0
        %7260 = vmatpush1.msra.mxu0 0.0
        %7261 = vmatprep.subr.mxu0 0.0
        %7262 = vmatpush1.msra.mxu0 0.0
        %7263 = vmatprep.subr.mxu0 0.0
        %7264 = vmatpush1.msra.mxu0 0.0
        %7265 = vmatprep.mubr.f32.mxu0 0.0
        %v7266 = vand.u32 %v6945, 4294901760
        %v7267 = vsub.f32 %v6945, %v7266
        %v7268 = vand.u32 %v7267, 4294901760
        %7269 = vmatmul.mubr.f32.gmra.mrb[0].mxu0 %v7268
        %v7270 = vpop.f32.mrb[0].mxu0
        %v7271 = vadd.f32 %v7194, %v7270
        %v7272 = vpop.f32.mrb[0].mxu0
        %7273 = vdwg.mxu0
        %7274 = vmatprep.subr.mxu0 0.0
        %v7275 = vand.u32 %v6933, 4294901760
        %v7276 = vsub.f32 %v6933, %v7275
        %v7277 = vand.u32 %v7276, 4294901760
        %7278 = vmatpush1.msra.mxu0 %v7277
        %7279 = vmatprep.subr.mxu0 0.0
        %v7280 = vand.u32 %v6934, 4294901760
        %v7281 = vsub.f32 %v6934, %v7280
        %v7282 = vand.u32 %v7281, 4294901760
        %7283 = vmatpush1.msra.mxu0 %v7282
        %7284 = vmatprep.subr.mxu0 0.0
        %v7285 = vand.u32 %v6935, 4294901760
        %v7286 = vsub.f32 %v6935, %v7285
        %v7287 = vand.u32 %v7286, 4294901760
        %7288 = vmatpush1.msra.mxu0 %v7287
        %7289 = vmatprep.subr.mxu0 0.0
        %v7290 = vand.u32 %v6936, 4294901760
        %v7291 = vsub.f32 %v6936, %v7290
        %v7292 = vand.u32 %v7291, 4294901760
        %7293 = vmatpush1.msra.mxu0 %v7292
        %7294 = vmatprep.subr.mxu0 0.0
        %7295 = vmatpush1.msra.mxu0 0.0
        %7296 = vmatprep.subr.mxu0 0.0
        %7297 = vmatpush1.msra.mxu0 0.0
        %7298 = vmatprep.subr.mxu0 0.0
        %7299 = vmatpush1.msra.mxu0 0.0
        %7300 = vmatprep.subr.mxu0 0.0
        %7301 = vmatpush1.msra.mxu0 0.0
        %7302 = vmatprep.subr.mxu0 0.0
        %7303 = vmatpush1.msra.mxu0 0.0
        %7304 = vmatprep.subr.mxu0 0.0
        %7305 = vmatpush1.msra.mxu0 0.0
        %7306 = vmatprep.subr.mxu0 0.0
        %7307 = vmatpush1.msra.mxu0 0.0
        %7308 = vmatprep.subr.mxu0 0.0
        %7309 = vmatpush1.msra.mxu0 0.0
        %7310 = vmatprep.subr.mxu0 0.0
        %7311 = vmatpush1.msra.mxu0 0.0
        %7312 = vmatprep.subr.mxu0 0.0
        %7313 = vmatpush1.msra.mxu0 0.0
        %7314 = vmatprep.subr.mxu0 0.0
        %7315 = vmatpush1.msra.mxu0 0.0
        %7316 = vmatprep.subr.mxu0 0.0
        %7317 = vmatpush1.msra.mxu0 0.0
        %7318 = vmatprep.subr.mxu0 0.0
        %7319 = vmatpush1.msra.mxu0 0.0
        %7320 = vmatprep.subr.mxu0 0.0
        %7321 = vmatpush1.msra.mxu0 0.0
        %7322 = vmatprep.subr.mxu0 0.0
        %7323 = vmatpush1.msra.mxu0 0.0
        %7324 = vmatprep.subr.mxu0 0.0
        %7325 = vmatpush1.msra.mxu0 0.0
        %7326 = vmatprep.subr.mxu0 0.0
        %7327 = vmatpush1.msra.mxu0 0.0
        %7328 = vmatprep.subr.mxu0 0.0
        %7329 = vmatpush1.msra.mxu0 0.0
        %7330 = vmatprep.subr.mxu0 0.0
        %7331 = vmatpush1.msra.mxu0 0.0
        %7332 = vmatprep.subr.mxu0 0.0
        %7333 = vmatpush1.msra.mxu0 0.0
        %7334 = vmatprep.subr.mxu0 0.0
        %7335 = vmatpush1.msra.mxu0 0.0
        %7336 = vmatprep.subr.mxu0 0.0
        %7337 = vmatpush1.msra.mxu0 0.0
        %7338 = vmatprep.subr.mxu0 0.0
        %7339 = vmatpush1.msra.mxu0 0.0
        %7340 = vmatprep.subr.mxu0 0.0
        %7341 = vmatpush1.msra.mxu0 0.0
        %7342 = vmatprep.subr.mxu0 0.0
        %7343 = vmatpush1.msra.mxu0 0.0
        %7344 = vmatprep.subr.mxu0 0.0
        %7345 = vmatpush1.msra.mxu0 0.0
        %7346 = vmatprep.subr.mxu0 0.0
        %7347 = vmatpush1.msra.mxu0 0.0
        %7348 = vmatprep.subr.mxu0 0.0
        %7349 = vmatpush1.msra.mxu0 0.0
        %7350 = vmatprep.mubr.f32.mxu0 0.0
        %v7351 = vand.u32 %v6945, 4294901760
        %7352 = vmatmul.mubr.f32.gmra.mrb[0].mxu0 %v7351
        %v7353 = vpop.f32.mrb[0].mxu0
        %v7354 = vadd.f32 %v7271, %v7353
        %v7355 = vpop.f32.mrb[0].mxu0
        %7356 = vdwg.mxu0
        %7357 = vmatprep.subr.mxu0 0.0
        %v7358 = vand.u32 %v6933, 4294901760
        %7359 = vmatpush1.msra.mxu0 %v7358
        %7360 = vmatprep.subr.mxu0 0.0
        %v7361 = vand.u32 %v6934, 4294901760
        %7362 = vmatpush1.msra.mxu0 %v7361
        %7363 = vmatprep.subr.mxu0 0.0
        %v7364 = vand.u32 %v6935, 4294901760
        %7365 = vmatpush1.msra.mxu0 %v7364
        %7366 = vmatprep.subr.mxu0 0.0
        %v7367 = vand.u32 %v6936, 4294901760
        %7368 = vmatpush1.msra.mxu0 %v7367
        %7369 = vmatprep.subr.mxu0 0.0
        %7370 = vmatpush1.msra.mxu0 0.0
        %7371 = vmatprep.subr.mxu0 0.0
        %7372 = vmatpush1.msra.mxu0 0.0
        %7373 = vmatprep.subr.mxu0 0.0
        %7374 = vmatpush1.msra.mxu0 0.0
        %7375 = vmatprep.subr.mxu0 0.0
        %7376 = vmatpush1.msra.mxu0 0.0
        %7377 = vmatprep.subr.mxu0 0.0
        %7378 = vmatpush1.msra.mxu0 0.0
        %7379 = vmatprep.subr.mxu0 0.0
        %7380 = vmatpush1.msra.mxu0 0.0
        %7381 = vmatprep.subr.mxu0 0.0
        %7382 = vmatpush1.msra.mxu0 0.0
        %7383 = vmatprep.subr.mxu0 0.0
        %7384 = vmatpush1.msra.mxu0 0.0
        %7385 = vmatprep.subr.mxu0 0.0
        %7386 = vmatpush1.msra.mxu0 0.0
        %7387 = vmatprep.subr.mxu0 0.0
        %7388 = vmatpush1.msra.mxu0 0.0
        %7389 = vmatprep.subr.mxu0 0.0
        %7390 = vmatpush1.msra.mxu0 0.0
        %7391 = vmatprep.subr.mxu0 0.0
        %7392 = vmatpush1.msra.mxu0 0.0
        %7393 = vmatprep.subr.mxu0 0.0
        %7394 = vmatpush1.msra.mxu0 0.0
        %7395 = vmatprep.subr.mxu0 0.0
        %7396 = vmatpush1.msra.mxu0 0.0
        %7397 = vmatprep.subr.mxu0 0.0
        %7398 = vmatpush1.msra.mxu0 0.0
        %7399 = vmatprep.subr.mxu0 0.0
        %7400 = vmatpush1.msra.mxu0 0.0
        %7401 = vmatprep.subr.mxu0 0.0
        %7402 = vmatpush1.msra.mxu0 0.0
        %7403 = vmatprep.subr.mxu0 0.0
        %7404 = vmatpush1.msra.mxu0 0.0
        %7405 = vmatprep.subr.mxu0 0.0
        %7406 = vmatpush1.msra.mxu0 0.0
        %7407 = vmatprep.subr.mxu0 0.0
        %7408 = vmatpush1.msra.mxu0 0.0
        %7409 = vmatprep.subr.mxu0 0.0
        %7410 = vmatpush1.msra.mxu0 0.0
        %7411 = vmatprep.subr.mxu0 0.0
        %7412 = vmatpush1.msra.mxu0 0.0
        %7413 = vmatprep.subr.mxu0 0.0
        %7414 = vmatpush1.msra.mxu0 0.0
        %7415 = vmatprep.subr.mxu0 0.0
        %7416 = vmatpush1.msra.mxu0 0.0
        %7417 = vmatprep.subr.mxu0 0.0
        %7418 = vmatpush1.msra.mxu0 0.0
        %7419 = vmatprep.subr.mxu0 0.0
        %7420 = vmatpush1.msra.mxu0 0.0
        %7421 = vmatprep.subr.mxu0 0.0
        %7422 = vmatpush1.msra.mxu0 0.0
        %7423 = vmatprep.subr.mxu0 0.0
        %7424 = vmatpush1.msra.mxu0 0.0
        %7425 = vmatprep.mubr.f32.mxu0 0.0
        %v7426 = vand.u32 %v6945, 4294901760
        %7427 = vmatmul.mubr.f32.gmra.mrb[0].mxu0 %v7426
        %v7428 = vpop.f32.mrb[0].mxu0
        %v7429 = vadd.f32 %v7354, %v7428
        %v7430 = vpop.f32.mrb[0].mxu0
        %7431 = vdwg.mxu0
        %7432 = vst.msk [vmem:[%s469] sm:$0xff] %vm2434, %v7429
        %s7433 = sand.u32 %s246, 1
        %s7434 = scalar_lea.sflag [#allocation6], %s7433
        %s7435 = sand.u32 %s246, 1
        %s7436 = smul.addr %s7435, 8
        %s7437 = scalar_lea.vmem [#allocation19], %s7436
        // Predicated region
        $region104: #{tpu_custom_call.1} parent=55 // pred_check
          %p7438 = pneg %p256
        $region105: #{tpu_custom_call.1} parent=55 // pred_check_branch
          %7440 = sbr.rel (%p7438) target = $region107
        $region106: #{tpu_custom_call.1} parent=55 // pred_region
          %s7442 = ssub.s32 128, 128
          %7443 = vsyncadd %s7434, %s7442
          %s7444 = sadd.s32 %s35, %s34
          %s7445 = smul.addr %s7444, 128
          %s7446 = scalar_lea.hbm %s9, %s7445
          %s7448 = sshll.u32 %s7437, 4
          %s7449 = int_to_ptr.vmem [resolvable:$true] %s7448
          %7451 = dma.vmem_to_hbm [thread:$0]  %s7449, 128, %s7446, %s7434
        $region107: #{tpu_custom_call.1} parent=55 // pred_fallthru
          _
      $region56: #{tpu_custom_call.1} parent=5 // pred_fallthru
        _
      %p7452 = scmp.le.s32.totalorder 2, %s25
      // Predicated region
      $region108: #{tpu_custom_call.1} parent=5 // pred_check
        %p7453 = pneg %p7452
      $region109: #{tpu_custom_call.1} parent=5 // pred_check_branch
        %7455 = sbr.rel (%p7453) target = $region111
      $region110: #{tpu_custom_call.1} parent=5 // pred_region
        %s7456 = ssub.s32 %s25, 2
        // Predicated region
        $region112: #{tpu_custom_call.1} parent=110 // pred_check
          %p7457 = pneg %p262
        $region113: #{tpu_custom_call.1} parent=110 // pred_check_branch
          %7459 = sbr.rel (%p7457) target = $region115
        $region114: #{tpu_custom_call.1} parent=110 // pred_region
          %s7460 = sand.u32 %s247, 1
          %s7461 = scalar_lea.sflag [#allocation6], %s7460
          %s7462 = sand.u32 %s247, 1
          %s7463 = smul.addr %s7462, 8
          %s7464 = scalar_lea.vmem [#allocation19], %s7463
          %7465 = dma.done %s7461, 128
        $region115: #{tpu_custom_call.1} parent=110 // pred_fallthru
          _
      $region111: #{tpu_custom_call.1} parent=5 // pred_fallthru
        _
    $region6: #{tpu_custom_call.1} parent=1 // loop_footer
      %s29 = sadd.s32 1, %s25
    $region7: #{tpu_custom_call.1} parent=1 // loop_footer_branch
      %24 = sbr.rel target = $region3
    $region8: #{tpu_custom_call.1} parent=1 // loop_exit
      _
    %7466 = vsyncpa [#allocation5], 1
    %s7467 = scalar_lea.sflag [#allocation5], 1
    %7468 = vsyncpa %s7467, 1
    %7469 = vsyncpa [#allocation8], 1
    %7470 = vsyncpa [#allocation11], 1
    %7471 = vsyncpa [#allocation14], 1
    %7472 = vsyncpa [#allocation17], 1
    %7473 = vsyncpa [#allocation6], 1
    %s7474 = scalar_lea.sflag [#allocation6], 1
    %7475 = vsyncpa %s7474, 1

</llo_original>
